<compile_context>
chip_gen: v7x
topology: tpu7x:2x2x1
jax: 0.10.0
libtpu: 0.0.40
codegen_flags: <defaults>
</compile_context>

<pallas_src>
import math
import jax
import jax.numpy as jnp
from jax.experimental import pallas as pl
from jax.experimental.pallas import tpu as pltpu  # noqa: F401  (TPU backend assumed)

# ---------------- synthetic BERT config (small) ----------------
VOCAB = 64
HIDDEN = 32
NUM_HEADS = 4
HEAD_DIM = HIDDEN // NUM_HEADS
INTERMEDIATE = 64
NUM_LAYERS = 2
MAX_POS = 64
LN_EPS = 1e-12
HEADS_OUT = 3          # 2 binary logits + 1 relevance logit
HEADS_OUT_PAD = 128    # lane-dense output width


# ---------------- in-kernel helpers ----------------
def _layer_norm(x, g, b):
    mu = jnp.mean(x, axis=-1, keepdims=True)
    var = jnp.mean((x - mu) ** 2, axis=-1, keepdims=True)
    return (x - mu) * jax.lax.rsqrt(var + LN_EPS) * g + b


def _gelu(x):
    # TODO(synk): HF BERT uses exact erf-GELU; tanh approximation used here
    # (guaranteed Mosaic lowering), max abs deviation ~1e-3.
    c = math.sqrt(2.0 / math.pi)
    return 0.5 * x * (1.0 + jnp.tanh(c * (x + 0.044715 * x * x * x)))


# ---------------- fused Pallas kernel ----------------
def _reranker_kernel(x_ref, bias_ref, emb_g_ref, emb_b_ref,
                     wq_ref, bq_ref, wk_ref, bk_ref, wv_ref, bv_ref,
                     wo_ref, bo_ref, ln1g_ref, ln1b_ref,
                     w1_ref, b1_ref, w2_ref, b2_ref, ln2g_ref, ln2b_ref,
                     wh_ref, bh_ref, out_ref):
    """Whole Reranker forward on one (B*L, H) slab resident in VMEM."""
    x = _layer_norm(x_ref[...], emb_g_ref[...], emb_b_ref[...])   # (BL, H)
    bias = bias_ref[...]                                          # (BL, BL) additive
    scale = 1.0 / math.sqrt(HEAD_DIM)

    for l in range(NUM_LAYERS):            # static, unrolled
        attn = None
        for h in range(NUM_HEADS):         # per-head weights pre-split -> no lane slicing
            qh = jnp.dot(x, wq_ref[l, h], preferred_element_type=jnp.float32) + bq_ref[l, h]
            kh = jnp.dot(x, wk_ref[l, h], preferred_element_type=jnp.float32) + bk_ref[l, h]
            vh = jnp.dot(x, wv_ref[l, h], preferred_element_type=jnp.float32) + bv_ref[l, h]
            # scores without materialising kh.T (contract last dims directly)
            s = jnp.einsum('qd,kd->qk', qh, kh,
                           preferred_element_type=jnp.float32) * scale + bias
            s = s - jnp.max(s, axis=-1, keepdims=True)
            p = jnp.exp(s)
            p = p * pl.reciprocal(jnp.sum(p, axis=-1, keepdims=True), approx=True)
            ctx = jnp.dot(p, vh, preferred_element_type=jnp.float32)            # (BL, HD)
            # fold the output projection per head -> no head concatenate
            part = jnp.dot(ctx, wo_ref[l, h], preferred_element_type=jnp.float32)
            attn = part if attn is None else attn + part
        attn = attn + bo_ref[l]
        h1 = _layer_norm(x + attn, ln1g_ref[l], ln1b_ref[l])

        ff = jnp.dot(h1, w1_ref[l], preferred_element_type=jnp.float32) + b1_ref[l]
        ff = _gelu(ff)
        ff = jnp.dot(ff, w2_ref[l], preferred_element_type=jnp.float32) + b2_ref[l]
        x = _layer_norm(h1 + ff, ln2g_ref[l], ln2b_ref[l])

    # Fused heads projection, lane-dense (BL, 128) store; the wrapper consumes
    # only the CLS rows (0, L, 2L, ...) and lanes [:3].
    out_ref[...] = (jnp.dot(x, wh_ref[...], preferred_element_type=jnp.float32)
                    + bh_ref[...])


# ---------------- parameters (deterministic, synthetic) ----------------
def init_params(key):
    keys = iter(jax.random.split(key, 128))

    def normal(shape):
        return 0.02 * jax.random.normal(next(keys), shape, jnp.float32)

    def zeros(shape):
        return jnp.zeros(shape, jnp.float32)

    def ones(shape):
        return jnp.ones(shape, jnp.float32)

    params = {
        "word_emb": normal((VOCAB, HIDDEN)),
        "pos_emb": normal((MAX_POS, HIDDEN)),
        "type_emb": normal((2, HIDDEN)),
        "emb_ln_g": ones((HIDDEN,)),
        "emb_ln_b": zeros((HIDDEN,)),
        "layers": [],
    }
    for _ in range(NUM_LAYERS):
        params["layers"].append(dict(
            wq=normal((HIDDEN, HIDDEN)), bq=zeros((HIDDEN,)),
            wk=normal((HIDDEN, HIDDEN)), bk=zeros((HIDDEN,)),
            wv=normal((HIDDEN, HIDDEN)), bv=zeros((HIDDEN,)),
            wo=normal((HIDDEN, HIDDEN)), bo=zeros((HIDDEN,)),
            ln1_g=ones((HIDDEN,)), ln1_b=zeros((HIDDEN,)),
            w1=normal((HIDDEN, INTERMEDIATE)), b1=zeros((INTERMEDIATE,)),
            w2=normal((INTERMEDIATE, HIDDEN)), b2=zeros((HIDDEN,)),
            ln2_g=ones((HIDDEN,)), ln2_b=zeros((HIDDEN,)),
        ))
    # Reranker heads: nn.Linear(H, 2) and nn.Linear(H, 1), init_weights():
    # weight ~ N(0, 0.02), bias = 0.  Stored (in, out) and fused into one (H, 3)
    # projection (equivalent to torch's x @ W.T + b under the synthetic init).
    params["w_heads"] = jnp.concatenate([normal((HIDDEN, 2)), normal((HIDDEN, 1))], axis=1)
    params["b_heads"] = zeros((HEADS_OUT,))
    return params


def _prep_kernel_params(params):
    """Reshape/stack params into kernel-friendly layouts: 2-D biases, per-head
    split attention weights, layer-stacked tensors, lane-padded heads."""
    H, NH, HD = HIDDEN, NUM_HEADS, HEAD_DIM

    def stack(fn, name):
        return jnp.stack([fn(lp[name]) for lp in params["layers"]])

    split_in = lambda w: w.reshape(H, NH, HD).transpose(1, 0, 2)     # (NH, H, HD)
    split_in_b = lambda b: b.reshape(NH, 1, HD)                      # (NH, 1, HD)
    split_out = lambda w: w.reshape(NH, HD, H)                       # (NH, HD, H)
    row = lambda v: v.reshape(1, -1)

    return dict(
        emb_g=row(params["emb_ln_g"]), emb_b=row(params["emb_ln_b"]),
        wq=stack(split_in, "wq"), bq=stack(split_in_b, "bq"),
        wk=stack(split_in, "wk"), bk=stack(split_in_b, "bk"),
        wv=stack(split_in, "wv"), bv=stack(split_in_b, "bv"),
        wo=stack(split_out, "wo"), bo=stack(row, "bo"),
        ln1g=stack(row, "ln1_g"), ln1b=stack(row, "ln1_b"),
        w1=stack(lambda w: w, "w1"), b1=stack(row, "b1"),
        w2=stack(lambda w: w, "w2"), b2=stack(row, "b2"),
        ln2g=stack(row, "ln2_g"), ln2b=stack(row, "ln2_b"),
        wh=jnp.pad(params["w_heads"], ((0, 0), (0, HEADS_OUT_PAD - HEADS_OUT))),
        bh=jnp.pad(params["b_heads"], (0, HEADS_OUT_PAD - HEADS_OUT)).reshape(1, -1),
    )


# ---------------- Reranker forward ----------------
def reranker_forward(params, input_ids, attention_mask):
    N, M, L = input_ids.shape
    B = N * M
    BL = B * L

    ids = input_ids.reshape(B, L)
    mask = attention_mask.reshape(BL).astype(jnp.float32)

    # BERT embeddings (gather = plain-JAX glue); token_type hard-coded to 0.
    x = (params["word_emb"][ids]
         + params["pos_emb"][:L][None, :, :]
         + params["type_emb"][0][None, None, :]).reshape(BL, HIDDEN)

    # Additive bias on the fused (BL, BL) score matrix:
    #   0 where (same sequence AND key not padded), else -10000
    # -> identical to HF's per-sequence (1 - mask) * -10000 key masking.
    seq_ids = jnp.repeat(jnp.arange(B, dtype=jnp.int32), L)
    same_seq = seq_ids[:, None] == seq_ids[None, :]
    attn_bias = jnp.where(same_seq & (mask[None, :] > 0.5),
                          0.0, -10000.0).astype(jnp.float32)

    kp = _prep_kernel_params(params)

    out = pl.pallas_call(
        _reranker_kernel,
        out_shape=jax.ShapeDtypeStruct((BL, HEADS_OUT_PAD), jnp.float32),
    )(x, attn_bias, kp["emb_g"], kp["emb_b"],
      kp["wq"], kp["bq"], kp["wk"], kp["bk"], kp["wv"], kp["bv"],
      kp["wo"], kp["bo"], kp["ln1g"], kp["ln1b"],
      kp["w1"], kp["b1"], kp["w2"], kp["b2"], kp["ln2g"], kp["ln2b"],
      kp["wh"], kp["bh"])

    # sequence_output = last_hidden_state + 0 * pooler_output.sum()  (== LHS,
    # pooler compute omitted).  Heads were applied to every token row in-kernel
    # (lane-dense output); select CLS rows and the 3 real logits here.
    cls_logits = out.reshape(N, M, L, HEADS_OUT_PAD)[:, :, 0, :HEADS_OUT]
    binary_logits = cls_logits[:, :, :2]
    relevance_logits = cls_logits[:, :, 2]
    return binary_logits, relevance_logits


# ---------------- main ----------------
if __name__ == "__main__":
    N, M, L = 2, 3, 8

    params = init_params(jax.random.PRNGKey(0))

    k_ids, k_len = jax.random.split(jax.random.PRNGKey(1))
    input_ids = jax.random.randint(k_ids, (N, M, L), 0, VOCAB, dtype=jnp.int32)
    lengths = jax.random.randint(k_len, (N, M, 1), 4, L + 1)
    attention_mask = (jnp.arange(L)[None, None, :] < lengths).astype(jnp.int32)

    fwd = jax.jit(reranker_forward)
    binary_logits, relevance_logits = fwd(params, input_ids, attention_mask)
    jax.block_until_ready((binary_logits, relevance_logits))

    assert binary_logits.shape == (N, M, 2)
    assert relevance_logits.shape == (N, M)
    print("KERNEL_OK")
</pallas_src>

<mosaic_0001>
module attributes {stable_mosaic.version = 11 : i64} {
  func.func @_reranker_kernel(%arg0: memref<48x32xf32, #tpu.memory_space<vmem>>, %arg1: memref<48x48xf32, #tpu.memory_space<vmem>>, %arg2: memref<1x32xf32, #tpu.memory_space<vmem>>, %arg3: memref<1x32xf32, #tpu.memory_space<vmem>>, %arg4: memref<2x4x32x8xf32, #tpu.memory_space<vmem>>, %arg5: memref<2x4x1x8xf32, #tpu.memory_space<vmem>>, %arg6: memref<2x4x32x8xf32, #tpu.memory_space<vmem>>, %arg7: memref<2x4x1x8xf32, #tpu.memory_space<vmem>>, %arg8: memref<2x4x32x8xf32, #tpu.memory_space<vmem>>, %arg9: memref<2x4x1x8xf32, #tpu.memory_space<vmem>>, %arg10: memref<2x4x8x32xf32, #tpu.memory_space<vmem>>, %arg11: memref<2x1x32xf32, #tpu.memory_space<vmem>>, %arg12: memref<2x1x32xf32, #tpu.memory_space<vmem>>, %arg13: memref<2x1x32xf32, #tpu.memory_space<vmem>>, %arg14: memref<2x32x64xf32, #tpu.memory_space<vmem>>, %arg15: memref<2x1x64xf32, #tpu.memory_space<vmem>>, %arg16: memref<2x64x32xf32, #tpu.memory_space<vmem>>, %arg17: memref<2x1x32xf32, #tpu.memory_space<vmem>>, %arg18: memref<2x1x32xf32, #tpu.memory_space<vmem>>, %arg19: memref<2x1x32xf32, #tpu.memory_space<vmem>>, %arg20: memref<32x128xf32, #tpu.memory_space<vmem>>, %arg21: memref<1x128xf32, #tpu.memory_space<vmem>>, %arg22: memref<48x128xf32, #tpu.memory_space<vmem>>) attributes {dimension_semantics = [], scalar_prefetch = 0 : i64, scratch_operands = 0 : i64, tpu.core_type = #tpu.core_type<tc>} {
    %c0 = arith.constant 0 : index
    %c0_0 = arith.constant 0 : index
    %0 = vector.load %arg0[%c0, %c0_0] : memref<48x32xf32, #tpu.memory_space<vmem>>, vector<48x32xf32>
    %c0_1 = arith.constant 0 : index
    %c0_2 = arith.constant 0 : index
    %1 = vector.load %arg2[%c0_1, %c0_2] : memref<1x32xf32, #tpu.memory_space<vmem>>, vector<1x32xf32>
    %c0_3 = arith.constant 0 : index
    %c0_4 = arith.constant 0 : index
    %2 = vector.load %arg3[%c0_3, %c0_4] : memref<1x32xf32, #tpu.memory_space<vmem>>, vector<1x32xf32>
    %cst = arith.constant dense<0.000000e+00> : vector<48xf32>
    %3 = vector.multi_reduction <add>, %0, %cst [1] : vector<48x32xf32> to vector<48xf32>
    %4 = vector.shape_cast %3 : vector<48xf32> to vector<48x1xf32>
    %cst_5 = arith.constant 3.200000e+01 : f32
    %5 = vector.broadcast %cst_5 : f32 to vector<48x1xf32>
    %6 = arith.divf %4, %5 : vector<48x1xf32>
    %7 = vector.broadcast %6 : vector<48x1xf32> to vector<48x32xf32>
    %8 = arith.subf %0, %7 : vector<48x32xf32>
    %9 = arith.mulf %8, %8 : vector<48x32xf32>
    %cst_6 = arith.constant dense<0.000000e+00> : vector<48xf32>
    %10 = vector.multi_reduction <add>, %9, %cst_6 [1] : vector<48x32xf32> to vector<48xf32>
    %11 = vector.shape_cast %10 : vector<48xf32> to vector<48x1xf32>
    %cst_7 = arith.constant 3.200000e+01 : f32
    %12 = vector.broadcast %cst_7 : f32 to vector<48x1xf32>
    %13 = arith.divf %11, %12 : vector<48x1xf32>
    %14 = vector.broadcast %6 : vector<48x1xf32> to vector<48x32xf32>
    %15 = arith.subf %0, %14 : vector<48x32xf32>
    %cst_8 = arith.constant 9.99999996E-13 : f32
    %16 = vector.broadcast %cst_8 : f32 to vector<48x1xf32>
    %17 = arith.addf %13, %16 : vector<48x1xf32>
    %18 = math.rsqrt %17 : vector<48x1xf32>
    %19 = vector.broadcast %18 : vector<48x1xf32> to vector<48x32xf32>
    %20 = arith.mulf %15, %19 : vector<48x32xf32>
    %21 = vector.broadcast %1 : vector<1x32xf32> to vector<48x32xf32>
    %22 = arith.mulf %20, %21 : vector<48x32xf32>
    %23 = vector.broadcast %2 : vector<1x32xf32> to vector<48x32xf32>
    %24 = arith.addf %22, %23 : vector<48x32xf32>
    %c0_9 = arith.constant 0 : index
    %c0_10 = arith.constant 0 : index
    %25 = vector.load %arg1[%c0_9, %c0_10] : memref<48x48xf32, #tpu.memory_space<vmem>>, vector<48x48xf32>
    %c0_11 = arith.constant 0 : index
    %c0_12 = arith.constant 0 : index
    %c0_13 = arith.constant 0 : index
    %c0_14 = arith.constant 0 : index
    %26 = vector.load %arg4[%c0_11, %c0_12, %c0_13, %c0_14] : memref<2x4x32x8xf32, #tpu.memory_space<vmem>>, vector<1x1x32x8xf32>
    %27 = vector.shape_cast %26 : vector<1x1x32x8xf32> to vector<32x8xf32>
    %cst_15 = arith.constant dense<0.000000e+00> : vector<48x8xf32>
    %28 = tpu.matmul %24, %27, %cst_15 {dimension_numbers = #tpu.dot_dimension_numbers<[1], [0], [0], [1], [0, 0, 1, 1], [], []>} : vector<48x32xf32>, vector<32x8xf32>, vector<48x8xf32> -> vector<48x8xf32>
    %c0_16 = arith.constant 0 : index
    %c0_17 = arith.constant 0 : index
    %c0_18 = arith.constant 0 : index
    %c0_19 = arith.constant 0 : index
    %29 = vector.load %arg5[%c0_16, %c0_17, %c0_18, %c0_19] : memref<2x4x1x8xf32, #tpu.memory_space<vmem>>, vector<1x1x1x8xf32>
    %30 = vector.shape_cast %29 : vector<1x1x1x8xf32> to vector<1x8xf32>
    %31 = vector.broadcast %30 : vector<1x8xf32> to vector<48x8xf32>
    %32 = arith.addf %28, %31 : vector<48x8xf32>
    %c0_20 = arith.constant 0 : index
    %c0_21 = arith.constant 0 : index
    %c0_22 = arith.constant 0 : index
    %c0_23 = arith.constant 0 : index
    %33 = vector.load %arg6[%c0_20, %c0_21, %c0_22, %c0_23] : memref<2x4x32x8xf32, #tpu.memory_space<vmem>>, vector<1x1x32x8xf32>
    %34 = vector.shape_cast %33 : vector<1x1x32x8xf32> to vector<32x8xf32>
    %cst_24 = arith.constant dense<0.000000e+00> : vector<48x8xf32>
    %35 = tpu.matmul %24, %34, %cst_24 {dimension_numbers = #tpu.dot_dimension_numbers<[1], [0], [0], [1], [0, 0, 1, 1], [], []>} : vector<48x32xf32>, vector<32x8xf32>, vector<48x8xf32> -> vector<48x8xf32>
    %c0_25 = arith.constant 0 : index
    %c0_26 = arith.constant 0 : index
    %c0_27 = arith.constant 0 : index
    %c0_28 = arith.constant 0 : index
    %36 = vector.load %arg7[%c0_25, %c0_26, %c0_27, %c0_28] : memref<2x4x1x8xf32, #tpu.memory_space<vmem>>, vector<1x1x1x8xf32>
    %37 = vector.shape_cast %36 : vector<1x1x1x8xf32> to vector<1x8xf32>
    %38 = vector.broadcast %37 : vector<1x8xf32> to vector<48x8xf32>
    %39 = arith.addf %35, %38 : vector<48x8xf32>
    %c0_29 = arith.constant 0 : index
    %c0_30 = arith.constant 0 : index
    %c0_31 = arith.constant 0 : index
    %c0_32 = arith.constant 0 : index
    %40 = vector.load %arg8[%c0_29, %c0_30, %c0_31, %c0_32] : memref<2x4x32x8xf32, #tpu.memory_space<vmem>>, vector<1x1x32x8xf32>
    %41 = vector.shape_cast %40 : vector<1x1x32x8xf32> to vector<32x8xf32>
    %cst_33 = arith.constant dense<0.000000e+00> : vector<48x8xf32>
    %42 = tpu.matmul %24, %41, %cst_33 {dimension_numbers = #tpu.dot_dimension_numbers<[1], [0], [0], [1], [0, 0, 1, 1], [], []>} : vector<48x32xf32>, vector<32x8xf32>, vector<48x8xf32> -> vector<48x8xf32>
    %c0_34 = arith.constant 0 : index
    %c0_35 = arith.constant 0 : index
    %c0_36 = arith.constant 0 : index
    %c0_37 = arith.constant 0 : index
    %43 = vector.load %arg9[%c0_34, %c0_35, %c0_36, %c0_37] : memref<2x4x1x8xf32, #tpu.memory_space<vmem>>, vector<1x1x1x8xf32>
    %44 = vector.shape_cast %43 : vector<1x1x1x8xf32> to vector<1x8xf32>
    %45 = vector.broadcast %44 : vector<1x8xf32> to vector<48x8xf32>
    %46 = arith.addf %42, %45 : vector<48x8xf32>
    "tpu.trace_start"() <{level = 10 : i32, message = "qd,kd->qk"}> : () -> ()
    %cst_38 = arith.constant dense<0.000000e+00> : vector<48x48xf32>
    %47 = tpu.matmul %32, %39, %cst_38 {dimension_numbers = #tpu.dot_dimension_numbers<[1], [1], [0], [0], [0, 0, 1, 0], [], []>} : vector<48x8xf32>, vector<48x8xf32>, vector<48x48xf32> -> vector<48x48xf32>
    "tpu.trace_stop"() : () -> ()
    %cst_39 = arith.constant 0.353553385 : f32
    %48 = vector.broadcast %cst_39 : f32 to vector<48x48xf32>
    %49 = arith.mulf %47, %48 : vector<48x48xf32>
    %50 = arith.addf %49, %25 : vector<48x48xf32>
    %cst_40 = arith.constant dense<0xFF800000> : vector<48xf32>
    %51 = vector.multi_reduction <maximumf>, %50, %cst_40 [1] : vector<48x48xf32> to vector<48xf32>
    %52 = vector.shape_cast %51 : vector<48xf32> to vector<48x1xf32>
    %53 = vector.broadcast %52 : vector<48x1xf32> to vector<48x48xf32>
    %54 = arith.subf %50, %53 : vector<48x48xf32>
    %55 = math.exp %54 : vector<48x48xf32>
    %cst_41 = arith.constant dense<0.000000e+00> : vector<48xf32>
    %56 = vector.multi_reduction <add>, %55, %cst_41 [1] : vector<48x48xf32> to vector<48xf32>
    %57 = vector.shape_cast %56 : vector<48xf32> to vector<48x1xf32>
    %58 = tpu.reciprocal %57 {approx = true} : vector<48x1xf32> -> vector<48x1xf32>
    %59 = vector.broadcast %58 : vector<48x1xf32> to vector<48x48xf32>
    %60 = arith.mulf %55, %59 : vector<48x48xf32>
    %cst_42 = arith.constant dense<0.000000e+00> : vector<48x8xf32>
    %61 = tpu.matmul %60, %46, %cst_42 {dimension_numbers = #tpu.dot_dimension_numbers<[1], [0], [0], [1], [0, 0, 1, 1], [], []>} : vector<48x48xf32>, vector<48x8xf32>, vector<48x8xf32> -> vector<48x8xf32>
    %c0_43 = arith.constant 0 : index
    %c0_44 = arith.constant 0 : index
    %c0_45 = arith.constant 0 : index
    %c0_46 = arith.constant 0 : index
    %62 = vector.load %arg10[%c0_43, %c0_44, %c0_45, %c0_46] : memref<2x4x8x32xf32, #tpu.memory_space<vmem>>, vector<1x1x8x32xf32>
    %63 = vector.shape_cast %62 : vector<1x1x8x32xf32> to vector<8x32xf32>
    %cst_47 = arith.constant dense<0.000000e+00> : vector<48x32xf32>
    %64 = tpu.matmul %61, %63, %cst_47 {dimension_numbers = #tpu.dot_dimension_numbers<[1], [0], [0], [1], [0, 0, 1, 1], [], []>} : vector<48x8xf32>, vector<8x32xf32>, vector<48x32xf32> -> vector<48x32xf32>
    %c0_48 = arith.constant 0 : index
    %c1 = arith.constant 1 : index
    %c0_49 = arith.constant 0 : index
    %c0_50 = arith.constant 0 : index
    %65 = vector.load %arg4[%c0_48, %c1, %c0_49, %c0_50] : memref<2x4x32x8xf32, #tpu.memory_space<vmem>>, vector<1x1x32x8xf32>
    %66 = vector.shape_cast %65 : vector<1x1x32x8xf32> to vector<32x8xf32>
    %cst_51 = arith.constant dense<0.000000e+00> : vector<48x8xf32>
    %67 = tpu.matmul %24, %66, %cst_51 {dimension_numbers = #tpu.dot_dimension_numbers<[1], [0], [0], [1], [0, 0, 1, 1], [], []>} : vector<48x32xf32>, vector<32x8xf32>, vector<48x8xf32> -> vector<48x8xf32>
    %c0_52 = arith.constant 0 : index
    %c1_53 = arith.constant 1 : index
    %c0_54 = arith.constant 0 : index
    %c0_55 = arith.constant 0 : index
    %68 = vector.load %arg5[%c0_52, %c1_53, %c0_54, %c0_55] : memref<2x4x1x8xf32, #tpu.memory_space<vmem>>, vector<1x1x1x8xf32>
    %69 = vector.shape_cast %68 : vector<1x1x1x8xf32> to vector<1x8xf32>
    %70 = vector.broadcast %69 : vector<1x8xf32> to vector<48x8xf32>
    %71 = arith.addf %67, %70 : vector<48x8xf32>
    %c0_56 = arith.constant 0 : index
    %c1_57 = arith.constant 1 : index
    %c0_58 = arith.constant 0 : index
    %c0_59 = arith.constant 0 : index
    %72 = vector.load %arg6[%c0_56, %c1_57, %c0_58, %c0_59] : memref<2x4x32x8xf32, #tpu.memory_space<vmem>>, vector<1x1x32x8xf32>
    %73 = vector.shape_cast %72 : vector<1x1x32x8xf32> to vector<32x8xf32>
    %cst_60 = arith.constant dense<0.000000e+00> : vector<48x8xf32>
    %74 = tpu.matmul %24, %73, %cst_60 {dimension_numbers = #tpu.dot_dimension_numbers<[1], [0], [0], [1], [0, 0, 1, 1], [], []>} : vector<48x32xf32>, vector<32x8xf32>, vector<48x8xf32> -> vector<48x8xf32>
    %c0_61 = arith.constant 0 : index
    %c1_62 = arith.constant 1 : index
    %c0_63 = arith.constant 0 : index
    %c0_64 = arith.constant 0 : index
    %75 = vector.load %arg7[%c0_61, %c1_62, %c0_63, %c0_64] : memref<2x4x1x8xf32, #tpu.memory_space<vmem>>, vector<1x1x1x8xf32>
    %76 = vector.shape_cast %75 : vector<1x1x1x8xf32> to vector<1x8xf32>
    %77 = vector.broadcast %76 : vector<1x8xf32> to vector<48x8xf32>
    %78 = arith.addf %74, %77 : vector<48x8xf32>
    %c0_65 = arith.constant 0 : index
    %c1_66 = arith.constant 1 : index
    %c0_67 = arith.constant 0 : index
    %c0_68 = arith.constant 0 : index
    %79 = vector.load %arg8[%c0_65, %c1_66, %c0_67, %c0_68] : memref<2x4x32x8xf32, #tpu.memory_space<vmem>>, vector<1x1x32x8xf32>
    %80 = vector.shape_cast %79 : vector<1x1x32x8xf32> to vector<32x8xf32>
    %cst_69 = arith.constant dense<0.000000e+00> : vector<48x8xf32>
    %81 = tpu.matmul %24, %80, %cst_69 {dimension_numbers = #tpu.dot_dimension_numbers<[1], [0], [0], [1], [0, 0, 1, 1], [], []>} : vector<48x32xf32>, vector<32x8xf32>, vector<48x8xf32> -> vector<48x8xf32>
    %c0_70 = arith.constant 0 : index
    %c1_71 = arith.constant 1 : index
    %c0_72 = arith.constant 0 : index
    %c0_73 = arith.constant 0 : index
    %82 = vector.load %arg9[%c0_70, %c1_71, %c0_72, %c0_73] : memref<2x4x1x8xf32, #tpu.memory_space<vmem>>, vector<1x1x1x8xf32>
    %83 = vector.shape_cast %82 : vector<1x1x1x8xf32> to vector<1x8xf32>
    %84 = vector.broadcast %83 : vector<1x8xf32> to vector<48x8xf32>
    %85 = arith.addf %81, %84 : vector<48x8xf32>
    "tpu.trace_start"() <{level = 10 : i32, message = "qd,kd->qk"}> : () -> ()
    %cst_74 = arith.constant dense<0.000000e+00> : vector<48x48xf32>
    %86 = tpu.matmul %71, %78, %cst_74 {dimension_numbers = #tpu.dot_dimension_numbers<[1], [1], [0], [0], [0, 0, 1, 0], [], []>} : vector<48x8xf32>, vector<48x8xf32>, vector<48x48xf32> -> vector<48x48xf32>
    "tpu.trace_stop"() : () -> ()
    %cst_75 = arith.constant 0.353553385 : f32
    %87 = vector.broadcast %cst_75 : f32 to vector<48x48xf32>
    %88 = arith.mulf %86, %87 : vector<48x48xf32>
    %89 = arith.addf %88, %25 : vector<48x48xf32>
    %cst_76 = arith.constant dense<0xFF800000> : vector<48xf32>
    %90 = vector.multi_reduction <maximumf>, %89, %cst_76 [1] : vector<48x48xf32> to vector<48xf32>
    %91 = vector.shape_cast %90 : vector<48xf32> to vector<48x1xf32>
    %92 = vector.broadcast %91 : vector<48x1xf32> to vector<48x48xf32>
    %93 = arith.subf %89, %92 : vector<48x48xf32>
    %94 = math.exp %93 : vector<48x48xf32>
    %cst_77 = arith.constant dense<0.000000e+00> : vector<48xf32>
    %95 = vector.multi_reduction <add>, %94, %cst_77 [1] : vector<48x48xf32> to vector<48xf32>
    %96 = vector.shape_cast %95 : vector<48xf32> to vector<48x1xf32>
    %97 = tpu.reciprocal %96 {approx = true} : vector<48x1xf32> -> vector<48x1xf32>
    %98 = vector.broadcast %97 : vector<48x1xf32> to vector<48x48xf32>
    %99 = arith.mulf %94, %98 : vector<48x48xf32>
    %cst_78 = arith.constant dense<0.000000e+00> : vector<48x8xf32>
    %100 = tpu.matmul %99, %85, %cst_78 {dimension_numbers = #tpu.dot_dimension_numbers<[1], [0], [0], [1], [0, 0, 1, 1], [], []>} : vector<48x48xf32>, vector<48x8xf32>, vector<48x8xf32> -> vector<48x8xf32>
    %c0_79 = arith.constant 0 : index
    %c1_80 = arith.constant 1 : index
    %c0_81 = arith.constant 0 : index
    %c0_82 = arith.constant 0 : index
    %101 = vector.load %arg10[%c0_79, %c1_80, %c0_81, %c0_82] : memref<2x4x8x32xf32, #tpu.memory_space<vmem>>, vector<1x1x8x32xf32>
    %102 = vector.shape_cast %101 : vector<1x1x8x32xf32> to vector<8x32xf32>
    %cst_83 = arith.constant dense<0.000000e+00> : vector<48x32xf32>
    %103 = tpu.matmul %100, %102, %cst_83 {dimension_numbers = #tpu.dot_dimension_numbers<[1], [0], [0], [1], [0, 0, 1, 1], [], []>} : vector<48x8xf32>, vector<8x32xf32>, vector<48x32xf32> -> vector<48x32xf32>
    %104 = arith.addf %64, %103 : vector<48x32xf32>
    %c0_84 = arith.constant 0 : index
    %c2 = arith.constant 2 : index
    %c0_85 = arith.constant 0 : index
    %c0_86 = arith.constant 0 : index
    %105 = vector.load %arg4[%c0_84, %c2, %c0_85, %c0_86] : memref<2x4x32x8xf32, #tpu.memory_space<vmem>>, vector<1x1x32x8xf32>
    %106 = vector.shape_cast %105 : vector<1x1x32x8xf32> to vector<32x8xf32>
    %cst_87 = arith.constant dense<0.000000e+00> : vector<48x8xf32>
    %107 = tpu.matmul %24, %106, %cst_87 {dimension_numbers = #tpu.dot_dimension_numbers<[1], [0], [0], [1], [0, 0, 1, 1], [], []>} : vector<48x32xf32>, vector<32x8xf32>, vector<48x8xf32> -> vector<48x8xf32>
    %c0_88 = arith.constant 0 : index
    %c2_89 = arith.constant 2 : index
    %c0_90 = arith.constant 0 : index
    %c0_91 = arith.constant 0 : index
    %108 = vector.load %arg5[%c0_88, %c2_89, %c0_90, %c0_91] : memref<2x4x1x8xf32, #tpu.memory_space<vmem>>, vector<1x1x1x8xf32>
    %109 = vector.shape_cast %108 : vector<1x1x1x8xf32> to vector<1x8xf32>
    %110 = vector.broadcast %109 : vector<1x8xf32> to vector<48x8xf32>
    %111 = arith.addf %107, %110 : vector<48x8xf32>
    %c0_92 = arith.constant 0 : index
    %c2_93 = arith.constant 2 : index
    %c0_94 = arith.constant 0 : index
    %c0_95 = arith.constant 0 : index
    %112 = vector.load %arg6[%c0_92, %c2_93, %c0_94, %c0_95] : memref<2x4x32x8xf32, #tpu.memory_space<vmem>>, vector<1x1x32x8xf32>
    %113 = vector.shape_cast %112 : vector<1x1x32x8xf32> to vector<32x8xf32>
    %cst_96 = arith.constant dense<0.000000e+00> : vector<48x8xf32>
    %114 = tpu.matmul %24, %113, %cst_96 {dimension_numbers = #tpu.dot_dimension_numbers<[1], [0], [0], [1], [0, 0, 1, 1], [], []>} : vector<48x32xf32>, vector<32x8xf32>, vector<48x8xf32> -> vector<48x8xf32>
    %c0_97 = arith.constant 0 : index
    %c2_98 = arith.constant 2 : index
    %c0_99 = arith.constant 0 : index
    %c0_100 = arith.constant 0 : index
    %115 = vector.load %arg7[%c0_97, %c2_98, %c0_99, %c0_100] : memref<2x4x1x8xf32, #tpu.memory_space<vmem>>, vector<1x1x1x8xf32>
    %116 = vector.shape_cast %115 : vector<1x1x1x8xf32> to vector<1x8xf32>
    %117 = vector.broadcast %116 : vector<1x8xf32> to vector<48x8xf32>
    %118 = arith.addf %114, %117 : vector<48x8xf32>
    %c0_101 = arith.constant 0 : index
    %c2_102 = arith.constant 2 : index
    %c0_103 = arith.constant 0 : index
    %c0_104 = arith.constant 0 : index
    %119 = vector.load %arg8[%c0_101, %c2_102, %c0_103, %c0_104] : memref<2x4x32x8xf32, #tpu.memory_space<vmem>>, vector<1x1x32x8xf32>
    %120 = vector.shape_cast %119 : vector<1x1x32x8xf32> to vector<32x8xf32>
    %cst_105 = arith.constant dense<0.000000e+00> : vector<48x8xf32>
    %121 = tpu.matmul %24, %120, %cst_105 {dimension_numbers = #tpu.dot_dimension_numbers<[1], [0], [0], [1], [0, 0, 1, 1], [], []>} : vector<48x32xf32>, vector<32x8xf32>, vector<48x8xf32> -> vector<48x8xf32>
    %c0_106 = arith.constant 0 : index
    %c2_107 = arith.constant 2 : index
    %c0_108 = arith.constant 0 : index
    %c0_109 = arith.constant 0 : index
    %122 = vector.load %arg9[%c0_106, %c2_107, %c0_108, %c0_109] : memref<2x4x1x8xf32, #tpu.memory_space<vmem>>, vector<1x1x1x8xf32>
    %123 = vector.shape_cast %122 : vector<1x1x1x8xf32> to vector<1x8xf32>
    %124 = vector.broadcast %123 : vector<1x8xf32> to vector<48x8xf32>
    %125 = arith.addf %121, %124 : vector<48x8xf32>
    "tpu.trace_start"() <{level = 10 : i32, message = "qd,kd->qk"}> : () -> ()
    %cst_110 = arith.constant dense<0.000000e+00> : vector<48x48xf32>
    %126 = tpu.matmul %111, %118, %cst_110 {dimension_numbers = #tpu.dot_dimension_numbers<[1], [1], [0], [0], [0, 0, 1, 0], [], []>} : vector<48x8xf32>, vector<48x8xf32>, vector<48x48xf32> -> vector<48x48xf32>
    "tpu.trace_stop"() : () -> ()
    %cst_111 = arith.constant 0.353553385 : f32
    %127 = vector.broadcast %cst_111 : f32 to vector<48x48xf32>
    %128 = arith.mulf %126, %127 : vector<48x48xf32>
    %129 = arith.addf %128, %25 : vector<48x48xf32>
    %cst_112 = arith.constant dense<0xFF800000> : vector<48xf32>
    %130 = vector.multi_reduction <maximumf>, %129, %cst_112 [1] : vector<48x48xf32> to vector<48xf32>
    %131 = vector.shape_cast %130 : vector<48xf32> to vector<48x1xf32>
    %132 = vector.broadcast %131 : vector<48x1xf32> to vector<48x48xf32>
    %133 = arith.subf %129, %132 : vector<48x48xf32>
    %134 = math.exp %133 : vector<48x48xf32>
    %cst_113 = arith.constant dense<0.000000e+00> : vector<48xf32>
    %135 = vector.multi_reduction <add>, %134, %cst_113 [1] : vector<48x48xf32> to vector<48xf32>
    %136 = vector.shape_cast %135 : vector<48xf32> to vector<48x1xf32>
    %137 = tpu.reciprocal %136 {approx = true} : vector<48x1xf32> -> vector<48x1xf32>
    %138 = vector.broadcast %137 : vector<48x1xf32> to vector<48x48xf32>
    %139 = arith.mulf %134, %138 : vector<48x48xf32>
    %cst_114 = arith.constant dense<0.000000e+00> : vector<48x8xf32>
    %140 = tpu.matmul %139, %125, %cst_114 {dimension_numbers = #tpu.dot_dimension_numbers<[1], [0], [0], [1], [0, 0, 1, 1], [], []>} : vector<48x48xf32>, vector<48x8xf32>, vector<48x8xf32> -> vector<48x8xf32>
    %c0_115 = arith.constant 0 : index
    %c2_116 = arith.constant 2 : index
    %c0_117 = arith.constant 0 : index
    %c0_118 = arith.constant 0 : index
    %141 = vector.load %arg10[%c0_115, %c2_116, %c0_117, %c0_118] : memref<2x4x8x32xf32, #tpu.memory_space<vmem>>, vector<1x1x8x32xf32>
    %142 = vector.shape_cast %141 : vector<1x1x8x32xf32> to vector<8x32xf32>
    %cst_119 = arith.constant dense<0.000000e+00> : vector<48x32xf32>
    %143 = tpu.matmul %140, %142, %cst_119 {dimension_numbers = #tpu.dot_dimension_numbers<[1], [0], [0], [1], [0, 0, 1, 1], [], []>} : vector<48x8xf32>, vector<8x32xf32>, vector<48x32xf32> -> vector<48x32xf32>
    %144 = arith.addf %104, %143 : vector<48x32xf32>
    %c0_120 = arith.constant 0 : index
    %c3 = arith.constant 3 : index
    %c0_121 = arith.constant 0 : index
    %c0_122 = arith.constant 0 : index
    %145 = vector.load %arg4[%c0_120, %c3, %c0_121, %c0_122] : memref<2x4x32x8xf32, #tpu.memory_space<vmem>>, vector<1x1x32x8xf32>
    %146 = vector.shape_cast %145 : vector<1x1x32x8xf32> to vector<32x8xf32>
    %cst_123 = arith.constant dense<0.000000e+00> : vector<48x8xf32>
    %147 = tpu.matmul %24, %146, %cst_123 {dimension_numbers = #tpu.dot_dimension_numbers<[1], [0], [0], [1], [0, 0, 1, 1], [], []>} : vector<48x32xf32>, vector<32x8xf32>, vector<48x8xf32> -> vector<48x8xf32>
    %c0_124 = arith.constant 0 : index
    %c3_125 = arith.constant 3 : index
    %c0_126 = arith.constant 0 : index
    %c0_127 = arith.constant 0 : index
    %148 = vector.load %arg5[%c0_124, %c3_125, %c0_126, %c0_127] : memref<2x4x1x8xf32, #tpu.memory_space<vmem>>, vector<1x1x1x8xf32>
    %149 = vector.shape_cast %148 : vector<1x1x1x8xf32> to vector<1x8xf32>
    %150 = vector.broadcast %149 : vector<1x8xf32> to vector<48x8xf32>
    %151 = arith.addf %147, %150 : vector<48x8xf32>
    %c0_128 = arith.constant 0 : index
    %c3_129 = arith.constant 3 : index
    %c0_130 = arith.constant 0 : index
    %c0_131 = arith.constant 0 : index
    %152 = vector.load %arg6[%c0_128, %c3_129, %c0_130, %c0_131] : memref<2x4x32x8xf32, #tpu.memory_space<vmem>>, vector<1x1x32x8xf32>
    %153 = vector.shape_cast %152 : vector<1x1x32x8xf32> to vector<32x8xf32>
    %cst_132 = arith.constant dense<0.000000e+00> : vector<48x8xf32>
    %154 = tpu.matmul %24, %153, %cst_132 {dimension_numbers = #tpu.dot_dimension_numbers<[1], [0], [0], [1], [0, 0, 1, 1], [], []>} : vector<48x32xf32>, vector<32x8xf32>, vector<48x8xf32> -> vector<48x8xf32>
    %c0_133 = arith.constant 0 : index
    %c3_134 = arith.constant 3 : index
    %c0_135 = arith.constant 0 : index
    %c0_136 = arith.constant 0 : index
    %155 = vector.load %arg7[%c0_133, %c3_134, %c0_135, %c0_136] : memref<2x4x1x8xf32, #tpu.memory_space<vmem>>, vector<1x1x1x8xf32>
    %156 = vector.shape_cast %155 : vector<1x1x1x8xf32> to vector<1x8xf32>
    %157 = vector.broadcast %156 : vector<1x8xf32> to vector<48x8xf32>
    %158 = arith.addf %154, %157 : vector<48x8xf32>
    %c0_137 = arith.constant 0 : index
    %c3_138 = arith.constant 3 : index
    %c0_139 = arith.constant 0 : index
    %c0_140 = arith.constant 0 : index
    %159 = vector.load %arg8[%c0_137, %c3_138, %c0_139, %c0_140] : memref<2x4x32x8xf32, #tpu.memory_space<vmem>>, vector<1x1x32x8xf32>
    %160 = vector.shape_cast %159 : vector<1x1x32x8xf32> to vector<32x8xf32>
    %cst_141 = arith.constant dense<0.000000e+00> : vector<48x8xf32>
    %161 = tpu.matmul %24, %160, %cst_141 {dimension_numbers = #tpu.dot_dimension_numbers<[1], [0], [0], [1], [0, 0, 1, 1], [], []>} : vector<48x32xf32>, vector<32x8xf32>, vector<48x8xf32> -> vector<48x8xf32>
    %c0_142 = arith.constant 0 : index
    %c3_143 = arith.constant 3 : index
    %c0_144 = arith.constant 0 : index
    %c0_145 = arith.constant 0 : index
    %162 = vector.load %arg9[%c0_142, %c3_143, %c0_144, %c0_145] : memref<2x4x1x8xf32, #tpu.memory_space<vmem>>, vector<1x1x1x8xf32>
    %163 = vector.shape_cast %162 : vector<1x1x1x8xf32> to vector<1x8xf32>
    %164 = vector.broadcast %163 : vector<1x8xf32> to vector<48x8xf32>
    %165 = arith.addf %161, %164 : vector<48x8xf32>
    "tpu.trace_start"() <{level = 10 : i32, message = "qd,kd->qk"}> : () -> ()
    %cst_146 = arith.constant dense<0.000000e+00> : vector<48x48xf32>
    %166 = tpu.matmul %151, %158, %cst_146 {dimension_numbers = #tpu.dot_dimension_numbers<[1], [1], [0], [0], [0, 0, 1, 0], [], []>} : vector<48x8xf32>, vector<48x8xf32>, vector<48x48xf32> -> vector<48x48xf32>
    "tpu.trace_stop"() : () -> ()
    %cst_147 = arith.constant 0.353553385 : f32
    %167 = vector.broadcast %cst_147 : f32 to vector<48x48xf32>
    %168 = arith.mulf %166, %167 : vector<48x48xf32>
    %169 = arith.addf %168, %25 : vector<48x48xf32>
    %cst_148 = arith.constant dense<0xFF800000> : vector<48xf32>
    %170 = vector.multi_reduction <maximumf>, %169, %cst_148 [1] : vector<48x48xf32> to vector<48xf32>
    %171 = vector.shape_cast %170 : vector<48xf32> to vector<48x1xf32>
    %172 = vector.broadcast %171 : vector<48x1xf32> to vector<48x48xf32>
    %173 = arith.subf %169, %172 : vector<48x48xf32>
    %174 = math.exp %173 : vector<48x48xf32>
    %cst_149 = arith.constant dense<0.000000e+00> : vector<48xf32>
    %175 = vector.multi_reduction <add>, %174, %cst_149 [1] : vector<48x48xf32> to vector<48xf32>
    %176 = vector.shape_cast %175 : vector<48xf32> to vector<48x1xf32>
    %177 = tpu.reciprocal %176 {approx = true} : vector<48x1xf32> -> vector<48x1xf32>
    %178 = vector.broadcast %177 : vector<48x1xf32> to vector<48x48xf32>
    %179 = arith.mulf %174, %178 : vector<48x48xf32>
    %cst_150 = arith.constant dense<0.000000e+00> : vector<48x8xf32>
    %180 = tpu.matmul %179, %165, %cst_150 {dimension_numbers = #tpu.dot_dimension_numbers<[1], [0], [0], [1], [0, 0, 1, 1], [], []>} : vector<48x48xf32>, vector<48x8xf32>, vector<48x8xf32> -> vector<48x8xf32>
    %c0_151 = arith.constant 0 : index
    %c3_152 = arith.constant 3 : index
    %c0_153 = arith.constant 0 : index
    %c0_154 = arith.constant 0 : index
    %181 = vector.load %arg10[%c0_151, %c3_152, %c0_153, %c0_154] : memref<2x4x8x32xf32, #tpu.memory_space<vmem>>, vector<1x1x8x32xf32>
    %182 = vector.shape_cast %181 : vector<1x1x8x32xf32> to vector<8x32xf32>
    %cst_155 = arith.constant dense<0.000000e+00> : vector<48x32xf32>
    %183 = tpu.matmul %180, %182, %cst_155 {dimension_numbers = #tpu.dot_dimension_numbers<[1], [0], [0], [1], [0, 0, 1, 1], [], []>} : vector<48x8xf32>, vector<8x32xf32>, vector<48x32xf32> -> vector<48x32xf32>
    %184 = arith.addf %144, %183 : vector<48x32xf32>
    %c0_156 = arith.constant 0 : index
    %c0_157 = arith.constant 0 : index
    %c0_158 = arith.constant 0 : index
    %185 = vector.load %arg11[%c0_156, %c0_157, %c0_158] : memref<2x1x32xf32, #tpu.memory_space<vmem>>, vector<1x1x32xf32>
    %186 = vector.shape_cast %185 : vector<1x1x32xf32> to vector<1x32xf32>
    %187 = vector.broadcast %186 : vector<1x32xf32> to vector<48x32xf32>
    %188 = arith.addf %184, %187 : vector<48x32xf32>
    %189 = arith.addf %24, %188 : vector<48x32xf32>
    %c0_159 = arith.constant 0 : index
    %c0_160 = arith.constant 0 : index
    %c0_161 = arith.constant 0 : index
    %190 = vector.load %arg12[%c0_159, %c0_160, %c0_161] : memref<2x1x32xf32, #tpu.memory_space<vmem>>, vector<1x1x32xf32>
    %191 = vector.shape_cast %190 : vector<1x1x32xf32> to vector<1x32xf32>
    %c0_162 = arith.constant 0 : index
    %c0_163 = arith.constant 0 : index
    %c0_164 = arith.constant 0 : index
    %192 = vector.load %arg13[%c0_162, %c0_163, %c0_164] : memref<2x1x32xf32, #tpu.memory_space<vmem>>, vector<1x1x32xf32>
    %193 = vector.shape_cast %192 : vector<1x1x32xf32> to vector<1x32xf32>
    %cst_165 = arith.constant dense<0.000000e+00> : vector<48xf32>
    %194 = vector.multi_reduction <add>, %189, %cst_165 [1] : vector<48x32xf32> to vector<48xf32>
    %195 = vector.shape_cast %194 : vector<48xf32> to vector<48x1xf32>
    %cst_166 = arith.constant 3.200000e+01 : f32
    %196 = vector.broadcast %cst_166 : f32 to vector<48x1xf32>
    %197 = arith.divf %195, %196 : vector<48x1xf32>
    %198 = vector.broadcast %197 : vector<48x1xf32> to vector<48x32xf32>
    %199 = arith.subf %189, %198 : vector<48x32xf32>
    %200 = arith.mulf %199, %199 : vector<48x32xf32>
    %cst_167 = arith.constant dense<0.000000e+00> : vector<48xf32>
    %201 = vector.multi_reduction <add>, %200, %cst_167 [1] : vector<48x32xf32> to vector<48xf32>
    %202 = vector.shape_cast %201 : vector<48xf32> to vector<48x1xf32>
    %cst_168 = arith.constant 3.200000e+01 : f32
    %203 = vector.broadcast %cst_168 : f32 to vector<48x1xf32>
    %204 = arith.divf %202, %203 : vector<48x1xf32>
    %205 = vector.broadcast %197 : vector<48x1xf32> to vector<48x32xf32>
    %206 = arith.subf %189, %205 : vector<48x32xf32>
    %cst_169 = arith.constant 9.99999996E-13 : f32
    %207 = vector.broadcast %cst_169 : f32 to vector<48x1xf32>
    %208 = arith.addf %204, %207 : vector<48x1xf32>
    %209 = math.rsqrt %208 : vector<48x1xf32>
    %210 = vector.broadcast %209 : vector<48x1xf32> to vector<48x32xf32>
    %211 = arith.mulf %206, %210 : vector<48x32xf32>
    %212 = vector.broadcast %191 : vector<1x32xf32> to vector<48x32xf32>
    %213 = arith.mulf %211, %212 : vector<48x32xf32>
    %214 = vector.broadcast %193 : vector<1x32xf32> to vector<48x32xf32>
    %215 = arith.addf %213, %214 : vector<48x32xf32>
    %c0_170 = arith.constant 0 : index
    %c0_171 = arith.constant 0 : index
    %c0_172 = arith.constant 0 : index
    %216 = vector.load %arg14[%c0_170, %c0_171, %c0_172] : memref<2x32x64xf32, #tpu.memory_space<vmem>>, vector<1x32x64xf32>
    %217 = vector.shape_cast %216 : vector<1x32x64xf32> to vector<32x64xf32>
    %cst_173 = arith.constant dense<0.000000e+00> : vector<48x64xf32>
    %218 = tpu.matmul %215, %217, %cst_173 {dimension_numbers = #tpu.dot_dimension_numbers<[1], [0], [0], [1], [0, 0, 1, 1], [], []>} : vector<48x32xf32>, vector<32x64xf32>, vector<48x64xf32> -> vector<48x64xf32>
    %c0_174 = arith.constant 0 : index
    %c0_175 = arith.constant 0 : index
    %c0_176 = arith.constant 0 : index
    %219 = vector.load %arg15[%c0_174, %c0_175, %c0_176] : memref<2x1x64xf32, #tpu.memory_space<vmem>>, vector<1x1x64xf32>
    %220 = vector.shape_cast %219 : vector<1x1x64xf32> to vector<1x64xf32>
    %221 = vector.broadcast %220 : vector<1x64xf32> to vector<48x64xf32>
    %222 = arith.addf %218, %221 : vector<48x64xf32>
    %cst_177 = arith.constant 5.000000e-01 : f32
    %223 = vector.broadcast %cst_177 : f32 to vector<48x64xf32>
    %224 = arith.mulf %223, %222 : vector<48x64xf32>
    %cst_178 = arith.constant 4.471500e-02 : f32
    %225 = vector.broadcast %cst_178 : f32 to vector<48x64xf32>
    %226 = arith.mulf %225, %222 : vector<48x64xf32>
    %227 = arith.mulf %226, %222 : vector<48x64xf32>
    %228 = arith.mulf %227, %222 : vector<48x64xf32>
    %229 = arith.addf %222, %228 : vector<48x64xf32>
    %cst_179 = arith.constant 0.797884583 : f32
    %230 = vector.broadcast %cst_179 : f32 to vector<48x64xf32>
    %231 = arith.mulf %230, %229 : vector<48x64xf32>
    %232 = math.tanh %231 : vector<48x64xf32>
    %cst_180 = arith.constant 1.000000e+00 : f32
    %233 = vector.broadcast %cst_180 : f32 to vector<48x64xf32>
    %234 = arith.addf %233, %232 : vector<48x64xf32>
    %235 = arith.mulf %224, %234 : vector<48x64xf32>
    %c0_181 = arith.constant 0 : index
    %c0_182 = arith.constant 0 : index
    %c0_183 = arith.constant 0 : index
    %236 = vector.load %arg16[%c0_181, %c0_182, %c0_183] : memref<2x64x32xf32, #tpu.memory_space<vmem>>, vector<1x64x32xf32>
    %237 = vector.shape_cast %236 : vector<1x64x32xf32> to vector<64x32xf32>
    %cst_184 = arith.constant dense<0.000000e+00> : vector<48x32xf32>
    %238 = tpu.matmul %235, %237, %cst_184 {dimension_numbers = #tpu.dot_dimension_numbers<[1], [0], [0], [1], [0, 0, 1, 1], [], []>} : vector<48x64xf32>, vector<64x32xf32>, vector<48x32xf32> -> vector<48x32xf32>
    %c0_185 = arith.constant 0 : index
    %c0_186 = arith.constant 0 : index
    %c0_187 = arith.constant 0 : index
    %239 = vector.load %arg17[%c0_185, %c0_186, %c0_187] : memref<2x1x32xf32, #tpu.memory_space<vmem>>, vector<1x1x32xf32>
    %240 = vector.shape_cast %239 : vector<1x1x32xf32> to vector<1x32xf32>
    %241 = vector.broadcast %240 : vector<1x32xf32> to vector<48x32xf32>
    %242 = arith.addf %238, %241 : vector<48x32xf32>
    %243 = arith.addf %215, %242 : vector<48x32xf32>
    %c0_188 = arith.constant 0 : index
    %c0_189 = arith.constant 0 : index
    %c0_190 = arith.constant 0 : index
    %244 = vector.load %arg18[%c0_188, %c0_189, %c0_190] : memref<2x1x32xf32, #tpu.memory_space<vmem>>, vector<1x1x32xf32>
    %245 = vector.shape_cast %244 : vector<1x1x32xf32> to vector<1x32xf32>
    %c0_191 = arith.constant 0 : index
    %c0_192 = arith.constant 0 : index
    %c0_193 = arith.constant 0 : index
    %246 = vector.load %arg19[%c0_191, %c0_192, %c0_193] : memref<2x1x32xf32, #tpu.memory_space<vmem>>, vector<1x1x32xf32>
    %247 = vector.shape_cast %246 : vector<1x1x32xf32> to vector<1x32xf32>
    %cst_194 = arith.constant dense<0.000000e+00> : vector<48xf32>
    %248 = vector.multi_reduction <add>, %243, %cst_194 [1] : vector<48x32xf32> to vector<48xf32>
    %249 = vector.shape_cast %248 : vector<48xf32> to vector<48x1xf32>
    %cst_195 = arith.constant 3.200000e+01 : f32
    %250 = vector.broadcast %cst_195 : f32 to vector<48x1xf32>
    %251 = arith.divf %249, %250 : vector<48x1xf32>
    %252 = vector.broadcast %251 : vector<48x1xf32> to vector<48x32xf32>
    %253 = arith.subf %243, %252 : vector<48x32xf32>
    %254 = arith.mulf %253, %253 : vector<48x32xf32>
    %cst_196 = arith.constant dense<0.000000e+00> : vector<48xf32>
    %255 = vector.multi_reduction <add>, %254, %cst_196 [1] : vector<48x32xf32> to vector<48xf32>
    %256 = vector.shape_cast %255 : vector<48xf32> to vector<48x1xf32>
    %cst_197 = arith.constant 3.200000e+01 : f32
    %257 = vector.broadcast %cst_197 : f32 to vector<48x1xf32>
    %258 = arith.divf %256, %257 : vector<48x1xf32>
    %259 = vector.broadcast %251 : vector<48x1xf32> to vector<48x32xf32>
    %260 = arith.subf %243, %259 : vector<48x32xf32>
    %cst_198 = arith.constant 9.99999996E-13 : f32
    %261 = vector.broadcast %cst_198 : f32 to vector<48x1xf32>
    %262 = arith.addf %258, %261 : vector<48x1xf32>
    %263 = math.rsqrt %262 : vector<48x1xf32>
    %264 = vector.broadcast %263 : vector<48x1xf32> to vector<48x32xf32>
    %265 = arith.mulf %260, %264 : vector<48x32xf32>
    %266 = vector.broadcast %245 : vector<1x32xf32> to vector<48x32xf32>
    %267 = arith.mulf %265, %266 : vector<48x32xf32>
    %268 = vector.broadcast %247 : vector<1x32xf32> to vector<48x32xf32>
    %269 = arith.addf %267, %268 : vector<48x32xf32>
    %c1_199 = arith.constant 1 : index
    %c0_200 = arith.constant 0 : index
    %c0_201 = arith.constant 0 : index
    %c0_202 = arith.constant 0 : index
    %270 = vector.load %arg4[%c1_199, %c0_200, %c0_201, %c0_202] : memref<2x4x32x8xf32, #tpu.memory_space<vmem>>, vector<1x1x32x8xf32>
    %271 = vector.shape_cast %270 : vector<1x1x32x8xf32> to vector<32x8xf32>
    %cst_203 = arith.constant dense<0.000000e+00> : vector<48x8xf32>
    %272 = tpu.matmul %269, %271, %cst_203 {dimension_numbers = #tpu.dot_dimension_numbers<[1], [0], [0], [1], [0, 0, 1, 1], [], []>} : vector<48x32xf32>, vector<32x8xf32>, vector<48x8xf32> -> vector<48x8xf32>
    %c1_204 = arith.constant 1 : index
    %c0_205 = arith.constant 0 : index
    %c0_206 = arith.constant 0 : index
    %c0_207 = arith.constant 0 : index
    %273 = vector.load %arg5[%c1_204, %c0_205, %c0_206, %c0_207] : memref<2x4x1x8xf32, #tpu.memory_space<vmem>>, vector<1x1x1x8xf32>
    %274 = vector.shape_cast %273 : vector<1x1x1x8xf32> to vector<1x8xf32>
    %275 = vector.broadcast %274 : vector<1x8xf32> to vector<48x8xf32>
    %276 = arith.addf %272, %275 : vector<48x8xf32>
    %c1_208 = arith.constant 1 : index
    %c0_209 = arith.constant 0 : index
    %c0_210 = arith.constant 0 : index
    %c0_211 = arith.constant 0 : index
    %277 = vector.load %arg6[%c1_208, %c0_209, %c0_210, %c0_211] : memref<2x4x32x8xf32, #tpu.memory_space<vmem>>, vector<1x1x32x8xf32>
    %278 = vector.shape_cast %277 : vector<1x1x32x8xf32> to vector<32x8xf32>
    %cst_212 = arith.constant dense<0.000000e+00> : vector<48x8xf32>
    %279 = tpu.matmul %269, %278, %cst_212 {dimension_numbers = #tpu.dot_dimension_numbers<[1], [0], [0], [1], [0, 0, 1, 1], [], []>} : vector<48x32xf32>, vector<32x8xf32>, vector<48x8xf32> -> vector<48x8xf32>
    %c1_213 = arith.constant 1 : index
    %c0_214 = arith.constant 0 : index
    %c0_215 = arith.constant 0 : index
    %c0_216 = arith.constant 0 : index
    %280 = vector.load %arg7[%c1_213, %c0_214, %c0_215, %c0_216] : memref<2x4x1x8xf32, #tpu.memory_space<vmem>>, vector<1x1x1x8xf32>
    %281 = vector.shape_cast %280 : vector<1x1x1x8xf32> to vector<1x8xf32>
    %282 = vector.broadcast %281 : vector<1x8xf32> to vector<48x8xf32>
    %283 = arith.addf %279, %282 : vector<48x8xf32>
    %c1_217 = arith.constant 1 : index
    %c0_218 = arith.constant 0 : index
    %c0_219 = arith.constant 0 : index
    %c0_220 = arith.constant 0 : index
    %284 = vector.load %arg8[%c1_217, %c0_218, %c0_219, %c0_220] : memref<2x4x32x8xf32, #tpu.memory_space<vmem>>, vector<1x1x32x8xf32>
    %285 = vector.shape_cast %284 : vector<1x1x32x8xf32> to vector<32x8xf32>
    %cst_221 = arith.constant dense<0.000000e+00> : vector<48x8xf32>
    %286 = tpu.matmul %269, %285, %cst_221 {dimension_numbers = #tpu.dot_dimension_numbers<[1], [0], [0], [1], [0, 0, 1, 1], [], []>} : vector<48x32xf32>, vector<32x8xf32>, vector<48x8xf32> -> vector<48x8xf32>
    %c1_222 = arith.constant 1 : index
    %c0_223 = arith.constant 0 : index
    %c0_224 = arith.constant 0 : index
    %c0_225 = arith.constant 0 : index
    %287 = vector.load %arg9[%c1_222, %c0_223, %c0_224, %c0_225] : memref<2x4x1x8xf32, #tpu.memory_space<vmem>>, vector<1x1x1x8xf32>
    %288 = vector.shape_cast %287 : vector<1x1x1x8xf32> to vector<1x8xf32>
    %289 = vector.broadcast %288 : vector<1x8xf32> to vector<48x8xf32>
    %290 = arith.addf %286, %289 : vector<48x8xf32>
    "tpu.trace_start"() <{level = 10 : i32, message = "qd,kd->qk"}> : () -> ()
    %cst_226 = arith.constant dense<0.000000e+00> : vector<48x48xf32>
    %291 = tpu.matmul %276, %283, %cst_226 {dimension_numbers = #tpu.dot_dimension_numbers<[1], [1], [0], [0], [0, 0, 1, 0], [], []>} : vector<48x8xf32>, vector<48x8xf32>, vector<48x48xf32> -> vector<48x48xf32>
    "tpu.trace_stop"() : () -> ()
    %cst_227 = arith.constant 0.353553385 : f32
    %292 = vector.broadcast %cst_227 : f32 to vector<48x48xf32>
    %293 = arith.mulf %291, %292 : vector<48x48xf32>
    %294 = arith.addf %293, %25 : vector<48x48xf32>
    %cst_228 = arith.constant dense<0xFF800000> : vector<48xf32>
    %295 = vector.multi_reduction <maximumf>, %294, %cst_228 [1] : vector<48x48xf32> to vector<48xf32>
    %296 = vector.shape_cast %295 : vector<48xf32> to vector<48x1xf32>
    %297 = vector.broadcast %296 : vector<48x1xf32> to vector<48x48xf32>
    %298 = arith.subf %294, %297 : vector<48x48xf32>
    %299 = math.exp %298 : vector<48x48xf32>
    %cst_229 = arith.constant dense<0.000000e+00> : vector<48xf32>
    %300 = vector.multi_reduction <add>, %299, %cst_229 [1] : vector<48x48xf32> to vector<48xf32>
    %301 = vector.shape_cast %300 : vector<48xf32> to vector<48x1xf32>
    %302 = tpu.reciprocal %301 {approx = true} : vector<48x1xf32> -> vector<48x1xf32>
    %303 = vector.broadcast %302 : vector<48x1xf32> to vector<48x48xf32>
    %304 = arith.mulf %299, %303 : vector<48x48xf32>
    %cst_230 = arith.constant dense<0.000000e+00> : vector<48x8xf32>
    %305 = tpu.matmul %304, %290, %cst_230 {dimension_numbers = #tpu.dot_dimension_numbers<[1], [0], [0], [1], [0, 0, 1, 1], [], []>} : vector<48x48xf32>, vector<48x8xf32>, vector<48x8xf32> -> vector<48x8xf32>
    %c1_231 = arith.constant 1 : index
    %c0_232 = arith.constant 0 : index
    %c0_233 = arith.constant 0 : index
    %c0_234 = arith.constant 0 : index
    %306 = vector.load %arg10[%c1_231, %c0_232, %c0_233, %c0_234] : memref<2x4x8x32xf32, #tpu.memory_space<vmem>>, vector<1x1x8x32xf32>
    %307 = vector.shape_cast %306 : vector<1x1x8x32xf32> to vector<8x32xf32>
    %cst_235 = arith.constant dense<0.000000e+00> : vector<48x32xf32>
    %308 = tpu.matmul %305, %307, %cst_235 {dimension_numbers = #tpu.dot_dimension_numbers<[1], [0], [0], [1], [0, 0, 1, 1], [], []>} : vector<48x8xf32>, vector<8x32xf32>, vector<48x32xf32> -> vector<48x32xf32>
    %c1_236 = arith.constant 1 : index
    %c1_237 = arith.constant 1 : index
    %c0_238 = arith.constant 0 : index
    %c0_239 = arith.constant 0 : index
    %309 = vector.load %arg4[%c1_236, %c1_237, %c0_238, %c0_239] : memref<2x4x32x8xf32, #tpu.memory_space<vmem>>, vector<1x1x32x8xf32>
    %310 = vector.shape_cast %309 : vector<1x1x32x8xf32> to vector<32x8xf32>
    %cst_240 = arith.constant dense<0.000000e+00> : vector<48x8xf32>
    %311 = tpu.matmul %269, %310, %cst_240 {dimension_numbers = #tpu.dot_dimension_numbers<[1], [0], [0], [1], [0, 0, 1, 1], [], []>} : vector<48x32xf32>, vector<32x8xf32>, vector<48x8xf32> -> vector<48x8xf32>
    %c1_241 = arith.constant 1 : index
    %c1_242 = arith.constant 1 : index
    %c0_243 = arith.constant 0 : index
    %c0_244 = arith.constant 0 : index
    %312 = vector.load %arg5[%c1_241, %c1_242, %c0_243, %c0_244] : memref<2x4x1x8xf32, #tpu.memory_space<vmem>>, vector<1x1x1x8xf32>
    %313 = vector.shape_cast %312 : vector<1x1x1x8xf32> to vector<1x8xf32>
    %314 = vector.broadcast %313 : vector<1x8xf32> to vector<48x8xf32>
    %315 = arith.addf %311, %314 : vector<48x8xf32>
    %c1_245 = arith.constant 1 : index
    %c1_246 = arith.constant 1 : index
    %c0_247 = arith.constant 0 : index
    %c0_248 = arith.constant 0 : index
    %316 = vector.load %arg6[%c1_245, %c1_246, %c0_247, %c0_248] : memref<2x4x32x8xf32, #tpu.memory_space<vmem>>, vector<1x1x32x8xf32>
    %317 = vector.shape_cast %316 : vector<1x1x32x8xf32> to vector<32x8xf32>
    %cst_249 = arith.constant dense<0.000000e+00> : vector<48x8xf32>
    %318 = tpu.matmul %269, %317, %cst_249 {dimension_numbers = #tpu.dot_dimension_numbers<[1], [0], [0], [1], [0, 0, 1, 1], [], []>} : vector<48x32xf32>, vector<32x8xf32>, vector<48x8xf32> -> vector<48x8xf32>
    %c1_250 = arith.constant 1 : index
    %c1_251 = arith.constant 1 : index
    %c0_252 = arith.constant 0 : index
    %c0_253 = arith.constant 0 : index
    %319 = vector.load %arg7[%c1_250, %c1_251, %c0_252, %c0_253] : memref<2x4x1x8xf32, #tpu.memory_space<vmem>>, vector<1x1x1x8xf32>
    %320 = vector.shape_cast %319 : vector<1x1x1x8xf32> to vector<1x8xf32>
    %321 = vector.broadcast %320 : vector<1x8xf32> to vector<48x8xf32>
    %322 = arith.addf %318, %321 : vector<48x8xf32>
    %c1_254 = arith.constant 1 : index
    %c1_255 = arith.constant 1 : index
    %c0_256 = arith.constant 0 : index
    %c0_257 = arith.constant 0 : index
    %323 = vector.load %arg8[%c1_254, %c1_255, %c0_256, %c0_257] : memref<2x4x32x8xf32, #tpu.memory_space<vmem>>, vector<1x1x32x8xf32>
    %324 = vector.shape_cast %323 : vector<1x1x32x8xf32> to vector<32x8xf32>
    %cst_258 = arith.constant dense<0.000000e+00> : vector<48x8xf32>
    %325 = tpu.matmul %269, %324, %cst_258 {dimension_numbers = #tpu.dot_dimension_numbers<[1], [0], [0], [1], [0, 0, 1, 1], [], []>} : vector<48x32xf32>, vector<32x8xf32>, vector<48x8xf32> -> vector<48x8xf32>
    %c1_259 = arith.constant 1 : index
    %c1_260 = arith.constant 1 : index
    %c0_261 = arith.constant 0 : index
    %c0_262 = arith.constant 0 : index
    %326 = vector.load %arg9[%c1_259, %c1_260, %c0_261, %c0_262] : memref<2x4x1x8xf32, #tpu.memory_space<vmem>>, vector<1x1x1x8xf32>
    %327 = vector.shape_cast %326 : vector<1x1x1x8xf32> to vector<1x8xf32>
    %328 = vector.broadcast %327 : vector<1x8xf32> to vector<48x8xf32>
    %329 = arith.addf %325, %328 : vector<48x8xf32>
    "tpu.trace_start"() <{level = 10 : i32, message = "qd,kd->qk"}> : () -> ()
    %cst_263 = arith.constant dense<0.000000e+00> : vector<48x48xf32>
    %330 = tpu.matmul %315, %322, %cst_263 {dimension_numbers = #tpu.dot_dimension_numbers<[1], [1], [0], [0], [0, 0, 1, 0], [], []>} : vector<48x8xf32>, vector<48x8xf32>, vector<48x48xf32> -> vector<48x48xf32>
    "tpu.trace_stop"() : () -> ()
    %cst_264 = arith.constant 0.353553385 : f32
    %331 = vector.broadcast %cst_264 : f32 to vector<48x48xf32>
    %332 = arith.mulf %330, %331 : vector<48x48xf32>
    %333 = arith.addf %332, %25 : vector<48x48xf32>
    %cst_265 = arith.constant dense<0xFF800000> : vector<48xf32>
    %334 = vector.multi_reduction <maximumf>, %333, %cst_265 [1] : vector<48x48xf32> to vector<48xf32>
    %335 = vector.shape_cast %334 : vector<48xf32> to vector<48x1xf32>
    %336 = vector.broadcast %335 : vector<48x1xf32> to vector<48x48xf32>
    %337 = arith.subf %333, %336 : vector<48x48xf32>
    %338 = math.exp %337 : vector<48x48xf32>
    %cst_266 = arith.constant dense<0.000000e+00> : vector<48xf32>
    %339 = vector.multi_reduction <add>, %338, %cst_266 [1] : vector<48x48xf32> to vector<48xf32>
    %340 = vector.shape_cast %339 : vector<48xf32> to vector<48x1xf32>
    %341 = tpu.reciprocal %340 {approx = true} : vector<48x1xf32> -> vector<48x1xf32>
    %342 = vector.broadcast %341 : vector<48x1xf32> to vector<48x48xf32>
    %343 = arith.mulf %338, %342 : vector<48x48xf32>
    %cst_267 = arith.constant dense<0.000000e+00> : vector<48x8xf32>
    %344 = tpu.matmul %343, %329, %cst_267 {dimension_numbers = #tpu.dot_dimension_numbers<[1], [0], [0], [1], [0, 0, 1, 1], [], []>} : vector<48x48xf32>, vector<48x8xf32>, vector<48x8xf32> -> vector<48x8xf32>
    %c1_268 = arith.constant 1 : index
    %c1_269 = arith.constant 1 : index
    %c0_270 = arith.constant 0 : index
    %c0_271 = arith.constant 0 : index
    %345 = vector.load %arg10[%c1_268, %c1_269, %c0_270, %c0_271] : memref<2x4x8x32xf32, #tpu.memory_space<vmem>>, vector<1x1x8x32xf32>
    %346 = vector.shape_cast %345 : vector<1x1x8x32xf32> to vector<8x32xf32>
    %cst_272 = arith.constant dense<0.000000e+00> : vector<48x32xf32>
    %347 = tpu.matmul %344, %346, %cst_272 {dimension_numbers = #tpu.dot_dimension_numbers<[1], [0], [0], [1], [0, 0, 1, 1], [], []>} : vector<48x8xf32>, vector<8x32xf32>, vector<48x32xf32> -> vector<48x32xf32>
    %348 = arith.addf %308, %347 : vector<48x32xf32>
    %c1_273 = arith.constant 1 : index
    %c2_274 = arith.constant 2 : index
    %c0_275 = arith.constant 0 : index
    %c0_276 = arith.constant 0 : index
    %349 = vector.load %arg4[%c1_273, %c2_274, %c0_275, %c0_276] : memref<2x4x32x8xf32, #tpu.memory_space<vmem>>, vector<1x1x32x8xf32>
    %350 = vector.shape_cast %349 : vector<1x1x32x8xf32> to vector<32x8xf32>
    %cst_277 = arith.constant dense<0.000000e+00> : vector<48x8xf32>
    %351 = tpu.matmul %269, %350, %cst_277 {dimension_numbers = #tpu.dot_dimension_numbers<[1], [0], [0], [1], [0, 0, 1, 1], [], []>} : vector<48x32xf32>, vector<32x8xf32>, vector<48x8xf32> -> vector<48x8xf32>
    %c1_278 = arith.constant 1 : index
    %c2_279 = arith.constant 2 : index
    %c0_280 = arith.constant 0 : index
    %c0_281 = arith.constant 0 : index
    %352 = vector.load %arg5[%c1_278, %c2_279, %c0_280, %c0_281] : memref<2x4x1x8xf32, #tpu.memory_space<vmem>>, vector<1x1x1x8xf32>
    %353 = vector.shape_cast %352 : vector<1x1x1x8xf32> to vector<1x8xf32>
    %354 = vector.broadcast %353 : vector<1x8xf32> to vector<48x8xf32>
    %355 = arith.addf %351, %354 : vector<48x8xf32>
    %c1_282 = arith.constant 1 : index
    %c2_283 = arith.constant 2 : index
    %c0_284 = arith.constant 0 : index
    %c0_285 = arith.constant 0 : index
    %356 = vector.load %arg6[%c1_282, %c2_283, %c0_284, %c0_285] : memref<2x4x32x8xf32, #tpu.memory_space<vmem>>, vector<1x1x32x8xf32>
    %357 = vector.shape_cast %356 : vector<1x1x32x8xf32> to vector<32x8xf32>
    %cst_286 = arith.constant dense<0.000000e+00> : vector<48x8xf32>
    %358 = tpu.matmul %269, %357, %cst_286 {dimension_numbers = #tpu.dot_dimension_numbers<[1], [0], [0], [1], [0, 0, 1, 1], [], []>} : vector<48x32xf32>, vector<32x8xf32>, vector<48x8xf32> -> vector<48x8xf32>
    %c1_287 = arith.constant 1 : index
    %c2_288 = arith.constant 2 : index
    %c0_289 = arith.constant 0 : index
    %c0_290 = arith.constant 0 : index
    %359 = vector.load %arg7[%c1_287, %c2_288, %c0_289, %c0_290] : memref<2x4x1x8xf32, #tpu.memory_space<vmem>>, vector<1x1x1x8xf32>
    %360 = vector.shape_cast %359 : vector<1x1x1x8xf32> to vector<1x8xf32>
    %361 = vector.broadcast %360 : vector<1x8xf32> to vector<48x8xf32>
    %362 = arith.addf %358, %361 : vector<48x8xf32>
    %c1_291 = arith.constant 1 : index
    %c2_292 = arith.constant 2 : index
    %c0_293 = arith.constant 0 : index
    %c0_294 = arith.constant 0 : index
    %363 = vector.load %arg8[%c1_291, %c2_292, %c0_293, %c0_294] : memref<2x4x32x8xf32, #tpu.memory_space<vmem>>, vector<1x1x32x8xf32>
    %364 = vector.shape_cast %363 : vector<1x1x32x8xf32> to vector<32x8xf32>
    %cst_295 = arith.constant dense<0.000000e+00> : vector<48x8xf32>
    %365 = tpu.matmul %269, %364, %cst_295 {dimension_numbers = #tpu.dot_dimension_numbers<[1], [0], [0], [1], [0, 0, 1, 1], [], []>} : vector<48x32xf32>, vector<32x8xf32>, vector<48x8xf32> -> vector<48x8xf32>
    %c1_296 = arith.constant 1 : index
    %c2_297 = arith.constant 2 : index
    %c0_298 = arith.constant 0 : index
    %c0_299 = arith.constant 0 : index
    %366 = vector.load %arg9[%c1_296, %c2_297, %c0_298, %c0_299] : memref<2x4x1x8xf32, #tpu.memory_space<vmem>>, vector<1x1x1x8xf32>
    %367 = vector.shape_cast %366 : vector<1x1x1x8xf32> to vector<1x8xf32>
    %368 = vector.broadcast %367 : vector<1x8xf32> to vector<48x8xf32>
    %369 = arith.addf %365, %368 : vector<48x8xf32>
    "tpu.trace_start"() <{level = 10 : i32, message = "qd,kd->qk"}> : () -> ()
    %cst_300 = arith.constant dense<0.000000e+00> : vector<48x48xf32>
    %370 = tpu.matmul %355, %362, %cst_300 {dimension_numbers = #tpu.dot_dimension_numbers<[1], [1], [0], [0], [0, 0, 1, 0], [], []>} : vector<48x8xf32>, vector<48x8xf32>, vector<48x48xf32> -> vector<48x48xf32>
    "tpu.trace_stop"() : () -> ()
    %cst_301 = arith.constant 0.353553385 : f32
    %371 = vector.broadcast %cst_301 : f32 to vector<48x48xf32>
    %372 = arith.mulf %370, %371 : vector<48x48xf32>
    %373 = arith.addf %372, %25 : vector<48x48xf32>
    %cst_302 = arith.constant dense<0xFF800000> : vector<48xf32>
    %374 = vector.multi_reduction <maximumf>, %373, %cst_302 [1] : vector<48x48xf32> to vector<48xf32>
    %375 = vector.shape_cast %374 : vector<48xf32> to vector<48x1xf32>
    %376 = vector.broadcast %375 : vector<48x1xf32> to vector<48x48xf32>
    %377 = arith.subf %373, %376 : vector<48x48xf32>
    %378 = math.exp %377 : vector<48x48xf32>
    %cst_303 = arith.constant dense<0.000000e+00> : vector<48xf32>
    %379 = vector.multi_reduction <add>, %378, %cst_303 [1] : vector<48x48xf32> to vector<48xf32>
    %380 = vector.shape_cast %379 : vector<48xf32> to vector<48x1xf32>
    %381 = tpu.reciprocal %380 {approx = true} : vector<48x1xf32> -> vector<48x1xf32>
    %382 = vector.broadcast %381 : vector<48x1xf32> to vector<48x48xf32>
    %383 = arith.mulf %378, %382 : vector<48x48xf32>
    %cst_304 = arith.constant dense<0.000000e+00> : vector<48x8xf32>
    %384 = tpu.matmul %383, %369, %cst_304 {dimension_numbers = #tpu.dot_dimension_numbers<[1], [0], [0], [1], [0, 0, 1, 1], [], []>} : vector<48x48xf32>, vector<48x8xf32>, vector<48x8xf32> -> vector<48x8xf32>
    %c1_305 = arith.constant 1 : index
    %c2_306 = arith.constant 2 : index
    %c0_307 = arith.constant 0 : index
    %c0_308 = arith.constant 0 : index
    %385 = vector.load %arg10[%c1_305, %c2_306, %c0_307, %c0_308] : memref<2x4x8x32xf32, #tpu.memory_space<vmem>>, vector<1x1x8x32xf32>
    %386 = vector.shape_cast %385 : vector<1x1x8x32xf32> to vector<8x32xf32>
    %cst_309 = arith.constant dense<0.000000e+00> : vector<48x32xf32>
    %387 = tpu.matmul %384, %386, %cst_309 {dimension_numbers = #tpu.dot_dimension_numbers<[1], [0], [0], [1], [0, 0, 1, 1], [], []>} : vector<48x8xf32>, vector<8x32xf32>, vector<48x32xf32> -> vector<48x32xf32>
    %388 = arith.addf %348, %387 : vector<48x32xf32>
    %c1_310 = arith.constant 1 : index
    %c3_311 = arith.constant 3 : index
    %c0_312 = arith.constant 0 : index
    %c0_313 = arith.constant 0 : index
    %389 = vector.load %arg4[%c1_310, %c3_311, %c0_312, %c0_313] : memref<2x4x32x8xf32, #tpu.memory_space<vmem>>, vector<1x1x32x8xf32>
    %390 = vector.shape_cast %389 : vector<1x1x32x8xf32> to vector<32x8xf32>
    %cst_314 = arith.constant dense<0.000000e+00> : vector<48x8xf32>
    %391 = tpu.matmul %269, %390, %cst_314 {dimension_numbers = #tpu.dot_dimension_numbers<[1], [0], [0], [1], [0, 0, 1, 1], [], []>} : vector<48x32xf32>, vector<32x8xf32>, vector<48x8xf32> -> vector<48x8xf32>
    %c1_315 = arith.constant 1 : index
    %c3_316 = arith.constant 3 : index
    %c0_317 = arith.constant 0 : index
    %c0_318 = arith.constant 0 : index
    %392 = vector.load %arg5[%c1_315, %c3_316, %c0_317, %c0_318] : memref<2x4x1x8xf32, #tpu.memory_space<vmem>>, vector<1x1x1x8xf32>
    %393 = vector.shape_cast %392 : vector<1x1x1x8xf32> to vector<1x8xf32>
    %394 = vector.broadcast %393 : vector<1x8xf32> to vector<48x8xf32>
    %395 = arith.addf %391, %394 : vector<48x8xf32>
    %c1_319 = arith.constant 1 : index
    %c3_320 = arith.constant 3 : index
    %c0_321 = arith.constant 0 : index
    %c0_322 = arith.constant 0 : index
    %396 = vector.load %arg6[%c1_319, %c3_320, %c0_321, %c0_322] : memref<2x4x32x8xf32, #tpu.memory_space<vmem>>, vector<1x1x32x8xf32>
    %397 = vector.shape_cast %396 : vector<1x1x32x8xf32> to vector<32x8xf32>
    %cst_323 = arith.constant dense<0.000000e+00> : vector<48x8xf32>
    %398 = tpu.matmul %269, %397, %cst_323 {dimension_numbers = #tpu.dot_dimension_numbers<[1], [0], [0], [1], [0, 0, 1, 1], [], []>} : vector<48x32xf32>, vector<32x8xf32>, vector<48x8xf32> -> vector<48x8xf32>
    %c1_324 = arith.constant 1 : index
    %c3_325 = arith.constant 3 : index
    %c0_326 = arith.constant 0 : index
    %c0_327 = arith.constant 0 : index
    %399 = vector.load %arg7[%c1_324, %c3_325, %c0_326, %c0_327] : memref<2x4x1x8xf32, #tpu.memory_space<vmem>>, vector<1x1x1x8xf32>
    %400 = vector.shape_cast %399 : vector<1x1x1x8xf32> to vector<1x8xf32>
    %401 = vector.broadcast %400 : vector<1x8xf32> to vector<48x8xf32>
    %402 = arith.addf %398, %401 : vector<48x8xf32>
    %c1_328 = arith.constant 1 : index
    %c3_329 = arith.constant 3 : index
    %c0_330 = arith.constant 0 : index
    %c0_331 = arith.constant 0 : index
    %403 = vector.load %arg8[%c1_328, %c3_329, %c0_330, %c0_331] : memref<2x4x32x8xf32, #tpu.memory_space<vmem>>, vector<1x1x32x8xf32>
    %404 = vector.shape_cast %403 : vector<1x1x32x8xf32> to vector<32x8xf32>
    %cst_332 = arith.constant dense<0.000000e+00> : vector<48x8xf32>
    %405 = tpu.matmul %269, %404, %cst_332 {dimension_numbers = #tpu.dot_dimension_numbers<[1], [0], [0], [1], [0, 0, 1, 1], [], []>} : vector<48x32xf32>, vector<32x8xf32>, vector<48x8xf32> -> vector<48x8xf32>
    %c1_333 = arith.constant 1 : index
    %c3_334 = arith.constant 3 : index
    %c0_335 = arith.constant 0 : index
    %c0_336 = arith.constant 0 : index
    %406 = vector.load %arg9[%c1_333, %c3_334, %c0_335, %c0_336] : memref<2x4x1x8xf32, #tpu.memory_space<vmem>>, vector<1x1x1x8xf32>
    %407 = vector.shape_cast %406 : vector<1x1x1x8xf32> to vector<1x8xf32>
    %408 = vector.broadcast %407 : vector<1x8xf32> to vector<48x8xf32>
    %409 = arith.addf %405, %408 : vector<48x8xf32>
    "tpu.trace_start"() <{level = 10 : i32, message = "qd,kd->qk"}> : () -> ()
    %cst_337 = arith.constant dense<0.000000e+00> : vector<48x48xf32>
    %410 = tpu.matmul %395, %402, %cst_337 {dimension_numbers = #tpu.dot_dimension_numbers<[1], [1], [0], [0], [0, 0, 1, 0], [], []>} : vector<48x8xf32>, vector<48x8xf32>, vector<48x48xf32> -> vector<48x48xf32>
    "tpu.trace_stop"() : () -> ()
    %cst_338 = arith.constant 0.353553385 : f32
    %411 = vector.broadcast %cst_338 : f32 to vector<48x48xf32>
    %412 = arith.mulf %410, %411 : vector<48x48xf32>
    %413 = arith.addf %412, %25 : vector<48x48xf32>
    %cst_339 = arith.constant dense<0xFF800000> : vector<48xf32>
    %414 = vector.multi_reduction <maximumf>, %413, %cst_339 [1] : vector<48x48xf32> to vector<48xf32>
    %415 = vector.shape_cast %414 : vector<48xf32> to vector<48x1xf32>
    %416 = vector.broadcast %415 : vector<48x1xf32> to vector<48x48xf32>
    %417 = arith.subf %413, %416 : vector<48x48xf32>
    %418 = math.exp %417 : vector<48x48xf32>
    %cst_340 = arith.constant dense<0.000000e+00> : vector<48xf32>
    %419 = vector.multi_reduction <add>, %418, %cst_340 [1] : vector<48x48xf32> to vector<48xf32>
    %420 = vector.shape_cast %419 : vector<48xf32> to vector<48x1xf32>
    %421 = tpu.reciprocal %420 {approx = true} : vector<48x1xf32> -> vector<48x1xf32>
    %422 = vector.broadcast %421 : vector<48x1xf32> to vector<48x48xf32>
    %423 = arith.mulf %418, %422 : vector<48x48xf32>
    %cst_341 = arith.constant dense<0.000000e+00> : vector<48x8xf32>
    %424 = tpu.matmul %423, %409, %cst_341 {dimension_numbers = #tpu.dot_dimension_numbers<[1], [0], [0], [1], [0, 0, 1, 1], [], []>} : vector<48x48xf32>, vector<48x8xf32>, vector<48x8xf32> -> vector<48x8xf32>
    %c1_342 = arith.constant 1 : index
    %c3_343 = arith.constant 3 : index
    %c0_344 = arith.constant 0 : index
    %c0_345 = arith.constant 0 : index
    %425 = vector.load %arg10[%c1_342, %c3_343, %c0_344, %c0_345] : memref<2x4x8x32xf32, #tpu.memory_space<vmem>>, vector<1x1x8x32xf32>
    %426 = vector.shape_cast %425 : vector<1x1x8x32xf32> to vector<8x32xf32>
    %cst_346 = arith.constant dense<0.000000e+00> : vector<48x32xf32>
    %427 = tpu.matmul %424, %426, %cst_346 {dimension_numbers = #tpu.dot_dimension_numbers<[1], [0], [0], [1], [0, 0, 1, 1], [], []>} : vector<48x8xf32>, vector<8x32xf32>, vector<48x32xf32> -> vector<48x32xf32>
    %428 = arith.addf %388, %427 : vector<48x32xf32>
    %c1_347 = arith.constant 1 : index
    %c0_348 = arith.constant 0 : index
    %c0_349 = arith.constant 0 : index
    %429 = vector.load %arg11[%c1_347, %c0_348, %c0_349] : memref<2x1x32xf32, #tpu.memory_space<vmem>>, vector<1x1x32xf32>
    %430 = vector.shape_cast %429 : vector<1x1x32xf32> to vector<1x32xf32>
    %431 = vector.broadcast %430 : vector<1x32xf32> to vector<48x32xf32>
    %432 = arith.addf %428, %431 : vector<48x32xf32>
    %433 = arith.addf %269, %432 : vector<48x32xf32>
    %c1_350 = arith.constant 1 : index
    %c0_351 = arith.constant 0 : index
    %c0_352 = arith.constant 0 : index
    %434 = vector.load %arg12[%c1_350, %c0_351, %c0_352] : memref<2x1x32xf32, #tpu.memory_space<vmem>>, vector<1x1x32xf32>
    %435 = vector.shape_cast %434 : vector<1x1x32xf32> to vector<1x32xf32>
    %c1_353 = arith.constant 1 : index
    %c0_354 = arith.constant 0 : index
    %c0_355 = arith.constant 0 : index
    %436 = vector.load %arg13[%c1_353, %c0_354, %c0_355] : memref<2x1x32xf32, #tpu.memory_space<vmem>>, vector<1x1x32xf32>
    %437 = vector.shape_cast %436 : vector<1x1x32xf32> to vector<1x32xf32>
    %cst_356 = arith.constant dense<0.000000e+00> : vector<48xf32>
    %438 = vector.multi_reduction <add>, %433, %cst_356 [1] : vector<48x32xf32> to vector<48xf32>
    %439 = vector.shape_cast %438 : vector<48xf32> to vector<48x1xf32>
    %cst_357 = arith.constant 3.200000e+01 : f32
    %440 = vector.broadcast %cst_357 : f32 to vector<48x1xf32>
    %441 = arith.divf %439, %440 : vector<48x1xf32>
    %442 = vector.broadcast %441 : vector<48x1xf32> to vector<48x32xf32>
    %443 = arith.subf %433, %442 : vector<48x32xf32>
    %444 = arith.mulf %443, %443 : vector<48x32xf32>
    %cst_358 = arith.constant dense<0.000000e+00> : vector<48xf32>
    %445 = vector.multi_reduction <add>, %444, %cst_358 [1] : vector<48x32xf32> to vector<48xf32>
    %446 = vector.shape_cast %445 : vector<48xf32> to vector<48x1xf32>
    %cst_359 = arith.constant 3.200000e+01 : f32
    %447 = vector.broadcast %cst_359 : f32 to vector<48x1xf32>
    %448 = arith.divf %446, %447 : vector<48x1xf32>
    %449 = vector.broadcast %441 : vector<48x1xf32> to vector<48x32xf32>
    %450 = arith.subf %433, %449 : vector<48x32xf32>
    %cst_360 = arith.constant 9.99999996E-13 : f32
    %451 = vector.broadcast %cst_360 : f32 to vector<48x1xf32>
    %452 = arith.addf %448, %451 : vector<48x1xf32>
    %453 = math.rsqrt %452 : vector<48x1xf32>
    %454 = vector.broadcast %453 : vector<48x1xf32> to vector<48x32xf32>
    %455 = arith.mulf %450, %454 : vector<48x32xf32>
    %456 = vector.broadcast %435 : vector<1x32xf32> to vector<48x32xf32>
    %457 = arith.mulf %455, %456 : vector<48x32xf32>
    %458 = vector.broadcast %437 : vector<1x32xf32> to vector<48x32xf32>
    %459 = arith.addf %457, %458 : vector<48x32xf32>
    %c1_361 = arith.constant 1 : index
    %c0_362 = arith.constant 0 : index
    %c0_363 = arith.constant 0 : index
    %460 = vector.load %arg14[%c1_361, %c0_362, %c0_363] : memref<2x32x64xf32, #tpu.memory_space<vmem>>, vector<1x32x64xf32>
    %461 = vector.shape_cast %460 : vector<1x32x64xf32> to vector<32x64xf32>
    %cst_364 = arith.constant dense<0.000000e+00> : vector<48x64xf32>
    %462 = tpu.matmul %459, %461, %cst_364 {dimension_numbers = #tpu.dot_dimension_numbers<[1], [0], [0], [1], [0, 0, 1, 1], [], []>} : vector<48x32xf32>, vector<32x64xf32>, vector<48x64xf32> -> vector<48x64xf32>
    %c1_365 = arith.constant 1 : index
    %c0_366 = arith.constant 0 : index
    %c0_367 = arith.constant 0 : index
    %463 = vector.load %arg15[%c1_365, %c0_366, %c0_367] : memref<2x1x64xf32, #tpu.memory_space<vmem>>, vector<1x1x64xf32>
    %464 = vector.shape_cast %463 : vector<1x1x64xf32> to vector<1x64xf32>
    %465 = vector.broadcast %464 : vector<1x64xf32> to vector<48x64xf32>
    %466 = arith.addf %462, %465 : vector<48x64xf32>
    %cst_368 = arith.constant 5.000000e-01 : f32
    %467 = vector.broadcast %cst_368 : f32 to vector<48x64xf32>
    %468 = arith.mulf %467, %466 : vector<48x64xf32>
    %cst_369 = arith.constant 4.471500e-02 : f32
    %469 = vector.broadcast %cst_369 : f32 to vector<48x64xf32>
    %470 = arith.mulf %469, %466 : vector<48x64xf32>
    %471 = arith.mulf %470, %466 : vector<48x64xf32>
    %472 = arith.mulf %471, %466 : vector<48x64xf32>
    %473 = arith.addf %466, %472 : vector<48x64xf32>
    %cst_370 = arith.constant 0.797884583 : f32
    %474 = vector.broadcast %cst_370 : f32 to vector<48x64xf32>
    %475 = arith.mulf %474, %473 : vector<48x64xf32>
    %476 = math.tanh %475 : vector<48x64xf32>
    %cst_371 = arith.constant 1.000000e+00 : f32
    %477 = vector.broadcast %cst_371 : f32 to vector<48x64xf32>
    %478 = arith.addf %477, %476 : vector<48x64xf32>
    %479 = arith.mulf %468, %478 : vector<48x64xf32>
    %c1_372 = arith.constant 1 : index
    %c0_373 = arith.constant 0 : index
    %c0_374 = arith.constant 0 : index
    %480 = vector.load %arg16[%c1_372, %c0_373, %c0_374] : memref<2x64x32xf32, #tpu.memory_space<vmem>>, vector<1x64x32xf32>
    %481 = vector.shape_cast %480 : vector<1x64x32xf32> to vector<64x32xf32>
    %cst_375 = arith.constant dense<0.000000e+00> : vector<48x32xf32>
    %482 = tpu.matmul %479, %481, %cst_375 {dimension_numbers = #tpu.dot_dimension_numbers<[1], [0], [0], [1], [0, 0, 1, 1], [], []>} : vector<48x64xf32>, vector<64x32xf32>, vector<48x32xf32> -> vector<48x32xf32>
    %c1_376 = arith.constant 1 : index
    %c0_377 = arith.constant 0 : index
    %c0_378 = arith.constant 0 : index
    %483 = vector.load %arg17[%c1_376, %c0_377, %c0_378] : memref<2x1x32xf32, #tpu.memory_space<vmem>>, vector<1x1x32xf32>
    %484 = vector.shape_cast %483 : vector<1x1x32xf32> to vector<1x32xf32>
    %485 = vector.broadcast %484 : vector<1x32xf32> to vector<48x32xf32>
    %486 = arith.addf %482, %485 : vector<48x32xf32>
    %487 = arith.addf %459, %486 : vector<48x32xf32>
    %c1_379 = arith.constant 1 : index
    %c0_380 = arith.constant 0 : index
    %c0_381 = arith.constant 0 : index
    %488 = vector.load %arg18[%c1_379, %c0_380, %c0_381] : memref<2x1x32xf32, #tpu.memory_space<vmem>>, vector<1x1x32xf32>
    %489 = vector.shape_cast %488 : vector<1x1x32xf32> to vector<1x32xf32>
    %c1_382 = arith.constant 1 : index
    %c0_383 = arith.constant 0 : index
    %c0_384 = arith.constant 0 : index
    %490 = vector.load %arg19[%c1_382, %c0_383, %c0_384] : memref<2x1x32xf32, #tpu.memory_space<vmem>>, vector<1x1x32xf32>
    %491 = vector.shape_cast %490 : vector<1x1x32xf32> to vector<1x32xf32>
    %cst_385 = arith.constant dense<0.000000e+00> : vector<48xf32>
    %492 = vector.multi_reduction <add>, %487, %cst_385 [1] : vector<48x32xf32> to vector<48xf32>
    %493 = vector.shape_cast %492 : vector<48xf32> to vector<48x1xf32>
    %cst_386 = arith.constant 3.200000e+01 : f32
    %494 = vector.broadcast %cst_386 : f32 to vector<48x1xf32>
    %495 = arith.divf %493, %494 : vector<48x1xf32>
    %496 = vector.broadcast %495 : vector<48x1xf32> to vector<48x32xf32>
    %497 = arith.subf %487, %496 : vector<48x32xf32>
    %498 = arith.mulf %497, %497 : vector<48x32xf32>
    %cst_387 = arith.constant dense<0.000000e+00> : vector<48xf32>
    %499 = vector.multi_reduction <add>, %498, %cst_387 [1] : vector<48x32xf32> to vector<48xf32>
    %500 = vector.shape_cast %499 : vector<48xf32> to vector<48x1xf32>
    %cst_388 = arith.constant 3.200000e+01 : f32
    %501 = vector.broadcast %cst_388 : f32 to vector<48x1xf32>
    %502 = arith.divf %500, %501 : vector<48x1xf32>
    %503 = vector.broadcast %495 : vector<48x1xf32> to vector<48x32xf32>
    %504 = arith.subf %487, %503 : vector<48x32xf32>
    %cst_389 = arith.constant 9.99999996E-13 : f32
    %505 = vector.broadcast %cst_389 : f32 to vector<48x1xf32>
    %506 = arith.addf %502, %505 : vector<48x1xf32>
    %507 = math.rsqrt %506 : vector<48x1xf32>
    %508 = vector.broadcast %507 : vector<48x1xf32> to vector<48x32xf32>
    %509 = arith.mulf %504, %508 : vector<48x32xf32>
    %510 = vector.broadcast %489 : vector<1x32xf32> to vector<48x32xf32>
    %511 = arith.mulf %509, %510 : vector<48x32xf32>
    %512 = vector.broadcast %491 : vector<1x32xf32> to vector<48x32xf32>
    %513 = arith.addf %511, %512 : vector<48x32xf32>
    %c0_390 = arith.constant 0 : index
    %c0_391 = arith.constant 0 : index
    %514 = vector.load %arg20[%c0_390, %c0_391] : memref<32x128xf32, #tpu.memory_space<vmem>>, vector<32x128xf32>
    %cst_392 = arith.constant dense<0.000000e+00> : vector<48x128xf32>
    %515 = tpu.matmul %513, %514, %cst_392 {dimension_numbers = #tpu.dot_dimension_numbers<[1], [0], [0], [1], [0, 0, 1, 1], [], []>} : vector<48x32xf32>, vector<32x128xf32>, vector<48x128xf32> -> vector<48x128xf32>
    %c0_393 = arith.constant 0 : index
    %c0_394 = arith.constant 0 : index
    %516 = vector.load %arg21[%c0_393, %c0_394] : memref<1x128xf32, #tpu.memory_space<vmem>>, vector<1x128xf32>
    %517 = vector.broadcast %516 : vector<1x128xf32> to vector<48x128xf32>
    %518 = arith.addf %515, %517 : vector<48x128xf32>
    %c0_395 = arith.constant 0 : index
    %c0_396 = arith.constant 0 : index
    %519 = vector.load %arg22[%c0_395, %c0_396] : memref<48x128xf32, #tpu.memory_space<vmem>>, vector<48x128xf32>
    tpu.vector_store %arg22[%c0_395, %c0_396], %518 {strides = array<i32>} : memref<48x128xf32, #tpu.memory_space<vmem>>, vector<48x128xf32>,
    return
  }
}

</mosaic_0001>

<llo_original>
// kernel: eq.8
$region0: #{eq.8}
  %s0 = inlined_call_operand.vmem [shape: s32[6,8], index: 0, kind: input, shape index: {}]
  %s1 = inlined_call_operand.vmem [shape: s32[48], index: 1, kind: output, shape index: {}]
  $region1: #{eq.8} parent=0
    #allocation0 [shape = 'u8[4096]{0}', space=vmem, size = 0x1000, scoped, tag = 'scoped mem for output reshape']
    %v2 = vld [vmem:[%s0] sm:$0x1]
    %vm3 = vcmask 64512
    %4 = vst.msk [vmem:[#allocation0] sm:$0x1] %vm3, %v2
    %s5 = scalar_lea.vmem %s0, 5
    %v6 = vld [vmem:[%s5] sm:$0x1]
    %7 = vrot.lane.b32.xlu0 %v6, 40
    %v8 = vpop.permute.xlu0 %7
    %vm9 = vcmask 392512
    %10 = vst.msk [vmem:[#allocation0] sm:$0x1] %vm9, %v8
    %s11 = scalar_lea.vmem %s0, 4
    %v12 = vld [vmem:[%s11] sm:$0x1]
    %13 = vrot.lane.b32.xlu0 %v12, 32
    %v14 = vpop.permute.xlu0 %13
    %vm15 = vcmask 326912
    %16 = vst.msk [vmem:[#allocation0] sm:$0x1] %vm15, %v14
    %s17 = scalar_lea.vmem %s0, 3
    %v18 = vld [vmem:[%s17] sm:$0x1]
    %19 = vrot.lane.b32.xlu0 %v18, 24
    %v20 = vpop.permute.xlu0 %19
    %vm21 = vcmask 261312
    %22 = vst.msk [vmem:[#allocation0] sm:$0x1] %vm21, %v20
    %s23 = scalar_lea.vmem %s0, 2
    %v24 = vld [vmem:[%s23] sm:$0x1]
    %25 = vrot.lane.b32.xlu0 %v24, 16
    %v26 = vpop.permute.xlu0 %25
    %vm27 = vcmask 195712
    %28 = vst.msk [vmem:[#allocation0] sm:$0x1] %vm27, %v26
    %s29 = scalar_lea.vmem %s0, 1
    %v30 = vld [vmem:[%s29] sm:$0x1]
    %31 = vrot.lane.b32.xlu0 %v30, 8
    %v32 = vpop.permute.xlu0 %31
    %vm33 = vcmask 130112
    %34 = vst.msk [vmem:[#allocation0] sm:$0x1] %vm33, %v32
    %s36 = sshllo.u32 0, 1
    %v38 = vld [vmem:[#allocation0] sm:%s36]
    %s39 = sshllo.u32 0, 1
    %40 = vst [vmem:[%s1] sm:%s39] %v38

// kernel: reranker_forward.1
$region0: #{reranker_forward.1}
  #allocation0 [shape = 'u32[]', space=smem, size = 0x4, offset = 0x4, fixed_abs, tag = 'smem constant byte address 0x4 - core index']
  #allocation1 [shape = 'u32[144,128]{1,0:T(1,128)}', space=vmem, size = 0x12000, scoped, tag = 'internal scratch']
  %s0 = inlined_call_operand.vmem [shape: f32[48,32], index: 0, kind: input, shape index: {}]
  %s1 = inlined_call_operand.vmem [shape: f32[48,48], index: 1, kind: input, shape index: {}]
  %s2 = inlined_call_operand.vmem [shape: f32[1,32], index: 2, kind: input, shape index: {}]
  %s3 = inlined_call_operand.vmem [shape: f32[1,32], index: 3, kind: input, shape index: {}]
  %s4 = inlined_call_operand.vmem [shape: f32[2,4,32,8], index: 4, kind: input, shape index: {}]
  %s5 = inlined_call_operand.vmem [shape: f32[2,4,1,8], index: 5, kind: input, shape index: {}]
  %s6 = inlined_call_operand.vmem [shape: f32[2,4,32,8], index: 6, kind: input, shape index: {}]
  %s7 = inlined_call_operand.vmem [shape: f32[2,4,1,8], index: 7, kind: input, shape index: {}]
  %s8 = inlined_call_operand.vmem [shape: f32[2,4,32,8], index: 8, kind: input, shape index: {}]
  %s9 = inlined_call_operand.vmem [shape: f32[2,4,1,8], index: 9, kind: input, shape index: {}]
  %s10 = inlined_call_operand.vmem [shape: f32[2,4,8,32], index: 10, kind: input, shape index: {}]
  %s11 = inlined_call_operand.vmem [shape: f32[2,1,32], index: 11, kind: input, shape index: {}]
  %s12 = inlined_call_operand.vmem [shape: f32[2,1,32], index: 12, kind: input, shape index: {}]
  %s13 = inlined_call_operand.vmem [shape: f32[2,1,32], index: 13, kind: input, shape index: {}]
  %s14 = inlined_call_operand.vmem [shape: f32[2,32,64], index: 14, kind: input, shape index: {}]
  %s15 = inlined_call_operand.vmem [shape: f32[2,1,64], index: 15, kind: input, shape index: {}]
  %s16 = inlined_call_operand.vmem [shape: f32[2,64,32], index: 16, kind: input, shape index: {}]
  %s17 = inlined_call_operand.vmem [shape: f32[2,1,32], index: 17, kind: input, shape index: {}]
  %s18 = inlined_call_operand.vmem [shape: f32[2,1,32], index: 18, kind: input, shape index: {}]
  %s19 = inlined_call_operand.vmem [shape: f32[2,1,32], index: 19, kind: input, shape index: {}]
  %s20 = inlined_call_operand.vmem [shape: f32[32,128], index: 20, kind: input, shape index: {}]
  %s21 = inlined_call_operand.vmem [shape: f32[1,128], index: 21, kind: input, shape index: {}]
  %s22 = inlined_call_operand.vmem [shape: f32[48,128], index: 22, kind: output, shape index: {}]
  %s23 = sld [smem:[#allocation0]]
  $region98: #{reranker_forward.1} parent=0
    _
  %s25 = ssub.s32 1, %s23
  %s26 = scalar_select 0, %s25, %s23
  // Predicated region
  $region2: #{reranker_forward.1} parent=0 // pred_check
    _
  $region3: #{reranker_forward.1} parent=0 // pred_check_branch
    %28 = sbr.rel (0) target = $region5
  $region4: #{reranker_forward.1} parent=0 // pred_region
    _
  $region5: #{reranker_forward.1} parent=0 // pred_fallthru
    _
  // Predicated region
  $region6: #{reranker_forward.1} parent=0 // pred_check
    _
  $region7: #{reranker_forward.1} parent=0 // pred_check_branch
    %30 = sbr.rel (0) target = $region9
  $region8: #{reranker_forward.1} parent=0 // pred_region
    _
  $region9: #{reranker_forward.1} parent=0 // pred_fallthru
    _
  // Predicated region
  $region10: #{reranker_forward.1} parent=0 // pred_check
    _
  $region11: #{reranker_forward.1} parent=0 // pred_check_branch
    %32 = sbr.rel (0) target = $region13
  $region12: #{reranker_forward.1} parent=0 // pred_region
    _
  $region13: #{reranker_forward.1} parent=0 // pred_fallthru
    _
  // Predicated region
  $region14: #{reranker_forward.1} parent=0 // pred_check
    _
  $region15: #{reranker_forward.1} parent=0 // pred_check_branch
    %34 = sbr.rel (0) target = $region17
  $region16: #{reranker_forward.1} parent=0 // pred_region
    _
  $region17: #{reranker_forward.1} parent=0 // pred_fallthru
    _
  // Predicated region
  $region18: #{reranker_forward.1} parent=0 // pred_check
    _
  $region19: #{reranker_forward.1} parent=0 // pred_check_branch
    %36 = sbr.rel (0) target = $region21
  $region20: #{reranker_forward.1} parent=0 // pred_region
    _
  $region21: #{reranker_forward.1} parent=0 // pred_fallthru
    _
  // Predicated region
  $region22: #{reranker_forward.1} parent=0 // pred_check
    _
  $region23: #{reranker_forward.1} parent=0 // pred_check_branch
    %38 = sbr.rel (0) target = $region25
  $region24: #{reranker_forward.1} parent=0 // pred_region
    _
  $region25: #{reranker_forward.1} parent=0 // pred_fallthru
    _
  // Predicated region
  $region26: #{reranker_forward.1} parent=0 // pred_check
    _
  $region27: #{reranker_forward.1} parent=0 // pred_check_branch
    %40 = sbr.rel (0) target = $region29
  $region28: #{reranker_forward.1} parent=0 // pred_region
    _
  $region29: #{reranker_forward.1} parent=0 // pred_fallthru
    _
  // Predicated region
  $region30: #{reranker_forward.1} parent=0 // pred_check
    _
  $region31: #{reranker_forward.1} parent=0 // pred_check_branch
    %42 = sbr.rel (0) target = $region33
  $region32: #{reranker_forward.1} parent=0 // pred_region
    _
  $region33: #{reranker_forward.1} parent=0 // pred_fallthru
    _
  // Predicated region
  $region34: #{reranker_forward.1} parent=0 // pred_check
    _
  $region35: #{reranker_forward.1} parent=0 // pred_check_branch
    %44 = sbr.rel (0) target = $region37
  $region36: #{reranker_forward.1} parent=0 // pred_region
    _
  $region37: #{reranker_forward.1} parent=0 // pred_fallthru
    _
  // Predicated region
  $region38: #{reranker_forward.1} parent=0 // pred_check
    _
  $region39: #{reranker_forward.1} parent=0 // pred_check_branch
    %46 = sbr.rel (0) target = $region41
  $region40: #{reranker_forward.1} parent=0 // pred_region
    _
  $region41: #{reranker_forward.1} parent=0 // pred_fallthru
    _
  // Predicated region
  $region42: #{reranker_forward.1} parent=0 // pred_check
    _
  $region43: #{reranker_forward.1} parent=0 // pred_check_branch
    %48 = sbr.rel (0) target = $region45
  $region44: #{reranker_forward.1} parent=0 // pred_region
    _
  $region45: #{reranker_forward.1} parent=0 // pred_fallthru
    _
  // Predicated region
  $region46: #{reranker_forward.1} parent=0 // pred_check
    _
  $region47: #{reranker_forward.1} parent=0 // pred_check_branch
    %50 = sbr.rel (0) target = $region49
  $region48: #{reranker_forward.1} parent=0 // pred_region
    _
  $region49: #{reranker_forward.1} parent=0 // pred_fallthru
    _
  // Predicated region
  $region50: #{reranker_forward.1} parent=0 // pred_check
    _
  $region51: #{reranker_forward.1} parent=0 // pred_check_branch
    %52 = sbr.rel (0) target = $region53
  $region52: #{reranker_forward.1} parent=0 // pred_region
    _
  $region53: #{reranker_forward.1} parent=0 // pred_fallthru
    _
  // Predicated region
  $region54: #{reranker_forward.1} parent=0 // pred_check
    _
  $region55: #{reranker_forward.1} parent=0 // pred_check_branch
    %54 = sbr.rel (0) target = $region57
  $region56: #{reranker_forward.1} parent=0 // pred_region
    _
  $region57: #{reranker_forward.1} parent=0 // pred_fallthru
    _
  // Predicated region
  $region58: #{reranker_forward.1} parent=0 // pred_check
    _
  $region59: #{reranker_forward.1} parent=0 // pred_check_branch
    %56 = sbr.rel (0) target = $region61
  $region60: #{reranker_forward.1} parent=0 // pred_region
    _
  $region61: #{reranker_forward.1} parent=0 // pred_fallthru
    _
  // Predicated region
  $region62: #{reranker_forward.1} parent=0 // pred_check
    _
  $region63: #{reranker_forward.1} parent=0 // pred_check_branch
    %58 = sbr.rel (0) target = $region65
  $region64: #{reranker_forward.1} parent=0 // pred_region
    _
  $region65: #{reranker_forward.1} parent=0 // pred_fallthru
    _
  // Predicated region
  $region66: #{reranker_forward.1} parent=0 // pred_check
    _
  $region67: #{reranker_forward.1} parent=0 // pred_check_branch
    %60 = sbr.rel (0) target = $region69
  $region68: #{reranker_forward.1} parent=0 // pred_region
    _
  $region69: #{reranker_forward.1} parent=0 // pred_fallthru
    _
  // Predicated region
  $region70: #{reranker_forward.1} parent=0 // pred_check
    _
  $region71: #{reranker_forward.1} parent=0 // pred_check_branch
    %62 = sbr.rel (0) target = $region73
  $region72: #{reranker_forward.1} parent=0 // pred_region
    _
  $region73: #{reranker_forward.1} parent=0 // pred_fallthru
    _
  // Predicated region
  $region74: #{reranker_forward.1} parent=0 // pred_check
    _
  $region75: #{reranker_forward.1} parent=0 // pred_check_branch
    %64 = sbr.rel (0) target = $region77
  $region76: #{reranker_forward.1} parent=0 // pred_region
    _
  $region77: #{reranker_forward.1} parent=0 // pred_fallthru
    _
  // Predicated region
  $region78: #{reranker_forward.1} parent=0 // pred_check
    _
  $region79: #{reranker_forward.1} parent=0 // pred_check_branch
    %66 = sbr.rel (0) target = $region81
  $region80: #{reranker_forward.1} parent=0 // pred_region
    _
  $region81: #{reranker_forward.1} parent=0 // pred_fallthru
    _
  // Predicated region
  $region82: #{reranker_forward.1} parent=0 // pred_check
    _
  $region83: #{reranker_forward.1} parent=0 // pred_check_branch
    %68 = sbr.rel (0) target = $region85
  $region84: #{reranker_forward.1} parent=0 // pred_region
    _
  $region85: #{reranker_forward.1} parent=0 // pred_fallthru
    _
  // Predicated region
  $region86: #{reranker_forward.1} parent=0 // pred_check
    _
  $region87: #{reranker_forward.1} parent=0 // pred_check_branch
    %70 = sbr.rel (0) target = $region89
  $region88: #{reranker_forward.1} parent=0 // pred_region
    _
  $region89: #{reranker_forward.1} parent=0 // pred_fallthru
    _
  %v71 = vld [vmem:[%s0] sm:$0xff]
  %v72 = vld [vmem:[%s0 + $0x8] sm:$0xff]
  %v73 = vld [vmem:[%s0 + $0x10] sm:$0xff]
  %v74 = vld [vmem:[%s0 + $0x18] sm:$0xff]
  %v75 = vld [vmem:[%s0 + $0x20] sm:$0xff]
  %v76 = vld [vmem:[%s0 + $0x28] sm:$0xff]
  %v77 = vld [vmem:[%s2] sm:$0x1]
  %v78 = vld [vmem:[%s3] sm:$0x1]
  %vm79 = vcmask 261120
  %v80 = vsel %vm79, %v71, 0.0
  %81 = vadd.xlane.f32.xlu0 %v80
  %v82 = vpop.xlane.xlu0 %81
  %v83 = vsel %vm79, %v72, 0.0
  %84 = vadd.xlane.f32.xlu0 %v83
  %v85 = vpop.xlane.xlu0 %84
  %v86 = vsel %vm79, %v73, 0.0
  %87 = vadd.xlane.f32.xlu0 %v86
  %v88 = vpop.xlane.xlu0 %87
  %v89 = vsel %vm79, %v74, 0.0
  %90 = vadd.xlane.f32.xlu0 %v89
  %v91 = vpop.xlane.xlu0 %90
  %v92 = vsel %vm79, %v75, 0.0
  %93 = vadd.xlane.f32.xlu0 %v92
  %v94 = vpop.xlane.xlu0 %93
  %v95 = vsel %vm79, %v76, 0.0
  %96 = vadd.xlane.f32.xlu0 %v95
  %v97 = vpop.xlane.xlu0 %96
  %v98 = vrcp.pop 32.0
  %v99 = vmul.f32 %v82, %v98
  %v100 = vmul.f32 %v85, %v98
  %v101 = vmul.f32 %v88, %v98
  %v102 = vmul.f32 %v91, %v98
  %v103 = vmul.f32 %v94, %v98
  %v104 = vmul.f32 %v97, %v98
  %v105 = vsub.f32 %v71, %v99
  %v106 = vsub.f32 %v72, %v100
  %v107 = vsub.f32 %v73, %v101
  %v108 = vsub.f32 %v74, %v102
  %v109 = vsub.f32 %v75, %v103
  %v110 = vsub.f32 %v76, %v104
  %v111 = vmul.f32 %v105, %v105
  %v112 = vmul.f32 %v106, %v106
  %v113 = vmul.f32 %v107, %v107
  %v114 = vmul.f32 %v108, %v108
  %v115 = vmul.f32 %v109, %v109
  %v116 = vmul.f32 %v110, %v110
  %v117 = vsel %vm79, %v111, 0.0
  %118 = vadd.xlane.f32.xlu0 %v117
  %v119 = vpop.xlane.xlu0 %118
  %v120 = vsel %vm79, %v112, 0.0
  %121 = vadd.xlane.f32.xlu0 %v120
  %v122 = vpop.xlane.xlu0 %121
  %v123 = vsel %vm79, %v113, 0.0
  %124 = vadd.xlane.f32.xlu0 %v123
  %v125 = vpop.xlane.xlu0 %124
  %v126 = vsel %vm79, %v114, 0.0
  %127 = vadd.xlane.f32.xlu0 %v126
  %v128 = vpop.xlane.xlu0 %127
  %v129 = vsel %vm79, %v115, 0.0
  %130 = vadd.xlane.f32.xlu0 %v129
  %v131 = vpop.xlane.xlu0 %130
  %v132 = vsel %vm79, %v116, 0.0
  %133 = vadd.xlane.f32.xlu0 %v132
  %v134 = vpop.xlane.xlu0 %133
  %v135 = vmul.f32 %v119, %v98
  %v136 = vmul.f32 %v122, %v98
  %v137 = vmul.f32 %v125, %v98
  %v138 = vmul.f32 %v128, %v98
  %v139 = vmul.f32 %v131, %v98
  %v140 = vmul.f32 %v134, %v98
  %v141 = vadd.f32 %v135, 1e-12
  %v142 = vadd.f32 %v136, 1e-12
  %v143 = vadd.f32 %v137, 1e-12
  %v144 = vadd.f32 %v138, 1e-12
  %v145 = vadd.f32 %v139, 1e-12
  %v146 = vadd.f32 %v140, 1e-12
  %v147 = vrsqrt.pop %v141
  %v148 = vrsqrt.pop %v142
  %v149 = vrsqrt.pop %v143
  %v150 = vrsqrt.pop %v144
  %v151 = vrsqrt.pop %v145
  %v152 = vrsqrt.pop %v146
  %v153 = vmul.f32 %v105, %v147
  %v154 = vmul.f32 %v106, %v148
  %v155 = vmul.f32 %v107, %v149
  %v156 = vmul.f32 %v108, %v150
  %v157 = vmul.f32 %v109, %v151
  %v158 = vmul.f32 %v110, %v152
  %v160 = vlaneseq
  %v161 = vshrl.u32 %v160, 7
  %v162 = vsub.s32 0, %v161
  %v163 = vrot.slane %v77, %v162
  %v165 = vmul.f32 %v153, %v163
  %v166 = vmul.f32 %v154, %v163
  %v167 = vmul.f32 %v155, %v163
  %v168 = vmul.f32 %v156, %v163
  %v169 = vmul.f32 %v157, %v163
  %v170 = vmul.f32 %v158, %v163
  %v172 = vlaneseq
  %v173 = vshrl.u32 %v172, 7
  %v174 = vsub.s32 0, %v173
  %v175 = vrot.slane %v78, %v174
  %v177 = vadd.f32 %v165, %v175
  %v178 = vadd.f32 %v166, %v175
  %v179 = vadd.f32 %v167, %v175
  %v180 = vadd.f32 %v168, %v175
  %v181 = vadd.f32 %v169, %v175
  %v182 = vadd.f32 %v170, %v175
  %v183 = vld [vmem:[%s1] sm:$0xff]
  %v184 = vld [vmem:[%s1 + $0x8] sm:$0xff]
  %v185 = vld [vmem:[%s1 + $0x10] sm:$0xff]
  %v186 = vld [vmem:[%s1 + $0x18] sm:$0xff]
  %v187 = vld [vmem:[%s1 + $0x20] sm:$0xff]
  %v188 = vld [vmem:[%s1 + $0x28] sm:$0xff]
  %v189 = vld [vmem:[%s4] sm:$0xff]
  %v190 = vld [vmem:[%s4 + $0x8] sm:$0xff]
  %v191 = vld [vmem:[%s4 + $0x10] sm:$0xff]
  %v192 = vld [vmem:[%s4 + $0x18] sm:$0xff]
  %v193 = vld [vmem:[%s5] sm:$0x1]
  %v195 = vlaneseq
  %v196 = vshrl.u32 %v195, 7
  %v197 = vsub.s32 0, %v196
  %v198 = vrot.slane %v193, %v197
  %v201 = vsel %vm79, %v177, 0
  %v204 = vsel %vm79, %v178, 0
  %v207 = vsel %vm79, %v179, 0
  %v210 = vsel %vm79, %v180, 0
  %v213 = vsel %vm79, %v181, 0
  %v216 = vsel %vm79, %v182, 0
  %218 = vmatprep.subr.mxu0 0.0
  %219 = vmatpush1.msra.mxu0 %v189
  %220 = vmatprep.subr.mxu0 0.0
  %221 = vmatpush1.msra.mxu0 %v190
  %222 = vmatprep.subr.mxu0 0.0
  %223 = vmatpush1.msra.mxu0 %v191
  %224 = vmatprep.subr.mxu0 0.0
  %225 = vmatpush1.msra.mxu0 %v192
  %226 = vmatprep.subr.mxu0 0.0
  %227 = vmatpush1.msra.mxu0 0.0
  %228 = vmatprep.subr.mxu0 0.0
  %229 = vmatpush1.msra.mxu0 0.0
  %230 = vmatprep.subr.mxu0 0.0
  %231 = vmatpush1.msra.mxu0 0.0
  %232 = vmatprep.subr.mxu0 0.0
  %233 = vmatpush1.msra.mxu0 0.0
  %234 = vmatprep.subr.mxu0 0.0
  %235 = vmatpush1.msra.mxu0 0.0
  %236 = vmatprep.subr.mxu0 0.0
  %237 = vmatpush1.msra.mxu0 0.0
  %238 = vmatprep.subr.mxu0 0.0
  %239 = vmatpush1.msra.mxu0 0.0
  %240 = vmatprep.subr.mxu0 0.0
  %241 = vmatpush1.msra.mxu0 0.0
  %242 = vmatprep.subr.mxu0 0.0
  %243 = vmatpush1.msra.mxu0 0.0
  %244 = vmatprep.subr.mxu0 0.0
  %245 = vmatpush1.msra.mxu0 0.0
  %246 = vmatprep.subr.mxu0 0.0
  %247 = vmatpush1.msra.mxu0 0.0
  %248 = vmatprep.subr.mxu0 0.0
  %249 = vmatpush1.msra.mxu0 0.0
  %250 = vmatprep.subr.mxu0 0.0
  %251 = vmatpush1.msra.mxu0 0.0
  %252 = vmatprep.subr.mxu0 0.0
  %253 = vmatpush1.msra.mxu0 0.0
  %254 = vmatprep.subr.mxu0 0.0
  %255 = vmatpush1.msra.mxu0 0.0
  %256 = vmatprep.subr.mxu0 0.0
  %257 = vmatpush1.msra.mxu0 0.0
  %258 = vmatprep.subr.mxu0 0.0
  %259 = vmatpush1.msra.mxu0 0.0
  %260 = vmatprep.subr.mxu0 0.0
  %261 = vmatpush1.msra.mxu0 0.0
  %262 = vmatprep.subr.mxu0 0.0
  %263 = vmatpush1.msra.mxu0 0.0
  %264 = vmatprep.subr.mxu0 0.0
  %265 = vmatpush1.msra.mxu0 0.0
  %266 = vmatprep.subr.mxu0 0.0
  %267 = vmatpush1.msra.mxu0 0.0
  %268 = vmatprep.subr.mxu0 0.0
  %269 = vmatpush1.msra.mxu0 0.0
  %270 = vmatprep.subr.mxu0 0.0
  %271 = vmatpush1.msra.mxu0 0.0
  %272 = vmatprep.subr.mxu0 0.0
  %273 = vmatpush1.msra.mxu0 0.0
  %274 = vmatprep.subr.mxu0 0.0
  %275 = vmatpush1.msra.mxu0 0.0
  %276 = vmatprep.subr.mxu0 0.0
  %277 = vmatpush1.msra.mxu0 0.0
  %278 = vmatprep.subr.mxu0 0.0
  %279 = vmatpush1.msra.mxu0 0.0
  %280 = vmatprep.subr.mxu0 0.0
  %281 = vmatpush1.msra.mxu0 0.0
  %282 = vmatprep.mubr.f32.mxu0 0.0
  %283 = vmatmul.mubr.f32.gmra.mrb[0].mxu0 %v201
  %v284 = vpop.f32.mrb[0].mxu0
  %v285 = vadd.f32 %v198, %v284
  %v286 = vpop.f32.mrb[0].mxu0
  %287 = vmatprep.mubr.f32.mxu0 0.0
  %288 = vmatmul.mubr.f32.gmra.mrb[0].mxu0 %v204
  %v289 = vpop.f32.mrb[0].mxu0
  %v290 = vadd.f32 %v198, %v289
  %v291 = vpop.f32.mrb[0].mxu0
  %292 = vmatprep.mubr.f32.mxu0 0.0
  %293 = vmatmul.mubr.f32.gmra.mrb[0].mxu0 %v207
  %v294 = vpop.f32.mrb[0].mxu0
  %v295 = vadd.f32 %v198, %v294
  %v296 = vpop.f32.mrb[0].mxu0
  %297 = vmatprep.mubr.f32.mxu0 0.0
  %298 = vmatmul.mubr.f32.gmra.mrb[0].mxu0 %v210
  %v299 = vpop.f32.mrb[0].mxu0
  %v300 = vadd.f32 %v198, %v299
  %v301 = vpop.f32.mrb[0].mxu0
  %302 = vmatprep.mubr.f32.mxu0 0.0
  %303 = vmatmul.mubr.f32.gmra.mrb[0].mxu0 %v213
  %v304 = vpop.f32.mrb[0].mxu0
  %v305 = vadd.f32 %v198, %v304
  %v306 = vpop.f32.mrb[0].mxu0
  %307 = vmatprep.mubr.f32.mxu0 0.0
  %308 = vmatmul.mubr.f32.gmra.mrb[0].mxu0 %v216
  %v309 = vpop.f32.mrb[0].mxu0
  %v310 = vadd.f32 %v198, %v309
  %v311 = vpop.f32.mrb[0].mxu0
  %312 = vdwg.mxu0
  %v313 = vld [vmem:[%s6] sm:$0xff]
  %v314 = vld [vmem:[%s6 + $0x8] sm:$0xff]
  %v315 = vld [vmem:[%s6 + $0x10] sm:$0xff]
  %v316 = vld [vmem:[%s6 + $0x18] sm:$0xff]
  %v317 = vld [vmem:[%s7] sm:$0x1]
  %v319 = vlaneseq
  %v320 = vshrl.u32 %v319, 7
  %v321 = vsub.s32 0, %v320
  %v322 = vrot.slane %v317, %v321
  %324 = vmatprep.subr.mxu0 0.0
  %325 = vmatpush1.msra.mxu0 %v313
  %326 = vmatprep.subr.mxu0 0.0
  %327 = vmatpush1.msra.mxu0 %v314
  %328 = vmatprep.subr.mxu0 0.0
  %329 = vmatpush1.msra.mxu0 %v315
  %330 = vmatprep.subr.mxu0 0.0
  %331 = vmatpush1.msra.mxu0 %v316
  %332 = vmatprep.subr.mxu0 0.0
  %333 = vmatpush1.msra.mxu0 0.0
  %334 = vmatprep.subr.mxu0 0.0
  %335 = vmatpush1.msra.mxu0 0.0
  %336 = vmatprep.subr.mxu0 0.0
  %337 = vmatpush1.msra.mxu0 0.0
  %338 = vmatprep.subr.mxu0 0.0
  %339 = vmatpush1.msra.mxu0 0.0
  %340 = vmatprep.subr.mxu0 0.0
  %341 = vmatpush1.msra.mxu0 0.0
  %342 = vmatprep.subr.mxu0 0.0
  %343 = vmatpush1.msra.mxu0 0.0
  %344 = vmatprep.subr.mxu0 0.0
  %345 = vmatpush1.msra.mxu0 0.0
  %346 = vmatprep.subr.mxu0 0.0
  %347 = vmatpush1.msra.mxu0 0.0
  %348 = vmatprep.subr.mxu0 0.0
  %349 = vmatpush1.msra.mxu0 0.0
  %350 = vmatprep.subr.mxu0 0.0
  %351 = vmatpush1.msra.mxu0 0.0
  %352 = vmatprep.subr.mxu0 0.0
  %353 = vmatpush1.msra.mxu0 0.0
  %354 = vmatprep.subr.mxu0 0.0
  %355 = vmatpush1.msra.mxu0 0.0
  %356 = vmatprep.subr.mxu0 0.0
  %357 = vmatpush1.msra.mxu0 0.0
  %358 = vmatprep.subr.mxu0 0.0
  %359 = vmatpush1.msra.mxu0 0.0
  %360 = vmatprep.subr.mxu0 0.0
  %361 = vmatpush1.msra.mxu0 0.0
  %362 = vmatprep.subr.mxu0 0.0
  %363 = vmatpush1.msra.mxu0 0.0
  %364 = vmatprep.subr.mxu0 0.0
  %365 = vmatpush1.msra.mxu0 0.0
  %366 = vmatprep.subr.mxu0 0.0
  %367 = vmatpush1.msra.mxu0 0.0
  %368 = vmatprep.subr.mxu0 0.0
  %369 = vmatpush1.msra.mxu0 0.0
  %370 = vmatprep.subr.mxu0 0.0
  %371 = vmatpush1.msra.mxu0 0.0
  %372 = vmatprep.subr.mxu0 0.0
  %373 = vmatpush1.msra.mxu0 0.0
  %374 = vmatprep.subr.mxu0 0.0
  %375 = vmatpush1.msra.mxu0 0.0
  %376 = vmatprep.subr.mxu0 0.0
  %377 = vmatpush1.msra.mxu0 0.0
  %378 = vmatprep.subr.mxu0 0.0
  %379 = vmatpush1.msra.mxu0 0.0
  %380 = vmatprep.subr.mxu0 0.0
  %381 = vmatpush1.msra.mxu0 0.0
  %382 = vmatprep.subr.mxu0 0.0
  %383 = vmatpush1.msra.mxu0 0.0
  %384 = vmatprep.subr.mxu0 0.0
  %385 = vmatpush1.msra.mxu0 0.0
  %386 = vmatprep.subr.mxu0 0.0
  %387 = vmatpush1.msra.mxu0 0.0
  %388 = vmatprep.mubr.f32.mxu0 0.0
  %389 = vmatmul.mubr.f32.gmra.mrb[0].mxu0 %v201
  %v390 = vpop.f32.mrb[0].mxu0
  %v391 = vadd.f32 %v322, %v390
  %v392 = vpop.f32.mrb[0].mxu0
  %393 = vmatprep.mubr.f32.mxu0 0.0
  %394 = vmatmul.mubr.f32.gmra.mrb[0].mxu0 %v204
  %v395 = vpop.f32.mrb[0].mxu0
  %v396 = vadd.f32 %v322, %v395
  %v397 = vpop.f32.mrb[0].mxu0
  %398 = vmatprep.mubr.f32.mxu0 0.0
  %399 = vmatmul.mubr.f32.gmra.mrb[0].mxu0 %v207
  %v400 = vpop.f32.mrb[0].mxu0
  %v401 = vadd.f32 %v322, %v400
  %v402 = vpop.f32.mrb[0].mxu0
  %403 = vmatprep.mubr.f32.mxu0 0.0
  %404 = vmatmul.mubr.f32.gmra.mrb[0].mxu0 %v210
  %v405 = vpop.f32.mrb[0].mxu0
  %v406 = vadd.f32 %v322, %v405
  %v407 = vpop.f32.mrb[0].mxu0
  %408 = vmatprep.mubr.f32.mxu0 0.0
  %409 = vmatmul.mubr.f32.gmra.mrb[0].mxu0 %v213
  %v410 = vpop.f32.mrb[0].mxu0
  %v411 = vadd.f32 %v322, %v410
  %v412 = vpop.f32.mrb[0].mxu0
  %413 = vmatprep.mubr.f32.mxu0 0.0
  %414 = vmatmul.mubr.f32.gmra.mrb[0].mxu0 %v216
  %v415 = vpop.f32.mrb[0].mxu0
  %v416 = vadd.f32 %v322, %v415
  %v417 = vpop.f32.mrb[0].mxu0
  %418 = vdwg.mxu0
  %v419 = vld [vmem:[%s8] sm:$0xff]
  %v420 = vld [vmem:[%s8 + $0x8] sm:$0xff]
  %v421 = vld [vmem:[%s8 + $0x10] sm:$0xff]
  %v422 = vld [vmem:[%s8 + $0x18] sm:$0xff]
  %v423 = vld [vmem:[%s9] sm:$0x1]
  %v425 = vlaneseq
  %v426 = vshrl.u32 %v425, 7
  %v427 = vsub.s32 0, %v426
  %v428 = vrot.slane %v423, %v427
  %430 = vmatprep.subr.mxu0 0.0
  %431 = vmatpush1.msra.mxu0 %v419
  %432 = vmatprep.subr.mxu0 0.0
  %433 = vmatpush1.msra.mxu0 %v420
  %434 = vmatprep.subr.mxu0 0.0
  %435 = vmatpush1.msra.mxu0 %v421
  %436 = vmatprep.subr.mxu0 0.0
  %437 = vmatpush1.msra.mxu0 %v422
  %438 = vmatprep.subr.mxu0 0.0
  %439 = vmatpush1.msra.mxu0 0.0
  %440 = vmatprep.subr.mxu0 0.0
  %441 = vmatpush1.msra.mxu0 0.0
  %442 = vmatprep.subr.mxu0 0.0
  %443 = vmatpush1.msra.mxu0 0.0
  %444 = vmatprep.subr.mxu0 0.0
  %445 = vmatpush1.msra.mxu0 0.0
  %446 = vmatprep.subr.mxu0 0.0
  %447 = vmatpush1.msra.mxu0 0.0
  %448 = vmatprep.subr.mxu0 0.0
  %449 = vmatpush1.msra.mxu0 0.0
  %450 = vmatprep.subr.mxu0 0.0
  %451 = vmatpush1.msra.mxu0 0.0
  %452 = vmatprep.subr.mxu0 0.0
  %453 = vmatpush1.msra.mxu0 0.0
  %454 = vmatprep.subr.mxu0 0.0
  %455 = vmatpush1.msra.mxu0 0.0
  %456 = vmatprep.subr.mxu0 0.0
  %457 = vmatpush1.msra.mxu0 0.0
  %458 = vmatprep.subr.mxu0 0.0
  %459 = vmatpush1.msra.mxu0 0.0
  %460 = vmatprep.subr.mxu0 0.0
  %461 = vmatpush1.msra.mxu0 0.0
  %462 = vmatprep.subr.mxu0 0.0
  %463 = vmatpush1.msra.mxu0 0.0
  %464 = vmatprep.subr.mxu0 0.0
  %465 = vmatpush1.msra.mxu0 0.0
  %466 = vmatprep.subr.mxu0 0.0
  %467 = vmatpush1.msra.mxu0 0.0
  %468 = vmatprep.subr.mxu0 0.0
  %469 = vmatpush1.msra.mxu0 0.0
  %470 = vmatprep.subr.mxu0 0.0
  %471 = vmatpush1.msra.mxu0 0.0
  %472 = vmatprep.subr.mxu0 0.0
  %473 = vmatpush1.msra.mxu0 0.0
  %474 = vmatprep.subr.mxu0 0.0
  %475 = vmatpush1.msra.mxu0 0.0
  %476 = vmatprep.subr.mxu0 0.0
  %477 = vmatpush1.msra.mxu0 0.0
  %478 = vmatprep.subr.mxu0 0.0
  %479 = vmatpush1.msra.mxu0 0.0
  %480 = vmatprep.subr.mxu0 0.0
  %481 = vmatpush1.msra.mxu0 0.0
  %482 = vmatprep.subr.mxu0 0.0
  %483 = vmatpush1.msra.mxu0 0.0
  %484 = vmatprep.subr.mxu0 0.0
  %485 = vmatpush1.msra.mxu0 0.0
  %486 = vmatprep.subr.mxu0 0.0
  %487 = vmatpush1.msra.mxu0 0.0
  %488 = vmatprep.subr.mxu0 0.0
  %489 = vmatpush1.msra.mxu0 0.0
  %490 = vmatprep.subr.mxu0 0.0
  %491 = vmatpush1.msra.mxu0 0.0
  %492 = vmatprep.subr.mxu0 0.0
  %493 = vmatpush1.msra.mxu0 0.0
  %494 = vmatprep.mubr.f32.mxu0 0.0
  %495 = vmatmul.mubr.f32.gmra.mrb[0].mxu0 %v201
  %v496 = vpop.f32.mrb[0].mxu0
  %v497 = vadd.f32 %v428, %v496
  %v498 = vpop.f32.mrb[0].mxu0
  %499 = vmatprep.mubr.f32.mxu0 0.0
  %500 = vmatmul.mubr.f32.gmra.mrb[0].mxu0 %v204
  %v501 = vpop.f32.mrb[0].mxu0
  %v502 = vadd.f32 %v428, %v501
  %v503 = vpop.f32.mrb[0].mxu0
  %504 = vmatprep.mubr.f32.mxu0 0.0
  %505 = vmatmul.mubr.f32.gmra.mrb[0].mxu0 %v207
  %v506 = vpop.f32.mrb[0].mxu0
  %v507 = vadd.f32 %v428, %v506
  %v508 = vpop.f32.mrb[0].mxu0
  %509 = vmatprep.mubr.f32.mxu0 0.0
  %510 = vmatmul.mubr.f32.gmra.mrb[0].mxu0 %v210
  %v511 = vpop.f32.mrb[0].mxu0
  %v512 = vadd.f32 %v428, %v511
  %v513 = vpop.f32.mrb[0].mxu0
  %514 = vmatprep.mubr.f32.mxu0 0.0
  %515 = vmatmul.mubr.f32.gmra.mrb[0].mxu0 %v213
  %v516 = vpop.f32.mrb[0].mxu0
  %v517 = vadd.f32 %v428, %v516
  %v518 = vpop.f32.mrb[0].mxu0
  %519 = vmatprep.mubr.f32.mxu0 0.0
  %520 = vmatmul.mubr.f32.gmra.mrb[0].mxu0 %v216
  %v521 = vpop.f32.mrb[0].mxu0
  %v522 = vadd.f32 %v428, %v521
  %v523 = vpop.f32.mrb[0].mxu0
  %524 = vdwg.mxu0
  %vm525 = vcmask 64512
  %v527 = vsel %vm525, %v285, 0
  %v530 = vsel %vm525, %v290, 0
  %v533 = vsel %vm525, %v295, 0
  %v536 = vsel %vm525, %v300, 0
  %v539 = vsel %vm525, %v305, 0
  %v542 = vsel %vm525, %v310, 0
  %v545 = vsel %vm525, %v391, 0
  %v548 = vsel %vm525, %v396, 0
  %v551 = vsel %vm525, %v401, 0
  %v554 = vsel %vm525, %v406, 0
  %v557 = vsel %vm525, %v411, 0
  %v560 = vsel %vm525, %v416, 0
  %562 = vmatprep.subr.mxu0 0.0
  %563 = vmatpush1.xpose.msra.mxu0 %v545
  %564 = vmatprep.subr.mxu0 0.0
  %565 = vmatpush1.xpose.msra.mxu0 %v548
  %566 = vmatprep.subr.mxu0 0.0
  %567 = vmatpush1.xpose.msra.mxu0 %v551
  %568 = vmatprep.subr.mxu0 0.0
  %569 = vmatpush1.xpose.msra.mxu0 %v554
  %570 = vmatprep.subr.mxu0 0.0
  %571 = vmatpush1.xpose.msra.mxu0 %v557
  %572 = vmatprep.subr.mxu0 0.0
  %573 = vmatpush1.xpose.msra.mxu0 %v560
  %574 = vmatprep.subr.mxu0 0.0
  %575 = vmatpush1.xpose.msra.mxu0 0.0
  %576 = vmatprep.subr.mxu0 0.0
  %577 = vmatpush1.xpose.msra.mxu0 0.0
  %578 = vmatprep.subr.mxu0 0.0
  %579 = vmatpush1.xpose.msra.mxu0 0.0
  %580 = vmatprep.subr.mxu0 0.0
  %581 = vmatpush1.xpose.msra.mxu0 0.0
  %582 = vmatprep.subr.mxu0 0.0
  %583 = vmatpush1.xpose.msra.mxu0 0.0
  %584 = vmatprep.subr.mxu0 0.0
  %585 = vmatpush1.xpose.msra.mxu0 0.0
  %586 = vmatprep.subr.mxu0 0.0
  %587 = vmatpush1.xpose.msra.mxu0 0.0
  %588 = vmatprep.subr.mxu0 0.0
  %589 = vmatpush1.xpose.msra.mxu0 0.0
  %590 = vmatprep.subr.mxu0 0.0
  %591 = vmatpush1.xpose.msra.mxu0 0.0
  %592 = vmatprep.subr.mxu0 0.0
  %593 = vmatpush1.xpose.msra.mxu0 0.0
  %594 = vmatprep.subr.mxu0 0.0
  %595 = vmatpush1.xpose.msra.mxu0 0.0
  %596 = vmatprep.subr.mxu0 0.0
  %597 = vmatpush1.xpose.msra.mxu0 0.0
  %598 = vmatprep.subr.mxu0 0.0
  %599 = vmatpush1.xpose.msra.mxu0 0.0
  %600 = vmatprep.subr.mxu0 0.0
  %601 = vmatpush1.xpose.msra.mxu0 0.0
  %602 = vmatprep.subr.mxu0 0.0
  %603 = vmatpush1.xpose.msra.mxu0 0.0
  %604 = vmatprep.subr.mxu0 0.0
  %605 = vmatpush1.xpose.msra.mxu0 0.0
  %606 = vmatprep.subr.mxu0 0.0
  %607 = vmatpush1.xpose.msra.mxu0 0.0
  %608 = vmatprep.subr.mxu0 0.0
  %609 = vmatpush1.xpose.msra.mxu0 0.0
  %610 = vmatprep.subr.mxu0 0.0
  %611 = vmatpush1.xpose.msra.mxu0 0.0
  %612 = vmatprep.subr.mxu0 0.0
  %613 = vmatpush1.xpose.msra.mxu0 0.0
  %614 = vmatprep.subr.mxu0 0.0
  %615 = vmatpush1.xpose.msra.mxu0 0.0
  %616 = vmatprep.subr.mxu0 0.0
  %617 = vmatpush1.xpose.msra.mxu0 0.0
  %618 = vmatprep.subr.mxu0 0.0
  %619 = vmatpush1.xpose.msra.mxu0 0.0
  %620 = vmatprep.subr.mxu0 0.0
  %621 = vmatpush1.xpose.msra.mxu0 0.0
  %622 = vmatprep.subr.mxu0 0.0
  %623 = vmatpush1.xpose.msra.mxu0 0.0
  %624 = vmatprep.subr.mxu0 0.0
  %625 = vmatpush1.xpose.msra.mxu0 0.0
  %626 = vmatprep.mubr.f32.mxu0 0.0
  %627 = vmatmul.mubr.f32.gmra.mrb[0].mxu0 %v527
  %v628 = vpop.f32.mrb[0].mxu0
  %v629 = vadd.f32 0.0, %v628
  %v630 = vpop.f32.mrb[0].mxu0
  %631 = vmatprep.mubr.f32.mxu0 0.0
  %632 = vmatmul.mubr.f32.gmra.mrb[0].mxu0 %v530
  %v633 = vpop.f32.mrb[0].mxu0
  %v634 = vadd.f32 0.0, %v633
  %v635 = vpop.f32.mrb[0].mxu0
  %636 = vmatprep.mubr.f32.mxu0 0.0
  %637 = vmatmul.mubr.f32.gmra.mrb[0].mxu0 %v533
  %v638 = vpop.f32.mrb[0].mxu0
  %v639 = vadd.f32 0.0, %v638
  %v640 = vpop.f32.mrb[0].mxu0
  %641 = vmatprep.mubr.f32.mxu0 0.0
  %642 = vmatmul.mubr.f32.gmra.mrb[0].mxu0 %v536
  %v643 = vpop.f32.mrb[0].mxu0
  %v644 = vadd.f32 0.0, %v643
  %v645 = vpop.f32.mrb[0].mxu0
  %646 = vmatprep.mubr.f32.mxu0 0.0
  %647 = vmatmul.mubr.f32.gmra.mrb[0].mxu0 %v539
  %v648 = vpop.f32.mrb[0].mxu0
  %v649 = vadd.f32 0.0, %v648
  %v650 = vpop.f32.mrb[0].mxu0
  %651 = vmatprep.mubr.f32.mxu0 0.0
  %652 = vmatmul.mubr.f32.gmra.mrb[0].mxu0 %v542
  %v653 = vpop.f32.mrb[0].mxu0
  %v654 = vadd.f32 0.0, %v653
  %v655 = vpop.f32.mrb[0].mxu0
  %656 = vdwg.mxu0
  %v657 = vmul.f32 %v629, 0.35355338
  %v658 = vmul.f32 %v634, 0.35355338
  %v659 = vmul.f32 %v639, 0.35355338
  %v660 = vmul.f32 %v644, 0.35355338
  %v661 = vmul.f32 %v649, 0.35355338
  %v662 = vmul.f32 %v654, 0.35355338
  %v663 = vadd.f32 %v657, %v183
  %v664 = vadd.f32 %v658, %v184
  %v665 = vadd.f32 %v659, %v185
  %v666 = vadd.f32 %v660, %v186
  %v667 = vadd.f32 %v661, %v187
  %v668 = vadd.f32 %v662, %v188
  %vm669 = vcmask 392192
  %v670 = vsel %vm669, %v663, -inf
  %671 = vmax.xlane.f32.xlu0 %v670
  %v672 = vpop.xlane.xlu0 %671
  %v673 = vsel %vm669, %v664, -inf
  %674 = vmax.xlane.f32.xlu0 %v673
  %v675 = vpop.xlane.xlu0 %674
  %v676 = vsel %vm669, %v665, -inf
  %677 = vmax.xlane.f32.xlu0 %v676
  %v678 = vpop.xlane.xlu0 %677
  %v679 = vsel %vm669, %v666, -inf
  %680 = vmax.xlane.f32.xlu0 %v679
  %v681 = vpop.xlane.xlu0 %680
  %v682 = vsel %vm669, %v667, -inf
  %683 = vmax.xlane.f32.xlu0 %v682
  %v684 = vpop.xlane.xlu0 %683
  %v685 = vsel %vm669, %v668, -inf
  %686 = vmax.xlane.f32.xlu0 %v685
  %v687 = vpop.xlane.xlu0 %686
  %v688 = vsub.f32 %v663, %v672
  %v689 = vsub.f32 %v664, %v675
  %v690 = vsub.f32 %v665, %v678
  %v691 = vsub.f32 %v666, %v681
  %v692 = vsub.f32 %v667, %v684
  %v693 = vsub.f32 %v668, %v687
  %v694 = vmul.f32 %v688, 1.442695
  %v695 = vpow.pop %v694
  %v696 = vmul.f32 %v689, 1.442695
  %v697 = vpow.pop %v696
  %v698 = vmul.f32 %v690, 1.442695
  %v699 = vpow.pop %v698
  %v700 = vmul.f32 %v691, 1.442695
  %v701 = vpow.pop %v700
  %v702 = vmul.f32 %v692, 1.442695
  %v703 = vpow.pop %v702
  %v704 = vmul.f32 %v693, 1.442695
  %v705 = vpow.pop %v704
  %v706 = vsel %vm669, %v695, 0.0
  %707 = vadd.xlane.f32.xlu0 %v706
  %v708 = vpop.xlane.xlu0 %707
  %v709 = vsel %vm669, %v697, 0.0
  %710 = vadd.xlane.f32.xlu0 %v709
  %v711 = vpop.xlane.xlu0 %710
  %v712 = vsel %vm669, %v699, 0.0
  %713 = vadd.xlane.f32.xlu0 %v712
  %v714 = vpop.xlane.xlu0 %713
  %v715 = vsel %vm669, %v701, 0.0
  %716 = vadd.xlane.f32.xlu0 %v715
  %v717 = vpop.xlane.xlu0 %716
  %v718 = vsel %vm669, %v703, 0.0
  %719 = vadd.xlane.f32.xlu0 %v718
  %v720 = vpop.xlane.xlu0 %719
  %v721 = vsel %vm669, %v705, 0.0
  %722 = vadd.xlane.f32.xlu0 %v721
  %v723 = vpop.xlane.xlu0 %722
  %v724 = vrcp.pop %v708
  %v725 = vrcp.pop %v711
  %v726 = vrcp.pop %v714
  %v727 = vrcp.pop %v717
  %v728 = vrcp.pop %v720
  %v729 = vrcp.pop %v723
  %v730 = vmul.f32 %v695, %v724
  %v731 = vmul.f32 %v697, %v725
  %v732 = vmul.f32 %v699, %v726
  %v733 = vmul.f32 %v701, %v727
  %v734 = vmul.f32 %v703, %v728
  %v735 = vmul.f32 %v705, %v729
  %v737 = vsel %vm669, %v730, 0
  %v740 = vsel %vm669, %v731, 0
  %v743 = vsel %vm669, %v732, 0
  %v746 = vsel %vm669, %v733, 0
  %v749 = vsel %vm669, %v734, 0
  %v752 = vsel %vm669, %v735, 0
  %754 = vmatprep.subr.mxu0 0.0
  %755 = vmatpush1.msra.mxu0 %v497
  %756 = vmatprep.subr.mxu0 0.0
  %757 = vmatpush1.msra.mxu0 %v502
  %758 = vmatprep.subr.mxu0 0.0
  %759 = vmatpush1.msra.mxu0 %v507
  %760 = vmatprep.subr.mxu0 0.0
  %761 = vmatpush1.msra.mxu0 %v512
  %762 = vmatprep.subr.mxu0 0.0
  %763 = vmatpush1.msra.mxu0 %v517
  %764 = vmatprep.subr.mxu0 0.0
  %765 = vmatpush1.msra.mxu0 %v522
  %766 = vmatprep.subr.mxu0 0.0
  %767 = vmatpush1.msra.mxu0 0.0
  %768 = vmatprep.subr.mxu0 0.0
  %769 = vmatpush1.msra.mxu0 0.0
  %770 = vmatprep.subr.mxu0 0.0
  %771 = vmatpush1.msra.mxu0 0.0
  %772 = vmatprep.subr.mxu0 0.0
  %773 = vmatpush1.msra.mxu0 0.0
  %774 = vmatprep.subr.mxu0 0.0
  %775 = vmatpush1.msra.mxu0 0.0
  %776 = vmatprep.subr.mxu0 0.0
  %777 = vmatpush1.msra.mxu0 0.0
  %778 = vmatprep.subr.mxu0 0.0
  %779 = vmatpush1.msra.mxu0 0.0
  %780 = vmatprep.subr.mxu0 0.0
  %781 = vmatpush1.msra.mxu0 0.0
  %782 = vmatprep.subr.mxu0 0.0
  %783 = vmatpush1.msra.mxu0 0.0
  %784 = vmatprep.subr.mxu0 0.0
  %785 = vmatpush1.msra.mxu0 0.0
  %786 = vmatprep.subr.mxu0 0.0
  %787 = vmatpush1.msra.mxu0 0.0
  %788 = vmatprep.subr.mxu0 0.0
  %789 = vmatpush1.msra.mxu0 0.0
  %790 = vmatprep.subr.mxu0 0.0
  %791 = vmatpush1.msra.mxu0 0.0
  %792 = vmatprep.subr.mxu0 0.0
  %793 = vmatpush1.msra.mxu0 0.0
  %794 = vmatprep.subr.mxu0 0.0
  %795 = vmatpush1.msra.mxu0 0.0
  %796 = vmatprep.subr.mxu0 0.0
  %797 = vmatpush1.msra.mxu0 0.0
  %798 = vmatprep.subr.mxu0 0.0
  %799 = vmatpush1.msra.mxu0 0.0
  %800 = vmatprep.subr.mxu0 0.0
  %801 = vmatpush1.msra.mxu0 0.0
  %802 = vmatprep.subr.mxu0 0.0
  %803 = vmatpush1.msra.mxu0 0.0
  %804 = vmatprep.subr.mxu0 0.0
  %805 = vmatpush1.msra.mxu0 0.0
  %806 = vmatprep.subr.mxu0 0.0
  %807 = vmatpush1.msra.mxu0 0.0
  %808 = vmatprep.subr.mxu0 0.0
  %809 = vmatpush1.msra.mxu0 0.0
  %810 = vmatprep.subr.mxu0 0.0
  %811 = vmatpush1.msra.mxu0 0.0
  %812 = vmatprep.subr.mxu0 0.0
  %813 = vmatpush1.msra.mxu0 0.0
  %814 = vmatprep.subr.mxu0 0.0
  %815 = vmatpush1.msra.mxu0 0.0
  %816 = vmatprep.subr.mxu0 0.0
  %817 = vmatpush1.msra.mxu0 0.0
  %818 = vmatprep.mubr.f32.mxu0 0.0
  %819 = vmatmul.mubr.f32.gmra.mrb[0].mxu0 %v737
  %v820 = vpop.f32.mrb[0].mxu0
  %v821 = vadd.f32 0.0, %v820
  %v822 = vpop.f32.mrb[0].mxu0
  %823 = vmatprep.mubr.f32.mxu0 0.0
  %824 = vmatmul.mubr.f32.gmra.mrb[0].mxu0 %v740
  %v825 = vpop.f32.mrb[0].mxu0
  %v826 = vadd.f32 0.0, %v825
  %v827 = vpop.f32.mrb[0].mxu0
  %828 = vmatprep.mubr.f32.mxu0 0.0
  %829 = vmatmul.mubr.f32.gmra.mrb[0].mxu0 %v743
  %v830 = vpop.f32.mrb[0].mxu0
  %v831 = vadd.f32 0.0, %v830
  %v832 = vpop.f32.mrb[0].mxu0
  %833 = vmatprep.mubr.f32.mxu0 0.0
  %834 = vmatmul.mubr.f32.gmra.mrb[0].mxu0 %v746
  %v835 = vpop.f32.mrb[0].mxu0
  %v836 = vadd.f32 0.0, %v835
  %v837 = vpop.f32.mrb[0].mxu0
  %838 = vmatprep.mubr.f32.mxu0 0.0
  %839 = vmatmul.mubr.f32.gmra.mrb[0].mxu0 %v749
  %v840 = vpop.f32.mrb[0].mxu0
  %v841 = vadd.f32 0.0, %v840
  %v842 = vpop.f32.mrb[0].mxu0
  %843 = vmatprep.mubr.f32.mxu0 0.0
  %844 = vmatmul.mubr.f32.gmra.mrb[0].mxu0 %v752
  %v845 = vpop.f32.mrb[0].mxu0
  %v846 = vadd.f32 0.0, %v845
  %v847 = vpop.f32.mrb[0].mxu0
  %848 = vdwg.mxu0
  %v849 = vld [vmem:[%s10] sm:$0xff]
  %s850 = scalar_lea.vmem %s4, 32
  %v851 = vld [vmem:[%s850] sm:$0xff]
  %v852 = vld [vmem:[%s850 + $0x8] sm:$0xff]
  %v853 = vld [vmem:[%s850 + $0x10] sm:$0xff]
  %v854 = vld [vmem:[%s850 + $0x18] sm:$0xff]
  %s855 = scalar_lea.vmem %s5, 1
  %v856 = vld [vmem:[%s855] sm:$0x1]
  %v858 = vlaneseq
  %v859 = vshrl.u32 %v858, 7
  %v860 = vsub.s32 0, %v859
  %v861 = vrot.slane %v856, %v860
  %863 = vmatprep.subr.mxu0 0.0
  %864 = vmatpush1.msra.mxu0 %v851
  %865 = vmatprep.subr.mxu0 0.0
  %866 = vmatpush1.msra.mxu0 %v852
  %867 = vmatprep.subr.mxu0 0.0
  %868 = vmatpush1.msra.mxu0 %v853
  %869 = vmatprep.subr.mxu0 0.0
  %870 = vmatpush1.msra.mxu0 %v854
  %871 = vmatprep.subr.mxu0 0.0
  %872 = vmatpush1.msra.mxu0 0.0
  %873 = vmatprep.subr.mxu0 0.0
  %874 = vmatpush1.msra.mxu0 0.0
  %875 = vmatprep.subr.mxu0 0.0
  %876 = vmatpush1.msra.mxu0 0.0
  %877 = vmatprep.subr.mxu0 0.0
  %878 = vmatpush1.msra.mxu0 0.0
  %879 = vmatprep.subr.mxu0 0.0
  %880 = vmatpush1.msra.mxu0 0.0
  %881 = vmatprep.subr.mxu0 0.0
  %882 = vmatpush1.msra.mxu0 0.0
  %883 = vmatprep.subr.mxu0 0.0
  %884 = vmatpush1.msra.mxu0 0.0
  %885 = vmatprep.subr.mxu0 0.0
  %886 = vmatpush1.msra.mxu0 0.0
  %887 = vmatprep.subr.mxu0 0.0
  %888 = vmatpush1.msra.mxu0 0.0
  %889 = vmatprep.subr.mxu0 0.0
  %890 = vmatpush1.msra.mxu0 0.0
  %891 = vmatprep.subr.mxu0 0.0
  %892 = vmatpush1.msra.mxu0 0.0
  %893 = vmatprep.subr.mxu0 0.0
  %894 = vmatpush1.msra.mxu0 0.0
  %895 = vmatprep.subr.mxu0 0.0
  %896 = vmatpush1.msra.mxu0 0.0
  %897 = vmatprep.subr.mxu0 0.0
  %898 = vmatpush1.msra.mxu0 0.0
  %899 = vmatprep.subr.mxu0 0.0
  %900 = vmatpush1.msra.mxu0 0.0
  %901 = vmatprep.subr.mxu0 0.0
  %902 = vmatpush1.msra.mxu0 0.0
  %903 = vmatprep.subr.mxu0 0.0
  %904 = vmatpush1.msra.mxu0 0.0
  %905 = vmatprep.subr.mxu0 0.0
  %906 = vmatpush1.msra.mxu0 0.0
  %907 = vmatprep.subr.mxu0 0.0
  %908 = vmatpush1.msra.mxu0 0.0
  %909 = vmatprep.subr.mxu0 0.0
  %910 = vmatpush1.msra.mxu0 0.0
  %911 = vmatprep.subr.mxu0 0.0
  %912 = vmatpush1.msra.mxu0 0.0
  %913 = vmatprep.subr.mxu0 0.0
  %914 = vmatpush1.msra.mxu0 0.0
  %915 = vmatprep.subr.mxu0 0.0
  %916 = vmatpush1.msra.mxu0 0.0
  %917 = vmatprep.subr.mxu0 0.0
  %918 = vmatpush1.msra.mxu0 0.0
  %919 = vmatprep.subr.mxu0 0.0
  %920 = vmatpush1.msra.mxu0 0.0
  %921 = vmatprep.subr.mxu0 0.0
  %922 = vmatpush1.msra.mxu0 0.0
  %923 = vmatprep.subr.mxu0 0.0
  %924 = vmatpush1.msra.mxu0 0.0
  %925 = vmatprep.subr.mxu0 0.0
  %926 = vmatpush1.msra.mxu0 0.0
  %927 = vmatprep.mubr.f32.mxu0 0.0
  %928 = vmatmul.mubr.f32.gmra.mrb[0].mxu0 %v201
  %v929 = vpop.f32.mrb[0].mxu0
  %v930 = vadd.f32 %v861, %v929
  %v931 = vpop.f32.mrb[0].mxu0
  %932 = vmatprep.mubr.f32.mxu0 0.0
  %933 = vmatmul.mubr.f32.gmra.mrb[0].mxu0 %v204
  %v934 = vpop.f32.mrb[0].mxu0
  %v935 = vadd.f32 %v861, %v934
  %v936 = vpop.f32.mrb[0].mxu0
  %937 = vmatprep.mubr.f32.mxu0 0.0
  %938 = vmatmul.mubr.f32.gmra.mrb[0].mxu0 %v207
  %v939 = vpop.f32.mrb[0].mxu0
  %v940 = vadd.f32 %v861, %v939
  %v941 = vpop.f32.mrb[0].mxu0
  %942 = vmatprep.mubr.f32.mxu0 0.0
  %943 = vmatmul.mubr.f32.gmra.mrb[0].mxu0 %v210
  %v944 = vpop.f32.mrb[0].mxu0
  %v945 = vadd.f32 %v861, %v944
  %v946 = vpop.f32.mrb[0].mxu0
  %947 = vmatprep.mubr.f32.mxu0 0.0
  %948 = vmatmul.mubr.f32.gmra.mrb[0].mxu0 %v213
  %v949 = vpop.f32.mrb[0].mxu0
  %v950 = vadd.f32 %v861, %v949
  %v951 = vpop.f32.mrb[0].mxu0
  %952 = vmatprep.mubr.f32.mxu0 0.0
  %953 = vmatmul.mubr.f32.gmra.mrb[0].mxu0 %v216
  %v954 = vpop.f32.mrb[0].mxu0
  %v955 = vadd.f32 %v861, %v954
  %v956 = vpop.f32.mrb[0].mxu0
  %957 = vdwg.mxu0
  %s958 = scalar_lea.vmem %s6, 32
  %v959 = vld [vmem:[%s958] sm:$0xff]
  %v960 = vld [vmem:[%s958 + $0x8] sm:$0xff]
  %v961 = vld [vmem:[%s958 + $0x10] sm:$0xff]
  %v962 = vld [vmem:[%s958 + $0x18] sm:$0xff]
  %s963 = scalar_lea.vmem %s7, 1
  %v964 = vld [vmem:[%s963] sm:$0x1]
  %v966 = vlaneseq
  %v967 = vshrl.u32 %v966, 7
  %v968 = vsub.s32 0, %v967
  %v969 = vrot.slane %v964, %v968
  %971 = vmatprep.subr.mxu0 0.0
  %972 = vmatpush1.msra.mxu0 %v959
  %973 = vmatprep.subr.mxu0 0.0
  %974 = vmatpush1.msra.mxu0 %v960
  %975 = vmatprep.subr.mxu0 0.0
  %976 = vmatpush1.msra.mxu0 %v961
  %977 = vmatprep.subr.mxu0 0.0
  %978 = vmatpush1.msra.mxu0 %v962
  %979 = vmatprep.subr.mxu0 0.0
  %980 = vmatpush1.msra.mxu0 0.0
  %981 = vmatprep.subr.mxu0 0.0
  %982 = vmatpush1.msra.mxu0 0.0
  %983 = vmatprep.subr.mxu0 0.0
  %984 = vmatpush1.msra.mxu0 0.0
  %985 = vmatprep.subr.mxu0 0.0
  %986 = vmatpush1.msra.mxu0 0.0
  %987 = vmatprep.subr.mxu0 0.0
  %988 = vmatpush1.msra.mxu0 0.0
  %989 = vmatprep.subr.mxu0 0.0
  %990 = vmatpush1.msra.mxu0 0.0
  %991 = vmatprep.subr.mxu0 0.0
  %992 = vmatpush1.msra.mxu0 0.0
  %993 = vmatprep.subr.mxu0 0.0
  %994 = vmatpush1.msra.mxu0 0.0
  %995 = vmatprep.subr.mxu0 0.0
  %996 = vmatpush1.msra.mxu0 0.0
  %997 = vmatprep.subr.mxu0 0.0
  %998 = vmatpush1.msra.mxu0 0.0
  %999 = vmatprep.subr.mxu0 0.0
  %1000 = vmatpush1.msra.mxu0 0.0
  %1001 = vmatprep.subr.mxu0 0.0
  %1002 = vmatpush1.msra.mxu0 0.0
  %1003 = vmatprep.subr.mxu0 0.0
  %1004 = vmatpush1.msra.mxu0 0.0
  %1005 = vmatprep.subr.mxu0 0.0
  %1006 = vmatpush1.msra.mxu0 0.0
  %1007 = vmatprep.subr.mxu0 0.0
  %1008 = vmatpush1.msra.mxu0 0.0
  %1009 = vmatprep.subr.mxu0 0.0
  %1010 = vmatpush1.msra.mxu0 0.0
  %1011 = vmatprep.subr.mxu0 0.0
  %1012 = vmatpush1.msra.mxu0 0.0
  %1013 = vmatprep.subr.mxu0 0.0
  %1014 = vmatpush1.msra.mxu0 0.0
  %1015 = vmatprep.subr.mxu0 0.0
  %1016 = vmatpush1.msra.mxu0 0.0
  %1017 = vmatprep.subr.mxu0 0.0
  %1018 = vmatpush1.msra.mxu0 0.0
  %1019 = vmatprep.subr.mxu0 0.0
  %1020 = vmatpush1.msra.mxu0 0.0
  %1021 = vmatprep.subr.mxu0 0.0
  %1022 = vmatpush1.msra.mxu0 0.0
  %1023 = vmatprep.subr.mxu0 0.0
  %1024 = vmatpush1.msra.mxu0 0.0
  %1025 = vmatprep.subr.mxu0 0.0
  %1026 = vmatpush1.msra.mxu0 0.0
  %1027 = vmatprep.subr.mxu0 0.0
  %1028 = vmatpush1.msra.mxu0 0.0
  %1029 = vmatprep.subr.mxu0 0.0
  %1030 = vmatpush1.msra.mxu0 0.0
  %1031 = vmatprep.subr.mxu0 0.0
  %1032 = vmatpush1.msra.mxu0 0.0
  %1033 = vmatprep.subr.mxu0 0.0
  %1034 = vmatpush1.msra.mxu0 0.0
  %1035 = vmatprep.mubr.f32.mxu0 0.0
  %1036 = vmatmul.mubr.f32.gmra.mrb[0].mxu0 %v201
  %v1037 = vpop.f32.mrb[0].mxu0
  %v1038 = vadd.f32 %v969, %v1037
  %v1039 = vpop.f32.mrb[0].mxu0
  %1040 = vmatprep.mubr.f32.mxu0 0.0
  %1041 = vmatmul.mubr.f32.gmra.mrb[0].mxu0 %v204
  %v1042 = vpop.f32.mrb[0].mxu0
  %v1043 = vadd.f32 %v969, %v1042
  %v1044 = vpop.f32.mrb[0].mxu0
  %1045 = vmatprep.mubr.f32.mxu0 0.0
  %1046 = vmatmul.mubr.f32.gmra.mrb[0].mxu0 %v207
  %v1047 = vpop.f32.mrb[0].mxu0
  %v1048 = vadd.f32 %v969, %v1047
  %v1049 = vpop.f32.mrb[0].mxu0
  %1050 = vmatprep.mubr.f32.mxu0 0.0
  %1051 = vmatmul.mubr.f32.gmra.mrb[0].mxu0 %v210
  %v1052 = vpop.f32.mrb[0].mxu0
  %v1053 = vadd.f32 %v969, %v1052
  %v1054 = vpop.f32.mrb[0].mxu0
  %1055 = vmatprep.mubr.f32.mxu0 0.0
  %1056 = vmatmul.mubr.f32.gmra.mrb[0].mxu0 %v213
  %v1057 = vpop.f32.mrb[0].mxu0
  %v1058 = vadd.f32 %v969, %v1057
  %v1059 = vpop.f32.mrb[0].mxu0
  %1060 = vmatprep.mubr.f32.mxu0 0.0
  %1061 = vmatmul.mubr.f32.gmra.mrb[0].mxu0 %v216
  %v1062 = vpop.f32.mrb[0].mxu0
  %v1063 = vadd.f32 %v969, %v1062
  %v1064 = vpop.f32.mrb[0].mxu0
  %1065 = vdwg.mxu0
  %s1066 = scalar_lea.vmem %s8, 32
  %v1067 = vld [vmem:[%s1066] sm:$0xff]
  %v1068 = vld [vmem:[%s1066 + $0x8] sm:$0xff]
  %v1069 = vld [vmem:[%s1066 + $0x10] sm:$0xff]
  %v1070 = vld [vmem:[%s1066 + $0x18] sm:$0xff]
  %s1071 = scalar_lea.vmem %s9, 1
  %v1072 = vld [vmem:[%s1071] sm:$0x1]
  %v1074 = vlaneseq
  %v1075 = vshrl.u32 %v1074, 7
  %v1076 = vsub.s32 0, %v1075
  %v1077 = vrot.slane %v1072, %v1076
  %1079 = vmatprep.subr.mxu0 0.0
  %1080 = vmatpush1.msra.mxu0 %v1067
  %1081 = vmatprep.subr.mxu0 0.0
  %1082 = vmatpush1.msra.mxu0 %v1068
  %1083 = vmatprep.subr.mxu0 0.0
  %1084 = vmatpush1.msra.mxu0 %v1069
  %1085 = vmatprep.subr.mxu0 0.0
  %1086 = vmatpush1.msra.mxu0 %v1070
  %1087 = vmatprep.subr.mxu0 0.0
  %1088 = vmatpush1.msra.mxu0 0.0
  %1089 = vmatprep.subr.mxu0 0.0
  %1090 = vmatpush1.msra.mxu0 0.0
  %1091 = vmatprep.subr.mxu0 0.0
  %1092 = vmatpush1.msra.mxu0 0.0
  %1093 = vmatprep.subr.mxu0 0.0
  %1094 = vmatpush1.msra.mxu0 0.0
  %1095 = vmatprep.subr.mxu0 0.0
  %1096 = vmatpush1.msra.mxu0 0.0
  %1097 = vmatprep.subr.mxu0 0.0
  %1098 = vmatpush1.msra.mxu0 0.0
  %1099 = vmatprep.subr.mxu0 0.0
  %1100 = vmatpush1.msra.mxu0 0.0
  %1101 = vmatprep.subr.mxu0 0.0
  %1102 = vmatpush1.msra.mxu0 0.0
  %1103 = vmatprep.subr.mxu0 0.0
  %1104 = vmatpush1.msra.mxu0 0.0
  %1105 = vmatprep.subr.mxu0 0.0
  %1106 = vmatpush1.msra.mxu0 0.0
  %1107 = vmatprep.subr.mxu0 0.0
  %1108 = vmatpush1.msra.mxu0 0.0
  %1109 = vmatprep.subr.mxu0 0.0
  %1110 = vmatpush1.msra.mxu0 0.0
  %1111 = vmatprep.subr.mxu0 0.0
  %1112 = vmatpush1.msra.mxu0 0.0
  %1113 = vmatprep.subr.mxu0 0.0
  %1114 = vmatpush1.msra.mxu0 0.0
  %1115 = vmatprep.subr.mxu0 0.0
  %1116 = vmatpush1.msra.mxu0 0.0
  %1117 = vmatprep.subr.mxu0 0.0
  %1118 = vmatpush1.msra.mxu0 0.0
  %1119 = vmatprep.subr.mxu0 0.0
  %1120 = vmatpush1.msra.mxu0 0.0
  %1121 = vmatprep.subr.mxu0 0.0
  %1122 = vmatpush1.msra.mxu0 0.0
  %1123 = vmatprep.subr.mxu0 0.0
  %1124 = vmatpush1.msra.mxu0 0.0
  %1125 = vmatprep.subr.mxu0 0.0
  %1126 = vmatpush1.msra.mxu0 0.0
  %1127 = vmatprep.subr.mxu0 0.0
  %1128 = vmatpush1.msra.mxu0 0.0
  %1129 = vmatprep.subr.mxu0 0.0
  %1130 = vmatpush1.msra.mxu0 0.0
  %1131 = vmatprep.subr.mxu0 0.0
  %1132 = vmatpush1.msra.mxu0 0.0
  %1133 = vmatprep.subr.mxu0 0.0
  %1134 = vmatpush1.msra.mxu0 0.0
  %1135 = vmatprep.subr.mxu0 0.0
  %1136 = vmatpush1.msra.mxu0 0.0
  %1137 = vmatprep.subr.mxu0 0.0
  %1138 = vmatpush1.msra.mxu0 0.0
  %1139 = vmatprep.subr.mxu0 0.0
  %1140 = vmatpush1.msra.mxu0 0.0
  %1141 = vmatprep.subr.mxu0 0.0
  %1142 = vmatpush1.msra.mxu0 0.0
  %1143 = vmatprep.mubr.f32.mxu0 0.0
  %1144 = vmatmul.mubr.f32.gmra.mrb[0].mxu0 %v201
  %v1145 = vpop.f32.mrb[0].mxu0
  %v1146 = vadd.f32 %v1077, %v1145
  %v1147 = vpop.f32.mrb[0].mxu0
  %1148 = vmatprep.mubr.f32.mxu0 0.0
  %1149 = vmatmul.mubr.f32.gmra.mrb[0].mxu0 %v204
  %v1150 = vpop.f32.mrb[0].mxu0
  %v1151 = vadd.f32 %v1077, %v1150
  %v1152 = vpop.f32.mrb[0].mxu0
  %1153 = vmatprep.mubr.f32.mxu0 0.0
  %1154 = vmatmul.mubr.f32.gmra.mrb[0].mxu0 %v207
  %v1155 = vpop.f32.mrb[0].mxu0
  %v1156 = vadd.f32 %v1077, %v1155
  %v1157 = vpop.f32.mrb[0].mxu0
  %1158 = vmatprep.mubr.f32.mxu0 0.0
  %1159 = vmatmul.mubr.f32.gmra.mrb[0].mxu0 %v210
  %v1160 = vpop.f32.mrb[0].mxu0
  %v1161 = vadd.f32 %v1077, %v1160
  %v1162 = vpop.f32.mrb[0].mxu0
  %1163 = vmatprep.mubr.f32.mxu0 0.0
  %1164 = vmatmul.mubr.f32.gmra.mrb[0].mxu0 %v213
  %v1165 = vpop.f32.mrb[0].mxu0
  %v1166 = vadd.f32 %v1077, %v1165
  %v1167 = vpop.f32.mrb[0].mxu0
  %1168 = vmatprep.mubr.f32.mxu0 0.0
  %1169 = vmatmul.mubr.f32.gmra.mrb[0].mxu0 %v216
  %v1170 = vpop.f32.mrb[0].mxu0
  %v1171 = vadd.f32 %v1077, %v1170
  %v1172 = vpop.f32.mrb[0].mxu0
  %1173 = vdwg.mxu0
  %v1175 = vsel %vm525, %v930, 0
  %v1178 = vsel %vm525, %v935, 0
  %v1181 = vsel %vm525, %v940, 0
  %v1184 = vsel %vm525, %v945, 0
  %v1187 = vsel %vm525, %v950, 0
  %v1190 = vsel %vm525, %v955, 0
  %v1193 = vsel %vm525, %v1038, 0
  %v1196 = vsel %vm525, %v1043, 0
  %v1199 = vsel %vm525, %v1048, 0
  %v1202 = vsel %vm525, %v1053, 0
  %v1205 = vsel %vm525, %v1058, 0
  %v1208 = vsel %vm525, %v1063, 0
  %1210 = vmatprep.subr.mxu0 0.0
  %1211 = vmatpush1.xpose.msra.mxu0 %v1193
  %1212 = vmatprep.subr.mxu0 0.0
  %1213 = vmatpush1.xpose.msra.mxu0 %v1196
  %1214 = vmatprep.subr.mxu0 0.0
  %1215 = vmatpush1.xpose.msra.mxu0 %v1199
  %1216 = vmatprep.subr.mxu0 0.0
  %1217 = vmatpush1.xpose.msra.mxu0 %v1202
  %1218 = vmatprep.subr.mxu0 0.0
  %1219 = vmatpush1.xpose.msra.mxu0 %v1205
  %1220 = vmatprep.subr.mxu0 0.0
  %1221 = vmatpush1.xpose.msra.mxu0 %v1208
  %1222 = vmatprep.subr.mxu0 0.0
  %1223 = vmatpush1.xpose.msra.mxu0 0.0
  %1224 = vmatprep.subr.mxu0 0.0
  %1225 = vmatpush1.xpose.msra.mxu0 0.0
  %1226 = vmatprep.subr.mxu0 0.0
  %1227 = vmatpush1.xpose.msra.mxu0 0.0
  %1228 = vmatprep.subr.mxu0 0.0
  %1229 = vmatpush1.xpose.msra.mxu0 0.0
  %1230 = vmatprep.subr.mxu0 0.0
  %1231 = vmatpush1.xpose.msra.mxu0 0.0
  %1232 = vmatprep.subr.mxu0 0.0
  %1233 = vmatpush1.xpose.msra.mxu0 0.0
  %1234 = vmatprep.subr.mxu0 0.0
  %1235 = vmatpush1.xpose.msra.mxu0 0.0
  %1236 = vmatprep.subr.mxu0 0.0
  %1237 = vmatpush1.xpose.msra.mxu0 0.0
  %1238 = vmatprep.subr.mxu0 0.0
  %1239 = vmatpush1.xpose.msra.mxu0 0.0
  %1240 = vmatprep.subr.mxu0 0.0
  %1241 = vmatpush1.xpose.msra.mxu0 0.0
  %1242 = vmatprep.subr.mxu0 0.0
  %1243 = vmatpush1.xpose.msra.mxu0 0.0
  %1244 = vmatprep.subr.mxu0 0.0
  %1245 = vmatpush1.xpose.msra.mxu0 0.0
  %1246 = vmatprep.subr.mxu0 0.0
  %1247 = vmatpush1.xpose.msra.mxu0 0.0
  %1248 = vmatprep.subr.mxu0 0.0
  %1249 = vmatpush1.xpose.msra.mxu0 0.0
  %1250 = vmatprep.subr.mxu0 0.0
  %1251 = vmatpush1.xpose.msra.mxu0 0.0
  %1252 = vmatprep.subr.mxu0 0.0
  %1253 = vmatpush1.xpose.msra.mxu0 0.0
  %1254 = vmatprep.subr.mxu0 0.0
  %1255 = vmatpush1.xpose.msra.mxu0 0.0
  %1256 = vmatprep.subr.mxu0 0.0
  %1257 = vmatpush1.xpose.msra.mxu0 0.0
  %1258 = vmatprep.subr.mxu0 0.0
  %1259 = vmatpush1.xpose.msra.mxu0 0.0
  %1260 = vmatprep.subr.mxu0 0.0
  %1261 = vmatpush1.xpose.msra.mxu0 0.0
  %1262 = vmatprep.subr.mxu0 0.0
  %1263 = vmatpush1.xpose.msra.mxu0 0.0
  %1264 = vmatprep.subr.mxu0 0.0
  %1265 = vmatpush1.xpose.msra.mxu0 0.0
  %1266 = vmatprep.subr.mxu0 0.0
  %1267 = vmatpush1.xpose.msra.mxu0 0.0
  %1268 = vmatprep.subr.mxu0 0.0
  %1269 = vmatpush1.xpose.msra.mxu0 0.0
  %1270 = vmatprep.subr.mxu0 0.0
  %1271 = vmatpush1.xpose.msra.mxu0 0.0
  %1272 = vmatprep.subr.mxu0 0.0
  %1273 = vmatpush1.xpose.msra.mxu0 0.0
  %1274 = vmatprep.mubr.f32.mxu0 0.0
  %1275 = vmatmul.mubr.f32.gmra.mrb[0].mxu0 %v1175
  %v1276 = vpop.f32.mrb[0].mxu0
  %v1277 = vadd.f32 0.0, %v1276
  %v1278 = vpop.f32.mrb[0].mxu0
  %1279 = vmatprep.mubr.f32.mxu0 0.0
  %1280 = vmatmul.mubr.f32.gmra.mrb[0].mxu0 %v1178
  %v1281 = vpop.f32.mrb[0].mxu0
  %v1282 = vadd.f32 0.0, %v1281
  %v1283 = vpop.f32.mrb[0].mxu0
  %1284 = vmatprep.mubr.f32.mxu0 0.0
  %1285 = vmatmul.mubr.f32.gmra.mrb[0].mxu0 %v1181
  %v1286 = vpop.f32.mrb[0].mxu0
  %v1287 = vadd.f32 0.0, %v1286
  %v1288 = vpop.f32.mrb[0].mxu0
  %1289 = vmatprep.mubr.f32.mxu0 0.0
  %1290 = vmatmul.mubr.f32.gmra.mrb[0].mxu0 %v1184
  %v1291 = vpop.f32.mrb[0].mxu0
  %v1292 = vadd.f32 0.0, %v1291
  %v1293 = vpop.f32.mrb[0].mxu0
  %1294 = vmatprep.mubr.f32.mxu0 0.0
  %1295 = vmatmul.mubr.f32.gmra.mrb[0].mxu0 %v1187
  %v1296 = vpop.f32.mrb[0].mxu0
  %v1297 = vadd.f32 0.0, %v1296
  %v1298 = vpop.f32.mrb[0].mxu0
  %1299 = vmatprep.mubr.f32.mxu0 0.0
  %1300 = vmatmul.mubr.f32.gmra.mrb[0].mxu0 %v1190
  %v1301 = vpop.f32.mrb[0].mxu0
  %v1302 = vadd.f32 0.0, %v1301
  %v1303 = vpop.f32.mrb[0].mxu0
  %1304 = vdwg.mxu0
  %v1305 = vmul.f32 %v1277, 0.35355338
  %v1306 = vmul.f32 %v1282, 0.35355338
  %v1307 = vmul.f32 %v1287, 0.35355338
  %v1308 = vmul.f32 %v1292, 0.35355338
  %v1309 = vmul.f32 %v1297, 0.35355338
  %v1310 = vmul.f32 %v1302, 0.35355338
  %v1311 = vadd.f32 %v1305, %v183
  %v1312 = vadd.f32 %v1306, %v184
  %v1313 = vadd.f32 %v1307, %v185
  %v1314 = vadd.f32 %v1308, %v186
  %v1315 = vadd.f32 %v1309, %v187
  %v1316 = vadd.f32 %v1310, %v188
  %v1317 = vsel %vm669, %v1311, -inf
  %1318 = vmax.xlane.f32.xlu0 %v1317
  %v1319 = vpop.xlane.xlu0 %1318
  %v1320 = vsel %vm669, %v1312, -inf
  %1321 = vmax.xlane.f32.xlu0 %v1320
  %v1322 = vpop.xlane.xlu0 %1321
  %v1323 = vsel %vm669, %v1313, -inf
  %1324 = vmax.xlane.f32.xlu0 %v1323
  %v1325 = vpop.xlane.xlu0 %1324
  %v1326 = vsel %vm669, %v1314, -inf
  %1327 = vmax.xlane.f32.xlu0 %v1326
  %v1328 = vpop.xlane.xlu0 %1327
  %v1329 = vsel %vm669, %v1315, -inf
  %1330 = vmax.xlane.f32.xlu0 %v1329
  %v1331 = vpop.xlane.xlu0 %1330
  %v1332 = vsel %vm669, %v1316, -inf
  %1333 = vmax.xlane.f32.xlu0 %v1332
  %v1334 = vpop.xlane.xlu0 %1333
  %v1335 = vsub.f32 %v1311, %v1319
  %v1336 = vsub.f32 %v1312, %v1322
  %v1337 = vsub.f32 %v1313, %v1325
  %v1338 = vsub.f32 %v1314, %v1328
  %v1339 = vsub.f32 %v1315, %v1331
  %v1340 = vsub.f32 %v1316, %v1334
  %v1341 = vmul.f32 %v1335, 1.442695
  %v1342 = vpow.pop %v1341
  %v1343 = vmul.f32 %v1336, 1.442695
  %v1344 = vpow.pop %v1343
  %v1345 = vmul.f32 %v1337, 1.442695
  %v1346 = vpow.pop %v1345
  %v1347 = vmul.f32 %v1338, 1.442695
  %v1348 = vpow.pop %v1347
  %v1349 = vmul.f32 %v1339, 1.442695
  %v1350 = vpow.pop %v1349
  %v1351 = vmul.f32 %v1340, 1.442695
  %v1352 = vpow.pop %v1351
  %v1353 = vsel %vm669, %v1342, 0.0
  %1354 = vadd.xlane.f32.xlu0 %v1353
  %v1355 = vpop.xlane.xlu0 %1354
  %v1356 = vsel %vm669, %v1344, 0.0
  %1357 = vadd.xlane.f32.xlu0 %v1356
  %v1358 = vpop.xlane.xlu0 %1357
  %v1359 = vsel %vm669, %v1346, 0.0
  %1360 = vadd.xlane.f32.xlu0 %v1359
  %v1361 = vpop.xlane.xlu0 %1360
  %v1362 = vsel %vm669, %v1348, 0.0
  %1363 = vadd.xlane.f32.xlu0 %v1362
  %v1364 = vpop.xlane.xlu0 %1363
  %v1365 = vsel %vm669, %v1350, 0.0
  %1366 = vadd.xlane.f32.xlu0 %v1365
  %v1367 = vpop.xlane.xlu0 %1366
  %v1368 = vsel %vm669, %v1352, 0.0
  %1369 = vadd.xlane.f32.xlu0 %v1368
  %v1370 = vpop.xlane.xlu0 %1369
  %v1371 = vrcp.pop %v1355
  %v1372 = vrcp.pop %v1358
  %v1373 = vrcp.pop %v1361
  %v1374 = vrcp.pop %v1364
  %v1375 = vrcp.pop %v1367
  %v1376 = vrcp.pop %v1370
  %v1377 = vmul.f32 %v1342, %v1371
  %v1378 = vmul.f32 %v1344, %v1372
  %v1379 = vmul.f32 %v1346, %v1373
  %v1380 = vmul.f32 %v1348, %v1374
  %v1381 = vmul.f32 %v1350, %v1375
  %v1382 = vmul.f32 %v1352, %v1376
  %v1384 = vsel %vm669, %v1377, 0
  %v1387 = vsel %vm669, %v1378, 0
  %v1390 = vsel %vm669, %v1379, 0
  %v1393 = vsel %vm669, %v1380, 0
  %v1396 = vsel %vm669, %v1381, 0
  %v1399 = vsel %vm669, %v1382, 0
  %1401 = vmatprep.subr.mxu0 0.0
  %1402 = vmatpush1.msra.mxu0 %v1146
  %1403 = vmatprep.subr.mxu0 0.0
  %1404 = vmatpush1.msra.mxu0 %v1151
  %1405 = vmatprep.subr.mxu0 0.0
  %1406 = vmatpush1.msra.mxu0 %v1156
  %1407 = vmatprep.subr.mxu0 0.0
  %1408 = vmatpush1.msra.mxu0 %v1161
  %1409 = vmatprep.subr.mxu0 0.0
  %1410 = vmatpush1.msra.mxu0 %v1166
  %1411 = vmatprep.subr.mxu0 0.0
  %1412 = vmatpush1.msra.mxu0 %v1171
  %1413 = vmatprep.subr.mxu0 0.0
  %1414 = vmatpush1.msra.mxu0 0.0
  %1415 = vmatprep.subr.mxu0 0.0
  %1416 = vmatpush1.msra.mxu0 0.0
  %1417 = vmatprep.subr.mxu0 0.0
  %1418 = vmatpush1.msra.mxu0 0.0
  %1419 = vmatprep.subr.mxu0 0.0
  %1420 = vmatpush1.msra.mxu0 0.0
  %1421 = vmatprep.subr.mxu0 0.0
  %1422 = vmatpush1.msra.mxu0 0.0
  %1423 = vmatprep.subr.mxu0 0.0
  %1424 = vmatpush1.msra.mxu0 0.0
  %1425 = vmatprep.subr.mxu0 0.0
  %1426 = vmatpush1.msra.mxu0 0.0
  %1427 = vmatprep.subr.mxu0 0.0
  %1428 = vmatpush1.msra.mxu0 0.0
  %1429 = vmatprep.subr.mxu0 0.0
  %1430 = vmatpush1.msra.mxu0 0.0
  %1431 = vmatprep.subr.mxu0 0.0
  %1432 = vmatpush1.msra.mxu0 0.0
  %1433 = vmatprep.subr.mxu0 0.0
  %1434 = vmatpush1.msra.mxu0 0.0
  %1435 = vmatprep.subr.mxu0 0.0
  %1436 = vmatpush1.msra.mxu0 0.0
  %1437 = vmatprep.subr.mxu0 0.0
  %1438 = vmatpush1.msra.mxu0 0.0
  %1439 = vmatprep.subr.mxu0 0.0
  %1440 = vmatpush1.msra.mxu0 0.0
  %1441 = vmatprep.subr.mxu0 0.0
  %1442 = vmatpush1.msra.mxu0 0.0
  %1443 = vmatprep.subr.mxu0 0.0
  %1444 = vmatpush1.msra.mxu0 0.0
  %1445 = vmatprep.subr.mxu0 0.0
  %1446 = vmatpush1.msra.mxu0 0.0
  %1447 = vmatprep.subr.mxu0 0.0
  %1448 = vmatpush1.msra.mxu0 0.0
  %1449 = vmatprep.subr.mxu0 0.0
  %1450 = vmatpush1.msra.mxu0 0.0
  %1451 = vmatprep.subr.mxu0 0.0
  %1452 = vmatpush1.msra.mxu0 0.0
  %1453 = vmatprep.subr.mxu0 0.0
  %1454 = vmatpush1.msra.mxu0 0.0
  %1455 = vmatprep.subr.mxu0 0.0
  %1456 = vmatpush1.msra.mxu0 0.0
  %1457 = vmatprep.subr.mxu0 0.0
  %1458 = vmatpush1.msra.mxu0 0.0
  %1459 = vmatprep.subr.mxu0 0.0
  %1460 = vmatpush1.msra.mxu0 0.0
  %1461 = vmatprep.subr.mxu0 0.0
  %1462 = vmatpush1.msra.mxu0 0.0
  %1463 = vmatprep.subr.mxu0 0.0
  %1464 = vmatpush1.msra.mxu0 0.0
  %1465 = vmatprep.mubr.f32.mxu0 0.0
  %1466 = vmatmul.mubr.f32.gmra.mrb[0].mxu0 %v1384
  %v1467 = vpop.f32.mrb[0].mxu0
  %v1468 = vadd.f32 0.0, %v1467
  %v1469 = vpop.f32.mrb[0].mxu0
  %1470 = vmatprep.mubr.f32.mxu0 0.0
  %1471 = vmatmul.mubr.f32.gmra.mrb[0].mxu0 %v1387
  %v1472 = vpop.f32.mrb[0].mxu0
  %v1473 = vadd.f32 0.0, %v1472
  %v1474 = vpop.f32.mrb[0].mxu0
  %1475 = vmatprep.mubr.f32.mxu0 0.0
  %1476 = vmatmul.mubr.f32.gmra.mrb[0].mxu0 %v1390
  %v1477 = vpop.f32.mrb[0].mxu0
  %v1478 = vadd.f32 0.0, %v1477
  %v1479 = vpop.f32.mrb[0].mxu0
  %1480 = vmatprep.mubr.f32.mxu0 0.0
  %1481 = vmatmul.mubr.f32.gmra.mrb[0].mxu0 %v1393
  %v1482 = vpop.f32.mrb[0].mxu0
  %v1483 = vadd.f32 0.0, %v1482
  %v1484 = vpop.f32.mrb[0].mxu0
  %1485 = vmatprep.mubr.f32.mxu0 0.0
  %1486 = vmatmul.mubr.f32.gmra.mrb[0].mxu0 %v1396
  %v1487 = vpop.f32.mrb[0].mxu0
  %v1488 = vadd.f32 0.0, %v1487
  %v1489 = vpop.f32.mrb[0].mxu0
  %1490 = vmatprep.mubr.f32.mxu0 0.0
  %1491 = vmatmul.mubr.f32.gmra.mrb[0].mxu0 %v1399
  %v1492 = vpop.f32.mrb[0].mxu0
  %v1493 = vadd.f32 0.0, %v1492
  %v1494 = vpop.f32.mrb[0].mxu0
  %1495 = vdwg.mxu0
  %s1496 = scalar_lea.vmem %s10, 8
  %v1497 = vld [vmem:[%s1496] sm:$0xff]
  %v1499 = vsel %vm525, %v1468, 0
  %v1502 = vsel %vm525, %v1473, 0
  %v1505 = vsel %vm525, %v1478, 0
  %v1508 = vsel %vm525, %v1483, 0
  %v1511 = vsel %vm525, %v1488, 0
  %v1514 = vsel %vm525, %v1493, 0
  %1516 = vmatprep.subr.mxu0 0.0
  %1517 = vmatpush1.msra.mxu0 %v1497
  %1518 = vmatprep.subr.mxu0 0.0
  %1519 = vmatpush1.msra.mxu0 0.0
  %1520 = vmatprep.subr.mxu0 0.0
  %1521 = vmatpush1.msra.mxu0 0.0
  %1522 = vmatprep.subr.mxu0 0.0
  %1523 = vmatpush1.msra.mxu0 0.0
  %1524 = vmatprep.subr.mxu0 0.0
  %1525 = vmatpush1.msra.mxu0 0.0
  %1526 = vmatprep.subr.mxu0 0.0
  %1527 = vmatpush1.msra.mxu0 0.0
  %1528 = vmatprep.subr.mxu0 0.0
  %1529 = vmatpush1.msra.mxu0 0.0
  %1530 = vmatprep.subr.mxu0 0.0
  %1531 = vmatpush1.msra.mxu0 0.0
  %1532 = vmatprep.subr.mxu0 0.0
  %1533 = vmatpush1.msra.mxu0 0.0
  %1534 = vmatprep.subr.mxu0 0.0
  %1535 = vmatpush1.msra.mxu0 0.0
  %1536 = vmatprep.subr.mxu0 0.0
  %1537 = vmatpush1.msra.mxu0 0.0
  %1538 = vmatprep.subr.mxu0 0.0
  %1539 = vmatpush1.msra.mxu0 0.0
  %1540 = vmatprep.subr.mxu0 0.0
  %1541 = vmatpush1.msra.mxu0 0.0
  %1542 = vmatprep.subr.mxu0 0.0
  %1543 = vmatpush1.msra.mxu0 0.0
  %1544 = vmatprep.subr.mxu0 0.0
  %1545 = vmatpush1.msra.mxu0 0.0
  %1546 = vmatprep.subr.mxu0 0.0
  %1547 = vmatpush1.msra.mxu0 0.0
  %1548 = vmatprep.subr.mxu0 0.0
  %1549 = vmatpush1.msra.mxu0 0.0
  %1550 = vmatprep.subr.mxu0 0.0
  %1551 = vmatpush1.msra.mxu0 0.0
  %1552 = vmatprep.subr.mxu0 0.0
  %1553 = vmatpush1.msra.mxu0 0.0
  %1554 = vmatprep.subr.mxu0 0.0
  %1555 = vmatpush1.msra.mxu0 0.0
  %1556 = vmatprep.subr.mxu0 0.0
  %1557 = vmatpush1.msra.mxu0 0.0
  %1558 = vmatprep.subr.mxu0 0.0
  %1559 = vmatpush1.msra.mxu0 0.0
  %1560 = vmatprep.subr.mxu0 0.0
  %1561 = vmatpush1.msra.mxu0 0.0
  %1562 = vmatprep.subr.mxu0 0.0
  %1563 = vmatpush1.msra.mxu0 0.0
  %1564 = vmatprep.subr.mxu0 0.0
  %1565 = vmatpush1.msra.mxu0 0.0
  %1566 = vmatprep.subr.mxu0 0.0
  %1567 = vmatpush1.msra.mxu0 0.0
  %1568 = vmatprep.subr.mxu0 0.0
  %1569 = vmatpush1.msra.mxu0 0.0
  %1570 = vmatprep.subr.mxu0 0.0
  %1571 = vmatpush1.msra.mxu0 0.0
  %1572 = vmatprep.subr.mxu0 0.0
  %1573 = vmatpush1.msra.mxu0 0.0
  %1574 = vmatprep.subr.mxu0 0.0
  %1575 = vmatpush1.msra.mxu0 0.0
  %1576 = vmatprep.subr.mxu0 0.0
  %1577 = vmatpush1.msra.mxu0 0.0
  %1578 = vmatprep.subr.mxu0 0.0
  %1579 = vmatpush1.msra.mxu0 0.0
  %1580 = vmatprep.mubr.f32.mxu0 0.0
  %1581 = vmatmul.mubr.f32.gmra.mrb[0].mxu0 %v1499
  %v1582 = vpop.f32.mrb[0].mxu0
  %v1583 = vadd.f32 0.0, %v1582
  %v1584 = vpop.f32.mrb[0].mxu0
  %1585 = vmatprep.mubr.f32.mxu0 0.0
  %1586 = vmatmul.mubr.f32.gmra.mrb[0].mxu0 %v1502
  %v1587 = vpop.f32.mrb[0].mxu0
  %v1588 = vadd.f32 0.0, %v1587
  %v1589 = vpop.f32.mrb[0].mxu0
  %1590 = vmatprep.mubr.f32.mxu0 0.0
  %1591 = vmatmul.mubr.f32.gmra.mrb[0].mxu0 %v1505
  %v1592 = vpop.f32.mrb[0].mxu0
  %v1593 = vadd.f32 0.0, %v1592
  %v1594 = vpop.f32.mrb[0].mxu0
  %1595 = vmatprep.mubr.f32.mxu0 0.0
  %1596 = vmatmul.mubr.f32.gmra.mrb[0].mxu0 %v1508
  %v1597 = vpop.f32.mrb[0].mxu0
  %v1598 = vadd.f32 0.0, %v1597
  %v1599 = vpop.f32.mrb[0].mxu0
  %1600 = vmatprep.mubr.f32.mxu0 0.0
  %1601 = vmatmul.mubr.f32.gmra.mrb[0].mxu0 %v1511
  %v1602 = vpop.f32.mrb[0].mxu0
  %v1603 = vadd.f32 0.0, %v1602
  %v1604 = vpop.f32.mrb[0].mxu0
  %1605 = vmatprep.mubr.f32.mxu0 0.0
  %1606 = vmatmul.mubr.f32.gmra.mrb[0].mxu0 %v1514
  %v1607 = vpop.f32.mrb[0].mxu0
  %v1608 = vadd.f32 0.0, %v1607
  %v1609 = vpop.f32.mrb[0].mxu0
  %1610 = vdwg.mxu0
  %v1612 = vsel %vm525, %v821, 0
  %v1615 = vsel %vm525, %v826, 0
  %v1618 = vsel %vm525, %v831, 0
  %v1621 = vsel %vm525, %v836, 0
  %v1624 = vsel %vm525, %v841, 0
  %v1627 = vsel %vm525, %v846, 0
  %1629 = vmatprep.subr.mxu0 0.0
  %1630 = vmatpush1.msra.mxu0 %v849
  %1631 = vmatprep.subr.mxu0 0.0
  %1632 = vmatpush1.msra.mxu0 0.0
  %1633 = vmatprep.subr.mxu0 0.0
  %1634 = vmatpush1.msra.mxu0 0.0
  %1635 = vmatprep.subr.mxu0 0.0
  %1636 = vmatpush1.msra.mxu0 0.0
  %1637 = vmatprep.subr.mxu0 0.0
  %1638 = vmatpush1.msra.mxu0 0.0
  %1639 = vmatprep.subr.mxu0 0.0
  %1640 = vmatpush1.msra.mxu0 0.0
  %1641 = vmatprep.subr.mxu0 0.0
  %1642 = vmatpush1.msra.mxu0 0.0
  %1643 = vmatprep.subr.mxu0 0.0
  %1644 = vmatpush1.msra.mxu0 0.0
  %1645 = vmatprep.subr.mxu0 0.0
  %1646 = vmatpush1.msra.mxu0 0.0
  %1647 = vmatprep.subr.mxu0 0.0
  %1648 = vmatpush1.msra.mxu0 0.0
  %1649 = vmatprep.subr.mxu0 0.0
  %1650 = vmatpush1.msra.mxu0 0.0
  %1651 = vmatprep.subr.mxu0 0.0
  %1652 = vmatpush1.msra.mxu0 0.0
  %1653 = vmatprep.subr.mxu0 0.0
  %1654 = vmatpush1.msra.mxu0 0.0
  %1655 = vmatprep.subr.mxu0 0.0
  %1656 = vmatpush1.msra.mxu0 0.0
  %1657 = vmatprep.subr.mxu0 0.0
  %1658 = vmatpush1.msra.mxu0 0.0
  %1659 = vmatprep.subr.mxu0 0.0
  %1660 = vmatpush1.msra.mxu0 0.0
  %1661 = vmatprep.subr.mxu0 0.0
  %1662 = vmatpush1.msra.mxu0 0.0
  %1663 = vmatprep.subr.mxu0 0.0
  %1664 = vmatpush1.msra.mxu0 0.0
  %1665 = vmatprep.subr.mxu0 0.0
  %1666 = vmatpush1.msra.mxu0 0.0
  %1667 = vmatprep.subr.mxu0 0.0
  %1668 = vmatpush1.msra.mxu0 0.0
  %1669 = vmatprep.subr.mxu0 0.0
  %1670 = vmatpush1.msra.mxu0 0.0
  %1671 = vmatprep.subr.mxu0 0.0
  %1672 = vmatpush1.msra.mxu0 0.0
  %1673 = vmatprep.subr.mxu0 0.0
  %1674 = vmatpush1.msra.mxu0 0.0
  %1675 = vmatprep.subr.mxu0 0.0
  %1676 = vmatpush1.msra.mxu0 0.0
  %1677 = vmatprep.subr.mxu0 0.0
  %1678 = vmatpush1.msra.mxu0 0.0
  %1679 = vmatprep.subr.mxu0 0.0
  %1680 = vmatpush1.msra.mxu0 0.0
  %1681 = vmatprep.subr.mxu0 0.0
  %1682 = vmatpush1.msra.mxu0 0.0
  %1683 = vmatprep.subr.mxu0 0.0
  %1684 = vmatpush1.msra.mxu0 0.0
  %1685 = vmatprep.subr.mxu0 0.0
  %1686 = vmatpush1.msra.mxu0 0.0
  %1687 = vmatprep.subr.mxu0 0.0
  %1688 = vmatpush1.msra.mxu0 0.0
  %1689 = vmatprep.subr.mxu0 0.0
  %1690 = vmatpush1.msra.mxu0 0.0
  %1691 = vmatprep.subr.mxu0 0.0
  %1692 = vmatpush1.msra.mxu0 0.0
  %1693 = vmatprep.mubr.f32.mxu0 0.0
  %1694 = vmatmul.mubr.f32.gmra.mrb[0].mxu0 %v1612
  %v1695 = vpop.f32.mrb[0].mxu0
  %v1696 = vadd.f32 %v1583, %v1695
  %v1697 = vpop.f32.mrb[0].mxu0
  %1698 = vmatprep.mubr.f32.mxu0 0.0
  %1699 = vmatmul.mubr.f32.gmra.mrb[0].mxu0 %v1615
  %v1700 = vpop.f32.mrb[0].mxu0
  %v1701 = vadd.f32 %v1588, %v1700
  %v1702 = vpop.f32.mrb[0].mxu0
  %1703 = vmatprep.mubr.f32.mxu0 0.0
  %1704 = vmatmul.mubr.f32.gmra.mrb[0].mxu0 %v1618
  %v1705 = vpop.f32.mrb[0].mxu0
  %v1706 = vadd.f32 %v1593, %v1705
  %v1707 = vpop.f32.mrb[0].mxu0
  %1708 = vmatprep.mubr.f32.mxu0 0.0
  %1709 = vmatmul.mubr.f32.gmra.mrb[0].mxu0 %v1621
  %v1710 = vpop.f32.mrb[0].mxu0
  %v1711 = vadd.f32 %v1598, %v1710
  %v1712 = vpop.f32.mrb[0].mxu0
  %1713 = vmatprep.mubr.f32.mxu0 0.0
  %1714 = vmatmul.mubr.f32.gmra.mrb[0].mxu0 %v1624
  %v1715 = vpop.f32.mrb[0].mxu0
  %v1716 = vadd.f32 %v1603, %v1715
  %v1717 = vpop.f32.mrb[0].mxu0
  %1718 = vmatprep.mubr.f32.mxu0 0.0
  %1719 = vmatmul.mubr.f32.gmra.mrb[0].mxu0 %v1627
  %v1720 = vpop.f32.mrb[0].mxu0
  %v1721 = vadd.f32 %v1608, %v1720
  %v1722 = vpop.f32.mrb[0].mxu0
  %1723 = vdwg.mxu0
  %s1724 = scalar_lea.vmem %s4, 64
  %v1725 = vld [vmem:[%s1724] sm:$0xff]
  %v1726 = vld [vmem:[%s1724 + $0x8] sm:$0xff]
  %v1727 = vld [vmem:[%s1724 + $0x10] sm:$0xff]
  %v1728 = vld [vmem:[%s1724 + $0x18] sm:$0xff]
  %s1729 = scalar_lea.vmem %s5, 2
  %v1730 = vld [vmem:[%s1729] sm:$0x1]
  %v1732 = vlaneseq
  %v1733 = vshrl.u32 %v1732, 7
  %v1734 = vsub.s32 0, %v1733
  %v1735 = vrot.slane %v1730, %v1734
  %1737 = vmatprep.subr.mxu0 0.0
  %1738 = vmatpush1.msra.mxu0 %v1725
  %1739 = vmatprep.subr.mxu0 0.0
  %1740 = vmatpush1.msra.mxu0 %v1726
  %1741 = vmatprep.subr.mxu0 0.0
  %1742 = vmatpush1.msra.mxu0 %v1727
  %1743 = vmatprep.subr.mxu0 0.0
  %1744 = vmatpush1.msra.mxu0 %v1728
  %1745 = vmatprep.subr.mxu0 0.0
  %1746 = vmatpush1.msra.mxu0 0.0
  %1747 = vmatprep.subr.mxu0 0.0
  %1748 = vmatpush1.msra.mxu0 0.0
  %1749 = vmatprep.subr.mxu0 0.0
  %1750 = vmatpush1.msra.mxu0 0.0
  %1751 = vmatprep.subr.mxu0 0.0
  %1752 = vmatpush1.msra.mxu0 0.0
  %1753 = vmatprep.subr.mxu0 0.0
  %1754 = vmatpush1.msra.mxu0 0.0
  %1755 = vmatprep.subr.mxu0 0.0
  %1756 = vmatpush1.msra.mxu0 0.0
  %1757 = vmatprep.subr.mxu0 0.0
  %1758 = vmatpush1.msra.mxu0 0.0
  %1759 = vmatprep.subr.mxu0 0.0
  %1760 = vmatpush1.msra.mxu0 0.0
  %1761 = vmatprep.subr.mxu0 0.0
  %1762 = vmatpush1.msra.mxu0 0.0
  %1763 = vmatprep.subr.mxu0 0.0
  %1764 = vmatpush1.msra.mxu0 0.0
  %1765 = vmatprep.subr.mxu0 0.0
  %1766 = vmatpush1.msra.mxu0 0.0
  %1767 = vmatprep.subr.mxu0 0.0
  %1768 = vmatpush1.msra.mxu0 0.0
  %1769 = vmatprep.subr.mxu0 0.0
  %1770 = vmatpush1.msra.mxu0 0.0
  %1771 = vmatprep.subr.mxu0 0.0
  %1772 = vmatpush1.msra.mxu0 0.0
  %1773 = vmatprep.subr.mxu0 0.0
  %1774 = vmatpush1.msra.mxu0 0.0
  %1775 = vmatprep.subr.mxu0 0.0
  %1776 = vmatpush1.msra.mxu0 0.0
  %1777 = vmatprep.subr.mxu0 0.0
  %1778 = vmatpush1.msra.mxu0 0.0
  %1779 = vmatprep.subr.mxu0 0.0
  %1780 = vmatpush1.msra.mxu0 0.0
  %1781 = vmatprep.subr.mxu0 0.0
  %1782 = vmatpush1.msra.mxu0 0.0
  %1783 = vmatprep.subr.mxu0 0.0
  %1784 = vmatpush1.msra.mxu0 0.0
  %1785 = vmatprep.subr.mxu0 0.0
  %1786 = vmatpush1.msra.mxu0 0.0
  %1787 = vmatprep.subr.mxu0 0.0
  %1788 = vmatpush1.msra.mxu0 0.0
  %1789 = vmatprep.subr.mxu0 0.0
  %1790 = vmatpush1.msra.mxu0 0.0
  %1791 = vmatprep.subr.mxu0 0.0
  %1792 = vmatpush1.msra.mxu0 0.0
  %1793 = vmatprep.subr.mxu0 0.0
  %1794 = vmatpush1.msra.mxu0 0.0
  %1795 = vmatprep.subr.mxu0 0.0
  %1796 = vmatpush1.msra.mxu0 0.0
  %1797 = vmatprep.subr.mxu0 0.0
  %1798 = vmatpush1.msra.mxu0 0.0
  %1799 = vmatprep.subr.mxu0 0.0
  %1800 = vmatpush1.msra.mxu0 0.0
  %1801 = vmatprep.mubr.f32.mxu0 0.0
  %1802 = vmatmul.mubr.f32.gmra.mrb[0].mxu0 %v201
  %v1803 = vpop.f32.mrb[0].mxu0
  %v1804 = vadd.f32 %v1735, %v1803
  %v1805 = vpop.f32.mrb[0].mxu0
  %1806 = vmatprep.mubr.f32.mxu0 0.0
  %1807 = vmatmul.mubr.f32.gmra.mrb[0].mxu0 %v204
  %v1808 = vpop.f32.mrb[0].mxu0
  %v1809 = vadd.f32 %v1735, %v1808
  %v1810 = vpop.f32.mrb[0].mxu0
  %1811 = vmatprep.mubr.f32.mxu0 0.0
  %1812 = vmatmul.mubr.f32.gmra.mrb[0].mxu0 %v207
  %v1813 = vpop.f32.mrb[0].mxu0
  %v1814 = vadd.f32 %v1735, %v1813
  %v1815 = vpop.f32.mrb[0].mxu0
  %1816 = vmatprep.mubr.f32.mxu0 0.0
  %1817 = vmatmul.mubr.f32.gmra.mrb[0].mxu0 %v210
  %v1818 = vpop.f32.mrb[0].mxu0
  %v1819 = vadd.f32 %v1735, %v1818
  %v1820 = vpop.f32.mrb[0].mxu0
  %1821 = vmatprep.mubr.f32.mxu0 0.0
  %1822 = vmatmul.mubr.f32.gmra.mrb[0].mxu0 %v213
  %v1823 = vpop.f32.mrb[0].mxu0
  %v1824 = vadd.f32 %v1735, %v1823
  %v1825 = vpop.f32.mrb[0].mxu0
  %1826 = vmatprep.mubr.f32.mxu0 0.0
  %1827 = vmatmul.mubr.f32.gmra.mrb[0].mxu0 %v216
  %v1828 = vpop.f32.mrb[0].mxu0
  %v1829 = vadd.f32 %v1735, %v1828
  %v1830 = vpop.f32.mrb[0].mxu0
  %1831 = vdwg.mxu0
  %s1832 = scalar_lea.vmem %s6, 64
  %v1833 = vld [vmem:[%s1832] sm:$0xff]
  %v1834 = vld [vmem:[%s1832 + $0x8] sm:$0xff]
  %v1835 = vld [vmem:[%s1832 + $0x10] sm:$0xff]
  %v1836 = vld [vmem:[%s1832 + $0x18] sm:$0xff]
  %s1837 = scalar_lea.vmem %s7, 2
  %v1838 = vld [vmem:[%s1837] sm:$0x1]
  %v1840 = vlaneseq
  %v1841 = vshrl.u32 %v1840, 7
  %v1842 = vsub.s32 0, %v1841
  %v1843 = vrot.slane %v1838, %v1842
  %1845 = vmatprep.subr.mxu0 0.0
  %1846 = vmatpush1.msra.mxu0 %v1833
  %1847 = vmatprep.subr.mxu0 0.0
  %1848 = vmatpush1.msra.mxu0 %v1834
  %1849 = vmatprep.subr.mxu0 0.0
  %1850 = vmatpush1.msra.mxu0 %v1835
  %1851 = vmatprep.subr.mxu0 0.0
  %1852 = vmatpush1.msra.mxu0 %v1836
  %1853 = vmatprep.subr.mxu0 0.0
  %1854 = vmatpush1.msra.mxu0 0.0
  %1855 = vmatprep.subr.mxu0 0.0
  %1856 = vmatpush1.msra.mxu0 0.0
  %1857 = vmatprep.subr.mxu0 0.0
  %1858 = vmatpush1.msra.mxu0 0.0
  %1859 = vmatprep.subr.mxu0 0.0
  %1860 = vmatpush1.msra.mxu0 0.0
  %1861 = vmatprep.subr.mxu0 0.0
  %1862 = vmatpush1.msra.mxu0 0.0
  %1863 = vmatprep.subr.mxu0 0.0
  %1864 = vmatpush1.msra.mxu0 0.0
  %1865 = vmatprep.subr.mxu0 0.0
  %1866 = vmatpush1.msra.mxu0 0.0
  %1867 = vmatprep.subr.mxu0 0.0
  %1868 = vmatpush1.msra.mxu0 0.0
  %1869 = vmatprep.subr.mxu0 0.0
  %1870 = vmatpush1.msra.mxu0 0.0
  %1871 = vmatprep.subr.mxu0 0.0
  %1872 = vmatpush1.msra.mxu0 0.0
  %1873 = vmatprep.subr.mxu0 0.0
  %1874 = vmatpush1.msra.mxu0 0.0
  %1875 = vmatprep.subr.mxu0 0.0
  %1876 = vmatpush1.msra.mxu0 0.0
  %1877 = vmatprep.subr.mxu0 0.0
  %1878 = vmatpush1.msra.mxu0 0.0
  %1879 = vmatprep.subr.mxu0 0.0
  %1880 = vmatpush1.msra.mxu0 0.0
  %1881 = vmatprep.subr.mxu0 0.0
  %1882 = vmatpush1.msra.mxu0 0.0
  %1883 = vmatprep.subr.mxu0 0.0
  %1884 = vmatpush1.msra.mxu0 0.0
  %1885 = vmatprep.subr.mxu0 0.0
  %1886 = vmatpush1.msra.mxu0 0.0
  %1887 = vmatprep.subr.mxu0 0.0
  %1888 = vmatpush1.msra.mxu0 0.0
  %1889 = vmatprep.subr.mxu0 0.0
  %1890 = vmatpush1.msra.mxu0 0.0
  %1891 = vmatprep.subr.mxu0 0.0
  %1892 = vmatpush1.msra.mxu0 0.0
  %1893 = vmatprep.subr.mxu0 0.0
  %1894 = vmatpush1.msra.mxu0 0.0
  %1895 = vmatprep.subr.mxu0 0.0
  %1896 = vmatpush1.msra.mxu0 0.0
  %1897 = vmatprep.subr.mxu0 0.0
  %1898 = vmatpush1.msra.mxu0 0.0
  %1899 = vmatprep.subr.mxu0 0.0
  %1900 = vmatpush1.msra.mxu0 0.0
  %1901 = vmatprep.subr.mxu0 0.0
  %1902 = vmatpush1.msra.mxu0 0.0
  %1903 = vmatprep.subr.mxu0 0.0
  %1904 = vmatpush1.msra.mxu0 0.0
  %1905 = vmatprep.subr.mxu0 0.0
  %1906 = vmatpush1.msra.mxu0 0.0
  %1907 = vmatprep.subr.mxu0 0.0
  %1908 = vmatpush1.msra.mxu0 0.0
  %1909 = vmatprep.mubr.f32.mxu0 0.0
  %1910 = vmatmul.mubr.f32.gmra.mrb[0].mxu0 %v201
  %v1911 = vpop.f32.mrb[0].mxu0
  %v1912 = vadd.f32 %v1843, %v1911
  %v1913 = vpop.f32.mrb[0].mxu0
  %1914 = vmatprep.mubr.f32.mxu0 0.0
  %1915 = vmatmul.mubr.f32.gmra.mrb[0].mxu0 %v204
  %v1916 = vpop.f32.mrb[0].mxu0
  %v1917 = vadd.f32 %v1843, %v1916
  %v1918 = vpop.f32.mrb[0].mxu0
  %1919 = vmatprep.mubr.f32.mxu0 0.0
  %1920 = vmatmul.mubr.f32.gmra.mrb[0].mxu0 %v207
  %v1921 = vpop.f32.mrb[0].mxu0
  %v1922 = vadd.f32 %v1843, %v1921
  %v1923 = vpop.f32.mrb[0].mxu0
  %1924 = vmatprep.mubr.f32.mxu0 0.0
  %1925 = vmatmul.mubr.f32.gmra.mrb[0].mxu0 %v210
  %v1926 = vpop.f32.mrb[0].mxu0
  %v1927 = vadd.f32 %v1843, %v1926
  %v1928 = vpop.f32.mrb[0].mxu0
  %1929 = vmatprep.mubr.f32.mxu0 0.0
  %1930 = vmatmul.mubr.f32.gmra.mrb[0].mxu0 %v213
  %v1931 = vpop.f32.mrb[0].mxu0
  %v1932 = vadd.f32 %v1843, %v1931
  %v1933 = vpop.f32.mrb[0].mxu0
  %1934 = vmatprep.mubr.f32.mxu0 0.0
  %1935 = vmatmul.mubr.f32.gmra.mrb[0].mxu0 %v216
  %v1936 = vpop.f32.mrb[0].mxu0
  %v1937 = vadd.f32 %v1843, %v1936
  %v1938 = vpop.f32.mrb[0].mxu0
  %1939 = vdwg.mxu0
  %s1940 = scalar_lea.vmem %s8, 64
  %v1941 = vld [vmem:[%s1940] sm:$0xff]
  %v1942 = vld [vmem:[%s1940 + $0x8] sm:$0xff]
  %v1943 = vld [vmem:[%s1940 + $0x10] sm:$0xff]
  %v1944 = vld [vmem:[%s1940 + $0x18] sm:$0xff]
  %s1945 = scalar_lea.vmem %s9, 2
  %v1946 = vld [vmem:[%s1945] sm:$0x1]
  %v1948 = vlaneseq
  %v1949 = vshrl.u32 %v1948, 7
  %v1950 = vsub.s32 0, %v1949
  %v1951 = vrot.slane %v1946, %v1950
  %1953 = vmatprep.subr.mxu0 0.0
  %1954 = vmatpush1.msra.mxu0 %v1941
  %1955 = vmatprep.subr.mxu0 0.0
  %1956 = vmatpush1.msra.mxu0 %v1942
  %1957 = vmatprep.subr.mxu0 0.0
  %1958 = vmatpush1.msra.mxu0 %v1943
  %1959 = vmatprep.subr.mxu0 0.0
  %1960 = vmatpush1.msra.mxu0 %v1944
  %1961 = vmatprep.subr.mxu0 0.0
  %1962 = vmatpush1.msra.mxu0 0.0
  %1963 = vmatprep.subr.mxu0 0.0
  %1964 = vmatpush1.msra.mxu0 0.0
  %1965 = vmatprep.subr.mxu0 0.0
  %1966 = vmatpush1.msra.mxu0 0.0
  %1967 = vmatprep.subr.mxu0 0.0
  %1968 = vmatpush1.msra.mxu0 0.0
  %1969 = vmatprep.subr.mxu0 0.0
  %1970 = vmatpush1.msra.mxu0 0.0
  %1971 = vmatprep.subr.mxu0 0.0
  %1972 = vmatpush1.msra.mxu0 0.0
  %1973 = vmatprep.subr.mxu0 0.0
  %1974 = vmatpush1.msra.mxu0 0.0
  %1975 = vmatprep.subr.mxu0 0.0
  %1976 = vmatpush1.msra.mxu0 0.0
  %1977 = vmatprep.subr.mxu0 0.0
  %1978 = vmatpush1.msra.mxu0 0.0
  %1979 = vmatprep.subr.mxu0 0.0
  %1980 = vmatpush1.msra.mxu0 0.0
  %1981 = vmatprep.subr.mxu0 0.0
  %1982 = vmatpush1.msra.mxu0 0.0
  %1983 = vmatprep.subr.mxu0 0.0
  %1984 = vmatpush1.msra.mxu0 0.0
  %1985 = vmatprep.subr.mxu0 0.0
  %1986 = vmatpush1.msra.mxu0 0.0
  %1987 = vmatprep.subr.mxu0 0.0
  %1988 = vmatpush1.msra.mxu0 0.0
  %1989 = vmatprep.subr.mxu0 0.0
  %1990 = vmatpush1.msra.mxu0 0.0
  %1991 = vmatprep.subr.mxu0 0.0
  %1992 = vmatpush1.msra.mxu0 0.0
  %1993 = vmatprep.subr.mxu0 0.0
  %1994 = vmatpush1.msra.mxu0 0.0
  %1995 = vmatprep.subr.mxu0 0.0
  %1996 = vmatpush1.msra.mxu0 0.0
  %1997 = vmatprep.subr.mxu0 0.0
  %1998 = vmatpush1.msra.mxu0 0.0
  %1999 = vmatprep.subr.mxu0 0.0
  %2000 = vmatpush1.msra.mxu0 0.0
  %2001 = vmatprep.subr.mxu0 0.0
  %2002 = vmatpush1.msra.mxu0 0.0
  %2003 = vmatprep.subr.mxu0 0.0
  %2004 = vmatpush1.msra.mxu0 0.0
  %2005 = vmatprep.subr.mxu0 0.0
  %2006 = vmatpush1.msra.mxu0 0.0
  %2007 = vmatprep.subr.mxu0 0.0
  %2008 = vmatpush1.msra.mxu0 0.0
  %2009 = vmatprep.subr.mxu0 0.0
  %2010 = vmatpush1.msra.mxu0 0.0
  %2011 = vmatprep.subr.mxu0 0.0
  %2012 = vmatpush1.msra.mxu0 0.0
  %2013 = vmatprep.subr.mxu0 0.0
  %2014 = vmatpush1.msra.mxu0 0.0
  %2015 = vmatprep.subr.mxu0 0.0
  %2016 = vmatpush1.msra.mxu0 0.0
  %2017 = vmatprep.mubr.f32.mxu0 0.0
  %2018 = vmatmul.mubr.f32.gmra.mrb[0].mxu0 %v201
  %v2019 = vpop.f32.mrb[0].mxu0
  %v2020 = vadd.f32 %v1951, %v2019
  %v2021 = vpop.f32.mrb[0].mxu0
  %2022 = vmatprep.mubr.f32.mxu0 0.0
  %2023 = vmatmul.mubr.f32.gmra.mrb[0].mxu0 %v204
  %v2024 = vpop.f32.mrb[0].mxu0
  %v2025 = vadd.f32 %v1951, %v2024
  %v2026 = vpop.f32.mrb[0].mxu0
  %2027 = vmatprep.mubr.f32.mxu0 0.0
  %2028 = vmatmul.mubr.f32.gmra.mrb[0].mxu0 %v207
  %v2029 = vpop.f32.mrb[0].mxu0
  %v2030 = vadd.f32 %v1951, %v2029
  %v2031 = vpop.f32.mrb[0].mxu0
  %2032 = vmatprep.mubr.f32.mxu0 0.0
  %2033 = vmatmul.mubr.f32.gmra.mrb[0].mxu0 %v210
  %v2034 = vpop.f32.mrb[0].mxu0
  %v2035 = vadd.f32 %v1951, %v2034
  %v2036 = vpop.f32.mrb[0].mxu0
  %2037 = vmatprep.mubr.f32.mxu0 0.0
  %2038 = vmatmul.mubr.f32.gmra.mrb[0].mxu0 %v213
  %v2039 = vpop.f32.mrb[0].mxu0
  %v2040 = vadd.f32 %v1951, %v2039
  %v2041 = vpop.f32.mrb[0].mxu0
  %2042 = vmatprep.mubr.f32.mxu0 0.0
  %2043 = vmatmul.mubr.f32.gmra.mrb[0].mxu0 %v216
  %v2044 = vpop.f32.mrb[0].mxu0
  %v2045 = vadd.f32 %v1951, %v2044
  %v2046 = vpop.f32.mrb[0].mxu0
  %2047 = vdwg.mxu0
  %v2049 = vsel %vm525, %v1804, 0
  %v2052 = vsel %vm525, %v1809, 0
  %v2055 = vsel %vm525, %v1814, 0
  %v2058 = vsel %vm525, %v1819, 0
  %v2061 = vsel %vm525, %v1824, 0
  %v2064 = vsel %vm525, %v1829, 0
  %v2067 = vsel %vm525, %v1912, 0
  %v2070 = vsel %vm525, %v1917, 0
  %v2073 = vsel %vm525, %v1922, 0
  %v2076 = vsel %vm525, %v1927, 0
  %v2079 = vsel %vm525, %v1932, 0
  %v2082 = vsel %vm525, %v1937, 0
  %2084 = vmatprep.subr.mxu0 0.0
  %2085 = vmatpush1.xpose.msra.mxu0 %v2067
  %2086 = vmatprep.subr.mxu0 0.0
  %2087 = vmatpush1.xpose.msra.mxu0 %v2070
  %2088 = vmatprep.subr.mxu0 0.0
  %2089 = vmatpush1.xpose.msra.mxu0 %v2073
  %2090 = vmatprep.subr.mxu0 0.0
  %2091 = vmatpush1.xpose.msra.mxu0 %v2076
  %2092 = vmatprep.subr.mxu0 0.0
  %2093 = vmatpush1.xpose.msra.mxu0 %v2079
  %2094 = vmatprep.subr.mxu0 0.0
  %2095 = vmatpush1.xpose.msra.mxu0 %v2082
  %2096 = vmatprep.subr.mxu0 0.0
  %2097 = vmatpush1.xpose.msra.mxu0 0.0
  %2098 = vmatprep.subr.mxu0 0.0
  %2099 = vmatpush1.xpose.msra.mxu0 0.0
  %2100 = vmatprep.subr.mxu0 0.0
  %2101 = vmatpush1.xpose.msra.mxu0 0.0
  %2102 = vmatprep.subr.mxu0 0.0
  %2103 = vmatpush1.xpose.msra.mxu0 0.0
  %2104 = vmatprep.subr.mxu0 0.0
  %2105 = vmatpush1.xpose.msra.mxu0 0.0
  %2106 = vmatprep.subr.mxu0 0.0
  %2107 = vmatpush1.xpose.msra.mxu0 0.0
  %2108 = vmatprep.subr.mxu0 0.0
  %2109 = vmatpush1.xpose.msra.mxu0 0.0
  %2110 = vmatprep.subr.mxu0 0.0
  %2111 = vmatpush1.xpose.msra.mxu0 0.0
  %2112 = vmatprep.subr.mxu0 0.0
  %2113 = vmatpush1.xpose.msra.mxu0 0.0
  %2114 = vmatprep.subr.mxu0 0.0
  %2115 = vmatpush1.xpose.msra.mxu0 0.0
  %2116 = vmatprep.subr.mxu0 0.0
  %2117 = vmatpush1.xpose.msra.mxu0 0.0
  %2118 = vmatprep.subr.mxu0 0.0
  %2119 = vmatpush1.xpose.msra.mxu0 0.0
  %2120 = vmatprep.subr.mxu0 0.0
  %2121 = vmatpush1.xpose.msra.mxu0 0.0
  %2122 = vmatprep.subr.mxu0 0.0
  %2123 = vmatpush1.xpose.msra.mxu0 0.0
  %2124 = vmatprep.subr.mxu0 0.0
  %2125 = vmatpush1.xpose.msra.mxu0 0.0
  %2126 = vmatprep.subr.mxu0 0.0
  %2127 = vmatpush1.xpose.msra.mxu0 0.0
  %2128 = vmatprep.subr.mxu0 0.0
  %2129 = vmatpush1.xpose.msra.mxu0 0.0
  %2130 = vmatprep.subr.mxu0 0.0
  %2131 = vmatpush1.xpose.msra.mxu0 0.0
  %2132 = vmatprep.subr.mxu0 0.0
  %2133 = vmatpush1.xpose.msra.mxu0 0.0
  %2134 = vmatprep.subr.mxu0 0.0
  %2135 = vmatpush1.xpose.msra.mxu0 0.0
  %2136 = vmatprep.subr.mxu0 0.0
  %2137 = vmatpush1.xpose.msra.mxu0 0.0
  %2138 = vmatprep.subr.mxu0 0.0
  %2139 = vmatpush1.xpose.msra.mxu0 0.0
  %2140 = vmatprep.subr.mxu0 0.0
  %2141 = vmatpush1.xpose.msra.mxu0 0.0
  %2142 = vmatprep.subr.mxu0 0.0
  %2143 = vmatpush1.xpose.msra.mxu0 0.0
  %2144 = vmatprep.subr.mxu0 0.0
  %2145 = vmatpush1.xpose.msra.mxu0 0.0
  %2146 = vmatprep.subr.mxu0 0.0
  %2147 = vmatpush1.xpose.msra.mxu0 0.0
  %2148 = vmatprep.mubr.f32.mxu0 0.0
  %2149 = vmatmul.mubr.f32.gmra.mrb[0].mxu0 %v2049
  %v2150 = vpop.f32.mrb[0].mxu0
  %v2151 = vadd.f32 0.0, %v2150
  %v2152 = vpop.f32.mrb[0].mxu0
  %2153 = vmatprep.mubr.f32.mxu0 0.0
  %2154 = vmatmul.mubr.f32.gmra.mrb[0].mxu0 %v2052
  %v2155 = vpop.f32.mrb[0].mxu0
  %v2156 = vadd.f32 0.0, %v2155
  %v2157 = vpop.f32.mrb[0].mxu0
  %2158 = vmatprep.mubr.f32.mxu0 0.0
  %2159 = vmatmul.mubr.f32.gmra.mrb[0].mxu0 %v2055
  %v2160 = vpop.f32.mrb[0].mxu0
  %v2161 = vadd.f32 0.0, %v2160
  %v2162 = vpop.f32.mrb[0].mxu0
  %2163 = vmatprep.mubr.f32.mxu0 0.0
  %2164 = vmatmul.mubr.f32.gmra.mrb[0].mxu0 %v2058
  %v2165 = vpop.f32.mrb[0].mxu0
  %v2166 = vadd.f32 0.0, %v2165
  %v2167 = vpop.f32.mrb[0].mxu0
  %2168 = vmatprep.mubr.f32.mxu0 0.0
  %2169 = vmatmul.mubr.f32.gmra.mrb[0].mxu0 %v2061
  %v2170 = vpop.f32.mrb[0].mxu0
  %v2171 = vadd.f32 0.0, %v2170
  %v2172 = vpop.f32.mrb[0].mxu0
  %2173 = vmatprep.mubr.f32.mxu0 0.0
  %2174 = vmatmul.mubr.f32.gmra.mrb[0].mxu0 %v2064
  %v2175 = vpop.f32.mrb[0].mxu0
  %v2176 = vadd.f32 0.0, %v2175
  %v2177 = vpop.f32.mrb[0].mxu0
  %2178 = vdwg.mxu0
  %v2179 = vmul.f32 %v2151, 0.35355338
  %v2180 = vmul.f32 %v2156, 0.35355338
  %v2181 = vmul.f32 %v2161, 0.35355338
  %v2182 = vmul.f32 %v2166, 0.35355338
  %v2183 = vmul.f32 %v2171, 0.35355338
  %v2184 = vmul.f32 %v2176, 0.35355338
  %v2185 = vadd.f32 %v2179, %v183
  %v2186 = vadd.f32 %v2180, %v184
  %v2187 = vadd.f32 %v2181, %v185
  %v2188 = vadd.f32 %v2182, %v186
  %v2189 = vadd.f32 %v2183, %v187
  %v2190 = vadd.f32 %v2184, %v188
  %v2191 = vsel %vm669, %v2185, -inf
  %2192 = vmax.xlane.f32.xlu0 %v2191
  %v2193 = vpop.xlane.xlu0 %2192
  %v2194 = vsel %vm669, %v2186, -inf
  %2195 = vmax.xlane.f32.xlu0 %v2194
  %v2196 = vpop.xlane.xlu0 %2195
  %v2197 = vsel %vm669, %v2187, -inf
  %2198 = vmax.xlane.f32.xlu0 %v2197
  %v2199 = vpop.xlane.xlu0 %2198
  %v2200 = vsel %vm669, %v2188, -inf
  %2201 = vmax.xlane.f32.xlu0 %v2200
  %v2202 = vpop.xlane.xlu0 %2201
  %v2203 = vsel %vm669, %v2189, -inf
  %2204 = vmax.xlane.f32.xlu0 %v2203
  %v2205 = vpop.xlane.xlu0 %2204
  %v2206 = vsel %vm669, %v2190, -inf
  %2207 = vmax.xlane.f32.xlu0 %v2206
  %v2208 = vpop.xlane.xlu0 %2207
  %v2209 = vsub.f32 %v2185, %v2193
  %v2210 = vsub.f32 %v2186, %v2196
  %v2211 = vsub.f32 %v2187, %v2199
  %v2212 = vsub.f32 %v2188, %v2202
  %v2213 = vsub.f32 %v2189, %v2205
  %v2214 = vsub.f32 %v2190, %v2208
  %v2215 = vmul.f32 %v2209, 1.442695
  %v2216 = vpow.pop %v2215
  %v2217 = vmul.f32 %v2210, 1.442695
  %v2218 = vpow.pop %v2217
  %v2219 = vmul.f32 %v2211, 1.442695
  %v2220 = vpow.pop %v2219
  %v2221 = vmul.f32 %v2212, 1.442695
  %v2222 = vpow.pop %v2221
  %v2223 = vmul.f32 %v2213, 1.442695
  %v2224 = vpow.pop %v2223
  %v2225 = vmul.f32 %v2214, 1.442695
  %v2226 = vpow.pop %v2225
  %v2227 = vsel %vm669, %v2216, 0.0
  %2228 = vadd.xlane.f32.xlu0 %v2227
  %v2229 = vpop.xlane.xlu0 %2228
  %v2230 = vsel %vm669, %v2218, 0.0
  %2231 = vadd.xlane.f32.xlu0 %v2230
  %v2232 = vpop.xlane.xlu0 %2231
  %v2233 = vsel %vm669, %v2220, 0.0
  %2234 = vadd.xlane.f32.xlu0 %v2233
  %v2235 = vpop.xlane.xlu0 %2234
  %v2236 = vsel %vm669, %v2222, 0.0
  %2237 = vadd.xlane.f32.xlu0 %v2236
  %v2238 = vpop.xlane.xlu0 %2237
  %v2239 = vsel %vm669, %v2224, 0.0
  %2240 = vadd.xlane.f32.xlu0 %v2239
  %v2241 = vpop.xlane.xlu0 %2240
  %v2242 = vsel %vm669, %v2226, 0.0
  %2243 = vadd.xlane.f32.xlu0 %v2242
  %v2244 = vpop.xlane.xlu0 %2243
  %v2245 = vrcp.pop %v2229
  %v2246 = vrcp.pop %v2232
  %v2247 = vrcp.pop %v2235
  %v2248 = vrcp.pop %v2238
  %v2249 = vrcp.pop %v2241
  %v2250 = vrcp.pop %v2244
  %v2251 = vmul.f32 %v2216, %v2245
  %v2252 = vmul.f32 %v2218, %v2246
  %v2253 = vmul.f32 %v2220, %v2247
  %v2254 = vmul.f32 %v2222, %v2248
  %v2255 = vmul.f32 %v2224, %v2249
  %v2256 = vmul.f32 %v2226, %v2250
  %v2258 = vsel %vm669, %v2251, 0
  %v2261 = vsel %vm669, %v2252, 0
  %v2264 = vsel %vm669, %v2253, 0
  %v2267 = vsel %vm669, %v2254, 0
  %v2270 = vsel %vm669, %v2255, 0
  %v2273 = vsel %vm669, %v2256, 0
  %2275 = vmatprep.subr.mxu0 0.0
  %2276 = vmatpush1.msra.mxu0 %v2020
  %2277 = vmatprep.subr.mxu0 0.0
  %2278 = vmatpush1.msra.mxu0 %v2025
  %2279 = vmatprep.subr.mxu0 0.0
  %2280 = vmatpush1.msra.mxu0 %v2030
  %2281 = vmatprep.subr.mxu0 0.0
  %2282 = vmatpush1.msra.mxu0 %v2035
  %2283 = vmatprep.subr.mxu0 0.0
  %2284 = vmatpush1.msra.mxu0 %v2040
  %2285 = vmatprep.subr.mxu0 0.0
  %2286 = vmatpush1.msra.mxu0 %v2045
  %2287 = vmatprep.subr.mxu0 0.0
  %2288 = vmatpush1.msra.mxu0 0.0
  %2289 = vmatprep.subr.mxu0 0.0
  %2290 = vmatpush1.msra.mxu0 0.0
  %2291 = vmatprep.subr.mxu0 0.0
  %2292 = vmatpush1.msra.mxu0 0.0
  %2293 = vmatprep.subr.mxu0 0.0
  %2294 = vmatpush1.msra.mxu0 0.0
  %2295 = vmatprep.subr.mxu0 0.0
  %2296 = vmatpush1.msra.mxu0 0.0
  %2297 = vmatprep.subr.mxu0 0.0
  %2298 = vmatpush1.msra.mxu0 0.0
  %2299 = vmatprep.subr.mxu0 0.0
  %2300 = vmatpush1.msra.mxu0 0.0
  %2301 = vmatprep.subr.mxu0 0.0
  %2302 = vmatpush1.msra.mxu0 0.0
  %2303 = vmatprep.subr.mxu0 0.0
  %2304 = vmatpush1.msra.mxu0 0.0
  %2305 = vmatprep.subr.mxu0 0.0
  %2306 = vmatpush1.msra.mxu0 0.0
  %2307 = vmatprep.subr.mxu0 0.0
  %2308 = vmatpush1.msra.mxu0 0.0
  %2309 = vmatprep.subr.mxu0 0.0
  %2310 = vmatpush1.msra.mxu0 0.0
  %2311 = vmatprep.subr.mxu0 0.0
  %2312 = vmatpush1.msra.mxu0 0.0
  %2313 = vmatprep.subr.mxu0 0.0
  %2314 = vmatpush1.msra.mxu0 0.0
  %2315 = vmatprep.subr.mxu0 0.0
  %2316 = vmatpush1.msra.mxu0 0.0
  %2317 = vmatprep.subr.mxu0 0.0
  %2318 = vmatpush1.msra.mxu0 0.0
  %2319 = vmatprep.subr.mxu0 0.0
  %2320 = vmatpush1.msra.mxu0 0.0
  %2321 = vmatprep.subr.mxu0 0.0
  %2322 = vmatpush1.msra.mxu0 0.0
  %2323 = vmatprep.subr.mxu0 0.0
  %2324 = vmatpush1.msra.mxu0 0.0
  %2325 = vmatprep.subr.mxu0 0.0
  %2326 = vmatpush1.msra.mxu0 0.0
  %2327 = vmatprep.subr.mxu0 0.0
  %2328 = vmatpush1.msra.mxu0 0.0
  %2329 = vmatprep.subr.mxu0 0.0
  %2330 = vmatpush1.msra.mxu0 0.0
  %2331 = vmatprep.subr.mxu0 0.0
  %2332 = vmatpush1.msra.mxu0 0.0
  %2333 = vmatprep.subr.mxu0 0.0
  %2334 = vmatpush1.msra.mxu0 0.0
  %2335 = vmatprep.subr.mxu0 0.0
  %2336 = vmatpush1.msra.mxu0 0.0
  %2337 = vmatprep.subr.mxu0 0.0
  %2338 = vmatpush1.msra.mxu0 0.0
  %2339 = vmatprep.mubr.f32.mxu0 0.0
  %2340 = vmatmul.mubr.f32.gmra.mrb[0].mxu0 %v2258
  %v2341 = vpop.f32.mrb[0].mxu0
  %v2342 = vadd.f32 0.0, %v2341
  %v2343 = vpop.f32.mrb[0].mxu0
  %2344 = vmatprep.mubr.f32.mxu0 0.0
  %2345 = vmatmul.mubr.f32.gmra.mrb[0].mxu0 %v2261
  %v2346 = vpop.f32.mrb[0].mxu0
  %v2347 = vadd.f32 0.0, %v2346
  %v2348 = vpop.f32.mrb[0].mxu0
  %2349 = vmatprep.mubr.f32.mxu0 0.0
  %2350 = vmatmul.mubr.f32.gmra.mrb[0].mxu0 %v2264
  %v2351 = vpop.f32.mrb[0].mxu0
  %v2352 = vadd.f32 0.0, %v2351
  %v2353 = vpop.f32.mrb[0].mxu0
  %2354 = vmatprep.mubr.f32.mxu0 0.0
  %2355 = vmatmul.mubr.f32.gmra.mrb[0].mxu0 %v2267
  %v2356 = vpop.f32.mrb[0].mxu0
  %v2357 = vadd.f32 0.0, %v2356
  %v2358 = vpop.f32.mrb[0].mxu0
  %2359 = vmatprep.mubr.f32.mxu0 0.0
  %2360 = vmatmul.mubr.f32.gmra.mrb[0].mxu0 %v2270
  %v2361 = vpop.f32.mrb[0].mxu0
  %v2362 = vadd.f32 0.0, %v2361
  %v2363 = vpop.f32.mrb[0].mxu0
  %2364 = vmatprep.mubr.f32.mxu0 0.0
  %2365 = vmatmul.mubr.f32.gmra.mrb[0].mxu0 %v2273
  %v2366 = vpop.f32.mrb[0].mxu0
  %v2367 = vadd.f32 0.0, %v2366
  %v2368 = vpop.f32.mrb[0].mxu0
  %2369 = vdwg.mxu0
  %s2370 = scalar_lea.vmem %s10, 16
  %v2371 = vld [vmem:[%s2370] sm:$0xff]
  %v2373 = vsel %vm525, %v2342, 0
  %v2376 = vsel %vm525, %v2347, 0
  %v2379 = vsel %vm525, %v2352, 0
  %v2382 = vsel %vm525, %v2357, 0
  %v2385 = vsel %vm525, %v2362, 0
  %v2388 = vsel %vm525, %v2367, 0
  %2390 = vmatprep.subr.mxu0 0.0
  %2391 = vmatpush1.msra.mxu0 %v2371
  %2392 = vmatprep.subr.mxu0 0.0
  %2393 = vmatpush1.msra.mxu0 0.0
  %2394 = vmatprep.subr.mxu0 0.0
  %2395 = vmatpush1.msra.mxu0 0.0
  %2396 = vmatprep.subr.mxu0 0.0
  %2397 = vmatpush1.msra.mxu0 0.0
  %2398 = vmatprep.subr.mxu0 0.0
  %2399 = vmatpush1.msra.mxu0 0.0
  %2400 = vmatprep.subr.mxu0 0.0
  %2401 = vmatpush1.msra.mxu0 0.0
  %2402 = vmatprep.subr.mxu0 0.0
  %2403 = vmatpush1.msra.mxu0 0.0
  %2404 = vmatprep.subr.mxu0 0.0
  %2405 = vmatpush1.msra.mxu0 0.0
  %2406 = vmatprep.subr.mxu0 0.0
  %2407 = vmatpush1.msra.mxu0 0.0
  %2408 = vmatprep.subr.mxu0 0.0
  %2409 = vmatpush1.msra.mxu0 0.0
  %2410 = vmatprep.subr.mxu0 0.0
  %2411 = vmatpush1.msra.mxu0 0.0
  %2412 = vmatprep.subr.mxu0 0.0
  %2413 = vmatpush1.msra.mxu0 0.0
  %2414 = vmatprep.subr.mxu0 0.0
  %2415 = vmatpush1.msra.mxu0 0.0
  %2416 = vmatprep.subr.mxu0 0.0
  %2417 = vmatpush1.msra.mxu0 0.0
  %2418 = vmatprep.subr.mxu0 0.0
  %2419 = vmatpush1.msra.mxu0 0.0
  %2420 = vmatprep.subr.mxu0 0.0
  %2421 = vmatpush1.msra.mxu0 0.0
  %2422 = vmatprep.subr.mxu0 0.0
  %2423 = vmatpush1.msra.mxu0 0.0
  %2424 = vmatprep.subr.mxu0 0.0
  %2425 = vmatpush1.msra.mxu0 0.0
  %2426 = vmatprep.subr.mxu0 0.0
  %2427 = vmatpush1.msra.mxu0 0.0
  %2428 = vmatprep.subr.mxu0 0.0
  %2429 = vmatpush1.msra.mxu0 0.0
  %2430 = vmatprep.subr.mxu0 0.0
  %2431 = vmatpush1.msra.mxu0 0.0
  %2432 = vmatprep.subr.mxu0 0.0
  %2433 = vmatpush1.msra.mxu0 0.0
  %2434 = vmatprep.subr.mxu0 0.0
  %2435 = vmatpush1.msra.mxu0 0.0
  %2436 = vmatprep.subr.mxu0 0.0
  %2437 = vmatpush1.msra.mxu0 0.0
  %2438 = vmatprep.subr.mxu0 0.0
  %2439 = vmatpush1.msra.mxu0 0.0
  %2440 = vmatprep.subr.mxu0 0.0
  %2441 = vmatpush1.msra.mxu0 0.0
  %2442 = vmatprep.subr.mxu0 0.0
  %2443 = vmatpush1.msra.mxu0 0.0
  %2444 = vmatprep.subr.mxu0 0.0
  %2445 = vmatpush1.msra.mxu0 0.0
  %2446 = vmatprep.subr.mxu0 0.0
  %2447 = vmatpush1.msra.mxu0 0.0
  %2448 = vmatprep.subr.mxu0 0.0
  %2449 = vmatpush1.msra.mxu0 0.0
  %2450 = vmatprep.subr.mxu0 0.0
  %2451 = vmatpush1.msra.mxu0 0.0
  %2452 = vmatprep.subr.mxu0 0.0
  %2453 = vmatpush1.msra.mxu0 0.0
  %2454 = vmatprep.mubr.f32.mxu0 0.0
  %2455 = vmatmul.mubr.f32.gmra.mrb[0].mxu0 %v2373
  %v2456 = vpop.f32.mrb[0].mxu0
  %v2457 = vadd.f32 0.0, %v2456
  %v2458 = vpop.f32.mrb[0].mxu0
  %2459 = vmatprep.mubr.f32.mxu0 0.0
  %2460 = vmatmul.mubr.f32.gmra.mrb[0].mxu0 %v2376
  %v2461 = vpop.f32.mrb[0].mxu0
  %v2462 = vadd.f32 0.0, %v2461
  %v2463 = vpop.f32.mrb[0].mxu0
  %2464 = vmatprep.mubr.f32.mxu0 0.0
  %2465 = vmatmul.mubr.f32.gmra.mrb[0].mxu0 %v2379
  %v2466 = vpop.f32.mrb[0].mxu0
  %v2467 = vadd.f32 0.0, %v2466
  %v2468 = vpop.f32.mrb[0].mxu0
  %2469 = vmatprep.mubr.f32.mxu0 0.0
  %2470 = vmatmul.mubr.f32.gmra.mrb[0].mxu0 %v2382
  %v2471 = vpop.f32.mrb[0].mxu0
  %v2472 = vadd.f32 0.0, %v2471
  %v2473 = vpop.f32.mrb[0].mxu0
  %2474 = vmatprep.mubr.f32.mxu0 0.0
  %2475 = vmatmul.mubr.f32.gmra.mrb[0].mxu0 %v2385
  %v2476 = vpop.f32.mrb[0].mxu0
  %v2477 = vadd.f32 0.0, %v2476
  %v2478 = vpop.f32.mrb[0].mxu0
  %2479 = vmatprep.mubr.f32.mxu0 0.0
  %2480 = vmatmul.mubr.f32.gmra.mrb[0].mxu0 %v2388
  %v2481 = vpop.f32.mrb[0].mxu0
  %v2482 = vadd.f32 0.0, %v2481
  %v2483 = vpop.f32.mrb[0].mxu0
  %2484 = vdwg.mxu0
  %v2485 = vadd.f32 %v1696, %v2457
  %v2486 = vadd.f32 %v1701, %v2462
  %v2487 = vadd.f32 %v1706, %v2467
  %v2488 = vadd.f32 %v1711, %v2472
  %v2489 = vadd.f32 %v1716, %v2477
  %v2490 = vadd.f32 %v1721, %v2482
  %s2491 = scalar_lea.vmem %s4, 96
  %v2492 = vld [vmem:[%s2491] sm:$0xff]
  %v2493 = vld [vmem:[%s2491 + $0x8] sm:$0xff]
  %v2494 = vld [vmem:[%s2491 + $0x10] sm:$0xff]
  %v2495 = vld [vmem:[%s2491 + $0x18] sm:$0xff]
  %s2496 = scalar_lea.vmem %s5, 3
  %v2497 = vld [vmem:[%s2496] sm:$0x1]
  %v2499 = vlaneseq
  %v2500 = vshrl.u32 %v2499, 7
  %v2501 = vsub.s32 0, %v2500
  %v2502 = vrot.slane %v2497, %v2501
  %2504 = vmatprep.subr.mxu0 0.0
  %2505 = vmatpush1.msra.mxu0 %v2492
  %2506 = vmatprep.subr.mxu0 0.0
  %2507 = vmatpush1.msra.mxu0 %v2493
  %2508 = vmatprep.subr.mxu0 0.0
  %2509 = vmatpush1.msra.mxu0 %v2494
  %2510 = vmatprep.subr.mxu0 0.0
  %2511 = vmatpush1.msra.mxu0 %v2495
  %2512 = vmatprep.subr.mxu0 0.0
  %2513 = vmatpush1.msra.mxu0 0.0
  %2514 = vmatprep.subr.mxu0 0.0
  %2515 = vmatpush1.msra.mxu0 0.0
  %2516 = vmatprep.subr.mxu0 0.0
  %2517 = vmatpush1.msra.mxu0 0.0
  %2518 = vmatprep.subr.mxu0 0.0
  %2519 = vmatpush1.msra.mxu0 0.0
  %2520 = vmatprep.subr.mxu0 0.0
  %2521 = vmatpush1.msra.mxu0 0.0
  %2522 = vmatprep.subr.mxu0 0.0
  %2523 = vmatpush1.msra.mxu0 0.0
  %2524 = vmatprep.subr.mxu0 0.0
  %2525 = vmatpush1.msra.mxu0 0.0
  %2526 = vmatprep.subr.mxu0 0.0
  %2527 = vmatpush1.msra.mxu0 0.0
  %2528 = vmatprep.subr.mxu0 0.0
  %2529 = vmatpush1.msra.mxu0 0.0
  %2530 = vmatprep.subr.mxu0 0.0
  %2531 = vmatpush1.msra.mxu0 0.0
  %2532 = vmatprep.subr.mxu0 0.0
  %2533 = vmatpush1.msra.mxu0 0.0
  %2534 = vmatprep.subr.mxu0 0.0
  %2535 = vmatpush1.msra.mxu0 0.0
  %2536 = vmatprep.subr.mxu0 0.0
  %2537 = vmatpush1.msra.mxu0 0.0
  %2538 = vmatprep.subr.mxu0 0.0
  %2539 = vmatpush1.msra.mxu0 0.0
  %2540 = vmatprep.subr.mxu0 0.0
  %2541 = vmatpush1.msra.mxu0 0.0
  %2542 = vmatprep.subr.mxu0 0.0
  %2543 = vmatpush1.msra.mxu0 0.0
  %2544 = vmatprep.subr.mxu0 0.0
  %2545 = vmatpush1.msra.mxu0 0.0
  %2546 = vmatprep.subr.mxu0 0.0
  %2547 = vmatpush1.msra.mxu0 0.0
  %2548 = vmatprep.subr.mxu0 0.0
  %2549 = vmatpush1.msra.mxu0 0.0
  %2550 = vmatprep.subr.mxu0 0.0
  %2551 = vmatpush1.msra.mxu0 0.0
  %2552 = vmatprep.subr.mxu0 0.0
  %2553 = vmatpush1.msra.mxu0 0.0
  %2554 = vmatprep.subr.mxu0 0.0
  %2555 = vmatpush1.msra.mxu0 0.0
  %2556 = vmatprep.subr.mxu0 0.0
  %2557 = vmatpush1.msra.mxu0 0.0
  %2558 = vmatprep.subr.mxu0 0.0
  %2559 = vmatpush1.msra.mxu0 0.0
  %2560 = vmatprep.subr.mxu0 0.0
  %2561 = vmatpush1.msra.mxu0 0.0
  %2562 = vmatprep.subr.mxu0 0.0
  %2563 = vmatpush1.msra.mxu0 0.0
  %2564 = vmatprep.subr.mxu0 0.0
  %2565 = vmatpush1.msra.mxu0 0.0
  %2566 = vmatprep.subr.mxu0 0.0
  %2567 = vmatpush1.msra.mxu0 0.0
  %2568 = vmatprep.mubr.f32.mxu0 0.0
  %2569 = vmatmul.mubr.f32.gmra.mrb[0].mxu0 %v201
  %v2570 = vpop.f32.mrb[0].mxu0
  %v2571 = vadd.f32 %v2502, %v2570
  %v2572 = vpop.f32.mrb[0].mxu0
  %2573 = vmatprep.mubr.f32.mxu0 0.0
  %2574 = vmatmul.mubr.f32.gmra.mrb[0].mxu0 %v204
  %v2575 = vpop.f32.mrb[0].mxu0
  %v2576 = vadd.f32 %v2502, %v2575
  %v2577 = vpop.f32.mrb[0].mxu0
  %2578 = vmatprep.mubr.f32.mxu0 0.0
  %2579 = vmatmul.mubr.f32.gmra.mrb[0].mxu0 %v207
  %v2580 = vpop.f32.mrb[0].mxu0
  %v2581 = vadd.f32 %v2502, %v2580
  %v2582 = vpop.f32.mrb[0].mxu0
  %2583 = vmatprep.mubr.f32.mxu0 0.0
  %2584 = vmatmul.mubr.f32.gmra.mrb[0].mxu0 %v210
  %v2585 = vpop.f32.mrb[0].mxu0
  %v2586 = vadd.f32 %v2502, %v2585
  %v2587 = vpop.f32.mrb[0].mxu0
  %2588 = vmatprep.mubr.f32.mxu0 0.0
  %2589 = vmatmul.mubr.f32.gmra.mrb[0].mxu0 %v213
  %v2590 = vpop.f32.mrb[0].mxu0
  %v2591 = vadd.f32 %v2502, %v2590
  %v2592 = vpop.f32.mrb[0].mxu0
  %2593 = vmatprep.mubr.f32.mxu0 0.0
  %2594 = vmatmul.mubr.f32.gmra.mrb[0].mxu0 %v216
  %v2595 = vpop.f32.mrb[0].mxu0
  %v2596 = vadd.f32 %v2502, %v2595
  %v2597 = vpop.f32.mrb[0].mxu0
  %2598 = vdwg.mxu0
  %s2599 = scalar_lea.vmem %s6, 96
  %v2600 = vld [vmem:[%s2599] sm:$0xff]
  %v2601 = vld [vmem:[%s2599 + $0x8] sm:$0xff]
  %v2602 = vld [vmem:[%s2599 + $0x10] sm:$0xff]
  %v2603 = vld [vmem:[%s2599 + $0x18] sm:$0xff]
  %s2604 = scalar_lea.vmem %s7, 3
  %v2605 = vld [vmem:[%s2604] sm:$0x1]
  %v2607 = vlaneseq
  %v2608 = vshrl.u32 %v2607, 7
  %v2609 = vsub.s32 0, %v2608
  %v2610 = vrot.slane %v2605, %v2609
  %2612 = vmatprep.subr.mxu0 0.0
  %2613 = vmatpush1.msra.mxu0 %v2600
  %2614 = vmatprep.subr.mxu0 0.0
  %2615 = vmatpush1.msra.mxu0 %v2601
  %2616 = vmatprep.subr.mxu0 0.0
  %2617 = vmatpush1.msra.mxu0 %v2602
  %2618 = vmatprep.subr.mxu0 0.0
  %2619 = vmatpush1.msra.mxu0 %v2603
  %2620 = vmatprep.subr.mxu0 0.0
  %2621 = vmatpush1.msra.mxu0 0.0
  %2622 = vmatprep.subr.mxu0 0.0
  %2623 = vmatpush1.msra.mxu0 0.0
  %2624 = vmatprep.subr.mxu0 0.0
  %2625 = vmatpush1.msra.mxu0 0.0
  %2626 = vmatprep.subr.mxu0 0.0
  %2627 = vmatpush1.msra.mxu0 0.0
  %2628 = vmatprep.subr.mxu0 0.0
  %2629 = vmatpush1.msra.mxu0 0.0
  %2630 = vmatprep.subr.mxu0 0.0
  %2631 = vmatpush1.msra.mxu0 0.0
  %2632 = vmatprep.subr.mxu0 0.0
  %2633 = vmatpush1.msra.mxu0 0.0
  %2634 = vmatprep.subr.mxu0 0.0
  %2635 = vmatpush1.msra.mxu0 0.0
  %2636 = vmatprep.subr.mxu0 0.0
  %2637 = vmatpush1.msra.mxu0 0.0
  %2638 = vmatprep.subr.mxu0 0.0
  %2639 = vmatpush1.msra.mxu0 0.0
  %2640 = vmatprep.subr.mxu0 0.0
  %2641 = vmatpush1.msra.mxu0 0.0
  %2642 = vmatprep.subr.mxu0 0.0
  %2643 = vmatpush1.msra.mxu0 0.0
  %2644 = vmatprep.subr.mxu0 0.0
  %2645 = vmatpush1.msra.mxu0 0.0
  %2646 = vmatprep.subr.mxu0 0.0
  %2647 = vmatpush1.msra.mxu0 0.0
  %2648 = vmatprep.subr.mxu0 0.0
  %2649 = vmatpush1.msra.mxu0 0.0
  %2650 = vmatprep.subr.mxu0 0.0
  %2651 = vmatpush1.msra.mxu0 0.0
  %2652 = vmatprep.subr.mxu0 0.0
  %2653 = vmatpush1.msra.mxu0 0.0
  %2654 = vmatprep.subr.mxu0 0.0
  %2655 = vmatpush1.msra.mxu0 0.0
  %2656 = vmatprep.subr.mxu0 0.0
  %2657 = vmatpush1.msra.mxu0 0.0
  %2658 = vmatprep.subr.mxu0 0.0
  %2659 = vmatpush1.msra.mxu0 0.0
  %2660 = vmatprep.subr.mxu0 0.0
  %2661 = vmatpush1.msra.mxu0 0.0
  %2662 = vmatprep.subr.mxu0 0.0
  %2663 = vmatpush1.msra.mxu0 0.0
  %2664 = vmatprep.subr.mxu0 0.0
  %2665 = vmatpush1.msra.mxu0 0.0
  %2666 = vmatprep.subr.mxu0 0.0
  %2667 = vmatpush1.msra.mxu0 0.0
  %2668 = vmatprep.subr.mxu0 0.0
  %2669 = vmatpush1.msra.mxu0 0.0
  %2670 = vmatprep.subr.mxu0 0.0
  %2671 = vmatpush1.msra.mxu0 0.0
  %2672 = vmatprep.subr.mxu0 0.0
  %2673 = vmatpush1.msra.mxu0 0.0
  %2674 = vmatprep.subr.mxu0 0.0
  %2675 = vmatpush1.msra.mxu0 0.0
  %2676 = vmatprep.mubr.f32.mxu0 0.0
  %2677 = vmatmul.mubr.f32.gmra.mrb[0].mxu0 %v201
  %v2678 = vpop.f32.mrb[0].mxu0
  %v2679 = vadd.f32 %v2610, %v2678
  %v2680 = vpop.f32.mrb[0].mxu0
  %2681 = vmatprep.mubr.f32.mxu0 0.0
  %2682 = vmatmul.mubr.f32.gmra.mrb[0].mxu0 %v204
  %v2683 = vpop.f32.mrb[0].mxu0
  %v2684 = vadd.f32 %v2610, %v2683
  %v2685 = vpop.f32.mrb[0].mxu0
  %2686 = vmatprep.mubr.f32.mxu0 0.0
  %2687 = vmatmul.mubr.f32.gmra.mrb[0].mxu0 %v207
  %v2688 = vpop.f32.mrb[0].mxu0
  %v2689 = vadd.f32 %v2610, %v2688
  %v2690 = vpop.f32.mrb[0].mxu0
  %2691 = vmatprep.mubr.f32.mxu0 0.0
  %2692 = vmatmul.mubr.f32.gmra.mrb[0].mxu0 %v210
  %v2693 = vpop.f32.mrb[0].mxu0
  %v2694 = vadd.f32 %v2610, %v2693
  %v2695 = vpop.f32.mrb[0].mxu0
  %2696 = vmatprep.mubr.f32.mxu0 0.0
  %2697 = vmatmul.mubr.f32.gmra.mrb[0].mxu0 %v213
  %v2698 = vpop.f32.mrb[0].mxu0
  %v2699 = vadd.f32 %v2610, %v2698
  %v2700 = vpop.f32.mrb[0].mxu0
  %2701 = vmatprep.mubr.f32.mxu0 0.0
  %2702 = vmatmul.mubr.f32.gmra.mrb[0].mxu0 %v216
  %v2703 = vpop.f32.mrb[0].mxu0
  %v2704 = vadd.f32 %v2610, %v2703
  %v2705 = vpop.f32.mrb[0].mxu0
  %2706 = vdwg.mxu0
  %s2707 = scalar_lea.vmem %s8, 96
  %v2708 = vld [vmem:[%s2707] sm:$0xff]
  %v2709 = vld [vmem:[%s2707 + $0x8] sm:$0xff]
  %v2710 = vld [vmem:[%s2707 + $0x10] sm:$0xff]
  %v2711 = vld [vmem:[%s2707 + $0x18] sm:$0xff]
  %s2712 = scalar_lea.vmem %s9, 3
  %v2713 = vld [vmem:[%s2712] sm:$0x1]
  %v2715 = vlaneseq
  %v2716 = vshrl.u32 %v2715, 7
  %v2717 = vsub.s32 0, %v2716
  %v2718 = vrot.slane %v2713, %v2717
  %2720 = vmatprep.subr.mxu0 0.0
  %2721 = vmatpush1.msra.mxu0 %v2708
  %2722 = vmatprep.subr.mxu0 0.0
  %2723 = vmatpush1.msra.mxu0 %v2709
  %2724 = vmatprep.subr.mxu0 0.0
  %2725 = vmatpush1.msra.mxu0 %v2710
  %2726 = vmatprep.subr.mxu0 0.0
  %2727 = vmatpush1.msra.mxu0 %v2711
  %2728 = vmatprep.subr.mxu0 0.0
  %2729 = vmatpush1.msra.mxu0 0.0
  %2730 = vmatprep.subr.mxu0 0.0
  %2731 = vmatpush1.msra.mxu0 0.0
  %2732 = vmatprep.subr.mxu0 0.0
  %2733 = vmatpush1.msra.mxu0 0.0
  %2734 = vmatprep.subr.mxu0 0.0
  %2735 = vmatpush1.msra.mxu0 0.0
  %2736 = vmatprep.subr.mxu0 0.0
  %2737 = vmatpush1.msra.mxu0 0.0
  %2738 = vmatprep.subr.mxu0 0.0
  %2739 = vmatpush1.msra.mxu0 0.0
  %2740 = vmatprep.subr.mxu0 0.0
  %2741 = vmatpush1.msra.mxu0 0.0
  %2742 = vmatprep.subr.mxu0 0.0
  %2743 = vmatpush1.msra.mxu0 0.0
  %2744 = vmatprep.subr.mxu0 0.0
  %2745 = vmatpush1.msra.mxu0 0.0
  %2746 = vmatprep.subr.mxu0 0.0
  %2747 = vmatpush1.msra.mxu0 0.0
  %2748 = vmatprep.subr.mxu0 0.0
  %2749 = vmatpush1.msra.mxu0 0.0
  %2750 = vmatprep.subr.mxu0 0.0
  %2751 = vmatpush1.msra.mxu0 0.0
  %2752 = vmatprep.subr.mxu0 0.0
  %2753 = vmatpush1.msra.mxu0 0.0
  %2754 = vmatprep.subr.mxu0 0.0
  %2755 = vmatpush1.msra.mxu0 0.0
  %2756 = vmatprep.subr.mxu0 0.0
  %2757 = vmatpush1.msra.mxu0 0.0
  %2758 = vmatprep.subr.mxu0 0.0
  %2759 = vmatpush1.msra.mxu0 0.0
  %2760 = vmatprep.subr.mxu0 0.0
  %2761 = vmatpush1.msra.mxu0 0.0
  %2762 = vmatprep.subr.mxu0 0.0
  %2763 = vmatpush1.msra.mxu0 0.0
  %2764 = vmatprep.subr.mxu0 0.0
  %2765 = vmatpush1.msra.mxu0 0.0
  %2766 = vmatprep.subr.mxu0 0.0
  %2767 = vmatpush1.msra.mxu0 0.0
  %2768 = vmatprep.subr.mxu0 0.0
  %2769 = vmatpush1.msra.mxu0 0.0
  %2770 = vmatprep.subr.mxu0 0.0
  %2771 = vmatpush1.msra.mxu0 0.0
  %2772 = vmatprep.subr.mxu0 0.0
  %2773 = vmatpush1.msra.mxu0 0.0
  %2774 = vmatprep.subr.mxu0 0.0
  %2775 = vmatpush1.msra.mxu0 0.0
  %2776 = vmatprep.subr.mxu0 0.0
  %2777 = vmatpush1.msra.mxu0 0.0
  %2778 = vmatprep.subr.mxu0 0.0
  %2779 = vmatpush1.msra.mxu0 0.0
  %2780 = vmatprep.subr.mxu0 0.0
  %2781 = vmatpush1.msra.mxu0 0.0
  %2782 = vmatprep.subr.mxu0 0.0
  %2783 = vmatpush1.msra.mxu0 0.0
  %2784 = vmatprep.mubr.f32.mxu0 0.0
  %2785 = vmatmul.mubr.f32.gmra.mrb[0].mxu0 %v201
  %v2786 = vpop.f32.mrb[0].mxu0
  %v2787 = vadd.f32 %v2718, %v2786
  %v2788 = vpop.f32.mrb[0].mxu0
  %2789 = vmatprep.mubr.f32.mxu0 0.0
  %2790 = vmatmul.mubr.f32.gmra.mrb[0].mxu0 %v204
  %v2791 = vpop.f32.mrb[0].mxu0
  %v2792 = vadd.f32 %v2718, %v2791
  %v2793 = vpop.f32.mrb[0].mxu0
  %2794 = vmatprep.mubr.f32.mxu0 0.0
  %2795 = vmatmul.mubr.f32.gmra.mrb[0].mxu0 %v207
  %v2796 = vpop.f32.mrb[0].mxu0
  %v2797 = vadd.f32 %v2718, %v2796
  %v2798 = vpop.f32.mrb[0].mxu0
  %2799 = vmatprep.mubr.f32.mxu0 0.0
  %2800 = vmatmul.mubr.f32.gmra.mrb[0].mxu0 %v210
  %v2801 = vpop.f32.mrb[0].mxu0
  %v2802 = vadd.f32 %v2718, %v2801
  %v2803 = vpop.f32.mrb[0].mxu0
  %2804 = vmatprep.mubr.f32.mxu0 0.0
  %2805 = vmatmul.mubr.f32.gmra.mrb[0].mxu0 %v213
  %v2806 = vpop.f32.mrb[0].mxu0
  %v2807 = vadd.f32 %v2718, %v2806
  %v2808 = vpop.f32.mrb[0].mxu0
  %2809 = vmatprep.mubr.f32.mxu0 0.0
  %2810 = vmatmul.mubr.f32.gmra.mrb[0].mxu0 %v216
  %v2811 = vpop.f32.mrb[0].mxu0
  %v2812 = vadd.f32 %v2718, %v2811
  %v2813 = vpop.f32.mrb[0].mxu0
  %2814 = vdwg.mxu0
  %v2816 = vsel %vm525, %v2571, 0
  %v2819 = vsel %vm525, %v2576, 0
  %v2822 = vsel %vm525, %v2581, 0
  %v2825 = vsel %vm525, %v2586, 0
  %v2828 = vsel %vm525, %v2591, 0
  %v2831 = vsel %vm525, %v2596, 0
  %v2834 = vsel %vm525, %v2679, 0
  %v2837 = vsel %vm525, %v2684, 0
  %v2840 = vsel %vm525, %v2689, 0
  %v2843 = vsel %vm525, %v2694, 0
  %v2846 = vsel %vm525, %v2699, 0
  %v2849 = vsel %vm525, %v2704, 0
  %2851 = vmatprep.subr.mxu0 0.0
  %2852 = vmatpush1.xpose.msra.mxu0 %v2834
  %2853 = vmatprep.subr.mxu0 0.0
  %2854 = vmatpush1.xpose.msra.mxu0 %v2837
  %2855 = vmatprep.subr.mxu0 0.0
  %2856 = vmatpush1.xpose.msra.mxu0 %v2840
  %2857 = vmatprep.subr.mxu0 0.0
  %2858 = vmatpush1.xpose.msra.mxu0 %v2843
  %2859 = vmatprep.subr.mxu0 0.0
  %2860 = vmatpush1.xpose.msra.mxu0 %v2846
  %2861 = vmatprep.subr.mxu0 0.0
  %2862 = vmatpush1.xpose.msra.mxu0 %v2849
  %2863 = vmatprep.subr.mxu0 0.0
  %2864 = vmatpush1.xpose.msra.mxu0 0.0
  %2865 = vmatprep.subr.mxu0 0.0
  %2866 = vmatpush1.xpose.msra.mxu0 0.0
  %2867 = vmatprep.subr.mxu0 0.0
  %2868 = vmatpush1.xpose.msra.mxu0 0.0
  %2869 = vmatprep.subr.mxu0 0.0
  %2870 = vmatpush1.xpose.msra.mxu0 0.0
  %2871 = vmatprep.subr.mxu0 0.0
  %2872 = vmatpush1.xpose.msra.mxu0 0.0
  %2873 = vmatprep.subr.mxu0 0.0
  %2874 = vmatpush1.xpose.msra.mxu0 0.0
  %2875 = vmatprep.subr.mxu0 0.0
  %2876 = vmatpush1.xpose.msra.mxu0 0.0
  %2877 = vmatprep.subr.mxu0 0.0
  %2878 = vmatpush1.xpose.msra.mxu0 0.0
  %2879 = vmatprep.subr.mxu0 0.0
  %2880 = vmatpush1.xpose.msra.mxu0 0.0
  %2881 = vmatprep.subr.mxu0 0.0
  %2882 = vmatpush1.xpose.msra.mxu0 0.0
  %2883 = vmatprep.subr.mxu0 0.0
  %2884 = vmatpush1.xpose.msra.mxu0 0.0
  %2885 = vmatprep.subr.mxu0 0.0
  %2886 = vmatpush1.xpose.msra.mxu0 0.0
  %2887 = vmatprep.subr.mxu0 0.0
  %2888 = vmatpush1.xpose.msra.mxu0 0.0
  %2889 = vmatprep.subr.mxu0 0.0
  %2890 = vmatpush1.xpose.msra.mxu0 0.0
  %2891 = vmatprep.subr.mxu0 0.0
  %2892 = vmatpush1.xpose.msra.mxu0 0.0
  %2893 = vmatprep.subr.mxu0 0.0
  %2894 = vmatpush1.xpose.msra.mxu0 0.0
  %2895 = vmatprep.subr.mxu0 0.0
  %2896 = vmatpush1.xpose.msra.mxu0 0.0
  %2897 = vmatprep.subr.mxu0 0.0
  %2898 = vmatpush1.xpose.msra.mxu0 0.0
  %2899 = vmatprep.subr.mxu0 0.0
  %2900 = vmatpush1.xpose.msra.mxu0 0.0
  %2901 = vmatprep.subr.mxu0 0.0
  %2902 = vmatpush1.xpose.msra.mxu0 0.0
  %2903 = vmatprep.subr.mxu0 0.0
  %2904 = vmatpush1.xpose.msra.mxu0 0.0
  %2905 = vmatprep.subr.mxu0 0.0
  %2906 = vmatpush1.xpose.msra.mxu0 0.0
  %2907 = vmatprep.subr.mxu0 0.0
  %2908 = vmatpush1.xpose.msra.mxu0 0.0
  %2909 = vmatprep.subr.mxu0 0.0
  %2910 = vmatpush1.xpose.msra.mxu0 0.0
  %2911 = vmatprep.subr.mxu0 0.0
  %2912 = vmatpush1.xpose.msra.mxu0 0.0
  %2913 = vmatprep.subr.mxu0 0.0
  %2914 = vmatpush1.xpose.msra.mxu0 0.0
  %2915 = vmatprep.mubr.f32.mxu0 0.0
  %2916 = vmatmul.mubr.f32.gmra.mrb[0].mxu0 %v2816
  %v2917 = vpop.f32.mrb[0].mxu0
  %v2918 = vadd.f32 0.0, %v2917
  %v2919 = vpop.f32.mrb[0].mxu0
  %2920 = vmatprep.mubr.f32.mxu0 0.0
  %2921 = vmatmul.mubr.f32.gmra.mrb[0].mxu0 %v2819
  %v2922 = vpop.f32.mrb[0].mxu0
  %v2923 = vadd.f32 0.0, %v2922
  %v2924 = vpop.f32.mrb[0].mxu0
  %2925 = vmatprep.mubr.f32.mxu0 0.0
  %2926 = vmatmul.mubr.f32.gmra.mrb[0].mxu0 %v2822
  %v2927 = vpop.f32.mrb[0].mxu0
  %v2928 = vadd.f32 0.0, %v2927
  %v2929 = vpop.f32.mrb[0].mxu0
  %2930 = vmatprep.mubr.f32.mxu0 0.0
  %2931 = vmatmul.mubr.f32.gmra.mrb[0].mxu0 %v2825
  %v2932 = vpop.f32.mrb[0].mxu0
  %v2933 = vadd.f32 0.0, %v2932
  %v2934 = vpop.f32.mrb[0].mxu0
  %2935 = vmatprep.mubr.f32.mxu0 0.0
  %2936 = vmatmul.mubr.f32.gmra.mrb[0].mxu0 %v2828
  %v2937 = vpop.f32.mrb[0].mxu0
  %v2938 = vadd.f32 0.0, %v2937
  %v2939 = vpop.f32.mrb[0].mxu0
  %2940 = vmatprep.mubr.f32.mxu0 0.0
  %2941 = vmatmul.mubr.f32.gmra.mrb[0].mxu0 %v2831
  %v2942 = vpop.f32.mrb[0].mxu0
  %v2943 = vadd.f32 0.0, %v2942
  %v2944 = vpop.f32.mrb[0].mxu0
  %2945 = vdwg.mxu0
  %v2946 = vmul.f32 %v2918, 0.35355338
  %v2947 = vmul.f32 %v2923, 0.35355338
  %v2948 = vmul.f32 %v2928, 0.35355338
  %v2949 = vmul.f32 %v2933, 0.35355338
  %v2950 = vmul.f32 %v2938, 0.35355338
  %v2951 = vmul.f32 %v2943, 0.35355338
  %v2952 = vadd.f32 %v2946, %v183
  %v2953 = vadd.f32 %v2947, %v184
  %v2954 = vadd.f32 %v2948, %v185
  %v2955 = vadd.f32 %v2949, %v186
  %v2956 = vadd.f32 %v2950, %v187
  %v2957 = vadd.f32 %v2951, %v188
  %v2958 = vsel %vm669, %v2952, -inf
  %2959 = vmax.xlane.f32.xlu0 %v2958
  %v2960 = vpop.xlane.xlu0 %2959
  %v2961 = vsel %vm669, %v2953, -inf
  %2962 = vmax.xlane.f32.xlu0 %v2961
  %v2963 = vpop.xlane.xlu0 %2962
  %v2964 = vsel %vm669, %v2954, -inf
  %2965 = vmax.xlane.f32.xlu0 %v2964
  %v2966 = vpop.xlane.xlu0 %2965
  %v2967 = vsel %vm669, %v2955, -inf
  %2968 = vmax.xlane.f32.xlu0 %v2967
  %v2969 = vpop.xlane.xlu0 %2968
  %v2970 = vsel %vm669, %v2956, -inf
  %2971 = vmax.xlane.f32.xlu0 %v2970
  %v2972 = vpop.xlane.xlu0 %2971
  %v2973 = vsel %vm669, %v2957, -inf
  %2974 = vmax.xlane.f32.xlu0 %v2973
  %v2975 = vpop.xlane.xlu0 %2974
  %v2976 = vsub.f32 %v2952, %v2960
  %v2977 = vsub.f32 %v2953, %v2963
  %v2978 = vsub.f32 %v2954, %v2966
  %v2979 = vsub.f32 %v2955, %v2969
  %v2980 = vsub.f32 %v2956, %v2972
  %v2981 = vsub.f32 %v2957, %v2975
  %v2982 = vmul.f32 %v2976, 1.442695
  %v2983 = vpow.pop %v2982
  %v2984 = vmul.f32 %v2977, 1.442695
  %v2985 = vpow.pop %v2984
  %v2986 = vmul.f32 %v2978, 1.442695
  %v2987 = vpow.pop %v2986
  %v2988 = vmul.f32 %v2979, 1.442695
  %v2989 = vpow.pop %v2988
  %v2990 = vmul.f32 %v2980, 1.442695
  %v2991 = vpow.pop %v2990
  %v2992 = vmul.f32 %v2981, 1.442695
  %v2993 = vpow.pop %v2992
  %v2994 = vsel %vm669, %v2983, 0.0
  %2995 = vadd.xlane.f32.xlu0 %v2994
  %v2996 = vpop.xlane.xlu0 %2995
  %v2997 = vsel %vm669, %v2985, 0.0
  %2998 = vadd.xlane.f32.xlu0 %v2997
  %v2999 = vpop.xlane.xlu0 %2998
  %v3000 = vsel %vm669, %v2987, 0.0
  %3001 = vadd.xlane.f32.xlu0 %v3000
  %v3002 = vpop.xlane.xlu0 %3001
  %v3003 = vsel %vm669, %v2989, 0.0
  %3004 = vadd.xlane.f32.xlu0 %v3003
  %v3005 = vpop.xlane.xlu0 %3004
  %v3006 = vsel %vm669, %v2991, 0.0
  %3007 = vadd.xlane.f32.xlu0 %v3006
  %v3008 = vpop.xlane.xlu0 %3007
  %v3009 = vsel %vm669, %v2993, 0.0
  %3010 = vadd.xlane.f32.xlu0 %v3009
  %v3011 = vpop.xlane.xlu0 %3010
  %v3012 = vrcp.pop %v2996
  %v3013 = vrcp.pop %v2999
  %v3014 = vrcp.pop %v3002
  %v3015 = vrcp.pop %v3005
  %v3016 = vrcp.pop %v3008
  %v3017 = vrcp.pop %v3011
  %v3018 = vmul.f32 %v2983, %v3012
  %v3019 = vmul.f32 %v2985, %v3013
  %v3020 = vmul.f32 %v2987, %v3014
  %v3021 = vmul.f32 %v2989, %v3015
  %v3022 = vmul.f32 %v2991, %v3016
  %v3023 = vmul.f32 %v2993, %v3017
  %v3025 = vsel %vm669, %v3018, 0
  %v3028 = vsel %vm669, %v3019, 0
  %v3031 = vsel %vm669, %v3020, 0
  %v3034 = vsel %vm669, %v3021, 0
  %v3037 = vsel %vm669, %v3022, 0
  %v3040 = vsel %vm669, %v3023, 0
  %3042 = vmatprep.subr.mxu0 0.0
  %3043 = vmatpush1.msra.mxu0 %v2787
  %3044 = vmatprep.subr.mxu0 0.0
  %3045 = vmatpush1.msra.mxu0 %v2792
  %3046 = vmatprep.subr.mxu0 0.0
  %3047 = vmatpush1.msra.mxu0 %v2797
  %3048 = vmatprep.subr.mxu0 0.0
  %3049 = vmatpush1.msra.mxu0 %v2802
  %3050 = vmatprep.subr.mxu0 0.0
  %3051 = vmatpush1.msra.mxu0 %v2807
  %3052 = vmatprep.subr.mxu0 0.0
  %3053 = vmatpush1.msra.mxu0 %v2812
  %3054 = vmatprep.subr.mxu0 0.0
  %3055 = vmatpush1.msra.mxu0 0.0
  %3056 = vmatprep.subr.mxu0 0.0
  %3057 = vmatpush1.msra.mxu0 0.0
  %3058 = vmatprep.subr.mxu0 0.0
  %3059 = vmatpush1.msra.mxu0 0.0
  %3060 = vmatprep.subr.mxu0 0.0
  %3061 = vmatpush1.msra.mxu0 0.0
  %3062 = vmatprep.subr.mxu0 0.0
  %3063 = vmatpush1.msra.mxu0 0.0
  %3064 = vmatprep.subr.mxu0 0.0
  %3065 = vmatpush1.msra.mxu0 0.0
  %3066 = vmatprep.subr.mxu0 0.0
  %3067 = vmatpush1.msra.mxu0 0.0
  %3068 = vmatprep.subr.mxu0 0.0
  %3069 = vmatpush1.msra.mxu0 0.0
  %3070 = vmatprep.subr.mxu0 0.0
  %3071 = vmatpush1.msra.mxu0 0.0
  %3072 = vmatprep.subr.mxu0 0.0
  %3073 = vmatpush1.msra.mxu0 0.0
  %3074 = vmatprep.subr.mxu0 0.0
  %3075 = vmatpush1.msra.mxu0 0.0
  %3076 = vmatprep.subr.mxu0 0.0
  %3077 = vmatpush1.msra.mxu0 0.0
  %3078 = vmatprep.subr.mxu0 0.0
  %3079 = vmatpush1.msra.mxu0 0.0
  %3080 = vmatprep.subr.mxu0 0.0
  %3081 = vmatpush1.msra.mxu0 0.0
  %3082 = vmatprep.subr.mxu0 0.0
  %3083 = vmatpush1.msra.mxu0 0.0
  %3084 = vmatprep.subr.mxu0 0.0
  %3085 = vmatpush1.msra.mxu0 0.0
  %3086 = vmatprep.subr.mxu0 0.0
  %3087 = vmatpush1.msra.mxu0 0.0
  %3088 = vmatprep.subr.mxu0 0.0
  %3089 = vmatpush1.msra.mxu0 0.0
  %3090 = vmatprep.subr.mxu0 0.0
  %3091 = vmatpush1.msra.mxu0 0.0
  %3092 = vmatprep.subr.mxu0 0.0
  %3093 = vmatpush1.msra.mxu0 0.0
  %3094 = vmatprep.subr.mxu0 0.0
  %3095 = vmatpush1.msra.mxu0 0.0
  %3096 = vmatprep.subr.mxu0 0.0
  %3097 = vmatpush1.msra.mxu0 0.0
  %3098 = vmatprep.subr.mxu0 0.0
  %3099 = vmatpush1.msra.mxu0 0.0
  %3100 = vmatprep.subr.mxu0 0.0
  %3101 = vmatpush1.msra.mxu0 0.0
  %3102 = vmatprep.subr.mxu0 0.0
  %3103 = vmatpush1.msra.mxu0 0.0
  %3104 = vmatprep.subr.mxu0 0.0
  %3105 = vmatpush1.msra.mxu0 0.0
  %3106 = vmatprep.mubr.f32.mxu0 0.0
  %3107 = vmatmul.mubr.f32.gmra.mrb[0].mxu0 %v3025
  %v3108 = vpop.f32.mrb[0].mxu0
  %v3109 = vadd.f32 0.0, %v3108
  %v3110 = vpop.f32.mrb[0].mxu0
  %3111 = vmatprep.mubr.f32.mxu0 0.0
  %3112 = vmatmul.mubr.f32.gmra.mrb[0].mxu0 %v3028
  %v3113 = vpop.f32.mrb[0].mxu0
  %v3114 = vadd.f32 0.0, %v3113
  %v3115 = vpop.f32.mrb[0].mxu0
  %3116 = vmatprep.mubr.f32.mxu0 0.0
  %3117 = vmatmul.mubr.f32.gmra.mrb[0].mxu0 %v3031
  %v3118 = vpop.f32.mrb[0].mxu0
  %v3119 = vadd.f32 0.0, %v3118
  %v3120 = vpop.f32.mrb[0].mxu0
  %3121 = vmatprep.mubr.f32.mxu0 0.0
  %3122 = vmatmul.mubr.f32.gmra.mrb[0].mxu0 %v3034
  %v3123 = vpop.f32.mrb[0].mxu0
  %v3124 = vadd.f32 0.0, %v3123
  %v3125 = vpop.f32.mrb[0].mxu0
  %3126 = vmatprep.mubr.f32.mxu0 0.0
  %3127 = vmatmul.mubr.f32.gmra.mrb[0].mxu0 %v3037
  %v3128 = vpop.f32.mrb[0].mxu0
  %v3129 = vadd.f32 0.0, %v3128
  %v3130 = vpop.f32.mrb[0].mxu0
  %3131 = vmatprep.mubr.f32.mxu0 0.0
  %3132 = vmatmul.mubr.f32.gmra.mrb[0].mxu0 %v3040
  %v3133 = vpop.f32.mrb[0].mxu0
  %v3134 = vadd.f32 0.0, %v3133
  %v3135 = vpop.f32.mrb[0].mxu0
  %3136 = vdwg.mxu0
  %s3137 = scalar_lea.vmem %s10, 24
  %v3138 = vld [vmem:[%s3137] sm:$0xff]
  %v3140 = vsel %vm525, %v3109, 0
  %v3143 = vsel %vm525, %v3114, 0
  %v3146 = vsel %vm525, %v3119, 0
  %v3149 = vsel %vm525, %v3124, 0
  %v3152 = vsel %vm525, %v3129, 0
  %v3155 = vsel %vm525, %v3134, 0
  %3157 = vmatprep.subr.mxu0 0.0
  %3158 = vmatpush1.msra.mxu0 %v3138
  %3159 = vmatprep.subr.mxu0 0.0
  %3160 = vmatpush1.msra.mxu0 0.0
  %3161 = vmatprep.subr.mxu0 0.0
  %3162 = vmatpush1.msra.mxu0 0.0
  %3163 = vmatprep.subr.mxu0 0.0
  %3164 = vmatpush1.msra.mxu0 0.0
  %3165 = vmatprep.subr.mxu0 0.0
  %3166 = vmatpush1.msra.mxu0 0.0
  %3167 = vmatprep.subr.mxu0 0.0
  %3168 = vmatpush1.msra.mxu0 0.0
  %3169 = vmatprep.subr.mxu0 0.0
  %3170 = vmatpush1.msra.mxu0 0.0
  %3171 = vmatprep.subr.mxu0 0.0
  %3172 = vmatpush1.msra.mxu0 0.0
  %3173 = vmatprep.subr.mxu0 0.0
  %3174 = vmatpush1.msra.mxu0 0.0
  %3175 = vmatprep.subr.mxu0 0.0
  %3176 = vmatpush1.msra.mxu0 0.0
  %3177 = vmatprep.subr.mxu0 0.0
  %3178 = vmatpush1.msra.mxu0 0.0
  %3179 = vmatprep.subr.mxu0 0.0
  %3180 = vmatpush1.msra.mxu0 0.0
  %3181 = vmatprep.subr.mxu0 0.0
  %3182 = vmatpush1.msra.mxu0 0.0
  %3183 = vmatprep.subr.mxu0 0.0
  %3184 = vmatpush1.msra.mxu0 0.0
  %3185 = vmatprep.subr.mxu0 0.0
  %3186 = vmatpush1.msra.mxu0 0.0
  %3187 = vmatprep.subr.mxu0 0.0
  %3188 = vmatpush1.msra.mxu0 0.0
  %3189 = vmatprep.subr.mxu0 0.0
  %3190 = vmatpush1.msra.mxu0 0.0
  %3191 = vmatprep.subr.mxu0 0.0
  %3192 = vmatpush1.msra.mxu0 0.0
  %3193 = vmatprep.subr.mxu0 0.0
  %3194 = vmatpush1.msra.mxu0 0.0
  %3195 = vmatprep.subr.mxu0 0.0
  %3196 = vmatpush1.msra.mxu0 0.0
  %3197 = vmatprep.subr.mxu0 0.0
  %3198 = vmatpush1.msra.mxu0 0.0
  %3199 = vmatprep.subr.mxu0 0.0
  %3200 = vmatpush1.msra.mxu0 0.0
  %3201 = vmatprep.subr.mxu0 0.0
  %3202 = vmatpush1.msra.mxu0 0.0
  %3203 = vmatprep.subr.mxu0 0.0
  %3204 = vmatpush1.msra.mxu0 0.0
  %3205 = vmatprep.subr.mxu0 0.0
  %3206 = vmatpush1.msra.mxu0 0.0
  %3207 = vmatprep.subr.mxu0 0.0
  %3208 = vmatpush1.msra.mxu0 0.0
  %3209 = vmatprep.subr.mxu0 0.0
  %3210 = vmatpush1.msra.mxu0 0.0
  %3211 = vmatprep.subr.mxu0 0.0
  %3212 = vmatpush1.msra.mxu0 0.0
  %3213 = vmatprep.subr.mxu0 0.0
  %3214 = vmatpush1.msra.mxu0 0.0
  %3215 = vmatprep.subr.mxu0 0.0
  %3216 = vmatpush1.msra.mxu0 0.0
  %3217 = vmatprep.subr.mxu0 0.0
  %3218 = vmatpush1.msra.mxu0 0.0
  %3219 = vmatprep.subr.mxu0 0.0
  %3220 = vmatpush1.msra.mxu0 0.0
  %3221 = vmatprep.mubr.f32.mxu0 0.0
  %3222 = vmatmul.mubr.f32.gmra.mrb[0].mxu0 %v3140
  %v3223 = vpop.f32.mrb[0].mxu0
  %v3224 = vadd.f32 0.0, %v3223
  %v3225 = vpop.f32.mrb[0].mxu0
  %3226 = vmatprep.mubr.f32.mxu0 0.0
  %3227 = vmatmul.mubr.f32.gmra.mrb[0].mxu0 %v3143
  %v3228 = vpop.f32.mrb[0].mxu0
  %v3229 = vadd.f32 0.0, %v3228
  %v3230 = vpop.f32.mrb[0].mxu0
  %3231 = vmatprep.mubr.f32.mxu0 0.0
  %3232 = vmatmul.mubr.f32.gmra.mrb[0].mxu0 %v3146
  %v3233 = vpop.f32.mrb[0].mxu0
  %v3234 = vadd.f32 0.0, %v3233
  %v3235 = vpop.f32.mrb[0].mxu0
  %3236 = vmatprep.mubr.f32.mxu0 0.0
  %3237 = vmatmul.mubr.f32.gmra.mrb[0].mxu0 %v3149
  %v3238 = vpop.f32.mrb[0].mxu0
  %v3239 = vadd.f32 0.0, %v3238
  %v3240 = vpop.f32.mrb[0].mxu0
  %3241 = vmatprep.mubr.f32.mxu0 0.0
  %3242 = vmatmul.mubr.f32.gmra.mrb[0].mxu0 %v3152
  %v3243 = vpop.f32.mrb[0].mxu0
  %v3244 = vadd.f32 0.0, %v3243
  %v3245 = vpop.f32.mrb[0].mxu0
  %3246 = vmatprep.mubr.f32.mxu0 0.0
  %3247 = vmatmul.mubr.f32.gmra.mrb[0].mxu0 %v3155
  %v3248 = vpop.f32.mrb[0].mxu0
  %v3249 = vadd.f32 0.0, %v3248
  %v3250 = vpop.f32.mrb[0].mxu0
  %3251 = vdwg.mxu0
  %v3252 = vadd.f32 %v2485, %v3224
  %v3253 = vadd.f32 %v2486, %v3229
  %v3254 = vadd.f32 %v2487, %v3234
  %v3255 = vadd.f32 %v2488, %v3239
  %v3256 = vadd.f32 %v2489, %v3244
  %v3257 = vadd.f32 %v2490, %v3249
  %v3258 = vld [vmem:[%s11] sm:$0x1]
  %v3260 = vlaneseq
  %v3261 = vshrl.u32 %v3260, 7
  %v3262 = vsub.s32 0, %v3261
  %v3263 = vrot.slane %v3258, %v3262
  %v3265 = vadd.f32 %v3252, %v3263
  %v3266 = vadd.f32 %v3253, %v3263
  %v3267 = vadd.f32 %v3254, %v3263
  %v3268 = vadd.f32 %v3255, %v3263
  %v3269 = vadd.f32 %v3256, %v3263
  %v3270 = vadd.f32 %v3257, %v3263
  %v3271 = vadd.f32 %v177, %v3265
  %v3272 = vadd.f32 %v178, %v3266
  %v3273 = vadd.f32 %v179, %v3267
  %v3274 = vadd.f32 %v180, %v3268
  %v3275 = vadd.f32 %v181, %v3269
  %v3276 = vadd.f32 %v182, %v3270
  %v3277 = vld [vmem:[%s12] sm:$0x1]
  %v3278 = vld [vmem:[%s13] sm:$0x1]
  %v3279 = vsel %vm79, %v3271, 0.0
  %3280 = vadd.xlane.f32.xlu0 %v3279
  %v3281 = vpop.xlane.xlu0 %3280
  %v3282 = vsel %vm79, %v3272, 0.0
  %3283 = vadd.xlane.f32.xlu0 %v3282
  %v3284 = vpop.xlane.xlu0 %3283
  %v3285 = vsel %vm79, %v3273, 0.0
  %3286 = vadd.xlane.f32.xlu0 %v3285
  %v3287 = vpop.xlane.xlu0 %3286
  %v3288 = vsel %vm79, %v3274, 0.0
  %3289 = vadd.xlane.f32.xlu0 %v3288
  %v3290 = vpop.xlane.xlu0 %3289
  %v3291 = vsel %vm79, %v3275, 0.0
  %3292 = vadd.xlane.f32.xlu0 %v3291
  %v3293 = vpop.xlane.xlu0 %3292
  %v3294 = vsel %vm79, %v3276, 0.0
  %3295 = vadd.xlane.f32.xlu0 %v3294
  %v3296 = vpop.xlane.xlu0 %3295
  %v3297 = vmul.f32 %v3281, %v98
  %v3298 = vmul.f32 %v3284, %v98
  %v3299 = vmul.f32 %v3287, %v98
  %v3300 = vmul.f32 %v3290, %v98
  %v3301 = vmul.f32 %v3293, %v98
  %v3302 = vmul.f32 %v3296, %v98
  %v3303 = vsub.f32 %v3271, %v3297
  %v3304 = vsub.f32 %v3272, %v3298
  %v3305 = vsub.f32 %v3273, %v3299
  %v3306 = vsub.f32 %v3274, %v3300
  %v3307 = vsub.f32 %v3275, %v3301
  %v3308 = vsub.f32 %v3276, %v3302
  %v3309 = vmul.f32 %v3303, %v3303
  %v3310 = vmul.f32 %v3304, %v3304
  %v3311 = vmul.f32 %v3305, %v3305
  %v3312 = vmul.f32 %v3306, %v3306
  %v3313 = vmul.f32 %v3307, %v3307
  %v3314 = vmul.f32 %v3308, %v3308
  %v3315 = vsel %vm79, %v3309, 0.0
  %3316 = vadd.xlane.f32.xlu0 %v3315
  %v3317 = vpop.xlane.xlu0 %3316
  %v3318 = vsel %vm79, %v3310, 0.0
  %3319 = vadd.xlane.f32.xlu0 %v3318
  %v3320 = vpop.xlane.xlu0 %3319
  %v3321 = vsel %vm79, %v3311, 0.0
  %3322 = vadd.xlane.f32.xlu0 %v3321
  %v3323 = vpop.xlane.xlu0 %3322
  %v3324 = vsel %vm79, %v3312, 0.0
  %3325 = vadd.xlane.f32.xlu0 %v3324
  %v3326 = vpop.xlane.xlu0 %3325
  %v3327 = vsel %vm79, %v3313, 0.0
  %3328 = vadd.xlane.f32.xlu0 %v3327
  %v3329 = vpop.xlane.xlu0 %3328
  %v3330 = vsel %vm79, %v3314, 0.0
  %3331 = vadd.xlane.f32.xlu0 %v3330
  %v3332 = vpop.xlane.xlu0 %3331
  %v3333 = vmul.f32 %v3317, %v98
  %v3334 = vmul.f32 %v3320, %v98
  %v3335 = vmul.f32 %v3323, %v98
  %v3336 = vmul.f32 %v3326, %v98
  %v3337 = vmul.f32 %v3329, %v98
  %v3338 = vmul.f32 %v3332, %v98
  %v3339 = vadd.f32 %v3333, 1e-12
  %v3340 = vadd.f32 %v3334, 1e-12
  %v3341 = vadd.f32 %v3335, 1e-12
  %v3342 = vadd.f32 %v3336, 1e-12
  %v3343 = vadd.f32 %v3337, 1e-12
  %v3344 = vadd.f32 %v3338, 1e-12
  %v3345 = vrsqrt.pop %v3339
  %v3346 = vrsqrt.pop %v3340
  %v3347 = vrsqrt.pop %v3341
  %v3348 = vrsqrt.pop %v3342
  %v3349 = vrsqrt.pop %v3343
  %v3350 = vrsqrt.pop %v3344
  %v3351 = vmul.f32 %v3303, %v3345
  %v3352 = vmul.f32 %v3304, %v3346
  %v3353 = vmul.f32 %v3305, %v3347
  %v3354 = vmul.f32 %v3306, %v3348
  %v3355 = vmul.f32 %v3307, %v3349
  %v3356 = vmul.f32 %v3308, %v3350
  %v3358 = vlaneseq
  %v3359 = vshrl.u32 %v3358, 7
  %v3360 = vsub.s32 0, %v3359
  %v3361 = vrot.slane %v3277, %v3360
  %v3363 = vmul.f32 %v3351, %v3361
  %v3364 = vmul.f32 %v3352, %v3361
  %v3365 = vmul.f32 %v3353, %v3361
  %v3366 = vmul.f32 %v3354, %v3361
  %v3367 = vmul.f32 %v3355, %v3361
  %v3368 = vmul.f32 %v3356, %v3361
  %v3370 = vlaneseq
  %v3371 = vshrl.u32 %v3370, 7
  %v3372 = vsub.s32 0, %v3371
  %v3373 = vrot.slane %v3278, %v3372
  %v3375 = vadd.f32 %v3363, %v3373
  %v3376 = vadd.f32 %v3364, %v3373
  %v3377 = vadd.f32 %v3365, %v3373
  %v3378 = vadd.f32 %v3366, %v3373
  %v3379 = vadd.f32 %v3367, %v3373
  %v3380 = vadd.f32 %v3368, %v3373
  %v3381 = vld [vmem:[%s14] sm:$0xff]
  %v3382 = vld [vmem:[%s14 + $0x8] sm:$0xff]
  %v3383 = vld [vmem:[%s14 + $0x10] sm:$0xff]
  %v3384 = vld [vmem:[%s14 + $0x18] sm:$0xff]
  %v3385 = vld [vmem:[%s15] sm:$0x1]
  %v3387 = vlaneseq
  %v3388 = vshrl.u32 %v3387, 7
  %v3389 = vsub.s32 0, %v3388
  %v3390 = vrot.slane %v3385, %v3389
  %v3393 = vsel %vm79, %v3375, 0
  %v3396 = vsel %vm79, %v3376, 0
  %v3399 = vsel %vm79, %v3377, 0
  %v3402 = vsel %vm79, %v3378, 0
  %v3405 = vsel %vm79, %v3379, 0
  %v3408 = vsel %vm79, %v3380, 0
  %3410 = vmatprep.subr.mxu0 0.0
  %3411 = vmatpush1.msra.mxu0 %v3381
  %3412 = vmatprep.subr.mxu0 0.0
  %3413 = vmatpush1.msra.mxu0 %v3382
  %3414 = vmatprep.subr.mxu0 0.0
  %3415 = vmatpush1.msra.mxu0 %v3383
  %3416 = vmatprep.subr.mxu0 0.0
  %3417 = vmatpush1.msra.mxu0 %v3384
  %3418 = vmatprep.subr.mxu0 0.0
  %3419 = vmatpush1.msra.mxu0 0.0
  %3420 = vmatprep.subr.mxu0 0.0
  %3421 = vmatpush1.msra.mxu0 0.0
  %3422 = vmatprep.subr.mxu0 0.0
  %3423 = vmatpush1.msra.mxu0 0.0
  %3424 = vmatprep.subr.mxu0 0.0
  %3425 = vmatpush1.msra.mxu0 0.0
  %3426 = vmatprep.subr.mxu0 0.0
  %3427 = vmatpush1.msra.mxu0 0.0
  %3428 = vmatprep.subr.mxu0 0.0
  %3429 = vmatpush1.msra.mxu0 0.0
  %3430 = vmatprep.subr.mxu0 0.0
  %3431 = vmatpush1.msra.mxu0 0.0
  %3432 = vmatprep.subr.mxu0 0.0
  %3433 = vmatpush1.msra.mxu0 0.0
  %3434 = vmatprep.subr.mxu0 0.0
  %3435 = vmatpush1.msra.mxu0 0.0
  %3436 = vmatprep.subr.mxu0 0.0
  %3437 = vmatpush1.msra.mxu0 0.0
  %3438 = vmatprep.subr.mxu0 0.0
  %3439 = vmatpush1.msra.mxu0 0.0
  %3440 = vmatprep.subr.mxu0 0.0
  %3441 = vmatpush1.msra.mxu0 0.0
  %3442 = vmatprep.subr.mxu0 0.0
  %3443 = vmatpush1.msra.mxu0 0.0
  %3444 = vmatprep.subr.mxu0 0.0
  %3445 = vmatpush1.msra.mxu0 0.0
  %3446 = vmatprep.subr.mxu0 0.0
  %3447 = vmatpush1.msra.mxu0 0.0
  %3448 = vmatprep.subr.mxu0 0.0
  %3449 = vmatpush1.msra.mxu0 0.0
  %3450 = vmatprep.subr.mxu0 0.0
  %3451 = vmatpush1.msra.mxu0 0.0
  %3452 = vmatprep.subr.mxu0 0.0
  %3453 = vmatpush1.msra.mxu0 0.0
  %3454 = vmatprep.subr.mxu0 0.0
  %3455 = vmatpush1.msra.mxu0 0.0
  %3456 = vmatprep.subr.mxu0 0.0
  %3457 = vmatpush1.msra.mxu0 0.0
  %3458 = vmatprep.subr.mxu0 0.0
  %3459 = vmatpush1.msra.mxu0 0.0
  %3460 = vmatprep.subr.mxu0 0.0
  %3461 = vmatpush1.msra.mxu0 0.0
  %3462 = vmatprep.subr.mxu0 0.0
  %3463 = vmatpush1.msra.mxu0 0.0
  %3464 = vmatprep.subr.mxu0 0.0
  %3465 = vmatpush1.msra.mxu0 0.0
  %3466 = vmatprep.subr.mxu0 0.0
  %3467 = vmatpush1.msra.mxu0 0.0
  %3468 = vmatprep.subr.mxu0 0.0
  %3469 = vmatpush1.msra.mxu0 0.0
  %3470 = vmatprep.subr.mxu0 0.0
  %3471 = vmatpush1.msra.mxu0 0.0
  %3472 = vmatprep.subr.mxu0 0.0
  %3473 = vmatpush1.msra.mxu0 0.0
  %3474 = vmatprep.mubr.f32.mxu0 0.0
  %3475 = vmatmul.mubr.f32.gmra.mrb[0].mxu0 %v3393
  %v3476 = vpop.f32.mrb[0].mxu0
  %v3477 = vadd.f32 %v3390, %v3476
  %v3478 = vpop.f32.mrb[0].mxu0
  %3479 = vmatprep.mubr.f32.mxu0 0.0
  %3480 = vmatmul.mubr.f32.gmra.mrb[0].mxu0 %v3396
  %v3481 = vpop.f32.mrb[0].mxu0
  %v3482 = vadd.f32 %v3390, %v3481
  %v3483 = vpop.f32.mrb[0].mxu0
  %3484 = vmatprep.mubr.f32.mxu0 0.0
  %3485 = vmatmul.mubr.f32.gmra.mrb[0].mxu0 %v3399
  %v3486 = vpop.f32.mrb[0].mxu0
  %v3487 = vadd.f32 %v3390, %v3486
  %v3488 = vpop.f32.mrb[0].mxu0
  %3489 = vmatprep.mubr.f32.mxu0 0.0
  %3490 = vmatmul.mubr.f32.gmra.mrb[0].mxu0 %v3402
  %v3491 = vpop.f32.mrb[0].mxu0
  %v3492 = vadd.f32 %v3390, %v3491
  %v3493 = vpop.f32.mrb[0].mxu0
  %3494 = vmatprep.mubr.f32.mxu0 0.0
  %3495 = vmatmul.mubr.f32.gmra.mrb[0].mxu0 %v3405
  %v3496 = vpop.f32.mrb[0].mxu0
  %v3497 = vadd.f32 %v3390, %v3496
  %v3498 = vpop.f32.mrb[0].mxu0
  %3499 = vmatprep.mubr.f32.mxu0 0.0
  %3500 = vmatmul.mubr.f32.gmra.mrb[0].mxu0 %v3408
  %v3501 = vpop.f32.mrb[0].mxu0
  %v3502 = vadd.f32 %v3390, %v3501
  %v3503 = vpop.f32.mrb[0].mxu0
  %3504 = vdwg.mxu0
  %v3505 = vmul.f32 %v3477, 0.5
  %v3506 = vmul.f32 %v3482, 0.5
  %v3507 = vmul.f32 %v3487, 0.5
  %v3508 = vmul.f32 %v3492, 0.5
  %v3509 = vmul.f32 %v3497, 0.5
  %v3510 = vmul.f32 %v3502, 0.5
  %v3511 = vmul.f32 %v3477, 0.044715
  %v3512 = vmul.f32 %v3482, 0.044715
  %v3513 = vmul.f32 %v3487, 0.044715
  %v3514 = vmul.f32 %v3492, 0.044715
  %v3515 = vmul.f32 %v3497, 0.044715
  %v3516 = vmul.f32 %v3502, 0.044715
  %v3517 = vmul.f32 %v3511, %v3477
  %v3518 = vmul.f32 %v3512, %v3482
  %v3519 = vmul.f32 %v3513, %v3487
  %v3520 = vmul.f32 %v3514, %v3492
  %v3521 = vmul.f32 %v3515, %v3497
  %v3522 = vmul.f32 %v3516, %v3502
  %v3523 = vmul.f32 %v3517, %v3477
  %v3524 = vmul.f32 %v3518, %v3482
  %v3525 = vmul.f32 %v3519, %v3487
  %v3526 = vmul.f32 %v3520, %v3492
  %v3527 = vmul.f32 %v3521, %v3497
  %v3528 = vmul.f32 %v3522, %v3502
  %v3529 = vadd.f32 %v3477, %v3523
  %v3530 = vadd.f32 %v3482, %v3524
  %v3531 = vadd.f32 %v3487, %v3525
  %v3532 = vadd.f32 %v3492, %v3526
  %v3533 = vadd.f32 %v3497, %v3527
  %v3534 = vadd.f32 %v3502, %v3528
  %v3535 = vmul.f32 %v3529, 0.7978846
  %v3536 = vmul.f32 %v3530, 0.7978846
  %v3537 = vmul.f32 %v3531, 0.7978846
  %v3538 = vmul.f32 %v3532, 0.7978846
  %v3539 = vmul.f32 %v3533, 0.7978846
  %v3540 = vmul.f32 %v3534, 0.7978846
  %v3541 = vtanh.pop %v3535
  %v3542 = vtanh.pop %v3536
  %v3543 = vtanh.pop %v3537
  %v3544 = vtanh.pop %v3538
  %v3545 = vtanh.pop %v3539
  %v3546 = vtanh.pop %v3540
  %v3547 = vadd.f32 %v3541, 1.0
  %v3548 = vadd.f32 %v3542, 1.0
  %v3549 = vadd.f32 %v3543, 1.0
  %v3550 = vadd.f32 %v3544, 1.0
  %v3551 = vadd.f32 %v3545, 1.0
  %v3552 = vadd.f32 %v3546, 1.0
  %v3553 = vmul.f32 %v3505, %v3547
  %v3554 = vmul.f32 %v3506, %v3548
  %v3555 = vmul.f32 %v3507, %v3549
  %v3556 = vmul.f32 %v3508, %v3550
  %v3557 = vmul.f32 %v3509, %v3551
  %v3558 = vmul.f32 %v3510, %v3552
  %v3559 = vld [vmem:[%s16] sm:$0xff]
  %v3560 = vld [vmem:[%s16 + $0x8] sm:$0xff]
  %v3561 = vld [vmem:[%s16 + $0x10] sm:$0xff]
  %v3562 = vld [vmem:[%s16 + $0x18] sm:$0xff]
  %v3563 = vld [vmem:[%s16 + $0x20] sm:$0xff]
  %v3564 = vld [vmem:[%s16 + $0x28] sm:$0xff]
  %v3565 = vld [vmem:[%s16 + $0x30] sm:$0xff]
  %v3566 = vld [vmem:[%s16 + $0x38] sm:$0xff]
  %v3567 = vld [vmem:[%s17] sm:$0x1]
  %v3569 = vlaneseq
  %v3570 = vshrl.u32 %v3569, 7
  %v3571 = vsub.s32 0, %v3570
  %v3572 = vrot.slane %v3567, %v3571
  %vm3574 = vcmask 523264
  %v3576 = vsel %vm3574, %v3553, 0
  %v3579 = vsel %vm3574, %v3554, 0
  %v3582 = vsel %vm3574, %v3555, 0
  %v3585 = vsel %vm3574, %v3556, 0
  %v3588 = vsel %vm3574, %v3557, 0
  %v3591 = vsel %vm3574, %v3558, 0
  %3593 = vmatprep.subr.mxu0 0.0
  %3594 = vmatpush1.msra.mxu0 %v3559
  %3595 = vmatprep.subr.mxu0 0.0
  %3596 = vmatpush1.msra.mxu0 %v3560
  %3597 = vmatprep.subr.mxu0 0.0
  %3598 = vmatpush1.msra.mxu0 %v3561
  %3599 = vmatprep.subr.mxu0 0.0
  %3600 = vmatpush1.msra.mxu0 %v3562
  %3601 = vmatprep.subr.mxu0 0.0
  %3602 = vmatpush1.msra.mxu0 %v3563
  %3603 = vmatprep.subr.mxu0 0.0
  %3604 = vmatpush1.msra.mxu0 %v3564
  %3605 = vmatprep.subr.mxu0 0.0
  %3606 = vmatpush1.msra.mxu0 %v3565
  %3607 = vmatprep.subr.mxu0 0.0
  %3608 = vmatpush1.msra.mxu0 %v3566
  %3609 = vmatprep.subr.mxu0 0.0
  %3610 = vmatpush1.msra.mxu0 0.0
  %3611 = vmatprep.subr.mxu0 0.0
  %3612 = vmatpush1.msra.mxu0 0.0
  %3613 = vmatprep.subr.mxu0 0.0
  %3614 = vmatpush1.msra.mxu0 0.0
  %3615 = vmatprep.subr.mxu0 0.0
  %3616 = vmatpush1.msra.mxu0 0.0
  %3617 = vmatprep.subr.mxu0 0.0
  %3618 = vmatpush1.msra.mxu0 0.0
  %3619 = vmatprep.subr.mxu0 0.0
  %3620 = vmatpush1.msra.mxu0 0.0
  %3621 = vmatprep.subr.mxu0 0.0
  %3622 = vmatpush1.msra.mxu0 0.0
  %3623 = vmatprep.subr.mxu0 0.0
  %3624 = vmatpush1.msra.mxu0 0.0
  %3625 = vmatprep.subr.mxu0 0.0
  %3626 = vmatpush1.msra.mxu0 0.0
  %3627 = vmatprep.subr.mxu0 0.0
  %3628 = vmatpush1.msra.mxu0 0.0
  %3629 = vmatprep.subr.mxu0 0.0
  %3630 = vmatpush1.msra.mxu0 0.0
  %3631 = vmatprep.subr.mxu0 0.0
  %3632 = vmatpush1.msra.mxu0 0.0
  %3633 = vmatprep.subr.mxu0 0.0
  %3634 = vmatpush1.msra.mxu0 0.0
  %3635 = vmatprep.subr.mxu0 0.0
  %3636 = vmatpush1.msra.mxu0 0.0
  %3637 = vmatprep.subr.mxu0 0.0
  %3638 = vmatpush1.msra.mxu0 0.0
  %3639 = vmatprep.subr.mxu0 0.0
  %3640 = vmatpush1.msra.mxu0 0.0
  %3641 = vmatprep.subr.mxu0 0.0
  %3642 = vmatpush1.msra.mxu0 0.0
  %3643 = vmatprep.subr.mxu0 0.0
  %3644 = vmatpush1.msra.mxu0 0.0
  %3645 = vmatprep.subr.mxu0 0.0
  %3646 = vmatpush1.msra.mxu0 0.0
  %3647 = vmatprep.subr.mxu0 0.0
  %3648 = vmatpush1.msra.mxu0 0.0
  %3649 = vmatprep.subr.mxu0 0.0
  %3650 = vmatpush1.msra.mxu0 0.0
  %3651 = vmatprep.subr.mxu0 0.0
  %3652 = vmatpush1.msra.mxu0 0.0
  %3653 = vmatprep.subr.mxu0 0.0
  %3654 = vmatpush1.msra.mxu0 0.0
  %3655 = vmatprep.subr.mxu0 0.0
  %3656 = vmatpush1.msra.mxu0 0.0
  %3657 = vmatprep.mubr.f32.mxu0 0.0
  %3658 = vmatmul.mubr.f32.gmra.mrb[0].mxu0 %v3576
  %v3659 = vpop.f32.mrb[0].mxu0
  %v3660 = vadd.f32 %v3572, %v3659
  %v3661 = vpop.f32.mrb[0].mxu0
  %3662 = vmatprep.mubr.f32.mxu0 0.0
  %3663 = vmatmul.mubr.f32.gmra.mrb[0].mxu0 %v3579
  %v3664 = vpop.f32.mrb[0].mxu0
  %v3665 = vadd.f32 %v3572, %v3664
  %v3666 = vpop.f32.mrb[0].mxu0
  %3667 = vmatprep.mubr.f32.mxu0 0.0
  %3668 = vmatmul.mubr.f32.gmra.mrb[0].mxu0 %v3582
  %v3669 = vpop.f32.mrb[0].mxu0
  %v3670 = vadd.f32 %v3572, %v3669
  %v3671 = vpop.f32.mrb[0].mxu0
  %3672 = vmatprep.mubr.f32.mxu0 0.0
  %3673 = vmatmul.mubr.f32.gmra.mrb[0].mxu0 %v3585
  %v3674 = vpop.f32.mrb[0].mxu0
  %v3675 = vadd.f32 %v3572, %v3674
  %v3676 = vpop.f32.mrb[0].mxu0
  %3677 = vmatprep.mubr.f32.mxu0 0.0
  %3678 = vmatmul.mubr.f32.gmra.mrb[0].mxu0 %v3588
  %v3679 = vpop.f32.mrb[0].mxu0
  %v3680 = vadd.f32 %v3572, %v3679
  %v3681 = vpop.f32.mrb[0].mxu0
  %3682 = vmatprep.mubr.f32.mxu0 0.0
  %3683 = vmatmul.mubr.f32.gmra.mrb[0].mxu0 %v3591
  %v3684 = vpop.f32.mrb[0].mxu0
  %v3685 = vadd.f32 %v3572, %v3684
  %v3686 = vpop.f32.mrb[0].mxu0
  %3687 = vdwg.mxu0
  %v3688 = vadd.f32 %v3375, %v3660
  %v3689 = vadd.f32 %v3376, %v3665
  %v3690 = vadd.f32 %v3377, %v3670
  %v3691 = vadd.f32 %v3378, %v3675
  %v3692 = vadd.f32 %v3379, %v3680
  %v3693 = vadd.f32 %v3380, %v3685
  %v3694 = vld [vmem:[%s18] sm:$0x1]
  %v3695 = vld [vmem:[%s19] sm:$0x1]
  %v3696 = vsel %vm79, %v3688, 0.0
  %3697 = vadd.xlane.f32.xlu0 %v3696
  %v3698 = vpop.xlane.xlu0 %3697
  %v3699 = vsel %vm79, %v3689, 0.0
  %3700 = vadd.xlane.f32.xlu0 %v3699
  %v3701 = vpop.xlane.xlu0 %3700
  %v3702 = vsel %vm79, %v3690, 0.0
  %3703 = vadd.xlane.f32.xlu0 %v3702
  %v3704 = vpop.xlane.xlu0 %3703
  %v3705 = vsel %vm79, %v3691, 0.0
  %3706 = vadd.xlane.f32.xlu0 %v3705
  %v3707 = vpop.xlane.xlu0 %3706
  %v3708 = vsel %vm79, %v3692, 0.0
  %3709 = vadd.xlane.f32.xlu0 %v3708
  %v3710 = vpop.xlane.xlu0 %3709
  %v3711 = vsel %vm79, %v3693, 0.0
  %3712 = vadd.xlane.f32.xlu0 %v3711
  %v3713 = vpop.xlane.xlu0 %3712
  %v3714 = vmul.f32 %v3698, %v98
  %v3715 = vmul.f32 %v3701, %v98
  %v3716 = vmul.f32 %v3704, %v98
  %v3717 = vmul.f32 %v3707, %v98
  %v3718 = vmul.f32 %v3710, %v98
  %v3719 = vmul.f32 %v3713, %v98
  %v3720 = vsub.f32 %v3688, %v3714
  %v3721 = vsub.f32 %v3689, %v3715
  %v3722 = vsub.f32 %v3690, %v3716
  %v3723 = vsub.f32 %v3691, %v3717
  %v3724 = vsub.f32 %v3692, %v3718
  %v3725 = vsub.f32 %v3693, %v3719
  %v3726 = vmul.f32 %v3720, %v3720
  %v3727 = vmul.f32 %v3721, %v3721
  %v3728 = vmul.f32 %v3722, %v3722
  %v3729 = vmul.f32 %v3723, %v3723
  %v3730 = vmul.f32 %v3724, %v3724
  %v3731 = vmul.f32 %v3725, %v3725
  %v3732 = vsel %vm79, %v3726, 0.0
  %3733 = vadd.xlane.f32.xlu0 %v3732
  %v3734 = vpop.xlane.xlu0 %3733
  %v3735 = vsel %vm79, %v3727, 0.0
  %3736 = vadd.xlane.f32.xlu0 %v3735
  %v3737 = vpop.xlane.xlu0 %3736
  %v3738 = vsel %vm79, %v3728, 0.0
  %3739 = vadd.xlane.f32.xlu0 %v3738
  %v3740 = vpop.xlane.xlu0 %3739
  %v3741 = vsel %vm79, %v3729, 0.0
  %3742 = vadd.xlane.f32.xlu0 %v3741
  %v3743 = vpop.xlane.xlu0 %3742
  %v3744 = vsel %vm79, %v3730, 0.0
  %3745 = vadd.xlane.f32.xlu0 %v3744
  %v3746 = vpop.xlane.xlu0 %3745
  %v3747 = vsel %vm79, %v3731, 0.0
  %3748 = vadd.xlane.f32.xlu0 %v3747
  %v3749 = vpop.xlane.xlu0 %3748
  %v3750 = vmul.f32 %v3734, %v98
  %v3751 = vmul.f32 %v3737, %v98
  %v3752 = vmul.f32 %v3740, %v98
  %v3753 = vmul.f32 %v3743, %v98
  %v3754 = vmul.f32 %v3746, %v98
  %v3755 = vmul.f32 %v3749, %v98
  %v3756 = vadd.f32 %v3750, 1e-12
  %v3757 = vadd.f32 %v3751, 1e-12
  %v3758 = vadd.f32 %v3752, 1e-12
  %v3759 = vadd.f32 %v3753, 1e-12
  %v3760 = vadd.f32 %v3754, 1e-12
  %v3761 = vadd.f32 %v3755, 1e-12
  %v3762 = vrsqrt.pop %v3756
  %v3763 = vrsqrt.pop %v3757
  %v3764 = vrsqrt.pop %v3758
  %v3765 = vrsqrt.pop %v3759
  %v3766 = vrsqrt.pop %v3760
  %v3767 = vrsqrt.pop %v3761
  %v3768 = vmul.f32 %v3720, %v3762
  %v3769 = vmul.f32 %v3721, %v3763
  %v3770 = vmul.f32 %v3722, %v3764
  %v3771 = vmul.f32 %v3723, %v3765
  %v3772 = vmul.f32 %v3724, %v3766
  %v3773 = vmul.f32 %v3725, %v3767
  %v3775 = vlaneseq
  %v3776 = vshrl.u32 %v3775, 7
  %v3777 = vsub.s32 0, %v3776
  %v3778 = vrot.slane %v3694, %v3777
  %v3780 = vmul.f32 %v3768, %v3778
  %v3781 = vmul.f32 %v3769, %v3778
  %v3782 = vmul.f32 %v3770, %v3778
  %v3783 = vmul.f32 %v3771, %v3778
  %v3784 = vmul.f32 %v3772, %v3778
  %v3785 = vmul.f32 %v3773, %v3778
  %v3787 = vlaneseq
  %v3788 = vshrl.u32 %v3787, 7
  %v3789 = vsub.s32 0, %v3788
  %v3790 = vrot.slane %v3695, %v3789
  %v3792 = vadd.f32 %v3780, %v3790
  %v3793 = vadd.f32 %v3781, %v3790
  %v3794 = vadd.f32 %v3782, %v3790
  %v3795 = vadd.f32 %v3783, %v3790
  %v3796 = vadd.f32 %v3784, %v3790
  %v3797 = vadd.f32 %v3785, %v3790
  %s3798 = scalar_lea.vmem %s4, 128
  %v3799 = vld [vmem:[%s3798] sm:$0xff]
  %v3800 = vld [vmem:[%s3798 + $0x8] sm:$0xff]
  %v3801 = vld [vmem:[%s3798 + $0x10] sm:$0xff]
  %v3802 = vld [vmem:[%s3798 + $0x18] sm:$0xff]
  %s3803 = scalar_lea.vmem %s5, 4
  %v3804 = vld [vmem:[%s3803] sm:$0x1]
  %v3806 = vlaneseq
  %v3807 = vshrl.u32 %v3806, 7
  %v3808 = vsub.s32 0, %v3807
  %v3809 = vrot.slane %v3804, %v3808
  %v3812 = vsel %vm79, %v3792, 0
  %v3815 = vsel %vm79, %v3793, 0
  %v3818 = vsel %vm79, %v3794, 0
  %v3821 = vsel %vm79, %v3795, 0
  %v3824 = vsel %vm79, %v3796, 0
  %v3827 = vsel %vm79, %v3797, 0
  %3829 = vmatprep.subr.mxu0 0.0
  %3830 = vmatpush1.msra.mxu0 %v3799
  %3831 = vmatprep.subr.mxu0 0.0
  %3832 = vmatpush1.msra.mxu0 %v3800
  %3833 = vmatprep.subr.mxu0 0.0
  %3834 = vmatpush1.msra.mxu0 %v3801
  %3835 = vmatprep.subr.mxu0 0.0
  %3836 = vmatpush1.msra.mxu0 %v3802
  %3837 = vmatprep.subr.mxu0 0.0
  %3838 = vmatpush1.msra.mxu0 0.0
  %3839 = vmatprep.subr.mxu0 0.0
  %3840 = vmatpush1.msra.mxu0 0.0
  %3841 = vmatprep.subr.mxu0 0.0
  %3842 = vmatpush1.msra.mxu0 0.0
  %3843 = vmatprep.subr.mxu0 0.0
  %3844 = vmatpush1.msra.mxu0 0.0
  %3845 = vmatprep.subr.mxu0 0.0
  %3846 = vmatpush1.msra.mxu0 0.0
  %3847 = vmatprep.subr.mxu0 0.0
  %3848 = vmatpush1.msra.mxu0 0.0
  %3849 = vmatprep.subr.mxu0 0.0
  %3850 = vmatpush1.msra.mxu0 0.0
  %3851 = vmatprep.subr.mxu0 0.0
  %3852 = vmatpush1.msra.mxu0 0.0
  %3853 = vmatprep.subr.mxu0 0.0
  %3854 = vmatpush1.msra.mxu0 0.0
  %3855 = vmatprep.subr.mxu0 0.0
  %3856 = vmatpush1.msra.mxu0 0.0
  %3857 = vmatprep.subr.mxu0 0.0
  %3858 = vmatpush1.msra.mxu0 0.0
  %3859 = vmatprep.subr.mxu0 0.0
  %3860 = vmatpush1.msra.mxu0 0.0
  %3861 = vmatprep.subr.mxu0 0.0
  %3862 = vmatpush1.msra.mxu0 0.0
  %3863 = vmatprep.subr.mxu0 0.0
  %3864 = vmatpush1.msra.mxu0 0.0
  %3865 = vmatprep.subr.mxu0 0.0
  %3866 = vmatpush1.msra.mxu0 0.0
  %3867 = vmatprep.subr.mxu0 0.0
  %3868 = vmatpush1.msra.mxu0 0.0
  %3869 = vmatprep.subr.mxu0 0.0
  %3870 = vmatpush1.msra.mxu0 0.0
  %3871 = vmatprep.subr.mxu0 0.0
  %3872 = vmatpush1.msra.mxu0 0.0
  %3873 = vmatprep.subr.mxu0 0.0
  %3874 = vmatpush1.msra.mxu0 0.0
  %3875 = vmatprep.subr.mxu0 0.0
  %3876 = vmatpush1.msra.mxu0 0.0
  %3877 = vmatprep.subr.mxu0 0.0
  %3878 = vmatpush1.msra.mxu0 0.0
  %3879 = vmatprep.subr.mxu0 0.0
  %3880 = vmatpush1.msra.mxu0 0.0
  %3881 = vmatprep.subr.mxu0 0.0
  %3882 = vmatpush1.msra.mxu0 0.0
  %3883 = vmatprep.subr.mxu0 0.0
  %3884 = vmatpush1.msra.mxu0 0.0
  %3885 = vmatprep.subr.mxu0 0.0
  %3886 = vmatpush1.msra.mxu0 0.0
  %3887 = vmatprep.subr.mxu0 0.0
  %3888 = vmatpush1.msra.mxu0 0.0
  %3889 = vmatprep.subr.mxu0 0.0
  %3890 = vmatpush1.msra.mxu0 0.0
  %3891 = vmatprep.subr.mxu0 0.0
  %3892 = vmatpush1.msra.mxu0 0.0
  %3893 = vmatprep.mubr.f32.mxu0 0.0
  %3894 = vmatmul.mubr.f32.gmra.mrb[0].mxu0 %v3812
  %v3895 = vpop.f32.mrb[0].mxu0
  %v3896 = vadd.f32 %v3809, %v3895
  %v3897 = vpop.f32.mrb[0].mxu0
  %3898 = vmatprep.mubr.f32.mxu0 0.0
  %3899 = vmatmul.mubr.f32.gmra.mrb[0].mxu0 %v3815
  %v3900 = vpop.f32.mrb[0].mxu0
  %v3901 = vadd.f32 %v3809, %v3900
  %v3902 = vpop.f32.mrb[0].mxu0
  %3903 = vmatprep.mubr.f32.mxu0 0.0
  %3904 = vmatmul.mubr.f32.gmra.mrb[0].mxu0 %v3818
  %v3905 = vpop.f32.mrb[0].mxu0
  %v3906 = vadd.f32 %v3809, %v3905
  %v3907 = vpop.f32.mrb[0].mxu0
  %3908 = vmatprep.mubr.f32.mxu0 0.0
  %3909 = vmatmul.mubr.f32.gmra.mrb[0].mxu0 %v3821
  %v3910 = vpop.f32.mrb[0].mxu0
  %v3911 = vadd.f32 %v3809, %v3910
  %v3912 = vpop.f32.mrb[0].mxu0
  %3913 = vmatprep.mubr.f32.mxu0 0.0
  %3914 = vmatmul.mubr.f32.gmra.mrb[0].mxu0 %v3824
  %v3915 = vpop.f32.mrb[0].mxu0
  %v3916 = vadd.f32 %v3809, %v3915
  %v3917 = vpop.f32.mrb[0].mxu0
  %3918 = vmatprep.mubr.f32.mxu0 0.0
  %3919 = vmatmul.mubr.f32.gmra.mrb[0].mxu0 %v3827
  %v3920 = vpop.f32.mrb[0].mxu0
  %v3921 = vadd.f32 %v3809, %v3920
  %v3922 = vpop.f32.mrb[0].mxu0
  %3923 = vdwg.mxu0
  %s3924 = scalar_lea.vmem %s6, 128
  %v3925 = vld [vmem:[%s3924] sm:$0xff]
  %v3926 = vld [vmem:[%s3924 + $0x8] sm:$0xff]
  %v3927 = vld [vmem:[%s3924 + $0x10] sm:$0xff]
  %v3928 = vld [vmem:[%s3924 + $0x18] sm:$0xff]
  %s3929 = scalar_lea.vmem %s7, 4
  %v3930 = vld [vmem:[%s3929] sm:$0x1]
  %v3932 = vlaneseq
  %v3933 = vshrl.u32 %v3932, 7
  %v3934 = vsub.s32 0, %v3933
  %v3935 = vrot.slane %v3930, %v3934
  %3937 = vmatprep.subr.mxu0 0.0
  %3938 = vmatpush1.msra.mxu0 %v3925
  %3939 = vmatprep.subr.mxu0 0.0
  %3940 = vmatpush1.msra.mxu0 %v3926
  %3941 = vmatprep.subr.mxu0 0.0
  %3942 = vmatpush1.msra.mxu0 %v3927
  %3943 = vmatprep.subr.mxu0 0.0
  %3944 = vmatpush1.msra.mxu0 %v3928
  %3945 = vmatprep.subr.mxu0 0.0
  %3946 = vmatpush1.msra.mxu0 0.0
  %3947 = vmatprep.subr.mxu0 0.0
  %3948 = vmatpush1.msra.mxu0 0.0
  %3949 = vmatprep.subr.mxu0 0.0
  %3950 = vmatpush1.msra.mxu0 0.0
  %3951 = vmatprep.subr.mxu0 0.0
  %3952 = vmatpush1.msra.mxu0 0.0
  %3953 = vmatprep.subr.mxu0 0.0
  %3954 = vmatpush1.msra.mxu0 0.0
  %3955 = vmatprep.subr.mxu0 0.0
  %3956 = vmatpush1.msra.mxu0 0.0
  %3957 = vmatprep.subr.mxu0 0.0
  %3958 = vmatpush1.msra.mxu0 0.0
  %3959 = vmatprep.subr.mxu0 0.0
  %3960 = vmatpush1.msra.mxu0 0.0
  %3961 = vmatprep.subr.mxu0 0.0
  %3962 = vmatpush1.msra.mxu0 0.0
  %3963 = vmatprep.subr.mxu0 0.0
  %3964 = vmatpush1.msra.mxu0 0.0
  %3965 = vmatprep.subr.mxu0 0.0
  %3966 = vmatpush1.msra.mxu0 0.0
  %3967 = vmatprep.subr.mxu0 0.0
  %3968 = vmatpush1.msra.mxu0 0.0
  %3969 = vmatprep.subr.mxu0 0.0
  %3970 = vmatpush1.msra.mxu0 0.0
  %3971 = vmatprep.subr.mxu0 0.0
  %3972 = vmatpush1.msra.mxu0 0.0
  %3973 = vmatprep.subr.mxu0 0.0
  %3974 = vmatpush1.msra.mxu0 0.0
  %3975 = vmatprep.subr.mxu0 0.0
  %3976 = vmatpush1.msra.mxu0 0.0
  %3977 = vmatprep.subr.mxu0 0.0
  %3978 = vmatpush1.msra.mxu0 0.0
  %3979 = vmatprep.subr.mxu0 0.0
  %3980 = vmatpush1.msra.mxu0 0.0
  %3981 = vmatprep.subr.mxu0 0.0
  %3982 = vmatpush1.msra.mxu0 0.0
  %3983 = vmatprep.subr.mxu0 0.0
  %3984 = vmatpush1.msra.mxu0 0.0
  %3985 = vmatprep.subr.mxu0 0.0
  %3986 = vmatpush1.msra.mxu0 0.0
  %3987 = vmatprep.subr.mxu0 0.0
  %3988 = vmatpush1.msra.mxu0 0.0
  %3989 = vmatprep.subr.mxu0 0.0
  %3990 = vmatpush1.msra.mxu0 0.0
  %3991 = vmatprep.subr.mxu0 0.0
  %3992 = vmatpush1.msra.mxu0 0.0
  %3993 = vmatprep.subr.mxu0 0.0
  %3994 = vmatpush1.msra.mxu0 0.0
  %3995 = vmatprep.subr.mxu0 0.0
  %3996 = vmatpush1.msra.mxu0 0.0
  %3997 = vmatprep.subr.mxu0 0.0
  %3998 = vmatpush1.msra.mxu0 0.0
  %3999 = vmatprep.subr.mxu0 0.0
  %4000 = vmatpush1.msra.mxu0 0.0
  %4001 = vmatprep.mubr.f32.mxu0 0.0
  %4002 = vmatmul.mubr.f32.gmra.mrb[0].mxu0 %v3812
  %v4003 = vpop.f32.mrb[0].mxu0
  %v4004 = vadd.f32 %v3935, %v4003
  %v4005 = vpop.f32.mrb[0].mxu0
  %4006 = vmatprep.mubr.f32.mxu0 0.0
  %4007 = vmatmul.mubr.f32.gmra.mrb[0].mxu0 %v3815
  %v4008 = vpop.f32.mrb[0].mxu0
  %v4009 = vadd.f32 %v3935, %v4008
  %v4010 = vpop.f32.mrb[0].mxu0
  %4011 = vmatprep.mubr.f32.mxu0 0.0
  %4012 = vmatmul.mubr.f32.gmra.mrb[0].mxu0 %v3818
  %v4013 = vpop.f32.mrb[0].mxu0
  %v4014 = vadd.f32 %v3935, %v4013
  %v4015 = vpop.f32.mrb[0].mxu0
  %4016 = vmatprep.mubr.f32.mxu0 0.0
  %4017 = vmatmul.mubr.f32.gmra.mrb[0].mxu0 %v3821
  %v4018 = vpop.f32.mrb[0].mxu0
  %v4019 = vadd.f32 %v3935, %v4018
  %v4020 = vpop.f32.mrb[0].mxu0
  %4021 = vmatprep.mubr.f32.mxu0 0.0
  %4022 = vmatmul.mubr.f32.gmra.mrb[0].mxu0 %v3824
  %v4023 = vpop.f32.mrb[0].mxu0
  %v4024 = vadd.f32 %v3935, %v4023
  %v4025 = vpop.f32.mrb[0].mxu0
  %4026 = vmatprep.mubr.f32.mxu0 0.0
  %4027 = vmatmul.mubr.f32.gmra.mrb[0].mxu0 %v3827
  %v4028 = vpop.f32.mrb[0].mxu0
  %v4029 = vadd.f32 %v3935, %v4028
  %v4030 = vpop.f32.mrb[0].mxu0
  %4031 = vdwg.mxu0
  %s4032 = scalar_lea.vmem %s8, 128
  %v4033 = vld [vmem:[%s4032] sm:$0xff]
  %v4034 = vld [vmem:[%s4032 + $0x8] sm:$0xff]
  %v4035 = vld [vmem:[%s4032 + $0x10] sm:$0xff]
  %v4036 = vld [vmem:[%s4032 + $0x18] sm:$0xff]
  %s4037 = scalar_lea.vmem %s9, 4
  %v4038 = vld [vmem:[%s4037] sm:$0x1]
  %v4040 = vlaneseq
  %v4041 = vshrl.u32 %v4040, 7
  %v4042 = vsub.s32 0, %v4041
  %v4043 = vrot.slane %v4038, %v4042
  %4045 = vmatprep.subr.mxu0 0.0
  %4046 = vmatpush1.msra.mxu0 %v4033
  %4047 = vmatprep.subr.mxu0 0.0
  %4048 = vmatpush1.msra.mxu0 %v4034
  %4049 = vmatprep.subr.mxu0 0.0
  %4050 = vmatpush1.msra.mxu0 %v4035
  %4051 = vmatprep.subr.mxu0 0.0
  %4052 = vmatpush1.msra.mxu0 %v4036
  %4053 = vmatprep.subr.mxu0 0.0
  %4054 = vmatpush1.msra.mxu0 0.0
  %4055 = vmatprep.subr.mxu0 0.0
  %4056 = vmatpush1.msra.mxu0 0.0
  %4057 = vmatprep.subr.mxu0 0.0
  %4058 = vmatpush1.msra.mxu0 0.0
  %4059 = vmatprep.subr.mxu0 0.0
  %4060 = vmatpush1.msra.mxu0 0.0
  %4061 = vmatprep.subr.mxu0 0.0
  %4062 = vmatpush1.msra.mxu0 0.0
  %4063 = vmatprep.subr.mxu0 0.0
  %4064 = vmatpush1.msra.mxu0 0.0
  %4065 = vmatprep.subr.mxu0 0.0
  %4066 = vmatpush1.msra.mxu0 0.0
  %4067 = vmatprep.subr.mxu0 0.0
  %4068 = vmatpush1.msra.mxu0 0.0
  %4069 = vmatprep.subr.mxu0 0.0
  %4070 = vmatpush1.msra.mxu0 0.0
  %4071 = vmatprep.subr.mxu0 0.0
  %4072 = vmatpush1.msra.mxu0 0.0
  %4073 = vmatprep.subr.mxu0 0.0
  %4074 = vmatpush1.msra.mxu0 0.0
  %4075 = vmatprep.subr.mxu0 0.0
  %4076 = vmatpush1.msra.mxu0 0.0
  %4077 = vmatprep.subr.mxu0 0.0
  %4078 = vmatpush1.msra.mxu0 0.0
  %4079 = vmatprep.subr.mxu0 0.0
  %4080 = vmatpush1.msra.mxu0 0.0
  %4081 = vmatprep.subr.mxu0 0.0
  %4082 = vmatpush1.msra.mxu0 0.0
  %4083 = vmatprep.subr.mxu0 0.0
  %4084 = vmatpush1.msra.mxu0 0.0
  %4085 = vmatprep.subr.mxu0 0.0
  %4086 = vmatpush1.msra.mxu0 0.0
  %4087 = vmatprep.subr.mxu0 0.0
  %4088 = vmatpush1.msra.mxu0 0.0
  %4089 = vmatprep.subr.mxu0 0.0
  %4090 = vmatpush1.msra.mxu0 0.0
  %4091 = vmatprep.subr.mxu0 0.0
  %4092 = vmatpush1.msra.mxu0 0.0
  %4093 = vmatprep.subr.mxu0 0.0
  %4094 = vmatpush1.msra.mxu0 0.0
  %4095 = vmatprep.subr.mxu0 0.0
  %4096 = vmatpush1.msra.mxu0 0.0
  %4097 = vmatprep.subr.mxu0 0.0
  %4098 = vmatpush1.msra.mxu0 0.0
  %4099 = vmatprep.subr.mxu0 0.0
  %4100 = vmatpush1.msra.mxu0 0.0
  %4101 = vmatprep.subr.mxu0 0.0
  %4102 = vmatpush1.msra.mxu0 0.0
  %4103 = vmatprep.subr.mxu0 0.0
  %4104 = vmatpush1.msra.mxu0 0.0
  %4105 = vmatprep.subr.mxu0 0.0
  %4106 = vmatpush1.msra.mxu0 0.0
  %4107 = vmatprep.subr.mxu0 0.0
  %4108 = vmatpush1.msra.mxu0 0.0
  %4109 = vmatprep.mubr.f32.mxu0 0.0
  %4110 = vmatmul.mubr.f32.gmra.mrb[0].mxu0 %v3812
  %v4111 = vpop.f32.mrb[0].mxu0
  %v4112 = vadd.f32 %v4043, %v4111
  %v4113 = vpop.f32.mrb[0].mxu0
  %4114 = vmatprep.mubr.f32.mxu0 0.0
  %4115 = vmatmul.mubr.f32.gmra.mrb[0].mxu0 %v3815
  %v4116 = vpop.f32.mrb[0].mxu0
  %v4117 = vadd.f32 %v4043, %v4116
  %v4118 = vpop.f32.mrb[0].mxu0
  %4119 = vmatprep.mubr.f32.mxu0 0.0
  %4120 = vmatmul.mubr.f32.gmra.mrb[0].mxu0 %v3818
  %v4121 = vpop.f32.mrb[0].mxu0
  %v4122 = vadd.f32 %v4043, %v4121
  %v4123 = vpop.f32.mrb[0].mxu0
  %4124 = vmatprep.mubr.f32.mxu0 0.0
  %4125 = vmatmul.mubr.f32.gmra.mrb[0].mxu0 %v3821
  %v4126 = vpop.f32.mrb[0].mxu0
  %v4127 = vadd.f32 %v4043, %v4126
  %v4128 = vpop.f32.mrb[0].mxu0
  %4129 = vmatprep.mubr.f32.mxu0 0.0
  %4130 = vmatmul.mubr.f32.gmra.mrb[0].mxu0 %v3824
  %v4131 = vpop.f32.mrb[0].mxu0
  %v4132 = vadd.f32 %v4043, %v4131
  %v4133 = vpop.f32.mrb[0].mxu0
  %4134 = vmatprep.mubr.f32.mxu0 0.0
  %4135 = vmatmul.mubr.f32.gmra.mrb[0].mxu0 %v3827
  %v4136 = vpop.f32.mrb[0].mxu0
  %v4137 = vadd.f32 %v4043, %v4136
  %v4138 = vpop.f32.mrb[0].mxu0
  %4139 = vdwg.mxu0
  %v4141 = vsel %vm525, %v3896, 0
  %v4144 = vsel %vm525, %v3901, 0
  %v4147 = vsel %vm525, %v3906, 0
  %v4150 = vsel %vm525, %v3911, 0
  %v4153 = vsel %vm525, %v3916, 0
  %v4156 = vsel %vm525, %v3921, 0
  %v4159 = vsel %vm525, %v4004, 0
  %v4162 = vsel %vm525, %v4009, 0
  %v4165 = vsel %vm525, %v4014, 0
  %v4168 = vsel %vm525, %v4019, 0
  %v4171 = vsel %vm525, %v4024, 0
  %v4174 = vsel %vm525, %v4029, 0
  %4176 = vmatprep.subr.mxu0 0.0
  %4177 = vmatpush1.xpose.msra.mxu0 %v4159
  %4178 = vmatprep.subr.mxu0 0.0
  %4179 = vmatpush1.xpose.msra.mxu0 %v4162
  %4180 = vmatprep.subr.mxu0 0.0
  %4181 = vmatpush1.xpose.msra.mxu0 %v4165
  %4182 = vmatprep.subr.mxu0 0.0
  %4183 = vmatpush1.xpose.msra.mxu0 %v4168
  %4184 = vmatprep.subr.mxu0 0.0
  %4185 = vmatpush1.xpose.msra.mxu0 %v4171
  %4186 = vmatprep.subr.mxu0 0.0
  %4187 = vmatpush1.xpose.msra.mxu0 %v4174
  %4188 = vmatprep.subr.mxu0 0.0
  %4189 = vmatpush1.xpose.msra.mxu0 0.0
  %4190 = vmatprep.subr.mxu0 0.0
  %4191 = vmatpush1.xpose.msra.mxu0 0.0
  %4192 = vmatprep.subr.mxu0 0.0
  %4193 = vmatpush1.xpose.msra.mxu0 0.0
  %4194 = vmatprep.subr.mxu0 0.0
  %4195 = vmatpush1.xpose.msra.mxu0 0.0
  %4196 = vmatprep.subr.mxu0 0.0
  %4197 = vmatpush1.xpose.msra.mxu0 0.0
  %4198 = vmatprep.subr.mxu0 0.0
  %4199 = vmatpush1.xpose.msra.mxu0 0.0
  %4200 = vmatprep.subr.mxu0 0.0
  %4201 = vmatpush1.xpose.msra.mxu0 0.0
  %4202 = vmatprep.subr.mxu0 0.0
  %4203 = vmatpush1.xpose.msra.mxu0 0.0
  %4204 = vmatprep.subr.mxu0 0.0
  %4205 = vmatpush1.xpose.msra.mxu0 0.0
  %4206 = vmatprep.subr.mxu0 0.0
  %4207 = vmatpush1.xpose.msra.mxu0 0.0
  %4208 = vmatprep.subr.mxu0 0.0
  %4209 = vmatpush1.xpose.msra.mxu0 0.0
  %4210 = vmatprep.subr.mxu0 0.0
  %4211 = vmatpush1.xpose.msra.mxu0 0.0
  %4212 = vmatprep.subr.mxu0 0.0
  %4213 = vmatpush1.xpose.msra.mxu0 0.0
  %4214 = vmatprep.subr.mxu0 0.0
  %4215 = vmatpush1.xpose.msra.mxu0 0.0
  %4216 = vmatprep.subr.mxu0 0.0
  %4217 = vmatpush1.xpose.msra.mxu0 0.0
  %4218 = vmatprep.subr.mxu0 0.0
  %4219 = vmatpush1.xpose.msra.mxu0 0.0
  %4220 = vmatprep.subr.mxu0 0.0
  %4221 = vmatpush1.xpose.msra.mxu0 0.0
  %4222 = vmatprep.subr.mxu0 0.0
  %4223 = vmatpush1.xpose.msra.mxu0 0.0
  %4224 = vmatprep.subr.mxu0 0.0
  %4225 = vmatpush1.xpose.msra.mxu0 0.0
  %4226 = vmatprep.subr.mxu0 0.0
  %4227 = vmatpush1.xpose.msra.mxu0 0.0
  %4228 = vmatprep.subr.mxu0 0.0
  %4229 = vmatpush1.xpose.msra.mxu0 0.0
  %4230 = vmatprep.subr.mxu0 0.0
  %4231 = vmatpush1.xpose.msra.mxu0 0.0
  %4232 = vmatprep.subr.mxu0 0.0
  %4233 = vmatpush1.xpose.msra.mxu0 0.0
  %4234 = vmatprep.subr.mxu0 0.0
  %4235 = vmatpush1.xpose.msra.mxu0 0.0
  %4236 = vmatprep.subr.mxu0 0.0
  %4237 = vmatpush1.xpose.msra.mxu0 0.0
  %4238 = vmatprep.subr.mxu0 0.0
  %4239 = vmatpush1.xpose.msra.mxu0 0.0
  %4240 = vmatprep.mubr.f32.mxu0 0.0
  %4241 = vmatmul.mubr.f32.gmra.mrb[0].mxu0 %v4141
  %v4242 = vpop.f32.mrb[0].mxu0
  %v4243 = vadd.f32 0.0, %v4242
  %v4244 = vpop.f32.mrb[0].mxu0
  %4245 = vmatprep.mubr.f32.mxu0 0.0
  %4246 = vmatmul.mubr.f32.gmra.mrb[0].mxu0 %v4144
  %v4247 = vpop.f32.mrb[0].mxu0
  %v4248 = vadd.f32 0.0, %v4247
  %v4249 = vpop.f32.mrb[0].mxu0
  %4250 = vmatprep.mubr.f32.mxu0 0.0
  %4251 = vmatmul.mubr.f32.gmra.mrb[0].mxu0 %v4147
  %v4252 = vpop.f32.mrb[0].mxu0
  %v4253 = vadd.f32 0.0, %v4252
  %v4254 = vpop.f32.mrb[0].mxu0
  %4255 = vmatprep.mubr.f32.mxu0 0.0
  %4256 = vmatmul.mubr.f32.gmra.mrb[0].mxu0 %v4150
  %v4257 = vpop.f32.mrb[0].mxu0
  %v4258 = vadd.f32 0.0, %v4257
  %v4259 = vpop.f32.mrb[0].mxu0
  %4260 = vmatprep.mubr.f32.mxu0 0.0
  %4261 = vmatmul.mubr.f32.gmra.mrb[0].mxu0 %v4153
  %v4262 = vpop.f32.mrb[0].mxu0
  %v4263 = vadd.f32 0.0, %v4262
  %v4264 = vpop.f32.mrb[0].mxu0
  %4265 = vmatprep.mubr.f32.mxu0 0.0
  %4266 = vmatmul.mubr.f32.gmra.mrb[0].mxu0 %v4156
  %v4267 = vpop.f32.mrb[0].mxu0
  %v4268 = vadd.f32 0.0, %v4267
  %v4269 = vpop.f32.mrb[0].mxu0
  %4270 = vdwg.mxu0
  %v4271 = vmul.f32 %v4243, 0.35355338
  %v4272 = vmul.f32 %v4248, 0.35355338
  %v4273 = vmul.f32 %v4253, 0.35355338
  %v4274 = vmul.f32 %v4258, 0.35355338
  %v4275 = vmul.f32 %v4263, 0.35355338
  %v4276 = vmul.f32 %v4268, 0.35355338
  %v4277 = vadd.f32 %v4271, %v183
  %v4278 = vadd.f32 %v4272, %v184
  %v4279 = vadd.f32 %v4273, %v185
  %v4280 = vadd.f32 %v4274, %v186
  %v4281 = vadd.f32 %v4275, %v187
  %v4282 = vadd.f32 %v4276, %v188
  %v4283 = vsel %vm669, %v4277, -inf
  %4284 = vmax.xlane.f32.xlu0 %v4283
  %v4285 = vpop.xlane.xlu0 %4284
  %v4286 = vsel %vm669, %v4278, -inf
  %4287 = vmax.xlane.f32.xlu0 %v4286
  %v4288 = vpop.xlane.xlu0 %4287
  %v4289 = vsel %vm669, %v4279, -inf
  %4290 = vmax.xlane.f32.xlu0 %v4289
  %v4291 = vpop.xlane.xlu0 %4290
  %v4292 = vsel %vm669, %v4280, -inf
  %4293 = vmax.xlane.f32.xlu0 %v4292
  %v4294 = vpop.xlane.xlu0 %4293
  %v4295 = vsel %vm669, %v4281, -inf
  %4296 = vmax.xlane.f32.xlu0 %v4295
  %v4297 = vpop.xlane.xlu0 %4296
  %v4298 = vsel %vm669, %v4282, -inf
  %4299 = vmax.xlane.f32.xlu0 %v4298
  %v4300 = vpop.xlane.xlu0 %4299
  %v4301 = vsub.f32 %v4277, %v4285
  %v4302 = vsub.f32 %v4278, %v4288
  %v4303 = vsub.f32 %v4279, %v4291
  %v4304 = vsub.f32 %v4280, %v4294
  %v4305 = vsub.f32 %v4281, %v4297
  %v4306 = vsub.f32 %v4282, %v4300
  %v4307 = vmul.f32 %v4301, 1.442695
  %v4308 = vpow.pop %v4307
  %v4309 = vmul.f32 %v4302, 1.442695
  %v4310 = vpow.pop %v4309
  %v4311 = vmul.f32 %v4303, 1.442695
  %v4312 = vpow.pop %v4311
  %v4313 = vmul.f32 %v4304, 1.442695
  %v4314 = vpow.pop %v4313
  %v4315 = vmul.f32 %v4305, 1.442695
  %v4316 = vpow.pop %v4315
  %v4317 = vmul.f32 %v4306, 1.442695
  %v4318 = vpow.pop %v4317
  %v4319 = vsel %vm669, %v4308, 0.0
  %4320 = vadd.xlane.f32.xlu0 %v4319
  %v4321 = vpop.xlane.xlu0 %4320
  %v4322 = vsel %vm669, %v4310, 0.0
  %4323 = vadd.xlane.f32.xlu0 %v4322
  %v4324 = vpop.xlane.xlu0 %4323
  %v4325 = vsel %vm669, %v4312, 0.0
  %4326 = vadd.xlane.f32.xlu0 %v4325
  %v4327 = vpop.xlane.xlu0 %4326
  %v4328 = vsel %vm669, %v4314, 0.0
  %4329 = vadd.xlane.f32.xlu0 %v4328
  %v4330 = vpop.xlane.xlu0 %4329
  %v4331 = vsel %vm669, %v4316, 0.0
  %4332 = vadd.xlane.f32.xlu0 %v4331
  %v4333 = vpop.xlane.xlu0 %4332
  %v4334 = vsel %vm669, %v4318, 0.0
  %4335 = vadd.xlane.f32.xlu0 %v4334
  %v4336 = vpop.xlane.xlu0 %4335
  %v4337 = vrcp.pop %v4321
  %v4338 = vrcp.pop %v4324
  %v4339 = vrcp.pop %v4327
  %v4340 = vrcp.pop %v4330
  %v4341 = vrcp.pop %v4333
  %v4342 = vrcp.pop %v4336
  %v4343 = vmul.f32 %v4308, %v4337
  %v4344 = vmul.f32 %v4310, %v4338
  %v4345 = vmul.f32 %v4312, %v4339
  %v4346 = vmul.f32 %v4314, %v4340
  %v4347 = vmul.f32 %v4316, %v4341
  %v4348 = vmul.f32 %v4318, %v4342
  %v4350 = vsel %vm669, %v4343, 0
  %v4353 = vsel %vm669, %v4344, 0
  %v4356 = vsel %vm669, %v4345, 0
  %v4359 = vsel %vm669, %v4346, 0
  %v4362 = vsel %vm669, %v4347, 0
  %v4365 = vsel %vm669, %v4348, 0
  %4367 = vmatprep.subr.mxu0 0.0
  %4368 = vmatpush1.msra.mxu0 %v4112
  %4369 = vmatprep.subr.mxu0 0.0
  %4370 = vmatpush1.msra.mxu0 %v4117
  %4371 = vmatprep.subr.mxu0 0.0
  %4372 = vmatpush1.msra.mxu0 %v4122
  %4373 = vmatprep.subr.mxu0 0.0
  %4374 = vmatpush1.msra.mxu0 %v4127
  %4375 = vmatprep.subr.mxu0 0.0
  %4376 = vmatpush1.msra.mxu0 %v4132
  %4377 = vmatprep.subr.mxu0 0.0
  %4378 = vmatpush1.msra.mxu0 %v4137
  %4379 = vmatprep.subr.mxu0 0.0
  %4380 = vmatpush1.msra.mxu0 0.0
  %4381 = vmatprep.subr.mxu0 0.0
  %4382 = vmatpush1.msra.mxu0 0.0
  %4383 = vmatprep.subr.mxu0 0.0
  %4384 = vmatpush1.msra.mxu0 0.0
  %4385 = vmatprep.subr.mxu0 0.0
  %4386 = vmatpush1.msra.mxu0 0.0
  %4387 = vmatprep.subr.mxu0 0.0
  %4388 = vmatpush1.msra.mxu0 0.0
  %4389 = vmatprep.subr.mxu0 0.0
  %4390 = vmatpush1.msra.mxu0 0.0
  %4391 = vmatprep.subr.mxu0 0.0
  %4392 = vmatpush1.msra.mxu0 0.0
  %4393 = vmatprep.subr.mxu0 0.0
  %4394 = vmatpush1.msra.mxu0 0.0
  %4395 = vmatprep.subr.mxu0 0.0
  %4396 = vmatpush1.msra.mxu0 0.0
  %4397 = vmatprep.subr.mxu0 0.0
  %4398 = vmatpush1.msra.mxu0 0.0
  %4399 = vmatprep.subr.mxu0 0.0
  %4400 = vmatpush1.msra.mxu0 0.0
  %4401 = vmatprep.subr.mxu0 0.0
  %4402 = vmatpush1.msra.mxu0 0.0
  %4403 = vmatprep.subr.mxu0 0.0
  %4404 = vmatpush1.msra.mxu0 0.0
  %4405 = vmatprep.subr.mxu0 0.0
  %4406 = vmatpush1.msra.mxu0 0.0
  %4407 = vmatprep.subr.mxu0 0.0
  %4408 = vmatpush1.msra.mxu0 0.0
  %4409 = vmatprep.subr.mxu0 0.0
  %4410 = vmatpush1.msra.mxu0 0.0
  %4411 = vmatprep.subr.mxu0 0.0
  %4412 = vmatpush1.msra.mxu0 0.0
  %4413 = vmatprep.subr.mxu0 0.0
  %4414 = vmatpush1.msra.mxu0 0.0
  %4415 = vmatprep.subr.mxu0 0.0
  %4416 = vmatpush1.msra.mxu0 0.0
  %4417 = vmatprep.subr.mxu0 0.0
  %4418 = vmatpush1.msra.mxu0 0.0
  %4419 = vmatprep.subr.mxu0 0.0
  %4420 = vmatpush1.msra.mxu0 0.0
  %4421 = vmatprep.subr.mxu0 0.0
  %4422 = vmatpush1.msra.mxu0 0.0
  %4423 = vmatprep.subr.mxu0 0.0
  %4424 = vmatpush1.msra.mxu0 0.0
  %4425 = vmatprep.subr.mxu0 0.0
  %4426 = vmatpush1.msra.mxu0 0.0
  %4427 = vmatprep.subr.mxu0 0.0
  %4428 = vmatpush1.msra.mxu0 0.0
  %4429 = vmatprep.subr.mxu0 0.0
  %4430 = vmatpush1.msra.mxu0 0.0
  %4431 = vmatprep.mubr.f32.mxu0 0.0
  %4432 = vmatmul.mubr.f32.gmra.mrb[0].mxu0 %v4350
  %v4433 = vpop.f32.mrb[0].mxu0
  %v4434 = vadd.f32 0.0, %v4433
  %v4435 = vpop.f32.mrb[0].mxu0
  %4436 = vmatprep.mubr.f32.mxu0 0.0
  %4437 = vmatmul.mubr.f32.gmra.mrb[0].mxu0 %v4353
  %v4438 = vpop.f32.mrb[0].mxu0
  %v4439 = vadd.f32 0.0, %v4438
  %v4440 = vpop.f32.mrb[0].mxu0
  %4441 = vmatprep.mubr.f32.mxu0 0.0
  %4442 = vmatmul.mubr.f32.gmra.mrb[0].mxu0 %v4356
  %v4443 = vpop.f32.mrb[0].mxu0
  %v4444 = vadd.f32 0.0, %v4443
  %v4445 = vpop.f32.mrb[0].mxu0
  %4446 = vmatprep.mubr.f32.mxu0 0.0
  %4447 = vmatmul.mubr.f32.gmra.mrb[0].mxu0 %v4359
  %v4448 = vpop.f32.mrb[0].mxu0
  %v4449 = vadd.f32 0.0, %v4448
  %v4450 = vpop.f32.mrb[0].mxu0
  %4451 = vmatprep.mubr.f32.mxu0 0.0
  %4452 = vmatmul.mubr.f32.gmra.mrb[0].mxu0 %v4362
  %v4453 = vpop.f32.mrb[0].mxu0
  %v4454 = vadd.f32 0.0, %v4453
  %v4455 = vpop.f32.mrb[0].mxu0
  %4456 = vmatprep.mubr.f32.mxu0 0.0
  %4457 = vmatmul.mubr.f32.gmra.mrb[0].mxu0 %v4365
  %v4458 = vpop.f32.mrb[0].mxu0
  %v4459 = vadd.f32 0.0, %v4458
  %v4460 = vpop.f32.mrb[0].mxu0
  %4461 = vdwg.mxu0
  %s4462 = scalar_lea.vmem %s10, 32
  %v4463 = vld [vmem:[%s4462] sm:$0xff]
  %s4464 = scalar_lea.vmem %s4, 160
  %v4465 = vld [vmem:[%s4464] sm:$0xff]
  %v4466 = vld [vmem:[%s4464 + $0x8] sm:$0xff]
  %v4467 = vld [vmem:[%s4464 + $0x10] sm:$0xff]
  %v4468 = vld [vmem:[%s4464 + $0x18] sm:$0xff]
  %s4469 = scalar_lea.vmem %s5, 5
  %v4470 = vld [vmem:[%s4469] sm:$0x1]
  %v4472 = vlaneseq
  %v4473 = vshrl.u32 %v4472, 7
  %v4474 = vsub.s32 0, %v4473
  %v4475 = vrot.slane %v4470, %v4474
  %4477 = vmatprep.subr.mxu0 0.0
  %4478 = vmatpush1.msra.mxu0 %v4465
  %4479 = vmatprep.subr.mxu0 0.0
  %4480 = vmatpush1.msra.mxu0 %v4466
  %4481 = vmatprep.subr.mxu0 0.0
  %4482 = vmatpush1.msra.mxu0 %v4467
  %4483 = vmatprep.subr.mxu0 0.0
  %4484 = vmatpush1.msra.mxu0 %v4468
  %4485 = vmatprep.subr.mxu0 0.0
  %4486 = vmatpush1.msra.mxu0 0.0
  %4487 = vmatprep.subr.mxu0 0.0
  %4488 = vmatpush1.msra.mxu0 0.0
  %4489 = vmatprep.subr.mxu0 0.0
  %4490 = vmatpush1.msra.mxu0 0.0
  %4491 = vmatprep.subr.mxu0 0.0
  %4492 = vmatpush1.msra.mxu0 0.0
  %4493 = vmatprep.subr.mxu0 0.0
  %4494 = vmatpush1.msra.mxu0 0.0
  %4495 = vmatprep.subr.mxu0 0.0
  %4496 = vmatpush1.msra.mxu0 0.0
  %4497 = vmatprep.subr.mxu0 0.0
  %4498 = vmatpush1.msra.mxu0 0.0
  %4499 = vmatprep.subr.mxu0 0.0
  %4500 = vmatpush1.msra.mxu0 0.0
  %4501 = vmatprep.subr.mxu0 0.0
  %4502 = vmatpush1.msra.mxu0 0.0
  %4503 = vmatprep.subr.mxu0 0.0
  %4504 = vmatpush1.msra.mxu0 0.0
  %4505 = vmatprep.subr.mxu0 0.0
  %4506 = vmatpush1.msra.mxu0 0.0
  %4507 = vmatprep.subr.mxu0 0.0
  %4508 = vmatpush1.msra.mxu0 0.0
  %4509 = vmatprep.subr.mxu0 0.0
  %4510 = vmatpush1.msra.mxu0 0.0
  %4511 = vmatprep.subr.mxu0 0.0
  %4512 = vmatpush1.msra.mxu0 0.0
  %4513 = vmatprep.subr.mxu0 0.0
  %4514 = vmatpush1.msra.mxu0 0.0
  %4515 = vmatprep.subr.mxu0 0.0
  %4516 = vmatpush1.msra.mxu0 0.0
  %4517 = vmatprep.subr.mxu0 0.0
  %4518 = vmatpush1.msra.mxu0 0.0
  %4519 = vmatprep.subr.mxu0 0.0
  %4520 = vmatpush1.msra.mxu0 0.0
  %4521 = vmatprep.subr.mxu0 0.0
  %4522 = vmatpush1.msra.mxu0 0.0
  %4523 = vmatprep.subr.mxu0 0.0
  %4524 = vmatpush1.msra.mxu0 0.0
  %4525 = vmatprep.subr.mxu0 0.0
  %4526 = vmatpush1.msra.mxu0 0.0
  %4527 = vmatprep.subr.mxu0 0.0
  %4528 = vmatpush1.msra.mxu0 0.0
  %4529 = vmatprep.subr.mxu0 0.0
  %4530 = vmatpush1.msra.mxu0 0.0
  %4531 = vmatprep.subr.mxu0 0.0
  %4532 = vmatpush1.msra.mxu0 0.0
  %4533 = vmatprep.subr.mxu0 0.0
  %4534 = vmatpush1.msra.mxu0 0.0
  %4535 = vmatprep.subr.mxu0 0.0
  %4536 = vmatpush1.msra.mxu0 0.0
  %4537 = vmatprep.subr.mxu0 0.0
  %4538 = vmatpush1.msra.mxu0 0.0
  %4539 = vmatprep.subr.mxu0 0.0
  %4540 = vmatpush1.msra.mxu0 0.0
  %4541 = vmatprep.mubr.f32.mxu0 0.0
  %4542 = vmatmul.mubr.f32.gmra.mrb[0].mxu0 %v3812
  %v4543 = vpop.f32.mrb[0].mxu0
  %v4544 = vadd.f32 %v4475, %v4543
  %v4545 = vpop.f32.mrb[0].mxu0
  %4546 = vmatprep.mubr.f32.mxu0 0.0
  %4547 = vmatmul.mubr.f32.gmra.mrb[0].mxu0 %v3815
  %v4548 = vpop.f32.mrb[0].mxu0
  %v4549 = vadd.f32 %v4475, %v4548
  %v4550 = vpop.f32.mrb[0].mxu0
  %4551 = vmatprep.mubr.f32.mxu0 0.0
  %4552 = vmatmul.mubr.f32.gmra.mrb[0].mxu0 %v3818
  %v4553 = vpop.f32.mrb[0].mxu0
  %v4554 = vadd.f32 %v4475, %v4553
  %v4555 = vpop.f32.mrb[0].mxu0
  %4556 = vmatprep.mubr.f32.mxu0 0.0
  %4557 = vmatmul.mubr.f32.gmra.mrb[0].mxu0 %v3821
  %v4558 = vpop.f32.mrb[0].mxu0
  %v4559 = vadd.f32 %v4475, %v4558
  %v4560 = vpop.f32.mrb[0].mxu0
  %4561 = vmatprep.mubr.f32.mxu0 0.0
  %4562 = vmatmul.mubr.f32.gmra.mrb[0].mxu0 %v3824
  %v4563 = vpop.f32.mrb[0].mxu0
  %v4564 = vadd.f32 %v4475, %v4563
  %v4565 = vpop.f32.mrb[0].mxu0
  %4566 = vmatprep.mubr.f32.mxu0 0.0
  %4567 = vmatmul.mubr.f32.gmra.mrb[0].mxu0 %v3827
  %v4568 = vpop.f32.mrb[0].mxu0
  %v4569 = vadd.f32 %v4475, %v4568
  %v4570 = vpop.f32.mrb[0].mxu0
  %4571 = vdwg.mxu0
  %s4572 = scalar_lea.vmem %s6, 160
  %v4573 = vld [vmem:[%s4572] sm:$0xff]
  %v4574 = vld [vmem:[%s4572 + $0x8] sm:$0xff]
  %v4575 = vld [vmem:[%s4572 + $0x10] sm:$0xff]
  %v4576 = vld [vmem:[%s4572 + $0x18] sm:$0xff]
  %s4577 = scalar_lea.vmem %s7, 5
  %v4578 = vld [vmem:[%s4577] sm:$0x1]
  %v4580 = vlaneseq
  %v4581 = vshrl.u32 %v4580, 7
  %v4582 = vsub.s32 0, %v4581
  %v4583 = vrot.slane %v4578, %v4582
  %4585 = vmatprep.subr.mxu0 0.0
  %4586 = vmatpush1.msra.mxu0 %v4573
  %4587 = vmatprep.subr.mxu0 0.0
  %4588 = vmatpush1.msra.mxu0 %v4574
  %4589 = vmatprep.subr.mxu0 0.0
  %4590 = vmatpush1.msra.mxu0 %v4575
  %4591 = vmatprep.subr.mxu0 0.0
  %4592 = vmatpush1.msra.mxu0 %v4576
  %4593 = vmatprep.subr.mxu0 0.0
  %4594 = vmatpush1.msra.mxu0 0.0
  %4595 = vmatprep.subr.mxu0 0.0
  %4596 = vmatpush1.msra.mxu0 0.0
  %4597 = vmatprep.subr.mxu0 0.0
  %4598 = vmatpush1.msra.mxu0 0.0
  %4599 = vmatprep.subr.mxu0 0.0
  %4600 = vmatpush1.msra.mxu0 0.0
  %4601 = vmatprep.subr.mxu0 0.0
  %4602 = vmatpush1.msra.mxu0 0.0
  %4603 = vmatprep.subr.mxu0 0.0
  %4604 = vmatpush1.msra.mxu0 0.0
  %4605 = vmatprep.subr.mxu0 0.0
  %4606 = vmatpush1.msra.mxu0 0.0
  %4607 = vmatprep.subr.mxu0 0.0
  %4608 = vmatpush1.msra.mxu0 0.0
  %4609 = vmatprep.subr.mxu0 0.0
  %4610 = vmatpush1.msra.mxu0 0.0
  %4611 = vmatprep.subr.mxu0 0.0
  %4612 = vmatpush1.msra.mxu0 0.0
  %4613 = vmatprep.subr.mxu0 0.0
  %4614 = vmatpush1.msra.mxu0 0.0
  %4615 = vmatprep.subr.mxu0 0.0
  %4616 = vmatpush1.msra.mxu0 0.0
  %4617 = vmatprep.subr.mxu0 0.0
  %4618 = vmatpush1.msra.mxu0 0.0
  %4619 = vmatprep.subr.mxu0 0.0
  %4620 = vmatpush1.msra.mxu0 0.0
  %4621 = vmatprep.subr.mxu0 0.0
  %4622 = vmatpush1.msra.mxu0 0.0
  %4623 = vmatprep.subr.mxu0 0.0
  %4624 = vmatpush1.msra.mxu0 0.0
  %4625 = vmatprep.subr.mxu0 0.0
  %4626 = vmatpush1.msra.mxu0 0.0
  %4627 = vmatprep.subr.mxu0 0.0
  %4628 = vmatpush1.msra.mxu0 0.0
  %4629 = vmatprep.subr.mxu0 0.0
  %4630 = vmatpush1.msra.mxu0 0.0
  %4631 = vmatprep.subr.mxu0 0.0
  %4632 = vmatpush1.msra.mxu0 0.0
  %4633 = vmatprep.subr.mxu0 0.0
  %4634 = vmatpush1.msra.mxu0 0.0
  %4635 = vmatprep.subr.mxu0 0.0
  %4636 = vmatpush1.msra.mxu0 0.0
  %4637 = vmatprep.subr.mxu0 0.0
  %4638 = vmatpush1.msra.mxu0 0.0
  %4639 = vmatprep.subr.mxu0 0.0
  %4640 = vmatpush1.msra.mxu0 0.0
  %4641 = vmatprep.subr.mxu0 0.0
  %4642 = vmatpush1.msra.mxu0 0.0
  %4643 = vmatprep.subr.mxu0 0.0
  %4644 = vmatpush1.msra.mxu0 0.0
  %4645 = vmatprep.subr.mxu0 0.0
  %4646 = vmatpush1.msra.mxu0 0.0
  %4647 = vmatprep.subr.mxu0 0.0
  %4648 = vmatpush1.msra.mxu0 0.0
  %4649 = vmatprep.mubr.f32.mxu0 0.0
  %4650 = vmatmul.mubr.f32.gmra.mrb[0].mxu0 %v3812
  %v4651 = vpop.f32.mrb[0].mxu0
  %v4652 = vadd.f32 %v4583, %v4651
  %v4653 = vpop.f32.mrb[0].mxu0
  %4654 = vmatprep.mubr.f32.mxu0 0.0
  %4655 = vmatmul.mubr.f32.gmra.mrb[0].mxu0 %v3815
  %v4656 = vpop.f32.mrb[0].mxu0
  %v4657 = vadd.f32 %v4583, %v4656
  %v4658 = vpop.f32.mrb[0].mxu0
  %4659 = vmatprep.mubr.f32.mxu0 0.0
  %4660 = vmatmul.mubr.f32.gmra.mrb[0].mxu0 %v3818
  %v4661 = vpop.f32.mrb[0].mxu0
  %v4662 = vadd.f32 %v4583, %v4661
  %v4663 = vpop.f32.mrb[0].mxu0
  %4664 = vmatprep.mubr.f32.mxu0 0.0
  %4665 = vmatmul.mubr.f32.gmra.mrb[0].mxu0 %v3821
  %v4666 = vpop.f32.mrb[0].mxu0
  %v4667 = vadd.f32 %v4583, %v4666
  %v4668 = vpop.f32.mrb[0].mxu0
  %4669 = vmatprep.mubr.f32.mxu0 0.0
  %4670 = vmatmul.mubr.f32.gmra.mrb[0].mxu0 %v3824
  %v4671 = vpop.f32.mrb[0].mxu0
  %v4672 = vadd.f32 %v4583, %v4671
  %v4673 = vpop.f32.mrb[0].mxu0
  %4674 = vmatprep.mubr.f32.mxu0 0.0
  %4675 = vmatmul.mubr.f32.gmra.mrb[0].mxu0 %v3827
  %v4676 = vpop.f32.mrb[0].mxu0
  %v4677 = vadd.f32 %v4583, %v4676
  %v4678 = vpop.f32.mrb[0].mxu0
  %4679 = vdwg.mxu0
  %s4680 = scalar_lea.vmem %s8, 160
  %v4681 = vld [vmem:[%s4680] sm:$0xff]
  %v4682 = vld [vmem:[%s4680 + $0x8] sm:$0xff]
  %v4683 = vld [vmem:[%s4680 + $0x10] sm:$0xff]
  %v4684 = vld [vmem:[%s4680 + $0x18] sm:$0xff]
  %s4685 = scalar_lea.vmem %s9, 5
  %v4686 = vld [vmem:[%s4685] sm:$0x1]
  %v4688 = vlaneseq
  %v4689 = vshrl.u32 %v4688, 7
  %v4690 = vsub.s32 0, %v4689
  %v4691 = vrot.slane %v4686, %v4690
  %4693 = vmatprep.subr.mxu0 0.0
  %4694 = vmatpush1.msra.mxu0 %v4681
  %4695 = vmatprep.subr.mxu0 0.0
  %4696 = vmatpush1.msra.mxu0 %v4682
  %4697 = vmatprep.subr.mxu0 0.0
  %4698 = vmatpush1.msra.mxu0 %v4683
  %4699 = vmatprep.subr.mxu0 0.0
  %4700 = vmatpush1.msra.mxu0 %v4684
  %4701 = vmatprep.subr.mxu0 0.0
  %4702 = vmatpush1.msra.mxu0 0.0
  %4703 = vmatprep.subr.mxu0 0.0
  %4704 = vmatpush1.msra.mxu0 0.0
  %4705 = vmatprep.subr.mxu0 0.0
  %4706 = vmatpush1.msra.mxu0 0.0
  %4707 = vmatprep.subr.mxu0 0.0
  %4708 = vmatpush1.msra.mxu0 0.0
  %4709 = vmatprep.subr.mxu0 0.0
  %4710 = vmatpush1.msra.mxu0 0.0
  %4711 = vmatprep.subr.mxu0 0.0
  %4712 = vmatpush1.msra.mxu0 0.0
  %4713 = vmatprep.subr.mxu0 0.0
  %4714 = vmatpush1.msra.mxu0 0.0
  %4715 = vmatprep.subr.mxu0 0.0
  %4716 = vmatpush1.msra.mxu0 0.0
  %4717 = vmatprep.subr.mxu0 0.0
  %4718 = vmatpush1.msra.mxu0 0.0
  %4719 = vmatprep.subr.mxu0 0.0
  %4720 = vmatpush1.msra.mxu0 0.0
  %4721 = vmatprep.subr.mxu0 0.0
  %4722 = vmatpush1.msra.mxu0 0.0
  %4723 = vmatprep.subr.mxu0 0.0
  %4724 = vmatpush1.msra.mxu0 0.0
  %4725 = vmatprep.subr.mxu0 0.0
  %4726 = vmatpush1.msra.mxu0 0.0
  %4727 = vmatprep.subr.mxu0 0.0
  %4728 = vmatpush1.msra.mxu0 0.0
  %4729 = vmatprep.subr.mxu0 0.0
  %4730 = vmatpush1.msra.mxu0 0.0
  %4731 = vmatprep.subr.mxu0 0.0
  %4732 = vmatpush1.msra.mxu0 0.0
  %4733 = vmatprep.subr.mxu0 0.0
  %4734 = vmatpush1.msra.mxu0 0.0
  %4735 = vmatprep.subr.mxu0 0.0
  %4736 = vmatpush1.msra.mxu0 0.0
  %4737 = vmatprep.subr.mxu0 0.0
  %4738 = vmatpush1.msra.mxu0 0.0
  %4739 = vmatprep.subr.mxu0 0.0
  %4740 = vmatpush1.msra.mxu0 0.0
  %4741 = vmatprep.subr.mxu0 0.0
  %4742 = vmatpush1.msra.mxu0 0.0
  %4743 = vmatprep.subr.mxu0 0.0
  %4744 = vmatpush1.msra.mxu0 0.0
  %4745 = vmatprep.subr.mxu0 0.0
  %4746 = vmatpush1.msra.mxu0 0.0
  %4747 = vmatprep.subr.mxu0 0.0
  %4748 = vmatpush1.msra.mxu0 0.0
  %4749 = vmatprep.subr.mxu0 0.0
  %4750 = vmatpush1.msra.mxu0 0.0
  %4751 = vmatprep.subr.mxu0 0.0
  %4752 = vmatpush1.msra.mxu0 0.0
  %4753 = vmatprep.subr.mxu0 0.0
  %4754 = vmatpush1.msra.mxu0 0.0
  %4755 = vmatprep.subr.mxu0 0.0
  %4756 = vmatpush1.msra.mxu0 0.0
  %4757 = vmatprep.mubr.f32.mxu0 0.0
  %4758 = vmatmul.mubr.f32.gmra.mrb[0].mxu0 %v3812
  %v4759 = vpop.f32.mrb[0].mxu0
  %v4760 = vadd.f32 %v4691, %v4759
  %v4761 = vpop.f32.mrb[0].mxu0
  %4762 = vmatprep.mubr.f32.mxu0 0.0
  %4763 = vmatmul.mubr.f32.gmra.mrb[0].mxu0 %v3815
  %v4764 = vpop.f32.mrb[0].mxu0
  %v4765 = vadd.f32 %v4691, %v4764
  %v4766 = vpop.f32.mrb[0].mxu0
  %4767 = vmatprep.mubr.f32.mxu0 0.0
  %4768 = vmatmul.mubr.f32.gmra.mrb[0].mxu0 %v3818
  %v4769 = vpop.f32.mrb[0].mxu0
  %v4770 = vadd.f32 %v4691, %v4769
  %v4771 = vpop.f32.mrb[0].mxu0
  %4772 = vmatprep.mubr.f32.mxu0 0.0
  %4773 = vmatmul.mubr.f32.gmra.mrb[0].mxu0 %v3821
  %v4774 = vpop.f32.mrb[0].mxu0
  %v4775 = vadd.f32 %v4691, %v4774
  %v4776 = vpop.f32.mrb[0].mxu0
  %4777 = vmatprep.mubr.f32.mxu0 0.0
  %4778 = vmatmul.mubr.f32.gmra.mrb[0].mxu0 %v3824
  %v4779 = vpop.f32.mrb[0].mxu0
  %v4780 = vadd.f32 %v4691, %v4779
  %v4781 = vpop.f32.mrb[0].mxu0
  %4782 = vmatprep.mubr.f32.mxu0 0.0
  %4783 = vmatmul.mubr.f32.gmra.mrb[0].mxu0 %v3827
  %v4784 = vpop.f32.mrb[0].mxu0
  %v4785 = vadd.f32 %v4691, %v4784
  %v4786 = vpop.f32.mrb[0].mxu0
  %4787 = vdwg.mxu0
  %v4789 = vsel %vm525, %v4544, 0
  %v4792 = vsel %vm525, %v4549, 0
  %v4795 = vsel %vm525, %v4554, 0
  %v4798 = vsel %vm525, %v4559, 0
  %v4801 = vsel %vm525, %v4564, 0
  %v4804 = vsel %vm525, %v4569, 0
  %v4807 = vsel %vm525, %v4652, 0
  %v4810 = vsel %vm525, %v4657, 0
  %v4813 = vsel %vm525, %v4662, 0
  %v4816 = vsel %vm525, %v4667, 0
  %v4819 = vsel %vm525, %v4672, 0
  %v4822 = vsel %vm525, %v4677, 0
  %4824 = vmatprep.subr.mxu0 0.0
  %4825 = vmatpush1.xpose.msra.mxu0 %v4807
  %4826 = vmatprep.subr.mxu0 0.0
  %4827 = vmatpush1.xpose.msra.mxu0 %v4810
  %4828 = vmatprep.subr.mxu0 0.0
  %4829 = vmatpush1.xpose.msra.mxu0 %v4813
  %4830 = vmatprep.subr.mxu0 0.0
  %4831 = vmatpush1.xpose.msra.mxu0 %v4816
  %4832 = vmatprep.subr.mxu0 0.0
  %4833 = vmatpush1.xpose.msra.mxu0 %v4819
  %4834 = vmatprep.subr.mxu0 0.0
  %4835 = vmatpush1.xpose.msra.mxu0 %v4822
  %4836 = vmatprep.subr.mxu0 0.0
  %4837 = vmatpush1.xpose.msra.mxu0 0.0
  %4838 = vmatprep.subr.mxu0 0.0
  %4839 = vmatpush1.xpose.msra.mxu0 0.0
  %4840 = vmatprep.subr.mxu0 0.0
  %4841 = vmatpush1.xpose.msra.mxu0 0.0
  %4842 = vmatprep.subr.mxu0 0.0
  %4843 = vmatpush1.xpose.msra.mxu0 0.0
  %4844 = vmatprep.subr.mxu0 0.0
  %4845 = vmatpush1.xpose.msra.mxu0 0.0
  %4846 = vmatprep.subr.mxu0 0.0
  %4847 = vmatpush1.xpose.msra.mxu0 0.0
  %4848 = vmatprep.subr.mxu0 0.0
  %4849 = vmatpush1.xpose.msra.mxu0 0.0
  %4850 = vmatprep.subr.mxu0 0.0
  %4851 = vmatpush1.xpose.msra.mxu0 0.0
  %4852 = vmatprep.subr.mxu0 0.0
  %4853 = vmatpush1.xpose.msra.mxu0 0.0
  %4854 = vmatprep.subr.mxu0 0.0
  %4855 = vmatpush1.xpose.msra.mxu0 0.0
  %4856 = vmatprep.subr.mxu0 0.0
  %4857 = vmatpush1.xpose.msra.mxu0 0.0
  %4858 = vmatprep.subr.mxu0 0.0
  %4859 = vmatpush1.xpose.msra.mxu0 0.0
  %4860 = vmatprep.subr.mxu0 0.0
  %4861 = vmatpush1.xpose.msra.mxu0 0.0
  %4862 = vmatprep.subr.mxu0 0.0
  %4863 = vmatpush1.xpose.msra.mxu0 0.0
  %4864 = vmatprep.subr.mxu0 0.0
  %4865 = vmatpush1.xpose.msra.mxu0 0.0
  %4866 = vmatprep.subr.mxu0 0.0
  %4867 = vmatpush1.xpose.msra.mxu0 0.0
  %4868 = vmatprep.subr.mxu0 0.0
  %4869 = vmatpush1.xpose.msra.mxu0 0.0
  %4870 = vmatprep.subr.mxu0 0.0
  %4871 = vmatpush1.xpose.msra.mxu0 0.0
  %4872 = vmatprep.subr.mxu0 0.0
  %4873 = vmatpush1.xpose.msra.mxu0 0.0
  %4874 = vmatprep.subr.mxu0 0.0
  %4875 = vmatpush1.xpose.msra.mxu0 0.0
  %4876 = vmatprep.subr.mxu0 0.0
  %4877 = vmatpush1.xpose.msra.mxu0 0.0
  %4878 = vmatprep.subr.mxu0 0.0
  %4879 = vmatpush1.xpose.msra.mxu0 0.0
  %4880 = vmatprep.subr.mxu0 0.0
  %4881 = vmatpush1.xpose.msra.mxu0 0.0
  %4882 = vmatprep.subr.mxu0 0.0
  %4883 = vmatpush1.xpose.msra.mxu0 0.0
  %4884 = vmatprep.subr.mxu0 0.0
  %4885 = vmatpush1.xpose.msra.mxu0 0.0
  %4886 = vmatprep.subr.mxu0 0.0
  %4887 = vmatpush1.xpose.msra.mxu0 0.0
  %4888 = vmatprep.mubr.f32.mxu0 0.0
  %4889 = vmatmul.mubr.f32.gmra.mrb[0].mxu0 %v4789
  %v4890 = vpop.f32.mrb[0].mxu0
  %v4891 = vadd.f32 0.0, %v4890
  %v4892 = vpop.f32.mrb[0].mxu0
  %4893 = vmatprep.mubr.f32.mxu0 0.0
  %4894 = vmatmul.mubr.f32.gmra.mrb[0].mxu0 %v4792
  %v4895 = vpop.f32.mrb[0].mxu0
  %v4896 = vadd.f32 0.0, %v4895
  %v4897 = vpop.f32.mrb[0].mxu0
  %4898 = vmatprep.mubr.f32.mxu0 0.0
  %4899 = vmatmul.mubr.f32.gmra.mrb[0].mxu0 %v4795
  %v4900 = vpop.f32.mrb[0].mxu0
  %v4901 = vadd.f32 0.0, %v4900
  %v4902 = vpop.f32.mrb[0].mxu0
  %4903 = vmatprep.mubr.f32.mxu0 0.0
  %4904 = vmatmul.mubr.f32.gmra.mrb[0].mxu0 %v4798
  %v4905 = vpop.f32.mrb[0].mxu0
  %v4906 = vadd.f32 0.0, %v4905
  %v4907 = vpop.f32.mrb[0].mxu0
  %4908 = vmatprep.mubr.f32.mxu0 0.0
  %4909 = vmatmul.mubr.f32.gmra.mrb[0].mxu0 %v4801
  %v4910 = vpop.f32.mrb[0].mxu0
  %v4911 = vadd.f32 0.0, %v4910
  %v4912 = vpop.f32.mrb[0].mxu0
  %4913 = vmatprep.mubr.f32.mxu0 0.0
  %4914 = vmatmul.mubr.f32.gmra.mrb[0].mxu0 %v4804
  %v4915 = vpop.f32.mrb[0].mxu0
  %v4916 = vadd.f32 0.0, %v4915
  %v4917 = vpop.f32.mrb[0].mxu0
  %4918 = vdwg.mxu0
  %v4919 = vmul.f32 %v4891, 0.35355338
  %v4920 = vmul.f32 %v4896, 0.35355338
  %v4921 = vmul.f32 %v4901, 0.35355338
  %v4922 = vmul.f32 %v4906, 0.35355338
  %v4923 = vmul.f32 %v4911, 0.35355338
  %v4924 = vmul.f32 %v4916, 0.35355338
  %v4925 = vadd.f32 %v4919, %v183
  %v4926 = vadd.f32 %v4920, %v184
  %v4927 = vadd.f32 %v4921, %v185
  %v4928 = vadd.f32 %v4922, %v186
  %v4929 = vadd.f32 %v4923, %v187
  %v4930 = vadd.f32 %v4924, %v188
  %v4931 = vsel %vm669, %v4925, -inf
  %4932 = vmax.xlane.f32.xlu0 %v4931
  %v4933 = vpop.xlane.xlu0 %4932
  %v4934 = vsel %vm669, %v4926, -inf
  %4935 = vmax.xlane.f32.xlu0 %v4934
  %v4936 = vpop.xlane.xlu0 %4935
  %v4937 = vsel %vm669, %v4927, -inf
  %4938 = vmax.xlane.f32.xlu0 %v4937
  %v4939 = vpop.xlane.xlu0 %4938
  %v4940 = vsel %vm669, %v4928, -inf
  %4941 = vmax.xlane.f32.xlu0 %v4940
  %v4942 = vpop.xlane.xlu0 %4941
  %v4943 = vsel %vm669, %v4929, -inf
  %4944 = vmax.xlane.f32.xlu0 %v4943
  %v4945 = vpop.xlane.xlu0 %4944
  %v4946 = vsel %vm669, %v4930, -inf
  %4947 = vmax.xlane.f32.xlu0 %v4946
  %v4948 = vpop.xlane.xlu0 %4947
  %v4949 = vsub.f32 %v4925, %v4933
  %v4950 = vsub.f32 %v4926, %v4936
  %v4951 = vsub.f32 %v4927, %v4939
  %v4952 = vsub.f32 %v4928, %v4942
  %v4953 = vsub.f32 %v4929, %v4945
  %v4954 = vsub.f32 %v4930, %v4948
  %v4955 = vmul.f32 %v4949, 1.442695
  %v4956 = vpow.pop %v4955
  %v4957 = vmul.f32 %v4950, 1.442695
  %v4958 = vpow.pop %v4957
  %v4959 = vmul.f32 %v4951, 1.442695
  %v4960 = vpow.pop %v4959
  %v4961 = vmul.f32 %v4952, 1.442695
  %v4962 = vpow.pop %v4961
  %v4963 = vmul.f32 %v4953, 1.442695
  %v4964 = vpow.pop %v4963
  %v4965 = vmul.f32 %v4954, 1.442695
  %v4966 = vpow.pop %v4965
  %v4967 = vsel %vm669, %v4956, 0.0
  %4968 = vadd.xlane.f32.xlu0 %v4967
  %v4969 = vpop.xlane.xlu0 %4968
  %v4970 = vsel %vm669, %v4958, 0.0
  %4971 = vadd.xlane.f32.xlu0 %v4970
  %v4972 = vpop.xlane.xlu0 %4971
  %v4973 = vsel %vm669, %v4960, 0.0
  %4974 = vadd.xlane.f32.xlu0 %v4973
  %v4975 = vpop.xlane.xlu0 %4974
  %v4976 = vsel %vm669, %v4962, 0.0
  %4977 = vadd.xlane.f32.xlu0 %v4976
  %v4978 = vpop.xlane.xlu0 %4977
  %v4979 = vsel %vm669, %v4964, 0.0
  %4980 = vadd.xlane.f32.xlu0 %v4979
  %v4981 = vpop.xlane.xlu0 %4980
  %v4982 = vsel %vm669, %v4966, 0.0
  %4983 = vadd.xlane.f32.xlu0 %v4982
  %v4984 = vpop.xlane.xlu0 %4983
  %v4985 = vrcp.pop %v4969
  %v4986 = vrcp.pop %v4972
  %v4987 = vrcp.pop %v4975
  %v4988 = vrcp.pop %v4978
  %v4989 = vrcp.pop %v4981
  %v4990 = vrcp.pop %v4984
  %v4991 = vmul.f32 %v4956, %v4985
  %v4992 = vmul.f32 %v4958, %v4986
  %v4993 = vmul.f32 %v4960, %v4987
  %v4994 = vmul.f32 %v4962, %v4988
  %v4995 = vmul.f32 %v4964, %v4989
  %v4996 = vmul.f32 %v4966, %v4990
  %v4998 = vsel %vm669, %v4991, 0
  %v5001 = vsel %vm669, %v4992, 0
  %v5004 = vsel %vm669, %v4993, 0
  %v5007 = vsel %vm669, %v4994, 0
  %v5010 = vsel %vm669, %v4995, 0
  %v5013 = vsel %vm669, %v4996, 0
  %5015 = vmatprep.subr.mxu0 0.0
  %5016 = vmatpush1.msra.mxu0 %v4760
  %5017 = vmatprep.subr.mxu0 0.0
  %5018 = vmatpush1.msra.mxu0 %v4765
  %5019 = vmatprep.subr.mxu0 0.0
  %5020 = vmatpush1.msra.mxu0 %v4770
  %5021 = vmatprep.subr.mxu0 0.0
  %5022 = vmatpush1.msra.mxu0 %v4775
  %5023 = vmatprep.subr.mxu0 0.0
  %5024 = vmatpush1.msra.mxu0 %v4780
  %5025 = vmatprep.subr.mxu0 0.0
  %5026 = vmatpush1.msra.mxu0 %v4785
  %5027 = vmatprep.subr.mxu0 0.0
  %5028 = vmatpush1.msra.mxu0 0.0
  %5029 = vmatprep.subr.mxu0 0.0
  %5030 = vmatpush1.msra.mxu0 0.0
  %5031 = vmatprep.subr.mxu0 0.0
  %5032 = vmatpush1.msra.mxu0 0.0
  %5033 = vmatprep.subr.mxu0 0.0
  %5034 = vmatpush1.msra.mxu0 0.0
  %5035 = vmatprep.subr.mxu0 0.0
  %5036 = vmatpush1.msra.mxu0 0.0
  %5037 = vmatprep.subr.mxu0 0.0
  %5038 = vmatpush1.msra.mxu0 0.0
  %5039 = vmatprep.subr.mxu0 0.0
  %5040 = vmatpush1.msra.mxu0 0.0
  %5041 = vmatprep.subr.mxu0 0.0
  %5042 = vmatpush1.msra.mxu0 0.0
  %5043 = vmatprep.subr.mxu0 0.0
  %5044 = vmatpush1.msra.mxu0 0.0
  %5045 = vmatprep.subr.mxu0 0.0
  %5046 = vmatpush1.msra.mxu0 0.0
  %5047 = vmatprep.subr.mxu0 0.0
  %5048 = vmatpush1.msra.mxu0 0.0
  %5049 = vmatprep.subr.mxu0 0.0
  %5050 = vmatpush1.msra.mxu0 0.0
  %5051 = vmatprep.subr.mxu0 0.0
  %5052 = vmatpush1.msra.mxu0 0.0
  %5053 = vmatprep.subr.mxu0 0.0
  %5054 = vmatpush1.msra.mxu0 0.0
  %5055 = vmatprep.subr.mxu0 0.0
  %5056 = vmatpush1.msra.mxu0 0.0
  %5057 = vmatprep.subr.mxu0 0.0
  %5058 = vmatpush1.msra.mxu0 0.0
  %5059 = vmatprep.subr.mxu0 0.0
  %5060 = vmatpush1.msra.mxu0 0.0
  %5061 = vmatprep.subr.mxu0 0.0
  %5062 = vmatpush1.msra.mxu0 0.0
  %5063 = vmatprep.subr.mxu0 0.0
  %5064 = vmatpush1.msra.mxu0 0.0
  %5065 = vmatprep.subr.mxu0 0.0
  %5066 = vmatpush1.msra.mxu0 0.0
  %5067 = vmatprep.subr.mxu0 0.0
  %5068 = vmatpush1.msra.mxu0 0.0
  %5069 = vmatprep.subr.mxu0 0.0
  %5070 = vmatpush1.msra.mxu0 0.0
  %5071 = vmatprep.subr.mxu0 0.0
  %5072 = vmatpush1.msra.mxu0 0.0
  %5073 = vmatprep.subr.mxu0 0.0
  %5074 = vmatpush1.msra.mxu0 0.0
  %5075 = vmatprep.subr.mxu0 0.0
  %5076 = vmatpush1.msra.mxu0 0.0
  %5077 = vmatprep.subr.mxu0 0.0
  %5078 = vmatpush1.msra.mxu0 0.0
  %5079 = vmatprep.mubr.f32.mxu0 0.0
  %5080 = vmatmul.mubr.f32.gmra.mrb[0].mxu0 %v4998
  %v5081 = vpop.f32.mrb[0].mxu0
  %v5082 = vadd.f32 0.0, %v5081
  %v5083 = vpop.f32.mrb[0].mxu0
  %5084 = vmatprep.mubr.f32.mxu0 0.0
  %5085 = vmatmul.mubr.f32.gmra.mrb[0].mxu0 %v5001
  %v5086 = vpop.f32.mrb[0].mxu0
  %v5087 = vadd.f32 0.0, %v5086
  %v5088 = vpop.f32.mrb[0].mxu0
  %5089 = vmatprep.mubr.f32.mxu0 0.0
  %5090 = vmatmul.mubr.f32.gmra.mrb[0].mxu0 %v5004
  %v5091 = vpop.f32.mrb[0].mxu0
  %v5092 = vadd.f32 0.0, %v5091
  %v5093 = vpop.f32.mrb[0].mxu0
  %5094 = vmatprep.mubr.f32.mxu0 0.0
  %5095 = vmatmul.mubr.f32.gmra.mrb[0].mxu0 %v5007
  %v5096 = vpop.f32.mrb[0].mxu0
  %v5097 = vadd.f32 0.0, %v5096
  %v5098 = vpop.f32.mrb[0].mxu0
  %5099 = vmatprep.mubr.f32.mxu0 0.0
  %5100 = vmatmul.mubr.f32.gmra.mrb[0].mxu0 %v5010
  %v5101 = vpop.f32.mrb[0].mxu0
  %v5102 = vadd.f32 0.0, %v5101
  %v5103 = vpop.f32.mrb[0].mxu0
  %5104 = vmatprep.mubr.f32.mxu0 0.0
  %5105 = vmatmul.mubr.f32.gmra.mrb[0].mxu0 %v5013
  %v5106 = vpop.f32.mrb[0].mxu0
  %v5107 = vadd.f32 0.0, %v5106
  %v5108 = vpop.f32.mrb[0].mxu0
  %5109 = vdwg.mxu0
  %s5110 = scalar_lea.vmem %s10, 40
  %v5111 = vld [vmem:[%s5110] sm:$0xff]
  %v5113 = vsel %vm525, %v5082, 0
  %v5116 = vsel %vm525, %v5087, 0
  %v5119 = vsel %vm525, %v5092, 0
  %v5122 = vsel %vm525, %v5097, 0
  %v5125 = vsel %vm525, %v5102, 0
  %v5128 = vsel %vm525, %v5107, 0
  %5130 = vmatprep.subr.mxu0 0.0
  %5131 = vmatpush1.msra.mxu0 %v5111
  %5132 = vmatprep.subr.mxu0 0.0
  %5133 = vmatpush1.msra.mxu0 0.0
  %5134 = vmatprep.subr.mxu0 0.0
  %5135 = vmatpush1.msra.mxu0 0.0
  %5136 = vmatprep.subr.mxu0 0.0
  %5137 = vmatpush1.msra.mxu0 0.0
  %5138 = vmatprep.subr.mxu0 0.0
  %5139 = vmatpush1.msra.mxu0 0.0
  %5140 = vmatprep.subr.mxu0 0.0
  %5141 = vmatpush1.msra.mxu0 0.0
  %5142 = vmatprep.subr.mxu0 0.0
  %5143 = vmatpush1.msra.mxu0 0.0
  %5144 = vmatprep.subr.mxu0 0.0
  %5145 = vmatpush1.msra.mxu0 0.0
  %5146 = vmatprep.subr.mxu0 0.0
  %5147 = vmatpush1.msra.mxu0 0.0
  %5148 = vmatprep.subr.mxu0 0.0
  %5149 = vmatpush1.msra.mxu0 0.0
  %5150 = vmatprep.subr.mxu0 0.0
  %5151 = vmatpush1.msra.mxu0 0.0
  %5152 = vmatprep.subr.mxu0 0.0
  %5153 = vmatpush1.msra.mxu0 0.0
  %5154 = vmatprep.subr.mxu0 0.0
  %5155 = vmatpush1.msra.mxu0 0.0
  %5156 = vmatprep.subr.mxu0 0.0
  %5157 = vmatpush1.msra.mxu0 0.0
  %5158 = vmatprep.subr.mxu0 0.0
  %5159 = vmatpush1.msra.mxu0 0.0
  %5160 = vmatprep.subr.mxu0 0.0
  %5161 = vmatpush1.msra.mxu0 0.0
  %5162 = vmatprep.subr.mxu0 0.0
  %5163 = vmatpush1.msra.mxu0 0.0
  %5164 = vmatprep.subr.mxu0 0.0
  %5165 = vmatpush1.msra.mxu0 0.0
  %5166 = vmatprep.subr.mxu0 0.0
  %5167 = vmatpush1.msra.mxu0 0.0
  %5168 = vmatprep.subr.mxu0 0.0
  %5169 = vmatpush1.msra.mxu0 0.0
  %5170 = vmatprep.subr.mxu0 0.0
  %5171 = vmatpush1.msra.mxu0 0.0
  %5172 = vmatprep.subr.mxu0 0.0
  %5173 = vmatpush1.msra.mxu0 0.0
  %5174 = vmatprep.subr.mxu0 0.0
  %5175 = vmatpush1.msra.mxu0 0.0
  %5176 = vmatprep.subr.mxu0 0.0
  %5177 = vmatpush1.msra.mxu0 0.0
  %5178 = vmatprep.subr.mxu0 0.0
  %5179 = vmatpush1.msra.mxu0 0.0
  %5180 = vmatprep.subr.mxu0 0.0
  %5181 = vmatpush1.msra.mxu0 0.0
  %5182 = vmatprep.subr.mxu0 0.0
  %5183 = vmatpush1.msra.mxu0 0.0
  %5184 = vmatprep.subr.mxu0 0.0
  %5185 = vmatpush1.msra.mxu0 0.0
  %5186 = vmatprep.subr.mxu0 0.0
  %5187 = vmatpush1.msra.mxu0 0.0
  %5188 = vmatprep.subr.mxu0 0.0
  %5189 = vmatpush1.msra.mxu0 0.0
  %5190 = vmatprep.subr.mxu0 0.0
  %5191 = vmatpush1.msra.mxu0 0.0
  %5192 = vmatprep.subr.mxu0 0.0
  %5193 = vmatpush1.msra.mxu0 0.0
  %5194 = vmatprep.mubr.f32.mxu0 0.0
  %5195 = vmatmul.mubr.f32.gmra.mrb[0].mxu0 %v5113
  %v5196 = vpop.f32.mrb[0].mxu0
  %v5197 = vadd.f32 0.0, %v5196
  %v5198 = vpop.f32.mrb[0].mxu0
  %5199 = vmatprep.mubr.f32.mxu0 0.0
  %5200 = vmatmul.mubr.f32.gmra.mrb[0].mxu0 %v5116
  %v5201 = vpop.f32.mrb[0].mxu0
  %v5202 = vadd.f32 0.0, %v5201
  %v5203 = vpop.f32.mrb[0].mxu0
  %5204 = vmatprep.mubr.f32.mxu0 0.0
  %5205 = vmatmul.mubr.f32.gmra.mrb[0].mxu0 %v5119
  %v5206 = vpop.f32.mrb[0].mxu0
  %v5207 = vadd.f32 0.0, %v5206
  %v5208 = vpop.f32.mrb[0].mxu0
  %5209 = vmatprep.mubr.f32.mxu0 0.0
  %5210 = vmatmul.mubr.f32.gmra.mrb[0].mxu0 %v5122
  %v5211 = vpop.f32.mrb[0].mxu0
  %v5212 = vadd.f32 0.0, %v5211
  %v5213 = vpop.f32.mrb[0].mxu0
  %5214 = vmatprep.mubr.f32.mxu0 0.0
  %5215 = vmatmul.mubr.f32.gmra.mrb[0].mxu0 %v5125
  %v5216 = vpop.f32.mrb[0].mxu0
  %v5217 = vadd.f32 0.0, %v5216
  %v5218 = vpop.f32.mrb[0].mxu0
  %5219 = vmatprep.mubr.f32.mxu0 0.0
  %5220 = vmatmul.mubr.f32.gmra.mrb[0].mxu0 %v5128
  %v5221 = vpop.f32.mrb[0].mxu0
  %v5222 = vadd.f32 0.0, %v5221
  %v5223 = vpop.f32.mrb[0].mxu0
  %5224 = vdwg.mxu0
  %v5226 = vsel %vm525, %v4434, 0
  %v5229 = vsel %vm525, %v4439, 0
  %v5232 = vsel %vm525, %v4444, 0
  %v5235 = vsel %vm525, %v4449, 0
  %v5238 = vsel %vm525, %v4454, 0
  %v5241 = vsel %vm525, %v4459, 0
  %5243 = vmatprep.subr.mxu0 0.0
  %5244 = vmatpush1.msra.mxu0 %v4463
  %5245 = vmatprep.subr.mxu0 0.0
  %5246 = vmatpush1.msra.mxu0 0.0
  %5247 = vmatprep.subr.mxu0 0.0
  %5248 = vmatpush1.msra.mxu0 0.0
  %5249 = vmatprep.subr.mxu0 0.0
  %5250 = vmatpush1.msra.mxu0 0.0
  %5251 = vmatprep.subr.mxu0 0.0
  %5252 = vmatpush1.msra.mxu0 0.0
  %5253 = vmatprep.subr.mxu0 0.0
  %5254 = vmatpush1.msra.mxu0 0.0
  %5255 = vmatprep.subr.mxu0 0.0
  %5256 = vmatpush1.msra.mxu0 0.0
  %5257 = vmatprep.subr.mxu0 0.0
  %5258 = vmatpush1.msra.mxu0 0.0
  %5259 = vmatprep.subr.mxu0 0.0
  %5260 = vmatpush1.msra.mxu0 0.0
  %5261 = vmatprep.subr.mxu0 0.0
  %5262 = vmatpush1.msra.mxu0 0.0
  %5263 = vmatprep.subr.mxu0 0.0
  %5264 = vmatpush1.msra.mxu0 0.0
  %5265 = vmatprep.subr.mxu0 0.0
  %5266 = vmatpush1.msra.mxu0 0.0
  %5267 = vmatprep.subr.mxu0 0.0
  %5268 = vmatpush1.msra.mxu0 0.0
  %5269 = vmatprep.subr.mxu0 0.0
  %5270 = vmatpush1.msra.mxu0 0.0
  %5271 = vmatprep.subr.mxu0 0.0
  %5272 = vmatpush1.msra.mxu0 0.0
  %5273 = vmatprep.subr.mxu0 0.0
  %5274 = vmatpush1.msra.mxu0 0.0
  %5275 = vmatprep.subr.mxu0 0.0
  %5276 = vmatpush1.msra.mxu0 0.0
  %5277 = vmatprep.subr.mxu0 0.0
  %5278 = vmatpush1.msra.mxu0 0.0
  %5279 = vmatprep.subr.mxu0 0.0
  %5280 = vmatpush1.msra.mxu0 0.0
  %5281 = vmatprep.subr.mxu0 0.0
  %5282 = vmatpush1.msra.mxu0 0.0
  %5283 = vmatprep.subr.mxu0 0.0
  %5284 = vmatpush1.msra.mxu0 0.0
  %5285 = vmatprep.subr.mxu0 0.0
  %5286 = vmatpush1.msra.mxu0 0.0
  %5287 = vmatprep.subr.mxu0 0.0
  %5288 = vmatpush1.msra.mxu0 0.0
  %5289 = vmatprep.subr.mxu0 0.0
  %5290 = vmatpush1.msra.mxu0 0.0
  %5291 = vmatprep.subr.mxu0 0.0
  %5292 = vmatpush1.msra.mxu0 0.0
  %5293 = vmatprep.subr.mxu0 0.0
  %5294 = vmatpush1.msra.mxu0 0.0
  %5295 = vmatprep.subr.mxu0 0.0
  %5296 = vmatpush1.msra.mxu0 0.0
  %5297 = vmatprep.subr.mxu0 0.0
  %5298 = vmatpush1.msra.mxu0 0.0
  %5299 = vmatprep.subr.mxu0 0.0
  %5300 = vmatpush1.msra.mxu0 0.0
  %5301 = vmatprep.subr.mxu0 0.0
  %5302 = vmatpush1.msra.mxu0 0.0
  %5303 = vmatprep.subr.mxu0 0.0
  %5304 = vmatpush1.msra.mxu0 0.0
  %5305 = vmatprep.subr.mxu0 0.0
  %5306 = vmatpush1.msra.mxu0 0.0
  %5307 = vmatprep.mubr.f32.mxu0 0.0
  %5308 = vmatmul.mubr.f32.gmra.mrb[0].mxu0 %v5226
  %v5309 = vpop.f32.mrb[0].mxu0
  %v5310 = vadd.f32 %v5197, %v5309
  %v5311 = vpop.f32.mrb[0].mxu0
  %5312 = vmatprep.mubr.f32.mxu0 0.0
  %5313 = vmatmul.mubr.f32.gmra.mrb[0].mxu0 %v5229
  %v5314 = vpop.f32.mrb[0].mxu0
  %v5315 = vadd.f32 %v5202, %v5314
  %v5316 = vpop.f32.mrb[0].mxu0
  %5317 = vmatprep.mubr.f32.mxu0 0.0
  %5318 = vmatmul.mubr.f32.gmra.mrb[0].mxu0 %v5232
  %v5319 = vpop.f32.mrb[0].mxu0
  %v5320 = vadd.f32 %v5207, %v5319
  %v5321 = vpop.f32.mrb[0].mxu0
  %5322 = vmatprep.mubr.f32.mxu0 0.0
  %5323 = vmatmul.mubr.f32.gmra.mrb[0].mxu0 %v5235
  %v5324 = vpop.f32.mrb[0].mxu0
  %v5325 = vadd.f32 %v5212, %v5324
  %v5326 = vpop.f32.mrb[0].mxu0
  %5327 = vmatprep.mubr.f32.mxu0 0.0
  %5328 = vmatmul.mubr.f32.gmra.mrb[0].mxu0 %v5238
  %v5329 = vpop.f32.mrb[0].mxu0
  %v5330 = vadd.f32 %v5217, %v5329
  %v5331 = vpop.f32.mrb[0].mxu0
  %5332 = vmatprep.mubr.f32.mxu0 0.0
  %5333 = vmatmul.mubr.f32.gmra.mrb[0].mxu0 %v5241
  %v5334 = vpop.f32.mrb[0].mxu0
  %v5335 = vadd.f32 %v5222, %v5334
  %v5336 = vpop.f32.mrb[0].mxu0
  %5337 = vdwg.mxu0
  %s5338 = scalar_lea.vmem %s4, 192
  %v5339 = vld [vmem:[%s5338] sm:$0xff]
  %v5340 = vld [vmem:[%s5338 + $0x8] sm:$0xff]
  %v5341 = vld [vmem:[%s5338 + $0x10] sm:$0xff]
  %v5342 = vld [vmem:[%s5338 + $0x18] sm:$0xff]
  %s5343 = scalar_lea.vmem %s5, 6
  %v5344 = vld [vmem:[%s5343] sm:$0x1]
  %v5346 = vlaneseq
  %v5347 = vshrl.u32 %v5346, 7
  %v5348 = vsub.s32 0, %v5347
  %v5349 = vrot.slane %v5344, %v5348
  %5351 = vmatprep.subr.mxu0 0.0
  %5352 = vmatpush1.msra.mxu0 %v5339
  %5353 = vmatprep.subr.mxu0 0.0
  %5354 = vmatpush1.msra.mxu0 %v5340
  %5355 = vmatprep.subr.mxu0 0.0
  %5356 = vmatpush1.msra.mxu0 %v5341
  %5357 = vmatprep.subr.mxu0 0.0
  %5358 = vmatpush1.msra.mxu0 %v5342
  %5359 = vmatprep.subr.mxu0 0.0
  %5360 = vmatpush1.msra.mxu0 0.0
  %5361 = vmatprep.subr.mxu0 0.0
  %5362 = vmatpush1.msra.mxu0 0.0
  %5363 = vmatprep.subr.mxu0 0.0
  %5364 = vmatpush1.msra.mxu0 0.0
  %5365 = vmatprep.subr.mxu0 0.0
  %5366 = vmatpush1.msra.mxu0 0.0
  %5367 = vmatprep.subr.mxu0 0.0
  %5368 = vmatpush1.msra.mxu0 0.0
  %5369 = vmatprep.subr.mxu0 0.0
  %5370 = vmatpush1.msra.mxu0 0.0
  %5371 = vmatprep.subr.mxu0 0.0
  %5372 = vmatpush1.msra.mxu0 0.0
  %5373 = vmatprep.subr.mxu0 0.0
  %5374 = vmatpush1.msra.mxu0 0.0
  %5375 = vmatprep.subr.mxu0 0.0
  %5376 = vmatpush1.msra.mxu0 0.0
  %5377 = vmatprep.subr.mxu0 0.0
  %5378 = vmatpush1.msra.mxu0 0.0
  %5379 = vmatprep.subr.mxu0 0.0
  %5380 = vmatpush1.msra.mxu0 0.0
  %5381 = vmatprep.subr.mxu0 0.0
  %5382 = vmatpush1.msra.mxu0 0.0
  %5383 = vmatprep.subr.mxu0 0.0
  %5384 = vmatpush1.msra.mxu0 0.0
  %5385 = vmatprep.subr.mxu0 0.0
  %5386 = vmatpush1.msra.mxu0 0.0
  %5387 = vmatprep.subr.mxu0 0.0
  %5388 = vmatpush1.msra.mxu0 0.0
  %5389 = vmatprep.subr.mxu0 0.0
  %5390 = vmatpush1.msra.mxu0 0.0
  %5391 = vmatprep.subr.mxu0 0.0
  %5392 = vmatpush1.msra.mxu0 0.0
  %5393 = vmatprep.subr.mxu0 0.0
  %5394 = vmatpush1.msra.mxu0 0.0
  %5395 = vmatprep.subr.mxu0 0.0
  %5396 = vmatpush1.msra.mxu0 0.0
  %5397 = vmatprep.subr.mxu0 0.0
  %5398 = vmatpush1.msra.mxu0 0.0
  %5399 = vmatprep.subr.mxu0 0.0
  %5400 = vmatpush1.msra.mxu0 0.0
  %5401 = vmatprep.subr.mxu0 0.0
  %5402 = vmatpush1.msra.mxu0 0.0
  %5403 = vmatprep.subr.mxu0 0.0
  %5404 = vmatpush1.msra.mxu0 0.0
  %5405 = vmatprep.subr.mxu0 0.0
  %5406 = vmatpush1.msra.mxu0 0.0
  %5407 = vmatprep.subr.mxu0 0.0
  %5408 = vmatpush1.msra.mxu0 0.0
  %5409 = vmatprep.subr.mxu0 0.0
  %5410 = vmatpush1.msra.mxu0 0.0
  %5411 = vmatprep.subr.mxu0 0.0
  %5412 = vmatpush1.msra.mxu0 0.0
  %5413 = vmatprep.subr.mxu0 0.0
  %5414 = vmatpush1.msra.mxu0 0.0
  %5415 = vmatprep.mubr.f32.mxu0 0.0
  %5416 = vmatmul.mubr.f32.gmra.mrb[0].mxu0 %v3812
  %v5417 = vpop.f32.mrb[0].mxu0
  %v5418 = vadd.f32 %v5349, %v5417
  %v5419 = vpop.f32.mrb[0].mxu0
  %5420 = vmatprep.mubr.f32.mxu0 0.0
  %5421 = vmatmul.mubr.f32.gmra.mrb[0].mxu0 %v3815
  %v5422 = vpop.f32.mrb[0].mxu0
  %v5423 = vadd.f32 %v5349, %v5422
  %v5424 = vpop.f32.mrb[0].mxu0
  %5425 = vmatprep.mubr.f32.mxu0 0.0
  %5426 = vmatmul.mubr.f32.gmra.mrb[0].mxu0 %v3818
  %v5427 = vpop.f32.mrb[0].mxu0
  %v5428 = vadd.f32 %v5349, %v5427
  %v5429 = vpop.f32.mrb[0].mxu0
  %5430 = vmatprep.mubr.f32.mxu0 0.0
  %5431 = vmatmul.mubr.f32.gmra.mrb[0].mxu0 %v3821
  %v5432 = vpop.f32.mrb[0].mxu0
  %v5433 = vadd.f32 %v5349, %v5432
  %v5434 = vpop.f32.mrb[0].mxu0
  %5435 = vmatprep.mubr.f32.mxu0 0.0
  %5436 = vmatmul.mubr.f32.gmra.mrb[0].mxu0 %v3824
  %v5437 = vpop.f32.mrb[0].mxu0
  %v5438 = vadd.f32 %v5349, %v5437
  %v5439 = vpop.f32.mrb[0].mxu0
  %5440 = vmatprep.mubr.f32.mxu0 0.0
  %5441 = vmatmul.mubr.f32.gmra.mrb[0].mxu0 %v3827
  %v5442 = vpop.f32.mrb[0].mxu0
  %v5443 = vadd.f32 %v5349, %v5442
  %v5444 = vpop.f32.mrb[0].mxu0
  %5445 = vdwg.mxu0
  %s5446 = scalar_lea.vmem %s6, 192
  %v5447 = vld [vmem:[%s5446] sm:$0xff]
  %v5448 = vld [vmem:[%s5446 + $0x8] sm:$0xff]
  %v5449 = vld [vmem:[%s5446 + $0x10] sm:$0xff]
  %v5450 = vld [vmem:[%s5446 + $0x18] sm:$0xff]
  %s5451 = scalar_lea.vmem %s7, 6
  %v5452 = vld [vmem:[%s5451] sm:$0x1]
  %v5454 = vlaneseq
  %v5455 = vshrl.u32 %v5454, 7
  %v5456 = vsub.s32 0, %v5455
  %v5457 = vrot.slane %v5452, %v5456
  %5459 = vmatprep.subr.mxu0 0.0
  %5460 = vmatpush1.msra.mxu0 %v5447
  %5461 = vmatprep.subr.mxu0 0.0
  %5462 = vmatpush1.msra.mxu0 %v5448
  %5463 = vmatprep.subr.mxu0 0.0
  %5464 = vmatpush1.msra.mxu0 %v5449
  %5465 = vmatprep.subr.mxu0 0.0
  %5466 = vmatpush1.msra.mxu0 %v5450
  %5467 = vmatprep.subr.mxu0 0.0
  %5468 = vmatpush1.msra.mxu0 0.0
  %5469 = vmatprep.subr.mxu0 0.0
  %5470 = vmatpush1.msra.mxu0 0.0
  %5471 = vmatprep.subr.mxu0 0.0
  %5472 = vmatpush1.msra.mxu0 0.0
  %5473 = vmatprep.subr.mxu0 0.0
  %5474 = vmatpush1.msra.mxu0 0.0
  %5475 = vmatprep.subr.mxu0 0.0
  %5476 = vmatpush1.msra.mxu0 0.0
  %5477 = vmatprep.subr.mxu0 0.0
  %5478 = vmatpush1.msra.mxu0 0.0
  %5479 = vmatprep.subr.mxu0 0.0
  %5480 = vmatpush1.msra.mxu0 0.0
  %5481 = vmatprep.subr.mxu0 0.0
  %5482 = vmatpush1.msra.mxu0 0.0
  %5483 = vmatprep.subr.mxu0 0.0
  %5484 = vmatpush1.msra.mxu0 0.0
  %5485 = vmatprep.subr.mxu0 0.0
  %5486 = vmatpush1.msra.mxu0 0.0
  %5487 = vmatprep.subr.mxu0 0.0
  %5488 = vmatpush1.msra.mxu0 0.0
  %5489 = vmatprep.subr.mxu0 0.0
  %5490 = vmatpush1.msra.mxu0 0.0
  %5491 = vmatprep.subr.mxu0 0.0
  %5492 = vmatpush1.msra.mxu0 0.0
  %5493 = vmatprep.subr.mxu0 0.0
  %5494 = vmatpush1.msra.mxu0 0.0
  %5495 = vmatprep.subr.mxu0 0.0
  %5496 = vmatpush1.msra.mxu0 0.0
  %5497 = vmatprep.subr.mxu0 0.0
  %5498 = vmatpush1.msra.mxu0 0.0
  %5499 = vmatprep.subr.mxu0 0.0
  %5500 = vmatpush1.msra.mxu0 0.0
  %5501 = vmatprep.subr.mxu0 0.0
  %5502 = vmatpush1.msra.mxu0 0.0
  %5503 = vmatprep.subr.mxu0 0.0
  %5504 = vmatpush1.msra.mxu0 0.0
  %5505 = vmatprep.subr.mxu0 0.0
  %5506 = vmatpush1.msra.mxu0 0.0
  %5507 = vmatprep.subr.mxu0 0.0
  %5508 = vmatpush1.msra.mxu0 0.0
  %5509 = vmatprep.subr.mxu0 0.0
  %5510 = vmatpush1.msra.mxu0 0.0
  %5511 = vmatprep.subr.mxu0 0.0
  %5512 = vmatpush1.msra.mxu0 0.0
  %5513 = vmatprep.subr.mxu0 0.0
  %5514 = vmatpush1.msra.mxu0 0.0
  %5515 = vmatprep.subr.mxu0 0.0
  %5516 = vmatpush1.msra.mxu0 0.0
  %5517 = vmatprep.subr.mxu0 0.0
  %5518 = vmatpush1.msra.mxu0 0.0
  %5519 = vmatprep.subr.mxu0 0.0
  %5520 = vmatpush1.msra.mxu0 0.0
  %5521 = vmatprep.subr.mxu0 0.0
  %5522 = vmatpush1.msra.mxu0 0.0
  %5523 = vmatprep.mubr.f32.mxu0 0.0
  %5524 = vmatmul.mubr.f32.gmra.mrb[0].mxu0 %v3812
  %v5525 = vpop.f32.mrb[0].mxu0
  %v5526 = vadd.f32 %v5457, %v5525
  %v5527 = vpop.f32.mrb[0].mxu0
  %5528 = vmatprep.mubr.f32.mxu0 0.0
  %5529 = vmatmul.mubr.f32.gmra.mrb[0].mxu0 %v3815
  %v5530 = vpop.f32.mrb[0].mxu0
  %v5531 = vadd.f32 %v5457, %v5530
  %v5532 = vpop.f32.mrb[0].mxu0
  %5533 = vmatprep.mubr.f32.mxu0 0.0
  %5534 = vmatmul.mubr.f32.gmra.mrb[0].mxu0 %v3818
  %v5535 = vpop.f32.mrb[0].mxu0
  %v5536 = vadd.f32 %v5457, %v5535
  %v5537 = vpop.f32.mrb[0].mxu0
  %5538 = vmatprep.mubr.f32.mxu0 0.0
  %5539 = vmatmul.mubr.f32.gmra.mrb[0].mxu0 %v3821
  %v5540 = vpop.f32.mrb[0].mxu0
  %v5541 = vadd.f32 %v5457, %v5540
  %v5542 = vpop.f32.mrb[0].mxu0
  %5543 = vmatprep.mubr.f32.mxu0 0.0
  %5544 = vmatmul.mubr.f32.gmra.mrb[0].mxu0 %v3824
  %v5545 = vpop.f32.mrb[0].mxu0
  %v5546 = vadd.f32 %v5457, %v5545
  %v5547 = vpop.f32.mrb[0].mxu0
  %5548 = vmatprep.mubr.f32.mxu0 0.0
  %5549 = vmatmul.mubr.f32.gmra.mrb[0].mxu0 %v3827
  %v5550 = vpop.f32.mrb[0].mxu0
  %v5551 = vadd.f32 %v5457, %v5550
  %v5552 = vpop.f32.mrb[0].mxu0
  %5553 = vdwg.mxu0
  %s5554 = scalar_lea.vmem %s8, 192
  %v5555 = vld [vmem:[%s5554] sm:$0xff]
  %v5556 = vld [vmem:[%s5554 + $0x8] sm:$0xff]
  %v5557 = vld [vmem:[%s5554 + $0x10] sm:$0xff]
  %v5558 = vld [vmem:[%s5554 + $0x18] sm:$0xff]
  %s5559 = scalar_lea.vmem %s9, 6
  %v5560 = vld [vmem:[%s5559] sm:$0x1]
  %v5562 = vlaneseq
  %v5563 = vshrl.u32 %v5562, 7
  %v5564 = vsub.s32 0, %v5563
  %v5565 = vrot.slane %v5560, %v5564
  %5567 = vmatprep.subr.mxu0 0.0
  %5568 = vmatpush1.msra.mxu0 %v5555
  %5569 = vmatprep.subr.mxu0 0.0
  %5570 = vmatpush1.msra.mxu0 %v5556
  %5571 = vmatprep.subr.mxu0 0.0
  %5572 = vmatpush1.msra.mxu0 %v5557
  %5573 = vmatprep.subr.mxu0 0.0
  %5574 = vmatpush1.msra.mxu0 %v5558
  %5575 = vmatprep.subr.mxu0 0.0
  %5576 = vmatpush1.msra.mxu0 0.0
  %5577 = vmatprep.subr.mxu0 0.0
  %5578 = vmatpush1.msra.mxu0 0.0
  %5579 = vmatprep.subr.mxu0 0.0
  %5580 = vmatpush1.msra.mxu0 0.0
  %5581 = vmatprep.subr.mxu0 0.0
  %5582 = vmatpush1.msra.mxu0 0.0
  %5583 = vmatprep.subr.mxu0 0.0
  %5584 = vmatpush1.msra.mxu0 0.0
  %5585 = vmatprep.subr.mxu0 0.0
  %5586 = vmatpush1.msra.mxu0 0.0
  %5587 = vmatprep.subr.mxu0 0.0
  %5588 = vmatpush1.msra.mxu0 0.0
  %5589 = vmatprep.subr.mxu0 0.0
  %5590 = vmatpush1.msra.mxu0 0.0
  %5591 = vmatprep.subr.mxu0 0.0
  %5592 = vmatpush1.msra.mxu0 0.0
  %5593 = vmatprep.subr.mxu0 0.0
  %5594 = vmatpush1.msra.mxu0 0.0
  %5595 = vmatprep.subr.mxu0 0.0
  %5596 = vmatpush1.msra.mxu0 0.0
  %5597 = vmatprep.subr.mxu0 0.0
  %5598 = vmatpush1.msra.mxu0 0.0
  %5599 = vmatprep.subr.mxu0 0.0
  %5600 = vmatpush1.msra.mxu0 0.0
  %5601 = vmatprep.subr.mxu0 0.0
  %5602 = vmatpush1.msra.mxu0 0.0
  %5603 = vmatprep.subr.mxu0 0.0
  %5604 = vmatpush1.msra.mxu0 0.0
  %5605 = vmatprep.subr.mxu0 0.0
  %5606 = vmatpush1.msra.mxu0 0.0
  %5607 = vmatprep.subr.mxu0 0.0
  %5608 = vmatpush1.msra.mxu0 0.0
  %5609 = vmatprep.subr.mxu0 0.0
  %5610 = vmatpush1.msra.mxu0 0.0
  %5611 = vmatprep.subr.mxu0 0.0
  %5612 = vmatpush1.msra.mxu0 0.0
  %5613 = vmatprep.subr.mxu0 0.0
  %5614 = vmatpush1.msra.mxu0 0.0
  %5615 = vmatprep.subr.mxu0 0.0
  %5616 = vmatpush1.msra.mxu0 0.0
  %5617 = vmatprep.subr.mxu0 0.0
  %5618 = vmatpush1.msra.mxu0 0.0
  %5619 = vmatprep.subr.mxu0 0.0
  %5620 = vmatpush1.msra.mxu0 0.0
  %5621 = vmatprep.subr.mxu0 0.0
  %5622 = vmatpush1.msra.mxu0 0.0
  %5623 = vmatprep.subr.mxu0 0.0
  %5624 = vmatpush1.msra.mxu0 0.0
  %5625 = vmatprep.subr.mxu0 0.0
  %5626 = vmatpush1.msra.mxu0 0.0
  %5627 = vmatprep.subr.mxu0 0.0
  %5628 = vmatpush1.msra.mxu0 0.0
  %5629 = vmatprep.subr.mxu0 0.0
  %5630 = vmatpush1.msra.mxu0 0.0
  %5631 = vmatprep.mubr.f32.mxu0 0.0
  %5632 = vmatmul.mubr.f32.gmra.mrb[0].mxu0 %v3812
  %v5633 = vpop.f32.mrb[0].mxu0
  %v5634 = vadd.f32 %v5565, %v5633
  %v5635 = vpop.f32.mrb[0].mxu0
  %5636 = vmatprep.mubr.f32.mxu0 0.0
  %5637 = vmatmul.mubr.f32.gmra.mrb[0].mxu0 %v3815
  %v5638 = vpop.f32.mrb[0].mxu0
  %v5639 = vadd.f32 %v5565, %v5638
  %v5640 = vpop.f32.mrb[0].mxu0
  %5641 = vmatprep.mubr.f32.mxu0 0.0
  %5642 = vmatmul.mubr.f32.gmra.mrb[0].mxu0 %v3818
  %v5643 = vpop.f32.mrb[0].mxu0
  %v5644 = vadd.f32 %v5565, %v5643
  %v5645 = vpop.f32.mrb[0].mxu0
  %5646 = vmatprep.mubr.f32.mxu0 0.0
  %5647 = vmatmul.mubr.f32.gmra.mrb[0].mxu0 %v3821
  %v5648 = vpop.f32.mrb[0].mxu0
  %v5649 = vadd.f32 %v5565, %v5648
  %v5650 = vpop.f32.mrb[0].mxu0
  %5651 = vmatprep.mubr.f32.mxu0 0.0
  %5652 = vmatmul.mubr.f32.gmra.mrb[0].mxu0 %v3824
  %v5653 = vpop.f32.mrb[0].mxu0
  %v5654 = vadd.f32 %v5565, %v5653
  %v5655 = vpop.f32.mrb[0].mxu0
  %5656 = vmatprep.mubr.f32.mxu0 0.0
  %5657 = vmatmul.mubr.f32.gmra.mrb[0].mxu0 %v3827
  %v5658 = vpop.f32.mrb[0].mxu0
  %v5659 = vadd.f32 %v5565, %v5658
  %v5660 = vpop.f32.mrb[0].mxu0
  %5661 = vdwg.mxu0
  %v5663 = vsel %vm525, %v5418, 0
  %v5666 = vsel %vm525, %v5423, 0
  %v5669 = vsel %vm525, %v5428, 0
  %v5672 = vsel %vm525, %v5433, 0
  %v5675 = vsel %vm525, %v5438, 0
  %v5678 = vsel %vm525, %v5443, 0
  %v5681 = vsel %vm525, %v5526, 0
  %v5684 = vsel %vm525, %v5531, 0
  %v5687 = vsel %vm525, %v5536, 0
  %v5690 = vsel %vm525, %v5541, 0
  %v5693 = vsel %vm525, %v5546, 0
  %v5696 = vsel %vm525, %v5551, 0
  %5698 = vmatprep.subr.mxu0 0.0
  %5699 = vmatpush1.xpose.msra.mxu0 %v5681
  %5700 = vmatprep.subr.mxu0 0.0
  %5701 = vmatpush1.xpose.msra.mxu0 %v5684
  %5702 = vmatprep.subr.mxu0 0.0
  %5703 = vmatpush1.xpose.msra.mxu0 %v5687
  %5704 = vmatprep.subr.mxu0 0.0
  %5705 = vmatpush1.xpose.msra.mxu0 %v5690
  %5706 = vmatprep.subr.mxu0 0.0
  %5707 = vmatpush1.xpose.msra.mxu0 %v5693
  %5708 = vmatprep.subr.mxu0 0.0
  %5709 = vmatpush1.xpose.msra.mxu0 %v5696
  %5710 = vmatprep.subr.mxu0 0.0
  %5711 = vmatpush1.xpose.msra.mxu0 0.0
  %5712 = vmatprep.subr.mxu0 0.0
  %5713 = vmatpush1.xpose.msra.mxu0 0.0
  %5714 = vmatprep.subr.mxu0 0.0
  %5715 = vmatpush1.xpose.msra.mxu0 0.0
  %5716 = vmatprep.subr.mxu0 0.0
  %5717 = vmatpush1.xpose.msra.mxu0 0.0
  %5718 = vmatprep.subr.mxu0 0.0
  %5719 = vmatpush1.xpose.msra.mxu0 0.0
  %5720 = vmatprep.subr.mxu0 0.0
  %5721 = vmatpush1.xpose.msra.mxu0 0.0
  %5722 = vmatprep.subr.mxu0 0.0
  %5723 = vmatpush1.xpose.msra.mxu0 0.0
  %5724 = vmatprep.subr.mxu0 0.0
  %5725 = vmatpush1.xpose.msra.mxu0 0.0
  %5726 = vmatprep.subr.mxu0 0.0
  %5727 = vmatpush1.xpose.msra.mxu0 0.0
  %5728 = vmatprep.subr.mxu0 0.0
  %5729 = vmatpush1.xpose.msra.mxu0 0.0
  %5730 = vmatprep.subr.mxu0 0.0
  %5731 = vmatpush1.xpose.msra.mxu0 0.0
  %5732 = vmatprep.subr.mxu0 0.0
  %5733 = vmatpush1.xpose.msra.mxu0 0.0
  %5734 = vmatprep.subr.mxu0 0.0
  %5735 = vmatpush1.xpose.msra.mxu0 0.0
  %5736 = vmatprep.subr.mxu0 0.0
  %5737 = vmatpush1.xpose.msra.mxu0 0.0
  %5738 = vmatprep.subr.mxu0 0.0
  %5739 = vmatpush1.xpose.msra.mxu0 0.0
  %5740 = vmatprep.subr.mxu0 0.0
  %5741 = vmatpush1.xpose.msra.mxu0 0.0
  %5742 = vmatprep.subr.mxu0 0.0
  %5743 = vmatpush1.xpose.msra.mxu0 0.0
  %5744 = vmatprep.subr.mxu0 0.0
  %5745 = vmatpush1.xpose.msra.mxu0 0.0
  %5746 = vmatprep.subr.mxu0 0.0
  %5747 = vmatpush1.xpose.msra.mxu0 0.0
  %5748 = vmatprep.subr.mxu0 0.0
  %5749 = vmatpush1.xpose.msra.mxu0 0.0
  %5750 = vmatprep.subr.mxu0 0.0
  %5751 = vmatpush1.xpose.msra.mxu0 0.0
  %5752 = vmatprep.subr.mxu0 0.0
  %5753 = vmatpush1.xpose.msra.mxu0 0.0
  %5754 = vmatprep.subr.mxu0 0.0
  %5755 = vmatpush1.xpose.msra.mxu0 0.0
  %5756 = vmatprep.subr.mxu0 0.0
  %5757 = vmatpush1.xpose.msra.mxu0 0.0
  %5758 = vmatprep.subr.mxu0 0.0
  %5759 = vmatpush1.xpose.msra.mxu0 0.0
  %5760 = vmatprep.subr.mxu0 0.0
  %5761 = vmatpush1.xpose.msra.mxu0 0.0
  %5762 = vmatprep.mubr.f32.mxu0 0.0
  %5763 = vmatmul.mubr.f32.gmra.mrb[0].mxu0 %v5663
  %v5764 = vpop.f32.mrb[0].mxu0
  %v5765 = vadd.f32 0.0, %v5764
  %v5766 = vpop.f32.mrb[0].mxu0
  %5767 = vmatprep.mubr.f32.mxu0 0.0
  %5768 = vmatmul.mubr.f32.gmra.mrb[0].mxu0 %v5666
  %v5769 = vpop.f32.mrb[0].mxu0
  %v5770 = vadd.f32 0.0, %v5769
  %v5771 = vpop.f32.mrb[0].mxu0
  %5772 = vmatprep.mubr.f32.mxu0 0.0
  %5773 = vmatmul.mubr.f32.gmra.mrb[0].mxu0 %v5669
  %v5774 = vpop.f32.mrb[0].mxu0
  %v5775 = vadd.f32 0.0, %v5774
  %v5776 = vpop.f32.mrb[0].mxu0
  %5777 = vmatprep.mubr.f32.mxu0 0.0
  %5778 = vmatmul.mubr.f32.gmra.mrb[0].mxu0 %v5672
  %v5779 = vpop.f32.mrb[0].mxu0
  %v5780 = vadd.f32 0.0, %v5779
  %v5781 = vpop.f32.mrb[0].mxu0
  %5782 = vmatprep.mubr.f32.mxu0 0.0
  %5783 = vmatmul.mubr.f32.gmra.mrb[0].mxu0 %v5675
  %v5784 = vpop.f32.mrb[0].mxu0
  %v5785 = vadd.f32 0.0, %v5784
  %v5786 = vpop.f32.mrb[0].mxu0
  %5787 = vmatprep.mubr.f32.mxu0 0.0
  %5788 = vmatmul.mubr.f32.gmra.mrb[0].mxu0 %v5678
  %v5789 = vpop.f32.mrb[0].mxu0
  %v5790 = vadd.f32 0.0, %v5789
  %v5791 = vpop.f32.mrb[0].mxu0
  %5792 = vdwg.mxu0
  %v5793 = vmul.f32 %v5765, 0.35355338
  %v5794 = vmul.f32 %v5770, 0.35355338
  %v5795 = vmul.f32 %v5775, 0.35355338
  %v5796 = vmul.f32 %v5780, 0.35355338
  %v5797 = vmul.f32 %v5785, 0.35355338
  %v5798 = vmul.f32 %v5790, 0.35355338
  %v5799 = vadd.f32 %v5793, %v183
  %v5800 = vadd.f32 %v5794, %v184
  %v5801 = vadd.f32 %v5795, %v185
  %v5802 = vadd.f32 %v5796, %v186
  %v5803 = vadd.f32 %v5797, %v187
  %v5804 = vadd.f32 %v5798, %v188
  %v5805 = vsel %vm669, %v5799, -inf
  %5806 = vmax.xlane.f32.xlu0 %v5805
  %v5807 = vpop.xlane.xlu0 %5806
  %v5808 = vsel %vm669, %v5800, -inf
  %5809 = vmax.xlane.f32.xlu0 %v5808
  %v5810 = vpop.xlane.xlu0 %5809
  %v5811 = vsel %vm669, %v5801, -inf
  %5812 = vmax.xlane.f32.xlu0 %v5811
  %v5813 = vpop.xlane.xlu0 %5812
  %v5814 = vsel %vm669, %v5802, -inf
  %5815 = vmax.xlane.f32.xlu0 %v5814
  %v5816 = vpop.xlane.xlu0 %5815
  %v5817 = vsel %vm669, %v5803, -inf
  %5818 = vmax.xlane.f32.xlu0 %v5817
  %v5819 = vpop.xlane.xlu0 %5818
  %v5820 = vsel %vm669, %v5804, -inf
  %5821 = vmax.xlane.f32.xlu0 %v5820
  %v5822 = vpop.xlane.xlu0 %5821
  %v5823 = vsub.f32 %v5799, %v5807
  %v5824 = vsub.f32 %v5800, %v5810
  %v5825 = vsub.f32 %v5801, %v5813
  %v5826 = vsub.f32 %v5802, %v5816
  %v5827 = vsub.f32 %v5803, %v5819
  %v5828 = vsub.f32 %v5804, %v5822
  %v5829 = vmul.f32 %v5823, 1.442695
  %v5830 = vpow.pop %v5829
  %v5831 = vmul.f32 %v5824, 1.442695
  %v5832 = vpow.pop %v5831
  %v5833 = vmul.f32 %v5825, 1.442695
  %v5834 = vpow.pop %v5833
  %v5835 = vmul.f32 %v5826, 1.442695
  %v5836 = vpow.pop %v5835
  %v5837 = vmul.f32 %v5827, 1.442695
  %v5838 = vpow.pop %v5837
  %v5839 = vmul.f32 %v5828, 1.442695
  %v5840 = vpow.pop %v5839
  %v5841 = vsel %vm669, %v5830, 0.0
  %5842 = vadd.xlane.f32.xlu0 %v5841
  %v5843 = vpop.xlane.xlu0 %5842
  %v5844 = vsel %vm669, %v5832, 0.0
  %5845 = vadd.xlane.f32.xlu0 %v5844
  %v5846 = vpop.xlane.xlu0 %5845
  %v5847 = vsel %vm669, %v5834, 0.0
  %5848 = vadd.xlane.f32.xlu0 %v5847
  %v5849 = vpop.xlane.xlu0 %5848
  %v5850 = vsel %vm669, %v5836, 0.0
  %5851 = vadd.xlane.f32.xlu0 %v5850
  %v5852 = vpop.xlane.xlu0 %5851
  %v5853 = vsel %vm669, %v5838, 0.0
  %5854 = vadd.xlane.f32.xlu0 %v5853
  %v5855 = vpop.xlane.xlu0 %5854
  %v5856 = vsel %vm669, %v5840, 0.0
  %5857 = vadd.xlane.f32.xlu0 %v5856
  %v5858 = vpop.xlane.xlu0 %5857
  %v5859 = vrcp.pop %v5843
  %v5860 = vrcp.pop %v5846
  %v5861 = vrcp.pop %v5849
  %v5862 = vrcp.pop %v5852
  %v5863 = vrcp.pop %v5855
  %v5864 = vrcp.pop %v5858
  %v5865 = vmul.f32 %v5830, %v5859
  %v5866 = vmul.f32 %v5832, %v5860
  %v5867 = vmul.f32 %v5834, %v5861
  %v5868 = vmul.f32 %v5836, %v5862
  %v5869 = vmul.f32 %v5838, %v5863
  %v5870 = vmul.f32 %v5840, %v5864
  %v5872 = vsel %vm669, %v5865, 0
  %v5875 = vsel %vm669, %v5866, 0
  %v5878 = vsel %vm669, %v5867, 0
  %v5881 = vsel %vm669, %v5868, 0
  %v5884 = vsel %vm669, %v5869, 0
  %v5887 = vsel %vm669, %v5870, 0
  %5889 = vmatprep.subr.mxu0 0.0
  %5890 = vmatpush1.msra.mxu0 %v5634
  %5891 = vmatprep.subr.mxu0 0.0
  %5892 = vmatpush1.msra.mxu0 %v5639
  %5893 = vmatprep.subr.mxu0 0.0
  %5894 = vmatpush1.msra.mxu0 %v5644
  %5895 = vmatprep.subr.mxu0 0.0
  %5896 = vmatpush1.msra.mxu0 %v5649
  %5897 = vmatprep.subr.mxu0 0.0
  %5898 = vmatpush1.msra.mxu0 %v5654
  %5899 = vmatprep.subr.mxu0 0.0
  %5900 = vmatpush1.msra.mxu0 %v5659
  %5901 = vmatprep.subr.mxu0 0.0
  %5902 = vmatpush1.msra.mxu0 0.0
  %5903 = vmatprep.subr.mxu0 0.0
  %5904 = vmatpush1.msra.mxu0 0.0
  %5905 = vmatprep.subr.mxu0 0.0
  %5906 = vmatpush1.msra.mxu0 0.0
  %5907 = vmatprep.subr.mxu0 0.0
  %5908 = vmatpush1.msra.mxu0 0.0
  %5909 = vmatprep.subr.mxu0 0.0
  %5910 = vmatpush1.msra.mxu0 0.0
  %5911 = vmatprep.subr.mxu0 0.0
  %5912 = vmatpush1.msra.mxu0 0.0
  %5913 = vmatprep.subr.mxu0 0.0
  %5914 = vmatpush1.msra.mxu0 0.0
  %5915 = vmatprep.subr.mxu0 0.0
  %5916 = vmatpush1.msra.mxu0 0.0
  %5917 = vmatprep.subr.mxu0 0.0
  %5918 = vmatpush1.msra.mxu0 0.0
  %5919 = vmatprep.subr.mxu0 0.0
  %5920 = vmatpush1.msra.mxu0 0.0
  %5921 = vmatprep.subr.mxu0 0.0
  %5922 = vmatpush1.msra.mxu0 0.0
  %5923 = vmatprep.subr.mxu0 0.0
  %5924 = vmatpush1.msra.mxu0 0.0
  %5925 = vmatprep.subr.mxu0 0.0
  %5926 = vmatpush1.msra.mxu0 0.0
  %5927 = vmatprep.subr.mxu0 0.0
  %5928 = vmatpush1.msra.mxu0 0.0
  %5929 = vmatprep.subr.mxu0 0.0
  %5930 = vmatpush1.msra.mxu0 0.0
  %5931 = vmatprep.subr.mxu0 0.0
  %5932 = vmatpush1.msra.mxu0 0.0
  %5933 = vmatprep.subr.mxu0 0.0
  %5934 = vmatpush1.msra.mxu0 0.0
  %5935 = vmatprep.subr.mxu0 0.0
  %5936 = vmatpush1.msra.mxu0 0.0
  %5937 = vmatprep.subr.mxu0 0.0
  %5938 = vmatpush1.msra.mxu0 0.0
  %5939 = vmatprep.subr.mxu0 0.0
  %5940 = vmatpush1.msra.mxu0 0.0
  %5941 = vmatprep.subr.mxu0 0.0
  %5942 = vmatpush1.msra.mxu0 0.0
  %5943 = vmatprep.subr.mxu0 0.0
  %5944 = vmatpush1.msra.mxu0 0.0
  %5945 = vmatprep.subr.mxu0 0.0
  %5946 = vmatpush1.msra.mxu0 0.0
  %5947 = vmatprep.subr.mxu0 0.0
  %5948 = vmatpush1.msra.mxu0 0.0
  %5949 = vmatprep.subr.mxu0 0.0
  %5950 = vmatpush1.msra.mxu0 0.0
  %5951 = vmatprep.subr.mxu0 0.0
  %5952 = vmatpush1.msra.mxu0 0.0
  %5953 = vmatprep.mubr.f32.mxu0 0.0
  %5954 = vmatmul.mubr.f32.gmra.mrb[0].mxu0 %v5872
  %v5955 = vpop.f32.mrb[0].mxu0
  %v5956 = vadd.f32 0.0, %v5955
  %v5957 = vpop.f32.mrb[0].mxu0
  %5958 = vmatprep.mubr.f32.mxu0 0.0
  %5959 = vmatmul.mubr.f32.gmra.mrb[0].mxu0 %v5875
  %v5960 = vpop.f32.mrb[0].mxu0
  %v5961 = vadd.f32 0.0, %v5960
  %v5962 = vpop.f32.mrb[0].mxu0
  %5963 = vmatprep.mubr.f32.mxu0 0.0
  %5964 = vmatmul.mubr.f32.gmra.mrb[0].mxu0 %v5878
  %v5965 = vpop.f32.mrb[0].mxu0
  %v5966 = vadd.f32 0.0, %v5965
  %v5967 = vpop.f32.mrb[0].mxu0
  %5968 = vmatprep.mubr.f32.mxu0 0.0
  %5969 = vmatmul.mubr.f32.gmra.mrb[0].mxu0 %v5881
  %v5970 = vpop.f32.mrb[0].mxu0
  %v5971 = vadd.f32 0.0, %v5970
  %v5972 = vpop.f32.mrb[0].mxu0
  %5973 = vmatprep.mubr.f32.mxu0 0.0
  %5974 = vmatmul.mubr.f32.gmra.mrb[0].mxu0 %v5884
  %v5975 = vpop.f32.mrb[0].mxu0
  %v5976 = vadd.f32 0.0, %v5975
  %v5977 = vpop.f32.mrb[0].mxu0
  %5978 = vmatprep.mubr.f32.mxu0 0.0
  %5979 = vmatmul.mubr.f32.gmra.mrb[0].mxu0 %v5887
  %v5980 = vpop.f32.mrb[0].mxu0
  %v5981 = vadd.f32 0.0, %v5980
  %v5982 = vpop.f32.mrb[0].mxu0
  %5983 = vdwg.mxu0
  %s5984 = scalar_lea.vmem %s10, 48
  %v5985 = vld [vmem:[%s5984] sm:$0xff]
  %v5987 = vsel %vm525, %v5956, 0
  %v5990 = vsel %vm525, %v5961, 0
  %v5993 = vsel %vm525, %v5966, 0
  %v5996 = vsel %vm525, %v5971, 0
  %v5999 = vsel %vm525, %v5976, 0
  %v6002 = vsel %vm525, %v5981, 0
  %6004 = vmatprep.subr.mxu0 0.0
  %6005 = vmatpush1.msra.mxu0 %v5985
  %6006 = vmatprep.subr.mxu0 0.0
  %6007 = vmatpush1.msra.mxu0 0.0
  %6008 = vmatprep.subr.mxu0 0.0
  %6009 = vmatpush1.msra.mxu0 0.0
  %6010 = vmatprep.subr.mxu0 0.0
  %6011 = vmatpush1.msra.mxu0 0.0
  %6012 = vmatprep.subr.mxu0 0.0
  %6013 = vmatpush1.msra.mxu0 0.0
  %6014 = vmatprep.subr.mxu0 0.0
  %6015 = vmatpush1.msra.mxu0 0.0
  %6016 = vmatprep.subr.mxu0 0.0
  %6017 = vmatpush1.msra.mxu0 0.0
  %6018 = vmatprep.subr.mxu0 0.0
  %6019 = vmatpush1.msra.mxu0 0.0
  %6020 = vmatprep.subr.mxu0 0.0
  %6021 = vmatpush1.msra.mxu0 0.0
  %6022 = vmatprep.subr.mxu0 0.0
  %6023 = vmatpush1.msra.mxu0 0.0
  %6024 = vmatprep.subr.mxu0 0.0
  %6025 = vmatpush1.msra.mxu0 0.0
  %6026 = vmatprep.subr.mxu0 0.0
  %6027 = vmatpush1.msra.mxu0 0.0
  %6028 = vmatprep.subr.mxu0 0.0
  %6029 = vmatpush1.msra.mxu0 0.0
  %6030 = vmatprep.subr.mxu0 0.0
  %6031 = vmatpush1.msra.mxu0 0.0
  %6032 = vmatprep.subr.mxu0 0.0
  %6033 = vmatpush1.msra.mxu0 0.0
  %6034 = vmatprep.subr.mxu0 0.0
  %6035 = vmatpush1.msra.mxu0 0.0
  %6036 = vmatprep.subr.mxu0 0.0
  %6037 = vmatpush1.msra.mxu0 0.0
  %6038 = vmatprep.subr.mxu0 0.0
  %6039 = vmatpush1.msra.mxu0 0.0
  %6040 = vmatprep.subr.mxu0 0.0
  %6041 = vmatpush1.msra.mxu0 0.0
  %6042 = vmatprep.subr.mxu0 0.0
  %6043 = vmatpush1.msra.mxu0 0.0
  %6044 = vmatprep.subr.mxu0 0.0
  %6045 = vmatpush1.msra.mxu0 0.0
  %6046 = vmatprep.subr.mxu0 0.0
  %6047 = vmatpush1.msra.mxu0 0.0
  %6048 = vmatprep.subr.mxu0 0.0
  %6049 = vmatpush1.msra.mxu0 0.0
  %6050 = vmatprep.subr.mxu0 0.0
  %6051 = vmatpush1.msra.mxu0 0.0
  %6052 = vmatprep.subr.mxu0 0.0
  %6053 = vmatpush1.msra.mxu0 0.0
  %6054 = vmatprep.subr.mxu0 0.0
  %6055 = vmatpush1.msra.mxu0 0.0
  %6056 = vmatprep.subr.mxu0 0.0
  %6057 = vmatpush1.msra.mxu0 0.0
  %6058 = vmatprep.subr.mxu0 0.0
  %6059 = vmatpush1.msra.mxu0 0.0
  %6060 = vmatprep.subr.mxu0 0.0
  %6061 = vmatpush1.msra.mxu0 0.0
  %6062 = vmatprep.subr.mxu0 0.0
  %6063 = vmatpush1.msra.mxu0 0.0
  %6064 = vmatprep.subr.mxu0 0.0
  %6065 = vmatpush1.msra.mxu0 0.0
  %6066 = vmatprep.subr.mxu0 0.0
  %6067 = vmatpush1.msra.mxu0 0.0
  %6068 = vmatprep.mubr.f32.mxu0 0.0
  %6069 = vmatmul.mubr.f32.gmra.mrb[0].mxu0 %v5987
  %v6070 = vpop.f32.mrb[0].mxu0
  %v6071 = vadd.f32 0.0, %v6070
  %v6072 = vpop.f32.mrb[0].mxu0
  %6073 = vmatprep.mubr.f32.mxu0 0.0
  %6074 = vmatmul.mubr.f32.gmra.mrb[0].mxu0 %v5990
  %v6075 = vpop.f32.mrb[0].mxu0
  %v6076 = vadd.f32 0.0, %v6075
  %v6077 = vpop.f32.mrb[0].mxu0
  %6078 = vmatprep.mubr.f32.mxu0 0.0
  %6079 = vmatmul.mubr.f32.gmra.mrb[0].mxu0 %v5993
  %v6080 = vpop.f32.mrb[0].mxu0
  %v6081 = vadd.f32 0.0, %v6080
  %v6082 = vpop.f32.mrb[0].mxu0
  %6083 = vmatprep.mubr.f32.mxu0 0.0
  %6084 = vmatmul.mubr.f32.gmra.mrb[0].mxu0 %v5996
  %v6085 = vpop.f32.mrb[0].mxu0
  %v6086 = vadd.f32 0.0, %v6085
  %v6087 = vpop.f32.mrb[0].mxu0
  %6088 = vmatprep.mubr.f32.mxu0 0.0
  %6089 = vmatmul.mubr.f32.gmra.mrb[0].mxu0 %v5999
  %v6090 = vpop.f32.mrb[0].mxu0
  %v6091 = vadd.f32 0.0, %v6090
  %v6092 = vpop.f32.mrb[0].mxu0
  %6093 = vmatprep.mubr.f32.mxu0 0.0
  %6094 = vmatmul.mubr.f32.gmra.mrb[0].mxu0 %v6002
  %v6095 = vpop.f32.mrb[0].mxu0
  %v6096 = vadd.f32 0.0, %v6095
  %v6097 = vpop.f32.mrb[0].mxu0
  %6098 = vdwg.mxu0
  %v6099 = vadd.f32 %v5310, %v6071
  %v6100 = vadd.f32 %v5315, %v6076
  %v6101 = vadd.f32 %v5320, %v6081
  %v6102 = vadd.f32 %v5325, %v6086
  %v6103 = vadd.f32 %v5330, %v6091
  %v6104 = vadd.f32 %v5335, %v6096
  %s6105 = scalar_lea.vmem %s4, 224
  %v6106 = vld [vmem:[%s6105] sm:$0xff]
  %v6107 = vld [vmem:[%s6105 + $0x8] sm:$0xff]
  %v6108 = vld [vmem:[%s6105 + $0x10] sm:$0xff]
  %v6109 = vld [vmem:[%s6105 + $0x18] sm:$0xff]
  %s6110 = scalar_lea.vmem %s5, 7
  %v6111 = vld [vmem:[%s6110] sm:$0x1]
  %v6113 = vlaneseq
  %v6114 = vshrl.u32 %v6113, 7
  %v6115 = vsub.s32 0, %v6114
  %v6116 = vrot.slane %v6111, %v6115
  %6118 = vmatprep.subr.mxu0 0.0
  %6119 = vmatpush1.msra.mxu0 %v6106
  %6120 = vmatprep.subr.mxu0 0.0
  %6121 = vmatpush1.msra.mxu0 %v6107
  %6122 = vmatprep.subr.mxu0 0.0
  %6123 = vmatpush1.msra.mxu0 %v6108
  %6124 = vmatprep.subr.mxu0 0.0
  %6125 = vmatpush1.msra.mxu0 %v6109
  %6126 = vmatprep.subr.mxu0 0.0
  %6127 = vmatpush1.msra.mxu0 0.0
  %6128 = vmatprep.subr.mxu0 0.0
  %6129 = vmatpush1.msra.mxu0 0.0
  %6130 = vmatprep.subr.mxu0 0.0
  %6131 = vmatpush1.msra.mxu0 0.0
  %6132 = vmatprep.subr.mxu0 0.0
  %6133 = vmatpush1.msra.mxu0 0.0
  %6134 = vmatprep.subr.mxu0 0.0
  %6135 = vmatpush1.msra.mxu0 0.0
  %6136 = vmatprep.subr.mxu0 0.0
  %6137 = vmatpush1.msra.mxu0 0.0
  %6138 = vmatprep.subr.mxu0 0.0
  %6139 = vmatpush1.msra.mxu0 0.0
  %6140 = vmatprep.subr.mxu0 0.0
  %6141 = vmatpush1.msra.mxu0 0.0
  %6142 = vmatprep.subr.mxu0 0.0
  %6143 = vmatpush1.msra.mxu0 0.0
  %6144 = vmatprep.subr.mxu0 0.0
  %6145 = vmatpush1.msra.mxu0 0.0
  %6146 = vmatprep.subr.mxu0 0.0
  %6147 = vmatpush1.msra.mxu0 0.0
  %6148 = vmatprep.subr.mxu0 0.0
  %6149 = vmatpush1.msra.mxu0 0.0
  %6150 = vmatprep.subr.mxu0 0.0
  %6151 = vmatpush1.msra.mxu0 0.0
  %6152 = vmatprep.subr.mxu0 0.0
  %6153 = vmatpush1.msra.mxu0 0.0
  %6154 = vmatprep.subr.mxu0 0.0
  %6155 = vmatpush1.msra.mxu0 0.0
  %6156 = vmatprep.subr.mxu0 0.0
  %6157 = vmatpush1.msra.mxu0 0.0
  %6158 = vmatprep.subr.mxu0 0.0
  %6159 = vmatpush1.msra.mxu0 0.0
  %6160 = vmatprep.subr.mxu0 0.0
  %6161 = vmatpush1.msra.mxu0 0.0
  %6162 = vmatprep.subr.mxu0 0.0
  %6163 = vmatpush1.msra.mxu0 0.0
  %6164 = vmatprep.subr.mxu0 0.0
  %6165 = vmatpush1.msra.mxu0 0.0
  %6166 = vmatprep.subr.mxu0 0.0
  %6167 = vmatpush1.msra.mxu0 0.0
  %6168 = vmatprep.subr.mxu0 0.0
  %6169 = vmatpush1.msra.mxu0 0.0
  %6170 = vmatprep.subr.mxu0 0.0
  %6171 = vmatpush1.msra.mxu0 0.0
  %6172 = vmatprep.subr.mxu0 0.0
  %6173 = vmatpush1.msra.mxu0 0.0
  %6174 = vmatprep.subr.mxu0 0.0
  %6175 = vmatpush1.msra.mxu0 0.0
  %6176 = vmatprep.subr.mxu0 0.0
  %6177 = vmatpush1.msra.mxu0 0.0
  %6178 = vmatprep.subr.mxu0 0.0
  %6179 = vmatpush1.msra.mxu0 0.0
  %6180 = vmatprep.subr.mxu0 0.0
  %6181 = vmatpush1.msra.mxu0 0.0
  %6182 = vmatprep.mubr.f32.mxu0 0.0
  %6183 = vmatmul.mubr.f32.gmra.mrb[0].mxu0 %v3812
  %v6184 = vpop.f32.mrb[0].mxu0
  %v6185 = vadd.f32 %v6116, %v6184
  %v6186 = vpop.f32.mrb[0].mxu0
  %6187 = vmatprep.mubr.f32.mxu0 0.0
  %6188 = vmatmul.mubr.f32.gmra.mrb[0].mxu0 %v3815
  %v6189 = vpop.f32.mrb[0].mxu0
  %v6190 = vadd.f32 %v6116, %v6189
  %v6191 = vpop.f32.mrb[0].mxu0
  %6192 = vmatprep.mubr.f32.mxu0 0.0
  %6193 = vmatmul.mubr.f32.gmra.mrb[0].mxu0 %v3818
  %v6194 = vpop.f32.mrb[0].mxu0
  %v6195 = vadd.f32 %v6116, %v6194
  %v6196 = vpop.f32.mrb[0].mxu0
  %6197 = vmatprep.mubr.f32.mxu0 0.0
  %6198 = vmatmul.mubr.f32.gmra.mrb[0].mxu0 %v3821
  %v6199 = vpop.f32.mrb[0].mxu0
  %v6200 = vadd.f32 %v6116, %v6199
  %v6201 = vpop.f32.mrb[0].mxu0
  %6202 = vmatprep.mubr.f32.mxu0 0.0
  %6203 = vmatmul.mubr.f32.gmra.mrb[0].mxu0 %v3824
  %v6204 = vpop.f32.mrb[0].mxu0
  %v6205 = vadd.f32 %v6116, %v6204
  %v6206 = vpop.f32.mrb[0].mxu0
  %6207 = vmatprep.mubr.f32.mxu0 0.0
  %6208 = vmatmul.mubr.f32.gmra.mrb[0].mxu0 %v3827
  %v6209 = vpop.f32.mrb[0].mxu0
  %v6210 = vadd.f32 %v6116, %v6209
  %v6211 = vpop.f32.mrb[0].mxu0
  %6212 = vdwg.mxu0
  %s6213 = scalar_lea.vmem %s6, 224
  %v6214 = vld [vmem:[%s6213] sm:$0xff]
  %v6215 = vld [vmem:[%s6213 + $0x8] sm:$0xff]
  %v6216 = vld [vmem:[%s6213 + $0x10] sm:$0xff]
  %v6217 = vld [vmem:[%s6213 + $0x18] sm:$0xff]
  %s6218 = scalar_lea.vmem %s7, 7
  %v6219 = vld [vmem:[%s6218] sm:$0x1]
  %v6221 = vlaneseq
  %v6222 = vshrl.u32 %v6221, 7
  %v6223 = vsub.s32 0, %v6222
  %v6224 = vrot.slane %v6219, %v6223
  %6226 = vmatprep.subr.mxu0 0.0
  %6227 = vmatpush1.msra.mxu0 %v6214
  %6228 = vmatprep.subr.mxu0 0.0
  %6229 = vmatpush1.msra.mxu0 %v6215
  %6230 = vmatprep.subr.mxu0 0.0
  %6231 = vmatpush1.msra.mxu0 %v6216
  %6232 = vmatprep.subr.mxu0 0.0
  %6233 = vmatpush1.msra.mxu0 %v6217
  %6234 = vmatprep.subr.mxu0 0.0
  %6235 = vmatpush1.msra.mxu0 0.0
  %6236 = vmatprep.subr.mxu0 0.0
  %6237 = vmatpush1.msra.mxu0 0.0
  %6238 = vmatprep.subr.mxu0 0.0
  %6239 = vmatpush1.msra.mxu0 0.0
  %6240 = vmatprep.subr.mxu0 0.0
  %6241 = vmatpush1.msra.mxu0 0.0
  %6242 = vmatprep.subr.mxu0 0.0
  %6243 = vmatpush1.msra.mxu0 0.0
  %6244 = vmatprep.subr.mxu0 0.0
  %6245 = vmatpush1.msra.mxu0 0.0
  %6246 = vmatprep.subr.mxu0 0.0
  %6247 = vmatpush1.msra.mxu0 0.0
  %6248 = vmatprep.subr.mxu0 0.0
  %6249 = vmatpush1.msra.mxu0 0.0
  %6250 = vmatprep.subr.mxu0 0.0
  %6251 = vmatpush1.msra.mxu0 0.0
  %6252 = vmatprep.subr.mxu0 0.0
  %6253 = vmatpush1.msra.mxu0 0.0
  %6254 = vmatprep.subr.mxu0 0.0
  %6255 = vmatpush1.msra.mxu0 0.0
  %6256 = vmatprep.subr.mxu0 0.0
  %6257 = vmatpush1.msra.mxu0 0.0
  %6258 = vmatprep.subr.mxu0 0.0
  %6259 = vmatpush1.msra.mxu0 0.0
  %6260 = vmatprep.subr.mxu0 0.0
  %6261 = vmatpush1.msra.mxu0 0.0
  %6262 = vmatprep.subr.mxu0 0.0
  %6263 = vmatpush1.msra.mxu0 0.0
  %6264 = vmatprep.subr.mxu0 0.0
  %6265 = vmatpush1.msra.mxu0 0.0
  %6266 = vmatprep.subr.mxu0 0.0
  %6267 = vmatpush1.msra.mxu0 0.0
  %6268 = vmatprep.subr.mxu0 0.0
  %6269 = vmatpush1.msra.mxu0 0.0
  %6270 = vmatprep.subr.mxu0 0.0
  %6271 = vmatpush1.msra.mxu0 0.0
  %6272 = vmatprep.subr.mxu0 0.0
  %6273 = vmatpush1.msra.mxu0 0.0
  %6274 = vmatprep.subr.mxu0 0.0
  %6275 = vmatpush1.msra.mxu0 0.0
  %6276 = vmatprep.subr.mxu0 0.0
  %6277 = vmatpush1.msra.mxu0 0.0
  %6278 = vmatprep.subr.mxu0 0.0
  %6279 = vmatpush1.msra.mxu0 0.0
  %6280 = vmatprep.subr.mxu0 0.0
  %6281 = vmatpush1.msra.mxu0 0.0
  %6282 = vmatprep.subr.mxu0 0.0
  %6283 = vmatpush1.msra.mxu0 0.0
  %6284 = vmatprep.subr.mxu0 0.0
  %6285 = vmatpush1.msra.mxu0 0.0
  %6286 = vmatprep.subr.mxu0 0.0
  %6287 = vmatpush1.msra.mxu0 0.0
  %6288 = vmatprep.subr.mxu0 0.0
  %6289 = vmatpush1.msra.mxu0 0.0
  %6290 = vmatprep.mubr.f32.mxu0 0.0
  %6291 = vmatmul.mubr.f32.gmra.mrb[0].mxu0 %v3812
  %v6292 = vpop.f32.mrb[0].mxu0
  %v6293 = vadd.f32 %v6224, %v6292
  %v6294 = vpop.f32.mrb[0].mxu0
  %6295 = vmatprep.mubr.f32.mxu0 0.0
  %6296 = vmatmul.mubr.f32.gmra.mrb[0].mxu0 %v3815
  %v6297 = vpop.f32.mrb[0].mxu0
  %v6298 = vadd.f32 %v6224, %v6297
  %v6299 = vpop.f32.mrb[0].mxu0
  %6300 = vmatprep.mubr.f32.mxu0 0.0
  %6301 = vmatmul.mubr.f32.gmra.mrb[0].mxu0 %v3818
  %v6302 = vpop.f32.mrb[0].mxu0
  %v6303 = vadd.f32 %v6224, %v6302
  %v6304 = vpop.f32.mrb[0].mxu0
  %6305 = vmatprep.mubr.f32.mxu0 0.0
  %6306 = vmatmul.mubr.f32.gmra.mrb[0].mxu0 %v3821
  %v6307 = vpop.f32.mrb[0].mxu0
  %v6308 = vadd.f32 %v6224, %v6307
  %v6309 = vpop.f32.mrb[0].mxu0
  %6310 = vmatprep.mubr.f32.mxu0 0.0
  %6311 = vmatmul.mubr.f32.gmra.mrb[0].mxu0 %v3824
  %v6312 = vpop.f32.mrb[0].mxu0
  %v6313 = vadd.f32 %v6224, %v6312
  %v6314 = vpop.f32.mrb[0].mxu0
  %6315 = vmatprep.mubr.f32.mxu0 0.0
  %6316 = vmatmul.mubr.f32.gmra.mrb[0].mxu0 %v3827
  %v6317 = vpop.f32.mrb[0].mxu0
  %v6318 = vadd.f32 %v6224, %v6317
  %v6319 = vpop.f32.mrb[0].mxu0
  %6320 = vdwg.mxu0
  %s6321 = scalar_lea.vmem %s8, 224
  %v6322 = vld [vmem:[%s6321] sm:$0xff]
  %v6323 = vld [vmem:[%s6321 + $0x8] sm:$0xff]
  %v6324 = vld [vmem:[%s6321 + $0x10] sm:$0xff]
  %v6325 = vld [vmem:[%s6321 + $0x18] sm:$0xff]
  %s6326 = scalar_lea.vmem %s9, 7
  %v6327 = vld [vmem:[%s6326] sm:$0x1]
  %v6329 = vlaneseq
  %v6330 = vshrl.u32 %v6329, 7
  %v6331 = vsub.s32 0, %v6330
  %v6332 = vrot.slane %v6327, %v6331
  %6334 = vmatprep.subr.mxu0 0.0
  %6335 = vmatpush1.msra.mxu0 %v6322
  %6336 = vmatprep.subr.mxu0 0.0
  %6337 = vmatpush1.msra.mxu0 %v6323
  %6338 = vmatprep.subr.mxu0 0.0
  %6339 = vmatpush1.msra.mxu0 %v6324
  %6340 = vmatprep.subr.mxu0 0.0
  %6341 = vmatpush1.msra.mxu0 %v6325
  %6342 = vmatprep.subr.mxu0 0.0
  %6343 = vmatpush1.msra.mxu0 0.0
  %6344 = vmatprep.subr.mxu0 0.0
  %6345 = vmatpush1.msra.mxu0 0.0
  %6346 = vmatprep.subr.mxu0 0.0
  %6347 = vmatpush1.msra.mxu0 0.0
  %6348 = vmatprep.subr.mxu0 0.0
  %6349 = vmatpush1.msra.mxu0 0.0
  %6350 = vmatprep.subr.mxu0 0.0
  %6351 = vmatpush1.msra.mxu0 0.0
  %6352 = vmatprep.subr.mxu0 0.0
  %6353 = vmatpush1.msra.mxu0 0.0
  %6354 = vmatprep.subr.mxu0 0.0
  %6355 = vmatpush1.msra.mxu0 0.0
  %6356 = vmatprep.subr.mxu0 0.0
  %6357 = vmatpush1.msra.mxu0 0.0
  %6358 = vmatprep.subr.mxu0 0.0
  %6359 = vmatpush1.msra.mxu0 0.0
  %6360 = vmatprep.subr.mxu0 0.0
  %6361 = vmatpush1.msra.mxu0 0.0
  %6362 = vmatprep.subr.mxu0 0.0
  %6363 = vmatpush1.msra.mxu0 0.0
  %6364 = vmatprep.subr.mxu0 0.0
  %6365 = vmatpush1.msra.mxu0 0.0
  %6366 = vmatprep.subr.mxu0 0.0
  %6367 = vmatpush1.msra.mxu0 0.0
  %6368 = vmatprep.subr.mxu0 0.0
  %6369 = vmatpush1.msra.mxu0 0.0
  %6370 = vmatprep.subr.mxu0 0.0
  %6371 = vmatpush1.msra.mxu0 0.0
  %6372 = vmatprep.subr.mxu0 0.0
  %6373 = vmatpush1.msra.mxu0 0.0
  %6374 = vmatprep.subr.mxu0 0.0
  %6375 = vmatpush1.msra.mxu0 0.0
  %6376 = vmatprep.subr.mxu0 0.0
  %6377 = vmatpush1.msra.mxu0 0.0
  %6378 = vmatprep.subr.mxu0 0.0
  %6379 = vmatpush1.msra.mxu0 0.0
  %6380 = vmatprep.subr.mxu0 0.0
  %6381 = vmatpush1.msra.mxu0 0.0
  %6382 = vmatprep.subr.mxu0 0.0
  %6383 = vmatpush1.msra.mxu0 0.0
  %6384 = vmatprep.subr.mxu0 0.0
  %6385 = vmatpush1.msra.mxu0 0.0
  %6386 = vmatprep.subr.mxu0 0.0
  %6387 = vmatpush1.msra.mxu0 0.0
  %6388 = vmatprep.subr.mxu0 0.0
  %6389 = vmatpush1.msra.mxu0 0.0
  %6390 = vmatprep.subr.mxu0 0.0
  %6391 = vmatpush1.msra.mxu0 0.0
  %6392 = vmatprep.subr.mxu0 0.0
  %6393 = vmatpush1.msra.mxu0 0.0
  %6394 = vmatprep.subr.mxu0 0.0
  %6395 = vmatpush1.msra.mxu0 0.0
  %6396 = vmatprep.subr.mxu0 0.0
  %6397 = vmatpush1.msra.mxu0 0.0
  %6398 = vmatprep.mubr.f32.mxu0 0.0
  %6399 = vmatmul.mubr.f32.gmra.mrb[0].mxu0 %v3812
  %v6400 = vpop.f32.mrb[0].mxu0
  %v6401 = vadd.f32 %v6332, %v6400
  %v6402 = vpop.f32.mrb[0].mxu0
  %6403 = vmatprep.mubr.f32.mxu0 0.0
  %6404 = vmatmul.mubr.f32.gmra.mrb[0].mxu0 %v3815
  %v6405 = vpop.f32.mrb[0].mxu0
  %v6406 = vadd.f32 %v6332, %v6405
  %v6407 = vpop.f32.mrb[0].mxu0
  %6408 = vmatprep.mubr.f32.mxu0 0.0
  %6409 = vmatmul.mubr.f32.gmra.mrb[0].mxu0 %v3818
  %v6410 = vpop.f32.mrb[0].mxu0
  %v6411 = vadd.f32 %v6332, %v6410
  %v6412 = vpop.f32.mrb[0].mxu0
  %6413 = vmatprep.mubr.f32.mxu0 0.0
  %6414 = vmatmul.mubr.f32.gmra.mrb[0].mxu0 %v3821
  %v6415 = vpop.f32.mrb[0].mxu0
  %v6416 = vadd.f32 %v6332, %v6415
  %v6417 = vpop.f32.mrb[0].mxu0
  %6418 = vmatprep.mubr.f32.mxu0 0.0
  %6419 = vmatmul.mubr.f32.gmra.mrb[0].mxu0 %v3824
  %v6420 = vpop.f32.mrb[0].mxu0
  %v6421 = vadd.f32 %v6332, %v6420
  %v6422 = vpop.f32.mrb[0].mxu0
  %6423 = vmatprep.mubr.f32.mxu0 0.0
  %6424 = vmatmul.mubr.f32.gmra.mrb[0].mxu0 %v3827
  %v6425 = vpop.f32.mrb[0].mxu0
  %v6426 = vadd.f32 %v6332, %v6425
  %v6427 = vpop.f32.mrb[0].mxu0
  %6428 = vdwg.mxu0
  %v6430 = vsel %vm525, %v6185, 0
  %v6433 = vsel %vm525, %v6190, 0
  %v6436 = vsel %vm525, %v6195, 0
  %v6439 = vsel %vm525, %v6200, 0
  %v6442 = vsel %vm525, %v6205, 0
  %v6445 = vsel %vm525, %v6210, 0
  %v6448 = vsel %vm525, %v6293, 0
  %v6451 = vsel %vm525, %v6298, 0
  %v6454 = vsel %vm525, %v6303, 0
  %v6457 = vsel %vm525, %v6308, 0
  %v6460 = vsel %vm525, %v6313, 0
  %v6463 = vsel %vm525, %v6318, 0
  %6465 = vmatprep.subr.mxu0 0.0
  %6466 = vmatpush1.xpose.msra.mxu0 %v6448
  %6467 = vmatprep.subr.mxu0 0.0
  %6468 = vmatpush1.xpose.msra.mxu0 %v6451
  %6469 = vmatprep.subr.mxu0 0.0
  %6470 = vmatpush1.xpose.msra.mxu0 %v6454
  %6471 = vmatprep.subr.mxu0 0.0
  %6472 = vmatpush1.xpose.msra.mxu0 %v6457
  %6473 = vmatprep.subr.mxu0 0.0
  %6474 = vmatpush1.xpose.msra.mxu0 %v6460
  %6475 = vmatprep.subr.mxu0 0.0
  %6476 = vmatpush1.xpose.msra.mxu0 %v6463
  %6477 = vmatprep.subr.mxu0 0.0
  %6478 = vmatpush1.xpose.msra.mxu0 0.0
  %6479 = vmatprep.subr.mxu0 0.0
  %6480 = vmatpush1.xpose.msra.mxu0 0.0
  %6481 = vmatprep.subr.mxu0 0.0
  %6482 = vmatpush1.xpose.msra.mxu0 0.0
  %6483 = vmatprep.subr.mxu0 0.0
  %6484 = vmatpush1.xpose.msra.mxu0 0.0
  %6485 = vmatprep.subr.mxu0 0.0
  %6486 = vmatpush1.xpose.msra.mxu0 0.0
  %6487 = vmatprep.subr.mxu0 0.0
  %6488 = vmatpush1.xpose.msra.mxu0 0.0
  %6489 = vmatprep.subr.mxu0 0.0
  %6490 = vmatpush1.xpose.msra.mxu0 0.0
  %6491 = vmatprep.subr.mxu0 0.0
  %6492 = vmatpush1.xpose.msra.mxu0 0.0
  %6493 = vmatprep.subr.mxu0 0.0
  %6494 = vmatpush1.xpose.msra.mxu0 0.0
  %6495 = vmatprep.subr.mxu0 0.0
  %6496 = vmatpush1.xpose.msra.mxu0 0.0
  %6497 = vmatprep.subr.mxu0 0.0
  %6498 = vmatpush1.xpose.msra.mxu0 0.0
  %6499 = vmatprep.subr.mxu0 0.0
  %6500 = vmatpush1.xpose.msra.mxu0 0.0
  %6501 = vmatprep.subr.mxu0 0.0
  %6502 = vmatpush1.xpose.msra.mxu0 0.0
  %6503 = vmatprep.subr.mxu0 0.0
  %6504 = vmatpush1.xpose.msra.mxu0 0.0
  %6505 = vmatprep.subr.mxu0 0.0
  %6506 = vmatpush1.xpose.msra.mxu0 0.0
  %6507 = vmatprep.subr.mxu0 0.0
  %6508 = vmatpush1.xpose.msra.mxu0 0.0
  %6509 = vmatprep.subr.mxu0 0.0
  %6510 = vmatpush1.xpose.msra.mxu0 0.0
  %6511 = vmatprep.subr.mxu0 0.0
  %6512 = vmatpush1.xpose.msra.mxu0 0.0
  %6513 = vmatprep.subr.mxu0 0.0
  %6514 = vmatpush1.xpose.msra.mxu0 0.0
  %6515 = vmatprep.subr.mxu0 0.0
  %6516 = vmatpush1.xpose.msra.mxu0 0.0
  %6517 = vmatprep.subr.mxu0 0.0
  %6518 = vmatpush1.xpose.msra.mxu0 0.0
  %6519 = vmatprep.subr.mxu0 0.0
  %6520 = vmatpush1.xpose.msra.mxu0 0.0
  %6521 = vmatprep.subr.mxu0 0.0
  %6522 = vmatpush1.xpose.msra.mxu0 0.0
  %6523 = vmatprep.subr.mxu0 0.0
  %6524 = vmatpush1.xpose.msra.mxu0 0.0
  %6525 = vmatprep.subr.mxu0 0.0
  %6526 = vmatpush1.xpose.msra.mxu0 0.0
  %6527 = vmatprep.subr.mxu0 0.0
  %6528 = vmatpush1.xpose.msra.mxu0 0.0
  %6529 = vmatprep.mubr.f32.mxu0 0.0
  %6530 = vmatmul.mubr.f32.gmra.mrb[0].mxu0 %v6430
  %v6531 = vpop.f32.mrb[0].mxu0
  %v6532 = vadd.f32 0.0, %v6531
  %v6533 = vpop.f32.mrb[0].mxu0
  %6534 = vmatprep.mubr.f32.mxu0 0.0
  %6535 = vmatmul.mubr.f32.gmra.mrb[0].mxu0 %v6433
  %v6536 = vpop.f32.mrb[0].mxu0
  %v6537 = vadd.f32 0.0, %v6536
  %v6538 = vpop.f32.mrb[0].mxu0
  %6539 = vmatprep.mubr.f32.mxu0 0.0
  %6540 = vmatmul.mubr.f32.gmra.mrb[0].mxu0 %v6436
  %v6541 = vpop.f32.mrb[0].mxu0
  %v6542 = vadd.f32 0.0, %v6541
  %v6543 = vpop.f32.mrb[0].mxu0
  %6544 = vmatprep.mubr.f32.mxu0 0.0
  %6545 = vmatmul.mubr.f32.gmra.mrb[0].mxu0 %v6439
  %v6546 = vpop.f32.mrb[0].mxu0
  %v6547 = vadd.f32 0.0, %v6546
  %v6548 = vpop.f32.mrb[0].mxu0
  %6549 = vmatprep.mubr.f32.mxu0 0.0
  %6550 = vmatmul.mubr.f32.gmra.mrb[0].mxu0 %v6442
  %v6551 = vpop.f32.mrb[0].mxu0
  %v6552 = vadd.f32 0.0, %v6551
  %v6553 = vpop.f32.mrb[0].mxu0
  %6554 = vmatprep.mubr.f32.mxu0 0.0
  %6555 = vmatmul.mubr.f32.gmra.mrb[0].mxu0 %v6445
  %v6556 = vpop.f32.mrb[0].mxu0
  %v6557 = vadd.f32 0.0, %v6556
  %v6558 = vpop.f32.mrb[0].mxu0
  %6559 = vdwg.mxu0
  %v6560 = vmul.f32 %v6532, 0.35355338
  %v6561 = vmul.f32 %v6537, 0.35355338
  %v6562 = vmul.f32 %v6542, 0.35355338
  %v6563 = vmul.f32 %v6547, 0.35355338
  %v6564 = vmul.f32 %v6552, 0.35355338
  %v6565 = vmul.f32 %v6557, 0.35355338
  %v6566 = vadd.f32 %v6560, %v183
  %v6567 = vadd.f32 %v6561, %v184
  %v6568 = vadd.f32 %v6562, %v185
  %v6569 = vadd.f32 %v6563, %v186
  %v6570 = vadd.f32 %v6564, %v187
  %v6571 = vadd.f32 %v6565, %v188
  %v6572 = vsel %vm669, %v6566, -inf
  %6573 = vmax.xlane.f32.xlu0 %v6572
  %v6574 = vpop.xlane.xlu0 %6573
  %v6575 = vsel %vm669, %v6567, -inf
  %6576 = vmax.xlane.f32.xlu0 %v6575
  %v6577 = vpop.xlane.xlu0 %6576
  %v6578 = vsel %vm669, %v6568, -inf
  %6579 = vmax.xlane.f32.xlu0 %v6578
  %v6580 = vpop.xlane.xlu0 %6579
  %v6581 = vsel %vm669, %v6569, -inf
  %6582 = vmax.xlane.f32.xlu0 %v6581
  %v6583 = vpop.xlane.xlu0 %6582
  %v6584 = vsel %vm669, %v6570, -inf
  %6585 = vmax.xlane.f32.xlu0 %v6584
  %v6586 = vpop.xlane.xlu0 %6585
  %v6587 = vsel %vm669, %v6571, -inf
  %6588 = vmax.xlane.f32.xlu0 %v6587
  %v6589 = vpop.xlane.xlu0 %6588
  %v6590 = vsub.f32 %v6566, %v6574
  %v6591 = vsub.f32 %v6567, %v6577
  %v6592 = vsub.f32 %v6568, %v6580
  %v6593 = vsub.f32 %v6569, %v6583
  %v6594 = vsub.f32 %v6570, %v6586
  %v6595 = vsub.f32 %v6571, %v6589
  %v6596 = vmul.f32 %v6590, 1.442695
  %v6597 = vpow.pop %v6596
  %v6598 = vmul.f32 %v6591, 1.442695
  %v6599 = vpow.pop %v6598
  %v6600 = vmul.f32 %v6592, 1.442695
  %v6601 = vpow.pop %v6600
  %v6602 = vmul.f32 %v6593, 1.442695
  %v6603 = vpow.pop %v6602
  %v6604 = vmul.f32 %v6594, 1.442695
  %v6605 = vpow.pop %v6604
  %v6606 = vmul.f32 %v6595, 1.442695
  %v6607 = vpow.pop %v6606
  %v6608 = vsel %vm669, %v6597, 0.0
  %6609 = vadd.xlane.f32.xlu0 %v6608
  %v6610 = vpop.xlane.xlu0 %6609
  %v6611 = vsel %vm669, %v6599, 0.0
  %6612 = vadd.xlane.f32.xlu0 %v6611
  %v6613 = vpop.xlane.xlu0 %6612
  %v6614 = vsel %vm669, %v6601, 0.0
  %6615 = vadd.xlane.f32.xlu0 %v6614
  %v6616 = vpop.xlane.xlu0 %6615
  %v6617 = vsel %vm669, %v6603, 0.0
  %6618 = vadd.xlane.f32.xlu0 %v6617
  %v6619 = vpop.xlane.xlu0 %6618
  %v6620 = vsel %vm669, %v6605, 0.0
  %6621 = vadd.xlane.f32.xlu0 %v6620
  %v6622 = vpop.xlane.xlu0 %6621
  %v6623 = vsel %vm669, %v6607, 0.0
  %6624 = vadd.xlane.f32.xlu0 %v6623
  %v6625 = vpop.xlane.xlu0 %6624
  %v6626 = vrcp.pop %v6610
  %v6627 = vrcp.pop %v6613
  %v6628 = vrcp.pop %v6616
  %v6629 = vrcp.pop %v6619
  %v6630 = vrcp.pop %v6622
  %v6631 = vrcp.pop %v6625
  %v6632 = vmul.f32 %v6597, %v6626
  %v6633 = vmul.f32 %v6599, %v6627
  %v6634 = vmul.f32 %v6601, %v6628
  %v6635 = vmul.f32 %v6603, %v6629
  %v6636 = vmul.f32 %v6605, %v6630
  %v6637 = vmul.f32 %v6607, %v6631
  %v6639 = vsel %vm669, %v6632, 0
  %v6642 = vsel %vm669, %v6633, 0
  %v6645 = vsel %vm669, %v6634, 0
  %v6648 = vsel %vm669, %v6635, 0
  %v6651 = vsel %vm669, %v6636, 0
  %v6654 = vsel %vm669, %v6637, 0
  %6656 = vmatprep.subr.mxu0 0.0
  %6657 = vmatpush1.msra.mxu0 %v6401
  %6658 = vmatprep.subr.mxu0 0.0
  %6659 = vmatpush1.msra.mxu0 %v6406
  %6660 = vmatprep.subr.mxu0 0.0
  %6661 = vmatpush1.msra.mxu0 %v6411
  %6662 = vmatprep.subr.mxu0 0.0
  %6663 = vmatpush1.msra.mxu0 %v6416
  %6664 = vmatprep.subr.mxu0 0.0
  %6665 = vmatpush1.msra.mxu0 %v6421
  %6666 = vmatprep.subr.mxu0 0.0
  %6667 = vmatpush1.msra.mxu0 %v6426
  %6668 = vmatprep.subr.mxu0 0.0
  %6669 = vmatpush1.msra.mxu0 0.0
  %6670 = vmatprep.subr.mxu0 0.0
  %6671 = vmatpush1.msra.mxu0 0.0
  %6672 = vmatprep.subr.mxu0 0.0
  %6673 = vmatpush1.msra.mxu0 0.0
  %6674 = vmatprep.subr.mxu0 0.0
  %6675 = vmatpush1.msra.mxu0 0.0
  %6676 = vmatprep.subr.mxu0 0.0
  %6677 = vmatpush1.msra.mxu0 0.0
  %6678 = vmatprep.subr.mxu0 0.0
  %6679 = vmatpush1.msra.mxu0 0.0
  %6680 = vmatprep.subr.mxu0 0.0
  %6681 = vmatpush1.msra.mxu0 0.0
  %6682 = vmatprep.subr.mxu0 0.0
  %6683 = vmatpush1.msra.mxu0 0.0
  %6684 = vmatprep.subr.mxu0 0.0
  %6685 = vmatpush1.msra.mxu0 0.0
  %6686 = vmatprep.subr.mxu0 0.0
  %6687 = vmatpush1.msra.mxu0 0.0
  %6688 = vmatprep.subr.mxu0 0.0
  %6689 = vmatpush1.msra.mxu0 0.0
  %6690 = vmatprep.subr.mxu0 0.0
  %6691 = vmatpush1.msra.mxu0 0.0
  %6692 = vmatprep.subr.mxu0 0.0
  %6693 = vmatpush1.msra.mxu0 0.0
  %6694 = vmatprep.subr.mxu0 0.0
  %6695 = vmatpush1.msra.mxu0 0.0
  %6696 = vmatprep.subr.mxu0 0.0
  %6697 = vmatpush1.msra.mxu0 0.0
  %6698 = vmatprep.subr.mxu0 0.0
  %6699 = vmatpush1.msra.mxu0 0.0
  %6700 = vmatprep.subr.mxu0 0.0
  %6701 = vmatpush1.msra.mxu0 0.0
  %6702 = vmatprep.subr.mxu0 0.0
  %6703 = vmatpush1.msra.mxu0 0.0
  %6704 = vmatprep.subr.mxu0 0.0
  %6705 = vmatpush1.msra.mxu0 0.0
  %6706 = vmatprep.subr.mxu0 0.0
  %6707 = vmatpush1.msra.mxu0 0.0
  %6708 = vmatprep.subr.mxu0 0.0
  %6709 = vmatpush1.msra.mxu0 0.0
  %6710 = vmatprep.subr.mxu0 0.0
  %6711 = vmatpush1.msra.mxu0 0.0
  %6712 = vmatprep.subr.mxu0 0.0
  %6713 = vmatpush1.msra.mxu0 0.0
  %6714 = vmatprep.subr.mxu0 0.0
  %6715 = vmatpush1.msra.mxu0 0.0
  %6716 = vmatprep.subr.mxu0 0.0
  %6717 = vmatpush1.msra.mxu0 0.0
  %6718 = vmatprep.subr.mxu0 0.0
  %6719 = vmatpush1.msra.mxu0 0.0
  %6720 = vmatprep.mubr.f32.mxu0 0.0
  %6721 = vmatmul.mubr.f32.gmra.mrb[0].mxu0 %v6639
  %v6722 = vpop.f32.mrb[0].mxu0
  %v6723 = vadd.f32 0.0, %v6722
  %v6724 = vpop.f32.mrb[0].mxu0
  %6725 = vmatprep.mubr.f32.mxu0 0.0
  %6726 = vmatmul.mubr.f32.gmra.mrb[0].mxu0 %v6642
  %v6727 = vpop.f32.mrb[0].mxu0
  %v6728 = vadd.f32 0.0, %v6727
  %v6729 = vpop.f32.mrb[0].mxu0
  %6730 = vmatprep.mubr.f32.mxu0 0.0
  %6731 = vmatmul.mubr.f32.gmra.mrb[0].mxu0 %v6645
  %v6732 = vpop.f32.mrb[0].mxu0
  %v6733 = vadd.f32 0.0, %v6732
  %v6734 = vpop.f32.mrb[0].mxu0
  %6735 = vmatprep.mubr.f32.mxu0 0.0
  %6736 = vmatmul.mubr.f32.gmra.mrb[0].mxu0 %v6648
  %v6737 = vpop.f32.mrb[0].mxu0
  %v6738 = vadd.f32 0.0, %v6737
  %v6739 = vpop.f32.mrb[0].mxu0
  %6740 = vmatprep.mubr.f32.mxu0 0.0
  %6741 = vmatmul.mubr.f32.gmra.mrb[0].mxu0 %v6651
  %v6742 = vpop.f32.mrb[0].mxu0
  %v6743 = vadd.f32 0.0, %v6742
  %v6744 = vpop.f32.mrb[0].mxu0
  %6745 = vmatprep.mubr.f32.mxu0 0.0
  %6746 = vmatmul.mubr.f32.gmra.mrb[0].mxu0 %v6654
  %v6747 = vpop.f32.mrb[0].mxu0
  %v6748 = vadd.f32 0.0, %v6747
  %v6749 = vpop.f32.mrb[0].mxu0
  %6750 = vdwg.mxu0
  %s6751 = scalar_lea.vmem %s10, 56
  %v6752 = vld [vmem:[%s6751] sm:$0xff]
  %v6754 = vsel %vm525, %v6723, 0
  %v6757 = vsel %vm525, %v6728, 0
  %v6760 = vsel %vm525, %v6733, 0
  %v6763 = vsel %vm525, %v6738, 0
  %v6766 = vsel %vm525, %v6743, 0
  %v6769 = vsel %vm525, %v6748, 0
  %6771 = vmatprep.subr.mxu0 0.0
  %6772 = vmatpush1.msra.mxu0 %v6752
  %6773 = vmatprep.subr.mxu0 0.0
  %6774 = vmatpush1.msra.mxu0 0.0
  %6775 = vmatprep.subr.mxu0 0.0
  %6776 = vmatpush1.msra.mxu0 0.0
  %6777 = vmatprep.subr.mxu0 0.0
  %6778 = vmatpush1.msra.mxu0 0.0
  %6779 = vmatprep.subr.mxu0 0.0
  %6780 = vmatpush1.msra.mxu0 0.0
  %6781 = vmatprep.subr.mxu0 0.0
  %6782 = vmatpush1.msra.mxu0 0.0
  %6783 = vmatprep.subr.mxu0 0.0
  %6784 = vmatpush1.msra.mxu0 0.0
  %6785 = vmatprep.subr.mxu0 0.0
  %6786 = vmatpush1.msra.mxu0 0.0
  %6787 = vmatprep.subr.mxu0 0.0
  %6788 = vmatpush1.msra.mxu0 0.0
  %6789 = vmatprep.subr.mxu0 0.0
  %6790 = vmatpush1.msra.mxu0 0.0
  %6791 = vmatprep.subr.mxu0 0.0
  %6792 = vmatpush1.msra.mxu0 0.0
  %6793 = vmatprep.subr.mxu0 0.0
  %6794 = vmatpush1.msra.mxu0 0.0
  %6795 = vmatprep.subr.mxu0 0.0
  %6796 = vmatpush1.msra.mxu0 0.0
  %6797 = vmatprep.subr.mxu0 0.0
  %6798 = vmatpush1.msra.mxu0 0.0
  %6799 = vmatprep.subr.mxu0 0.0
  %6800 = vmatpush1.msra.mxu0 0.0
  %6801 = vmatprep.subr.mxu0 0.0
  %6802 = vmatpush1.msra.mxu0 0.0
  %6803 = vmatprep.subr.mxu0 0.0
  %6804 = vmatpush1.msra.mxu0 0.0
  %6805 = vmatprep.subr.mxu0 0.0
  %6806 = vmatpush1.msra.mxu0 0.0
  %6807 = vmatprep.subr.mxu0 0.0
  %6808 = vmatpush1.msra.mxu0 0.0
  %6809 = vmatprep.subr.mxu0 0.0
  %6810 = vmatpush1.msra.mxu0 0.0
  %6811 = vmatprep.subr.mxu0 0.0
  %6812 = vmatpush1.msra.mxu0 0.0
  %6813 = vmatprep.subr.mxu0 0.0
  %6814 = vmatpush1.msra.mxu0 0.0
  %6815 = vmatprep.subr.mxu0 0.0
  %6816 = vmatpush1.msra.mxu0 0.0
  %6817 = vmatprep.subr.mxu0 0.0
  %6818 = vmatpush1.msra.mxu0 0.0
  %6819 = vmatprep.subr.mxu0 0.0
  %6820 = vmatpush1.msra.mxu0 0.0
  %6821 = vmatprep.subr.mxu0 0.0
  %6822 = vmatpush1.msra.mxu0 0.0
  %6823 = vmatprep.subr.mxu0 0.0
  %6824 = vmatpush1.msra.mxu0 0.0
  %6825 = vmatprep.subr.mxu0 0.0
  %6826 = vmatpush1.msra.mxu0 0.0
  %6827 = vmatprep.subr.mxu0 0.0
  %6828 = vmatpush1.msra.mxu0 0.0
  %6829 = vmatprep.subr.mxu0 0.0
  %6830 = vmatpush1.msra.mxu0 0.0
  %6831 = vmatprep.subr.mxu0 0.0
  %6832 = vmatpush1.msra.mxu0 0.0
  %6833 = vmatprep.subr.mxu0 0.0
  %6834 = vmatpush1.msra.mxu0 0.0
  %6835 = vmatprep.mubr.f32.mxu0 0.0
  %6836 = vmatmul.mubr.f32.gmra.mrb[0].mxu0 %v6754
  %v6837 = vpop.f32.mrb[0].mxu0
  %v6838 = vadd.f32 0.0, %v6837
  %v6839 = vpop.f32.mrb[0].mxu0
  %6840 = vmatprep.mubr.f32.mxu0 0.0
  %6841 = vmatmul.mubr.f32.gmra.mrb[0].mxu0 %v6757
  %v6842 = vpop.f32.mrb[0].mxu0
  %v6843 = vadd.f32 0.0, %v6842
  %v6844 = vpop.f32.mrb[0].mxu0
  %6845 = vmatprep.mubr.f32.mxu0 0.0
  %6846 = vmatmul.mubr.f32.gmra.mrb[0].mxu0 %v6760
  %v6847 = vpop.f32.mrb[0].mxu0
  %v6848 = vadd.f32 0.0, %v6847
  %v6849 = vpop.f32.mrb[0].mxu0
  %6850 = vmatprep.mubr.f32.mxu0 0.0
  %6851 = vmatmul.mubr.f32.gmra.mrb[0].mxu0 %v6763
  %v6852 = vpop.f32.mrb[0].mxu0
  %v6853 = vadd.f32 0.0, %v6852
  %v6854 = vpop.f32.mrb[0].mxu0
  %6855 = vmatprep.mubr.f32.mxu0 0.0
  %6856 = vmatmul.mubr.f32.gmra.mrb[0].mxu0 %v6766
  %v6857 = vpop.f32.mrb[0].mxu0
  %v6858 = vadd.f32 0.0, %v6857
  %v6859 = vpop.f32.mrb[0].mxu0
  %6860 = vmatprep.mubr.f32.mxu0 0.0
  %6861 = vmatmul.mubr.f32.gmra.mrb[0].mxu0 %v6769
  %v6862 = vpop.f32.mrb[0].mxu0
  %v6863 = vadd.f32 0.0, %v6862
  %v6864 = vpop.f32.mrb[0].mxu0
  %6865 = vdwg.mxu0
  %v6866 = vadd.f32 %v6099, %v6838
  %v6867 = vadd.f32 %v6100, %v6843
  %v6868 = vadd.f32 %v6101, %v6848
  %v6869 = vadd.f32 %v6102, %v6853
  %v6870 = vadd.f32 %v6103, %v6858
  %v6871 = vadd.f32 %v6104, %v6863
  %s6872 = scalar_lea.vmem %s11, 1
  %v6873 = vld [vmem:[%s6872] sm:$0x1]
  %v6875 = vlaneseq
  %v6876 = vshrl.u32 %v6875, 7
  %v6877 = vsub.s32 0, %v6876
  %v6878 = vrot.slane %v6873, %v6877
  %v6880 = vadd.f32 %v6866, %v6878
  %v6881 = vadd.f32 %v6867, %v6878
  %v6882 = vadd.f32 %v6868, %v6878
  %v6883 = vadd.f32 %v6869, %v6878
  %v6884 = vadd.f32 %v6870, %v6878
  %v6885 = vadd.f32 %v6871, %v6878
  %v6886 = vadd.f32 %v3792, %v6880
  %v6887 = vadd.f32 %v3793, %v6881
  %v6888 = vadd.f32 %v3794, %v6882
  %v6889 = vadd.f32 %v3795, %v6883
  %v6890 = vadd.f32 %v3796, %v6884
  %v6891 = vadd.f32 %v3797, %v6885
  %s6892 = scalar_lea.vmem %s12, 1
  %v6893 = vld [vmem:[%s6892] sm:$0x1]
  %s6894 = scalar_lea.vmem %s13, 1
  %v6895 = vld [vmem:[%s6894] sm:$0x1]
  %v6896 = vsel %vm79, %v6886, 0.0
  %6897 = vadd.xlane.f32.xlu0 %v6896
  %v6898 = vpop.xlane.xlu0 %6897
  %v6899 = vsel %vm79, %v6887, 0.0
  %6900 = vadd.xlane.f32.xlu0 %v6899
  %v6901 = vpop.xlane.xlu0 %6900
  %v6902 = vsel %vm79, %v6888, 0.0
  %6903 = vadd.xlane.f32.xlu0 %v6902
  %v6904 = vpop.xlane.xlu0 %6903
  %v6905 = vsel %vm79, %v6889, 0.0
  %6906 = vadd.xlane.f32.xlu0 %v6905
  %v6907 = vpop.xlane.xlu0 %6906
  %v6908 = vsel %vm79, %v6890, 0.0
  %6909 = vadd.xlane.f32.xlu0 %v6908
  %v6910 = vpop.xlane.xlu0 %6909
  %v6911 = vsel %vm79, %v6891, 0.0
  %6912 = vadd.xlane.f32.xlu0 %v6911
  %v6913 = vpop.xlane.xlu0 %6912
  %v6914 = vmul.f32 %v6898, %v98
  %v6915 = vmul.f32 %v6901, %v98
  %v6916 = vmul.f32 %v6904, %v98
  %v6917 = vmul.f32 %v6907, %v98
  %v6918 = vmul.f32 %v6910, %v98
  %v6919 = vmul.f32 %v6913, %v98
  %v6920 = vsub.f32 %v6886, %v6914
  %v6921 = vsub.f32 %v6887, %v6915
  %v6922 = vsub.f32 %v6888, %v6916
  %v6923 = vsub.f32 %v6889, %v6917
  %v6924 = vsub.f32 %v6890, %v6918
  %v6925 = vsub.f32 %v6891, %v6919
  %v6926 = vmul.f32 %v6920, %v6920
  %v6927 = vmul.f32 %v6921, %v6921
  %v6928 = vmul.f32 %v6922, %v6922
  %v6929 = vmul.f32 %v6923, %v6923
  %v6930 = vmul.f32 %v6924, %v6924
  %v6931 = vmul.f32 %v6925, %v6925
  %v6932 = vsel %vm79, %v6926, 0.0
  %6933 = vadd.xlane.f32.xlu0 %v6932
  %v6934 = vpop.xlane.xlu0 %6933
  %v6935 = vsel %vm79, %v6927, 0.0
  %6936 = vadd.xlane.f32.xlu0 %v6935
  %v6937 = vpop.xlane.xlu0 %6936
  %v6938 = vsel %vm79, %v6928, 0.0
  %6939 = vadd.xlane.f32.xlu0 %v6938
  %v6940 = vpop.xlane.xlu0 %6939
  %v6941 = vsel %vm79, %v6929, 0.0
  %6942 = vadd.xlane.f32.xlu0 %v6941
  %v6943 = vpop.xlane.xlu0 %6942
  %v6944 = vsel %vm79, %v6930, 0.0
  %6945 = vadd.xlane.f32.xlu0 %v6944
  %v6946 = vpop.xlane.xlu0 %6945
  %v6947 = vsel %vm79, %v6931, 0.0
  %6948 = vadd.xlane.f32.xlu0 %v6947
  %v6949 = vpop.xlane.xlu0 %6948
  %v6950 = vmul.f32 %v6934, %v98
  %v6951 = vmul.f32 %v6937, %v98
  %v6952 = vmul.f32 %v6940, %v98
  %v6953 = vmul.f32 %v6943, %v98
  %v6954 = vmul.f32 %v6946, %v98
  %v6955 = vmul.f32 %v6949, %v98
  %v6956 = vadd.f32 %v6950, 1e-12
  %v6957 = vadd.f32 %v6951, 1e-12
  %v6958 = vadd.f32 %v6952, 1e-12
  %v6959 = vadd.f32 %v6953, 1e-12
  %v6960 = vadd.f32 %v6954, 1e-12
  %v6961 = vadd.f32 %v6955, 1e-12
  %v6962 = vrsqrt.pop %v6956
  %v6963 = vrsqrt.pop %v6957
  %v6964 = vrsqrt.pop %v6958
  %v6965 = vrsqrt.pop %v6959
  %v6966 = vrsqrt.pop %v6960
  %v6967 = vrsqrt.pop %v6961
  %v6968 = vmul.f32 %v6920, %v6962
  %v6969 = vmul.f32 %v6921, %v6963
  %v6970 = vmul.f32 %v6922, %v6964
  %v6971 = vmul.f32 %v6923, %v6965
  %v6972 = vmul.f32 %v6924, %v6966
  %v6973 = vmul.f32 %v6925, %v6967
  %v6975 = vlaneseq
  %v6976 = vshrl.u32 %v6975, 7
  %v6977 = vsub.s32 0, %v6976
  %v6978 = vrot.slane %v6893, %v6977
  %v6980 = vmul.f32 %v6968, %v6978
  %v6981 = vmul.f32 %v6969, %v6978
  %v6982 = vmul.f32 %v6970, %v6978
  %v6983 = vmul.f32 %v6971, %v6978
  %v6984 = vmul.f32 %v6972, %v6978
  %v6985 = vmul.f32 %v6973, %v6978
  %v6987 = vlaneseq
  %v6988 = vshrl.u32 %v6987, 7
  %v6989 = vsub.s32 0, %v6988
  %v6990 = vrot.slane %v6895, %v6989
  %v6992 = vadd.f32 %v6980, %v6990
  %v6993 = vadd.f32 %v6981, %v6990
  %v6994 = vadd.f32 %v6982, %v6990
  %v6995 = vadd.f32 %v6983, %v6990
  %v6996 = vadd.f32 %v6984, %v6990
  %v6997 = vadd.f32 %v6985, %v6990
  %s6998 = scalar_lea.vmem %s14, 32
  %v6999 = vld [vmem:[%s6998] sm:$0xff]
  %v7000 = vld [vmem:[%s6998 + $0x8] sm:$0xff]
  %v7001 = vld [vmem:[%s6998 + $0x10] sm:$0xff]
  %v7002 = vld [vmem:[%s6998 + $0x18] sm:$0xff]
  %s7003 = scalar_lea.vmem %s15, 1
  %v7004 = vld [vmem:[%s7003] sm:$0x1]
  %v7006 = vlaneseq
  %v7007 = vshrl.u32 %v7006, 7
  %v7008 = vsub.s32 0, %v7007
  %v7009 = vrot.slane %v7004, %v7008
  %v7012 = vsel %vm79, %v6992, 0
  %v7015 = vsel %vm79, %v6993, 0
  %v7018 = vsel %vm79, %v6994, 0
  %v7021 = vsel %vm79, %v6995, 0
  %v7024 = vsel %vm79, %v6996, 0
  %v7027 = vsel %vm79, %v6997, 0
  %7029 = vmatprep.subr.mxu0 0.0
  %7030 = vmatpush1.msra.mxu0 %v6999
  %7031 = vmatprep.subr.mxu0 0.0
  %7032 = vmatpush1.msra.mxu0 %v7000
  %7033 = vmatprep.subr.mxu0 0.0
  %7034 = vmatpush1.msra.mxu0 %v7001
  %7035 = vmatprep.subr.mxu0 0.0
  %7036 = vmatpush1.msra.mxu0 %v7002
  %7037 = vmatprep.subr.mxu0 0.0
  %7038 = vmatpush1.msra.mxu0 0.0
  %7039 = vmatprep.subr.mxu0 0.0
  %7040 = vmatpush1.msra.mxu0 0.0
  %7041 = vmatprep.subr.mxu0 0.0
  %7042 = vmatpush1.msra.mxu0 0.0
  %7043 = vmatprep.subr.mxu0 0.0
  %7044 = vmatpush1.msra.mxu0 0.0
  %7045 = vmatprep.subr.mxu0 0.0
  %7046 = vmatpush1.msra.mxu0 0.0
  %7047 = vmatprep.subr.mxu0 0.0
  %7048 = vmatpush1.msra.mxu0 0.0
  %7049 = vmatprep.subr.mxu0 0.0
  %7050 = vmatpush1.msra.mxu0 0.0
  %7051 = vmatprep.subr.mxu0 0.0
  %7052 = vmatpush1.msra.mxu0 0.0
  %7053 = vmatprep.subr.mxu0 0.0
  %7054 = vmatpush1.msra.mxu0 0.0
  %7055 = vmatprep.subr.mxu0 0.0
  %7056 = vmatpush1.msra.mxu0 0.0
  %7057 = vmatprep.subr.mxu0 0.0
  %7058 = vmatpush1.msra.mxu0 0.0
  %7059 = vmatprep.subr.mxu0 0.0
  %7060 = vmatpush1.msra.mxu0 0.0
  %7061 = vmatprep.subr.mxu0 0.0
  %7062 = vmatpush1.msra.mxu0 0.0
  %7063 = vmatprep.subr.mxu0 0.0
  %7064 = vmatpush1.msra.mxu0 0.0
  %7065 = vmatprep.subr.mxu0 0.0
  %7066 = vmatpush1.msra.mxu0 0.0
  %7067 = vmatprep.subr.mxu0 0.0
  %7068 = vmatpush1.msra.mxu0 0.0
  %7069 = vmatprep.subr.mxu0 0.0
  %7070 = vmatpush1.msra.mxu0 0.0
  %7071 = vmatprep.subr.mxu0 0.0
  %7072 = vmatpush1.msra.mxu0 0.0
  %7073 = vmatprep.subr.mxu0 0.0
  %7074 = vmatpush1.msra.mxu0 0.0
  %7075 = vmatprep.subr.mxu0 0.0
  %7076 = vmatpush1.msra.mxu0 0.0
  %7077 = vmatprep.subr.mxu0 0.0
  %7078 = vmatpush1.msra.mxu0 0.0
  %7079 = vmatprep.subr.mxu0 0.0
  %7080 = vmatpush1.msra.mxu0 0.0
  %7081 = vmatprep.subr.mxu0 0.0
  %7082 = vmatpush1.msra.mxu0 0.0
  %7083 = vmatprep.subr.mxu0 0.0
  %7084 = vmatpush1.msra.mxu0 0.0
  %7085 = vmatprep.subr.mxu0 0.0
  %7086 = vmatpush1.msra.mxu0 0.0
  %7087 = vmatprep.subr.mxu0 0.0
  %7088 = vmatpush1.msra.mxu0 0.0
  %7089 = vmatprep.subr.mxu0 0.0
  %7090 = vmatpush1.msra.mxu0 0.0
  %7091 = vmatprep.subr.mxu0 0.0
  %7092 = vmatpush1.msra.mxu0 0.0
  %7093 = vmatprep.mubr.f32.mxu0 0.0
  %7094 = vmatmul.mubr.f32.gmra.mrb[0].mxu0 %v7012
  %v7095 = vpop.f32.mrb[0].mxu0
  %v7096 = vadd.f32 %v7009, %v7095
  %v7097 = vpop.f32.mrb[0].mxu0
  %7098 = vmatprep.mubr.f32.mxu0 0.0
  %7099 = vmatmul.mubr.f32.gmra.mrb[0].mxu0 %v7015
  %v7100 = vpop.f32.mrb[0].mxu0
  %v7101 = vadd.f32 %v7009, %v7100
  %v7102 = vpop.f32.mrb[0].mxu0
  %7103 = vmatprep.mubr.f32.mxu0 0.0
  %7104 = vmatmul.mubr.f32.gmra.mrb[0].mxu0 %v7018
  %v7105 = vpop.f32.mrb[0].mxu0
  %v7106 = vadd.f32 %v7009, %v7105
  %v7107 = vpop.f32.mrb[0].mxu0
  %7108 = vmatprep.mubr.f32.mxu0 0.0
  %7109 = vmatmul.mubr.f32.gmra.mrb[0].mxu0 %v7021
  %v7110 = vpop.f32.mrb[0].mxu0
  %v7111 = vadd.f32 %v7009, %v7110
  %v7112 = vpop.f32.mrb[0].mxu0
  %7113 = vmatprep.mubr.f32.mxu0 0.0
  %7114 = vmatmul.mubr.f32.gmra.mrb[0].mxu0 %v7024
  %v7115 = vpop.f32.mrb[0].mxu0
  %v7116 = vadd.f32 %v7009, %v7115
  %v7117 = vpop.f32.mrb[0].mxu0
  %7118 = vmatprep.mubr.f32.mxu0 0.0
  %7119 = vmatmul.mubr.f32.gmra.mrb[0].mxu0 %v7027
  %v7120 = vpop.f32.mrb[0].mxu0
  %v7121 = vadd.f32 %v7009, %v7120
  %v7122 = vpop.f32.mrb[0].mxu0
  %7123 = vdwg.mxu0
  %v7124 = vmul.f32 %v7096, 0.5
  %v7125 = vmul.f32 %v7101, 0.5
  %v7126 = vmul.f32 %v7106, 0.5
  %v7127 = vmul.f32 %v7111, 0.5
  %v7128 = vmul.f32 %v7116, 0.5
  %v7129 = vmul.f32 %v7121, 0.5
  %v7130 = vmul.f32 %v7096, 0.044715
  %v7131 = vmul.f32 %v7101, 0.044715
  %v7132 = vmul.f32 %v7106, 0.044715
  %v7133 = vmul.f32 %v7111, 0.044715
  %v7134 = vmul.f32 %v7116, 0.044715
  %v7135 = vmul.f32 %v7121, 0.044715
  %v7136 = vmul.f32 %v7130, %v7096
  %v7137 = vmul.f32 %v7131, %v7101
  %v7138 = vmul.f32 %v7132, %v7106
  %v7139 = vmul.f32 %v7133, %v7111
  %v7140 = vmul.f32 %v7134, %v7116
  %v7141 = vmul.f32 %v7135, %v7121
  %v7142 = vmul.f32 %v7136, %v7096
  %v7143 = vmul.f32 %v7137, %v7101
  %v7144 = vmul.f32 %v7138, %v7106
  %v7145 = vmul.f32 %v7139, %v7111
  %v7146 = vmul.f32 %v7140, %v7116
  %v7147 = vmul.f32 %v7141, %v7121
  %v7148 = vadd.f32 %v7096, %v7142
  %v7149 = vadd.f32 %v7101, %v7143
  %v7150 = vadd.f32 %v7106, %v7144
  %v7151 = vadd.f32 %v7111, %v7145
  %v7152 = vadd.f32 %v7116, %v7146
  %v7153 = vadd.f32 %v7121, %v7147
  %v7154 = vmul.f32 %v7148, 0.7978846
  %v7155 = vmul.f32 %v7149, 0.7978846
  %v7156 = vmul.f32 %v7150, 0.7978846
  %v7157 = vmul.f32 %v7151, 0.7978846
  %v7158 = vmul.f32 %v7152, 0.7978846
  %v7159 = vmul.f32 %v7153, 0.7978846
  %v7160 = vtanh.pop %v7154
  %v7161 = vtanh.pop %v7155
  %v7162 = vtanh.pop %v7156
  %v7163 = vtanh.pop %v7157
  %v7164 = vtanh.pop %v7158
  %v7165 = vtanh.pop %v7159
  %v7166 = vadd.f32 %v7160, 1.0
  %v7167 = vadd.f32 %v7161, 1.0
  %v7168 = vadd.f32 %v7162, 1.0
  %v7169 = vadd.f32 %v7163, 1.0
  %v7170 = vadd.f32 %v7164, 1.0
  %v7171 = vadd.f32 %v7165, 1.0
  %v7172 = vmul.f32 %v7124, %v7166
  %v7173 = vmul.f32 %v7125, %v7167
  %v7174 = vmul.f32 %v7126, %v7168
  %v7175 = vmul.f32 %v7127, %v7169
  %v7176 = vmul.f32 %v7128, %v7170
  %v7177 = vmul.f32 %v7129, %v7171
  %s7178 = scalar_lea.vmem %s16, 64
  %v7179 = vld [vmem:[%s7178] sm:$0xff]
  %v7180 = vld [vmem:[%s7178 + $0x8] sm:$0xff]
  %v7181 = vld [vmem:[%s7178 + $0x10] sm:$0xff]
  %v7182 = vld [vmem:[%s7178 + $0x18] sm:$0xff]
  %v7183 = vld [vmem:[%s7178 + $0x20] sm:$0xff]
  %v7184 = vld [vmem:[%s7178 + $0x28] sm:$0xff]
  %v7185 = vld [vmem:[%s7178 + $0x30] sm:$0xff]
  %v7186 = vld [vmem:[%s7178 + $0x38] sm:$0xff]
  %s7187 = scalar_lea.vmem %s17, 1
  %v7188 = vld [vmem:[%s7187] sm:$0x1]
  %v7190 = vlaneseq
  %v7191 = vshrl.u32 %v7190, 7
  %v7192 = vsub.s32 0, %v7191
  %v7193 = vrot.slane %v7188, %v7192
  %v7196 = vsel %vm3574, %v7172, 0
  %v7199 = vsel %vm3574, %v7173, 0
  %v7202 = vsel %vm3574, %v7174, 0
  %v7205 = vsel %vm3574, %v7175, 0
  %v7208 = vsel %vm3574, %v7176, 0
  %v7211 = vsel %vm3574, %v7177, 0
  %7213 = vmatprep.subr.mxu0 0.0
  %7214 = vmatpush1.msra.mxu0 %v7179
  %7215 = vmatprep.subr.mxu0 0.0
  %7216 = vmatpush1.msra.mxu0 %v7180
  %7217 = vmatprep.subr.mxu0 0.0
  %7218 = vmatpush1.msra.mxu0 %v7181
  %7219 = vmatprep.subr.mxu0 0.0
  %7220 = vmatpush1.msra.mxu0 %v7182
  %7221 = vmatprep.subr.mxu0 0.0
  %7222 = vmatpush1.msra.mxu0 %v7183
  %7223 = vmatprep.subr.mxu0 0.0
  %7224 = vmatpush1.msra.mxu0 %v7184
  %7225 = vmatprep.subr.mxu0 0.0
  %7226 = vmatpush1.msra.mxu0 %v7185
  %7227 = vmatprep.subr.mxu0 0.0
  %7228 = vmatpush1.msra.mxu0 %v7186
  %7229 = vmatprep.subr.mxu0 0.0
  %7230 = vmatpush1.msra.mxu0 0.0
  %7231 = vmatprep.subr.mxu0 0.0
  %7232 = vmatpush1.msra.mxu0 0.0
  %7233 = vmatprep.subr.mxu0 0.0
  %7234 = vmatpush1.msra.mxu0 0.0
  %7235 = vmatprep.subr.mxu0 0.0
  %7236 = vmatpush1.msra.mxu0 0.0
  %7237 = vmatprep.subr.mxu0 0.0
  %7238 = vmatpush1.msra.mxu0 0.0
  %7239 = vmatprep.subr.mxu0 0.0
  %7240 = vmatpush1.msra.mxu0 0.0
  %7241 = vmatprep.subr.mxu0 0.0
  %7242 = vmatpush1.msra.mxu0 0.0
  %7243 = vmatprep.subr.mxu0 0.0
  %7244 = vmatpush1.msra.mxu0 0.0
  %7245 = vmatprep.subr.mxu0 0.0
  %7246 = vmatpush1.msra.mxu0 0.0
  %7247 = vmatprep.subr.mxu0 0.0
  %7248 = vmatpush1.msra.mxu0 0.0
  %7249 = vmatprep.subr.mxu0 0.0
  %7250 = vmatpush1.msra.mxu0 0.0
  %7251 = vmatprep.subr.mxu0 0.0
  %7252 = vmatpush1.msra.mxu0 0.0
  %7253 = vmatprep.subr.mxu0 0.0
  %7254 = vmatpush1.msra.mxu0 0.0
  %7255 = vmatprep.subr.mxu0 0.0
  %7256 = vmatpush1.msra.mxu0 0.0
  %7257 = vmatprep.subr.mxu0 0.0
  %7258 = vmatpush1.msra.mxu0 0.0
  %7259 = vmatprep.subr.mxu0 0.0
  %7260 = vmatpush1.msra.mxu0 0.0
  %7261 = vmatprep.subr.mxu0 0.0
  %7262 = vmatpush1.msra.mxu0 0.0
  %7263 = vmatprep.subr.mxu0 0.0
  %7264 = vmatpush1.msra.mxu0 0.0
  %7265 = vmatprep.subr.mxu0 0.0
  %7266 = vmatpush1.msra.mxu0 0.0
  %7267 = vmatprep.subr.mxu0 0.0
  %7268 = vmatpush1.msra.mxu0 0.0
  %7269 = vmatprep.subr.mxu0 0.0
  %7270 = vmatpush1.msra.mxu0 0.0
  %7271 = vmatprep.subr.mxu0 0.0
  %7272 = vmatpush1.msra.mxu0 0.0
  %7273 = vmatprep.subr.mxu0 0.0
  %7274 = vmatpush1.msra.mxu0 0.0
  %7275 = vmatprep.subr.mxu0 0.0
  %7276 = vmatpush1.msra.mxu0 0.0
  %7277 = vmatprep.mubr.f32.mxu0 0.0
  %7278 = vmatmul.mubr.f32.gmra.mrb[0].mxu0 %v7196
  %v7279 = vpop.f32.mrb[0].mxu0
  %v7280 = vadd.f32 %v7193, %v7279
  %v7281 = vpop.f32.mrb[0].mxu0
  %7282 = vmatprep.mubr.f32.mxu0 0.0
  %7283 = vmatmul.mubr.f32.gmra.mrb[0].mxu0 %v7199
  %v7284 = vpop.f32.mrb[0].mxu0
  %v7285 = vadd.f32 %v7193, %v7284
  %v7286 = vpop.f32.mrb[0].mxu0
  %7287 = vmatprep.mubr.f32.mxu0 0.0
  %7288 = vmatmul.mubr.f32.gmra.mrb[0].mxu0 %v7202
  %v7289 = vpop.f32.mrb[0].mxu0
  %v7290 = vadd.f32 %v7193, %v7289
  %v7291 = vpop.f32.mrb[0].mxu0
  %7292 = vmatprep.mubr.f32.mxu0 0.0
  %7293 = vmatmul.mubr.f32.gmra.mrb[0].mxu0 %v7205
  %v7294 = vpop.f32.mrb[0].mxu0
  %v7295 = vadd.f32 %v7193, %v7294
  %v7296 = vpop.f32.mrb[0].mxu0
  %7297 = vmatprep.mubr.f32.mxu0 0.0
  %7298 = vmatmul.mubr.f32.gmra.mrb[0].mxu0 %v7208
  %v7299 = vpop.f32.mrb[0].mxu0
  %v7300 = vadd.f32 %v7193, %v7299
  %v7301 = vpop.f32.mrb[0].mxu0
  %7302 = vmatprep.mubr.f32.mxu0 0.0
  %7303 = vmatmul.mubr.f32.gmra.mrb[0].mxu0 %v7211
  %v7304 = vpop.f32.mrb[0].mxu0
  %v7305 = vadd.f32 %v7193, %v7304
  %v7306 = vpop.f32.mrb[0].mxu0
  %7307 = vdwg.mxu0
  %v7308 = vadd.f32 %v6992, %v7280
  %v7309 = vadd.f32 %v6993, %v7285
  %v7310 = vadd.f32 %v6994, %v7290
  %v7311 = vadd.f32 %v6995, %v7295
  %v7312 = vadd.f32 %v6996, %v7300
  %v7313 = vadd.f32 %v6997, %v7305
  %s7314 = scalar_lea.vmem %s18, 1
  %v7315 = vld [vmem:[%s7314] sm:$0x1]
  %s7316 = scalar_lea.vmem %s19, 1
  %v7317 = vld [vmem:[%s7316] sm:$0x1]
  %v7318 = vsel %vm79, %v7308, 0.0
  %7319 = vadd.xlane.f32.xlu0 %v7318
  %v7320 = vpop.xlane.xlu0 %7319
  %v7321 = vsel %vm79, %v7309, 0.0
  %7322 = vadd.xlane.f32.xlu0 %v7321
  %v7323 = vpop.xlane.xlu0 %7322
  %v7324 = vsel %vm79, %v7310, 0.0
  %7325 = vadd.xlane.f32.xlu0 %v7324
  %v7326 = vpop.xlane.xlu0 %7325
  %v7327 = vsel %vm79, %v7311, 0.0
  %7328 = vadd.xlane.f32.xlu0 %v7327
  %v7329 = vpop.xlane.xlu0 %7328
  %v7330 = vsel %vm79, %v7312, 0.0
  %7331 = vadd.xlane.f32.xlu0 %v7330
  %v7332 = vpop.xlane.xlu0 %7331
  %v7333 = vsel %vm79, %v7313, 0.0
  %7334 = vadd.xlane.f32.xlu0 %v7333
  %v7335 = vpop.xlane.xlu0 %7334
  %v7336 = vmul.f32 %v7320, %v98
  %v7337 = vmul.f32 %v7323, %v98
  %v7338 = vmul.f32 %v7326, %v98
  %v7339 = vmul.f32 %v7329, %v98
  %v7340 = vmul.f32 %v7332, %v98
  %v7341 = vmul.f32 %v7335, %v98
  %v7342 = vsub.f32 %v7308, %v7336
  %v7343 = vsub.f32 %v7309, %v7337
  %v7344 = vsub.f32 %v7310, %v7338
  %v7345 = vsub.f32 %v7311, %v7339
  %v7346 = vsub.f32 %v7312, %v7340
  %v7347 = vsub.f32 %v7313, %v7341
  %v7348 = vmul.f32 %v7342, %v7342
  %v7349 = vmul.f32 %v7343, %v7343
  %v7350 = vmul.f32 %v7344, %v7344
  %v7351 = vmul.f32 %v7345, %v7345
  %v7352 = vmul.f32 %v7346, %v7346
  %v7353 = vmul.f32 %v7347, %v7347
  %v7354 = vsel %vm79, %v7348, 0.0
  %7355 = vadd.xlane.f32.xlu0 %v7354
  %v7356 = vpop.xlane.xlu0 %7355
  %v7357 = vsel %vm79, %v7349, 0.0
  %7358 = vadd.xlane.f32.xlu0 %v7357
  %v7359 = vpop.xlane.xlu0 %7358
  %v7360 = vsel %vm79, %v7350, 0.0
  %7361 = vadd.xlane.f32.xlu0 %v7360
  %v7362 = vpop.xlane.xlu0 %7361
  %v7363 = vsel %vm79, %v7351, 0.0
  %7364 = vadd.xlane.f32.xlu0 %v7363
  %v7365 = vpop.xlane.xlu0 %7364
  %v7366 = vsel %vm79, %v7352, 0.0
  %7367 = vadd.xlane.f32.xlu0 %v7366
  %v7368 = vpop.xlane.xlu0 %7367
  %v7369 = vsel %vm79, %v7353, 0.0
  %7370 = vadd.xlane.f32.xlu0 %v7369
  %v7371 = vpop.xlane.xlu0 %7370
  %v7372 = vmul.f32 %v7356, %v98
  %v7373 = vmul.f32 %v7359, %v98
  %v7374 = vmul.f32 %v7362, %v98
  %v7375 = vmul.f32 %v7365, %v98
  %v7376 = vmul.f32 %v7368, %v98
  %v7377 = vmul.f32 %v7371, %v98
  %v7378 = vadd.f32 %v7372, 1e-12
  %v7379 = vadd.f32 %v7373, 1e-12
  %v7380 = vadd.f32 %v7374, 1e-12
  %v7381 = vadd.f32 %v7375, 1e-12
  %v7382 = vadd.f32 %v7376, 1e-12
  %v7383 = vadd.f32 %v7377, 1e-12
  %v7384 = vrsqrt.pop %v7378
  %v7385 = vrsqrt.pop %v7379
  %v7386 = vrsqrt.pop %v7380
  %v7387 = vrsqrt.pop %v7381
  %v7388 = vrsqrt.pop %v7382
  %v7389 = vrsqrt.pop %v7383
  %v7390 = vmul.f32 %v7342, %v7384
  %v7391 = vmul.f32 %v7343, %v7385
  %v7392 = vmul.f32 %v7344, %v7386
  %v7393 = vmul.f32 %v7345, %v7387
  %v7394 = vmul.f32 %v7346, %v7388
  %v7395 = vmul.f32 %v7347, %v7389
  %v7397 = vlaneseq
  %v7398 = vshrl.u32 %v7397, 7
  %v7399 = vsub.s32 0, %v7398
  %v7400 = vrot.slane %v7315, %v7399
  %v7402 = vmul.f32 %v7390, %v7400
  %v7403 = vmul.f32 %v7391, %v7400
  %v7404 = vmul.f32 %v7392, %v7400
  %v7405 = vmul.f32 %v7393, %v7400
  %v7406 = vmul.f32 %v7394, %v7400
  %v7407 = vmul.f32 %v7395, %v7400
  %v7409 = vlaneseq
  %v7410 = vshrl.u32 %v7409, 7
  %v7411 = vsub.s32 0, %v7410
  %v7412 = vrot.slane %v7317, %v7411
  %v7414 = vadd.f32 %v7402, %v7412
  %v7415 = vadd.f32 %v7403, %v7412
  %v7416 = vadd.f32 %v7404, %v7412
  %v7417 = vadd.f32 %v7405, %v7412
  %v7418 = vadd.f32 %v7406, %v7412
  %v7419 = vadd.f32 %v7407, %v7412
  %v7420 = vld [vmem:[%s20] sm:$0xff]
  %v7421 = vld [vmem:[%s20 + $0x8] sm:$0xff]
  %v7422 = vld [vmem:[%s20 + $0x10] sm:$0xff]
  %v7423 = vld [vmem:[%s20 + $0x18] sm:$0xff]
  %v7424 = vld [vmem:[%s21] sm:$0x1]
  %v7426 = vlaneseq
  %v7427 = vshrl.u32 %v7426, 7
  %v7428 = vsub.s32 0, %v7427
  %v7429 = vrot.slane %v7424, %v7428
  %v7432 = vsel %vm79, %v7414, 0
  %v7435 = vsel %vm79, %v7415, 0
  %v7438 = vsel %vm79, %v7416, 0
  %v7441 = vsel %vm79, %v7417, 0
  %v7444 = vsel %vm79, %v7418, 0
  %v7447 = vsel %vm79, %v7419, 0
  %7449 = vmatprep.subr.mxu0 0.0
  %7450 = vmatpush1.msra.mxu0 %v7420
  %7451 = vmatprep.subr.mxu0 0.0
  %7452 = vmatpush1.msra.mxu0 %v7421
  %7453 = vmatprep.subr.mxu0 0.0
  %7454 = vmatpush1.msra.mxu0 %v7422
  %7455 = vmatprep.subr.mxu0 0.0
  %7456 = vmatpush1.msra.mxu0 %v7423
  %7457 = vmatprep.subr.mxu0 0.0
  %7458 = vmatpush1.msra.mxu0 0.0
  %7459 = vmatprep.subr.mxu0 0.0
  %7460 = vmatpush1.msra.mxu0 0.0
  %7461 = vmatprep.subr.mxu0 0.0
  %7462 = vmatpush1.msra.mxu0 0.0
  %7463 = vmatprep.subr.mxu0 0.0
  %7464 = vmatpush1.msra.mxu0 0.0
  %7465 = vmatprep.subr.mxu0 0.0
  %7466 = vmatpush1.msra.mxu0 0.0
  %7467 = vmatprep.subr.mxu0 0.0
  %7468 = vmatpush1.msra.mxu0 0.0
  %7469 = vmatprep.subr.mxu0 0.0
  %7470 = vmatpush1.msra.mxu0 0.0
  %7471 = vmatprep.subr.mxu0 0.0
  %7472 = vmatpush1.msra.mxu0 0.0
  %7473 = vmatprep.subr.mxu0 0.0
  %7474 = vmatpush1.msra.mxu0 0.0
  %7475 = vmatprep.subr.mxu0 0.0
  %7476 = vmatpush1.msra.mxu0 0.0
  %7477 = vmatprep.subr.mxu0 0.0
  %7478 = vmatpush1.msra.mxu0 0.0
  %7479 = vmatprep.subr.mxu0 0.0
  %7480 = vmatpush1.msra.mxu0 0.0
  %7481 = vmatprep.subr.mxu0 0.0
  %7482 = vmatpush1.msra.mxu0 0.0
  %7483 = vmatprep.subr.mxu0 0.0
  %7484 = vmatpush1.msra.mxu0 0.0
  %7485 = vmatprep.subr.mxu0 0.0
  %7486 = vmatpush1.msra.mxu0 0.0
  %7487 = vmatprep.subr.mxu0 0.0
  %7488 = vmatpush1.msra.mxu0 0.0
  %7489 = vmatprep.subr.mxu0 0.0
  %7490 = vmatpush1.msra.mxu0 0.0
  %7491 = vmatprep.subr.mxu0 0.0
  %7492 = vmatpush1.msra.mxu0 0.0
  %7493 = vmatprep.subr.mxu0 0.0
  %7494 = vmatpush1.msra.mxu0 0.0
  %7495 = vmatprep.subr.mxu0 0.0
  %7496 = vmatpush1.msra.mxu0 0.0
  %7497 = vmatprep.subr.mxu0 0.0
  %7498 = vmatpush1.msra.mxu0 0.0
  %7499 = vmatprep.subr.mxu0 0.0
  %7500 = vmatpush1.msra.mxu0 0.0
  %7501 = vmatprep.subr.mxu0 0.0
  %7502 = vmatpush1.msra.mxu0 0.0
  %7503 = vmatprep.subr.mxu0 0.0
  %7504 = vmatpush1.msra.mxu0 0.0
  %7505 = vmatprep.subr.mxu0 0.0
  %7506 = vmatpush1.msra.mxu0 0.0
  %7507 = vmatprep.subr.mxu0 0.0
  %7508 = vmatpush1.msra.mxu0 0.0
  %7509 = vmatprep.subr.mxu0 0.0
  %7510 = vmatpush1.msra.mxu0 0.0
  %7511 = vmatprep.subr.mxu0 0.0
  %7512 = vmatpush1.msra.mxu0 0.0
  %7513 = vmatprep.mubr.f32.mxu0 0.0
  %7514 = vmatmul.mubr.f32.gmra.mrb[0].mxu0 %v7432
  %v7515 = vpop.f32.mrb[0].mxu0
  %v7516 = vadd.f32 %v7429, %v7515
  %v7517 = vpop.f32.mrb[0].mxu0
  %7518 = vmatprep.mubr.f32.mxu0 0.0
  %7519 = vmatmul.mubr.f32.gmra.mrb[0].mxu0 %v7435
  %v7520 = vpop.f32.mrb[0].mxu0
  %v7521 = vadd.f32 %v7429, %v7520
  %v7522 = vpop.f32.mrb[0].mxu0
  %7523 = vmatprep.mubr.f32.mxu0 0.0
  %7524 = vmatmul.mubr.f32.gmra.mrb[0].mxu0 %v7438
  %v7525 = vpop.f32.mrb[0].mxu0
  %v7526 = vadd.f32 %v7429, %v7525
  %v7527 = vpop.f32.mrb[0].mxu0
  %7528 = vmatprep.mubr.f32.mxu0 0.0
  %7529 = vmatmul.mubr.f32.gmra.mrb[0].mxu0 %v7441
  %v7530 = vpop.f32.mrb[0].mxu0
  %v7531 = vadd.f32 %v7429, %v7530
  %v7532 = vpop.f32.mrb[0].mxu0
  %7533 = vmatprep.mubr.f32.mxu0 0.0
  %7534 = vmatmul.mubr.f32.gmra.mrb[0].mxu0 %v7444
  %v7535 = vpop.f32.mrb[0].mxu0
  %v7536 = vadd.f32 %v7429, %v7535
  %v7537 = vpop.f32.mrb[0].mxu0
  %7538 = vmatprep.mubr.f32.mxu0 0.0
  %7539 = vmatmul.mubr.f32.gmra.mrb[0].mxu0 %v7447
  %v7540 = vpop.f32.mrb[0].mxu0
  %v7541 = vadd.f32 %v7429, %v7540
  %v7542 = vpop.f32.mrb[0].mxu0
  %7543 = vdwg.mxu0
  %7544 = vst [vmem:[%s22] sm:$0xff] %v7516
  %7545 = vst [vmem:[%s22 + $0x8] sm:$0xff] %v7521
  %7546 = vst [vmem:[%s22 + $0x10] sm:$0xff] %v7526
  %7547 = vst [vmem:[%s22 + $0x18] sm:$0xff] %v7531
  %7548 = vst [vmem:[%s22 + $0x20] sm:$0xff] %v7536
  %7549 = vst [vmem:[%s22 + $0x28] sm:$0xff] %v7541
  // Predicated region
  $region90: #{reranker_forward.1} parent=0 // pred_check
    _
  $region91: #{reranker_forward.1} parent=0 // pred_check_branch
    %7551 = sbr.rel (0) target = $region93
  $region92: #{reranker_forward.1} parent=0 // pred_region
    _
  $region93: #{reranker_forward.1} parent=0 // pred_fallthru
    _
  // Predicated region
  $region94: #{reranker_forward.1} parent=0 // pred_check
    _
  $region95: #{reranker_forward.1} parent=0 // pred_check_branch
    %7553 = sbr.rel (0) target = $region97
  $region96: #{reranker_forward.1} parent=0 // pred_region
    _
  $region97: #{reranker_forward.1} parent=0 // pred_fallthru
    _

</llo_original>
